<compile_context>
chip_gen: v6e
topology: v6e:2x2x1
jax: 0.10.0
libtpu: 0.0.40
codegen_flags: <defaults>
</compile_context>

<pallas_src>
import numpy as np

import jax
import jax.numpy as jnp
from jax.experimental import pallas as pl
from jax.experimental.pallas import tpu as pltpu


TB_MAX = 32  # batch tile; ~0.5 MiB/image of padded VMEM temps -> <16 MiB/step.


def _round_up(n, m):
    return ((n + m - 1) // m) * m


# --------------------------------------------------------------------------- kernel
def fashion_kernel(x_ref, w1_ref, b1_ref, w2_ref, b2_ref,
                   fw1_ref, fb1_ref, fw2_ref, fb2_ref, out_ref):
    f32 = jnp.float32
    tb = x_ref.shape[0]
    x = x_ref[...]                                        # (tb, 28, 28)  (b, H, W)

    # ---- conv1: 5 row-shifted matmuls against Toeplitz-packed weights -------------
    # result lane layout: l = pw*10 + o   (pw = output column, o = output channel)
    acc1 = jnp.zeros((tb * 24, 240), f32)
    for kh in range(5):
        lhs = x[:, kh:kh + 24, :].reshape(tb * 24, 28)    # rows = b*24 + output row
        acc1 = acc1 + jnp.dot(lhs, w1_ref[kh], preferred_element_type=f32)
    acc1 = acc1 + b1_ref[...]                             # (tb*24, 240)

    # ---- 2x2 maxpool + relu (H: sublane pairing; W: lane-shift max) ---------------
    a1 = acc1.reshape(tb, 12, 2, 240)
    a1 = jnp.maximum(a1[:, :, 0, :], a1[:, :, 1, :])      # H-pool -> (tb, 12, 240)
    a1 = jnp.maximum(a1[:, :, 0:230], a1[:, :, 10:240])   # W-pool -> (tb, 12, 230)
    p1 = jnp.maximum(a1, 0.0)     # valid lanes: 20*iw + c; junk lanes hit zero weights

    # ---- conv2 (Dropout2d = identity in eval): 5 row-shifted matmuls --------------
    # result lane layout: m = ow*20 + oc
    acc2 = jnp.zeros((tb * 8, 160), f32)
    for kh in range(5):
        lhs = p1[:, kh:kh + 8, :].reshape(tb * 8, 230)
        acc2 = acc2 + jnp.dot(lhs, w2_ref[kh], preferred_element_type=f32)
    acc2 = acc2 + b2_ref[...]                             # (tb*8, 160)

    a2 = acc2.reshape(tb, 4, 2, 160)
    a2 = jnp.maximum(a2[:, :, 0, :], a2[:, :, 1, :])      # H-pool -> (tb, 4, 160)
    a2 = jnp.maximum(a2[:, :, 0:140], a2[:, :, 20:160])   # W-pool -> (tb, 4, 140)
    p2 = jnp.maximum(a2, 0.0)     # valid lanes: 40*ow + oc

    # ---- fc1 + relu: contract the 4 pooled rows with row-permuted packed weights --
    h1 = jnp.zeros((tb, 50), f32)
    for oh in range(4):
        h1 = h1 + jnp.dot(p2[:, oh, :], fw1_ref[oh], preferred_element_type=f32)
    h1 = jnp.maximum(h1 + fb1_ref[...], 0.0)
    # TODO(synk): F.dropout / Dropout2d are identity here (inference mode);
    # stochastic training-mode dropout is not reproduced.

    # ---- fc2 + log_softmax over axis 1 ---------------------------------------------
    logits = jnp.dot(h1, fw2_ref[...], preferred_element_type=f32) + fb2_ref[...]
    z = logits - jnp.max(logits, axis=1, keepdims=True)
    out_ref[...] = z - jnp.log(jnp.sum(jnp.exp(z), axis=1, keepdims=True))


# --------------------------------------------------------------- one-time param pack
def pack_params(params):
    """Hoisted, one-time host-side packing of the PyTorch-layout parameters."""
    w1 = np.asarray(jax.device_get(params["conv1_w"]), np.float32)   # (10,1,5,5) OIHW
    b1 = np.asarray(jax.device_get(params["conv1_b"]), np.float32)   # (10,)
    w2 = np.asarray(jax.device_get(params["conv2_w"]), np.float32)   # (20,10,5,5)
    b2 = np.asarray(jax.device_get(params["conv2_b"]), np.float32)   # (20,)
    fc1_w = np.asarray(jax.device_get(params["fc1_w"]), np.float32)  # (50, 320)
    fc1_b = np.asarray(jax.device_get(params["fc1_b"]), np.float32)  # (50,)
    fc2_w = np.asarray(jax.device_get(params["fc2_w"]), np.float32)  # (10, 50)
    fc2_b = np.asarray(jax.device_get(params["fc2_b"]), np.float32)  # (10,)

    # conv1 Toeplitz: W1T[kh, iw, pw*10 + o] = w1[o, 0, kh, iw - pw] for 0 <= iw-pw < 5
    W1T = np.zeros((5, 28, 24 * 10), np.float32)
    for kh in range(5):
        for kw in range(5):
            for pw in range(24):
                W1T[kh, pw + kw, pw * 10:(pw + 1) * 10] = w1[:, 0, kh, kw]

    # conv2 Toeplitz over the pooled conv1 lane layout (valid lanes = 20*iw + c):
    # W2T[kh, 20*iw + c, ow*20 + oc] = w2[oc, c, kh, iw - ow] for 0 <= iw-ow < 5
    W2T = np.zeros((5, 230, 8 * 20), np.float32)
    for kh in range(5):
        for kw in range(5):
            for ow in range(8):
                iw = ow + kw
                W2T[kh, 20 * iw:20 * iw + 10, ow * 20:(ow + 1) * 20] = w2[:, :, kh, kw].T

    # fc1 rows permuted to the kernel's (oh, 40*ow + oc) layout; PyTorch NCHW flatten
    # feature index is oc*16 + oh*4 + ow.  Junk lanes keep zero rows.
    FW1T = np.zeros((4, 140, 50), np.float32)
    for oh in range(4):
        for ow in range(4):
            for oc in range(20):
                FW1T[oh, 40 * ow + oc, :] = fc1_w[:, oc * 16 + oh * 4 + ow]

    return dict(
        w1=jnp.asarray(W1T),
        b1=jnp.asarray(np.tile(b1, 24).reshape(1, 240)),
        w2=jnp.asarray(W2T),
        b2=jnp.asarray(np.tile(b2, 8).reshape(1, 160)),
        fw1=jnp.asarray(FW1T),
        fb1=jnp.asarray(fc1_b.reshape(1, 50)),
        fw2=jnp.asarray(fc2_w.T.copy()),
        fb2=jnp.asarray(fc2_b.reshape(1, 10)),
    )


# ---------------------------------------------------------------------------- wrapper
@jax.jit
def fashion_forward(x_nchw, packed):
    n = x_nchw.shape[0]
    x = x_nchw.reshape(n, 28, 28).astype(jnp.float32)     # NCHW with C=1 -> (N, H, W)

    tb = min(TB_MAX, _round_up(n, 8))
    n_pad = _round_up(n, tb)
    if n_pad != n:
        x = jnp.pad(x, ((0, n_pad - n), (0, 0), (0, 0)))

    out = pl.pallas_call(
        fashion_kernel,
        out_shape=jax.ShapeDtypeStruct((n_pad, 10), jnp.float32),
        grid=(n_pad // tb,),
        in_specs=[
            pl.BlockSpec((tb, 28, 28), lambda i: (i, 0, 0)),       # x (batch-tiled)
            pl.BlockSpec((5, 28, 240), lambda i: (0, 0, 0)),       # conv1 packed W
            pl.BlockSpec((1, 240), lambda i: (0, 0)),              # conv1 bias (tiled)
            pl.BlockSpec((5, 230, 160), lambda i: (0, 0, 0)),      # conv2 packed W
            pl.BlockSpec((1, 160), lambda i: (0, 0)),              # conv2 bias (tiled)
            pl.BlockSpec((4, 140, 50), lambda i: (0, 0, 0)),       # fc1 packed W
            pl.BlockSpec((1, 50), lambda i: (0, 0)),               # fc1 bias
            pl.BlockSpec((50, 10), lambda i: (0, 0)),              # fc2 W^T
            pl.BlockSpec((1, 10), lambda i: (0, 0)),               # fc2 bias
        ],
        out_specs=pl.BlockSpec((tb, 10), lambda i: (i, 0)),
        compiler_params=pltpu.CompilerParams(
            dimension_semantics=("parallel",),
            vmem_limit_bytes=48 * 1024 * 1024,
        ),
    )(x, packed["w1"], packed["b1"], packed["w2"], packed["b2"],
      packed["fw1"], packed["fb1"], packed["fw2"], packed["fb2"])

    return out[:n]


# ----------------------------------------------------------------- reference & params
def init_params(key):
    """Deterministic synthetic parameters, PyTorch-default-style uniform init."""
    ks = jax.random.split(key, 8)

    def u(k, shape, fan_in):
        bound = 1.0 / (float(fan_in) ** 0.5)
        return jax.random.uniform(k, shape, jnp.float32, -bound, bound)

    return {
        "conv1_w": u(ks[0], (10, 1, 5, 5), 1 * 5 * 5),     # OIHW
        "conv1_b": u(ks[1], (10,), 1 * 5 * 5),
        "conv2_w": u(ks[2], (20, 10, 5, 5), 10 * 5 * 5),   # OIHW
        "conv2_b": u(ks[3], (20,), 10 * 5 * 5),
        "fc1_w":   u(ks[4], (50, 320), 320),               # (out, in), torch layout
        "fc1_b":   u(ks[5], (50,), 320),
        "fc2_w":   u(ks[6], (10, 50), 50),
        "fc2_b":   u(ks[7], (10,), 50),
    }


@jax.jit
def reference_forward(x_nchw, params):
    """Pure-JAX (XLA) reference of the PyTorch forward pass, eval mode."""
    hp = jax.lax.Precision.HIGHEST
    x = x_nchw.astype(jnp.float32)
    y = jax.lax.conv_general_dilated(
        x, params["conv1_w"], (1, 1), "VALID",
        dimension_numbers=("NCHW", "OIHW", "NCHW"), precision=hp)
    y = y + params["conv1_b"][None, :, None, None]
    y = jax.lax.reduce_window(y, -jnp.inf, jax.lax.max, (1, 1, 2, 2), (1, 1, 2, 2), "VALID")
    y = jax.nn.relu(y)
    y = jax.lax.conv_general_dilated(
        y, params["conv2_w"], (1, 1), "VALID",
        dimension_numbers=("NCHW", "OIHW", "NCHW"), precision=hp)
    y = y + params["conv2_b"][None, :, None, None]
    y = jax.lax.reduce_window(y, -jnp.inf, jax.lax.max, (1, 1, 2, 2), (1, 1, 2, 2), "VALID")
    y = jax.nn.relu(y)
    y = y.reshape(y.shape[0], 320)
    y = jax.nn.relu(jnp.dot(y, params["fc1_w"].T, precision=hp) + params["fc1_b"])
    y = jnp.dot(y, params["fc2_w"].T, precision=hp) + params["fc2_b"]
    return jax.nn.log_softmax(y, axis=1)


if __name__ == "__main__":
    key = jax.random.PRNGKey(0)
    pkey, xkey = jax.random.split(key)
    params = init_params(pkey)
    packed = pack_params(params)                 # one-time host-side packing
    # fc1 expects 20*4*4 = 320 features after two conv+pool stages => 28x28 input.
    x = jax.random.normal(xkey, (2, 1, 28, 28), jnp.float32)

    out = fashion_forward(x, packed)
    jax.block_until_ready(out)
    assert out.shape == (2, 10)

    # log_softmax rows should (approximately) exponentiate-sum to 1.
    assert bool(jnp.all(jnp.abs(jnp.sum(jnp.exp(out), axis=1) - 1.0) < 1e-4))
    # Match the pure-JAX reference (generous tol for TPU matmul precision modes).
    ref = reference_forward(x, params)
    assert bool(jnp.all(jnp.abs(out - ref) < 5e-2)), "mismatch vs reference forward"
    print("KERNEL_OK")
</pallas_src>

<mosaic_0001>
module attributes {stable_mosaic.version = 11 : i64} {
  func.func @fashion_kernel(%arg0: i32, %arg1: memref<8x28x28xf32, #tpu.memory_space<vmem>>, %arg2: memref<5x28x240xf32, #tpu.memory_space<vmem>>, %arg3: memref<1x240xf32, #tpu.memory_space<vmem>>, %arg4: memref<5x230x160xf32, #tpu.memory_space<vmem>>, %arg5: memref<1x160xf32, #tpu.memory_space<vmem>>, %arg6: memref<4x140x50xf32, #tpu.memory_space<vmem>>, %arg7: memref<1x50xf32, #tpu.memory_space<vmem>>, %arg8: memref<50x10xf32, #tpu.memory_space<vmem>>, %arg9: memref<1x10xf32, #tpu.memory_space<vmem>>, %arg10: memref<8x10xf32, #tpu.memory_space<vmem>>) attributes {dimension_semantics = [#tpu.dimension_semantics<parallel>], iteration_bounds = array<i64: 1>, scalar_prefetch = 0 : i64, scratch_operands = 0 : i64, tpu.core_type = #tpu.core_type<tc>, window_params = [{transform_indices = @transform_0, window_bounds = array<i64: 8, 28, 28>}, {pipeline_mode = #tpu.pipeline_mode<synchronous>, transform_indices = @transform_1, window_bounds = array<i64: 5, 28, 240>}, {pipeline_mode = #tpu.pipeline_mode<synchronous>, transform_indices = @transform_2, window_bounds = array<i64: 1, 240>}, {pipeline_mode = #tpu.pipeline_mode<synchronous>, transform_indices = @transform_3, window_bounds = array<i64: 5, 230, 160>}, {pipeline_mode = #tpu.pipeline_mode<synchronous>, transform_indices = @transform_4, window_bounds = array<i64: 1, 160>}, {pipeline_mode = #tpu.pipeline_mode<synchronous>, transform_indices = @transform_5, window_bounds = array<i64: 4, 140, 50>}, {pipeline_mode = #tpu.pipeline_mode<synchronous>, transform_indices = @transform_6, window_bounds = array<i64: 1, 50>}, {pipeline_mode = #tpu.pipeline_mode<synchronous>, transform_indices = @transform_7, window_bounds = array<i64: 50, 10>}, {pipeline_mode = #tpu.pipeline_mode<synchronous>, transform_indices = @transform_8, window_bounds = array<i64: 1, 10>}, {transform_indices = @transform_9, window_bounds = array<i64: 8, 10>}]} {
    %c0 = arith.constant 0 : index
    %c0_0 = arith.constant 0 : index
    %c0_1 = arith.constant 0 : index
    %0 = vector.load %arg1[%c0, %c0_0, %c0_1] : memref<8x28x28xf32, #tpu.memory_space<vmem>>, vector<8x28x28xf32>
    %cst = arith.constant 0.000000e+00 : f32
    %1 = vector.broadcast %cst : f32 to vector<192x240xf32>
    %2 = vector.extract_strided_slice %0 {offsets = [0, 0, 0], sizes = [8, 24, 28], strides = [1, 1, 1]} : vector<8x28x28xf32> to vector<8x24x28xf32>
    %3 = vector.shape_cast %2 : vector<8x24x28xf32> to vector<192x28xf32>
    %c0_2 = arith.constant 0 : index
    %c0_3 = arith.constant 0 : index
    %c0_4 = arith.constant 0 : index
    %4 = vector.load %arg2[%c0_2, %c0_3, %c0_4] : memref<5x28x240xf32, #tpu.memory_space<vmem>>, vector<1x28x240xf32>
    %5 = vector.shape_cast %4 : vector<1x28x240xf32> to vector<28x240xf32>
    %cst_5 = arith.constant dense<0.000000e+00> : vector<192x240xf32>
    %6 = tpu.matmul %3, %5, %cst_5 {dimension_numbers = #tpu.dot_dimension_numbers<[1], [0], [0], [1], [0, 0, 1, 1], [], []>} : vector<192x28xf32>, vector<28x240xf32>, vector<192x240xf32> -> vector<192x240xf32>
    %7 = arith.addf %1, %6 : vector<192x240xf32>
    %8 = vector.extract_strided_slice %0 {offsets = [0, 1, 0], sizes = [8, 24, 28], strides = [1, 1, 1]} : vector<8x28x28xf32> to vector<8x24x28xf32>
    %9 = vector.shape_cast %8 : vector<8x24x28xf32> to vector<192x28xf32>
    %c1 = arith.constant 1 : index
    %c0_6 = arith.constant 0 : index
    %c0_7 = arith.constant 0 : index
    %10 = vector.load %arg2[%c1, %c0_6, %c0_7] : memref<5x28x240xf32, #tpu.memory_space<vmem>>, vector<1x28x240xf32>
    %11 = vector.shape_cast %10 : vector<1x28x240xf32> to vector<28x240xf32>
    %cst_8 = arith.constant dense<0.000000e+00> : vector<192x240xf32>
    %12 = tpu.matmul %9, %11, %cst_8 {dimension_numbers = #tpu.dot_dimension_numbers<[1], [0], [0], [1], [0, 0, 1, 1], [], []>} : vector<192x28xf32>, vector<28x240xf32>, vector<192x240xf32> -> vector<192x240xf32>
    %13 = arith.addf %7, %12 : vector<192x240xf32>
    %14 = vector.extract_strided_slice %0 {offsets = [0, 2, 0], sizes = [8, 24, 28], strides = [1, 1, 1]} : vector<8x28x28xf32> to vector<8x24x28xf32>
    %15 = vector.shape_cast %14 : vector<8x24x28xf32> to vector<192x28xf32>
    %c2 = arith.constant 2 : index
    %c0_9 = arith.constant 0 : index
    %c0_10 = arith.constant 0 : index
    %16 = vector.load %arg2[%c2, %c0_9, %c0_10] : memref<5x28x240xf32, #tpu.memory_space<vmem>>, vector<1x28x240xf32>
    %17 = vector.shape_cast %16 : vector<1x28x240xf32> to vector<28x240xf32>
    %cst_11 = arith.constant dense<0.000000e+00> : vector<192x240xf32>
    %18 = tpu.matmul %15, %17, %cst_11 {dimension_numbers = #tpu.dot_dimension_numbers<[1], [0], [0], [1], [0, 0, 1, 1], [], []>} : vector<192x28xf32>, vector<28x240xf32>, vector<192x240xf32> -> vector<192x240xf32>
    %19 = arith.addf %13, %18 : vector<192x240xf32>
    %20 = vector.extract_strided_slice %0 {offsets = [0, 3, 0], sizes = [8, 24, 28], strides = [1, 1, 1]} : vector<8x28x28xf32> to vector<8x24x28xf32>
    %21 = vector.shape_cast %20 : vector<8x24x28xf32> to vector<192x28xf32>
    %c3 = arith.constant 3 : index
    %c0_12 = arith.constant 0 : index
    %c0_13 = arith.constant 0 : index
    %22 = vector.load %arg2[%c3, %c0_12, %c0_13] : memref<5x28x240xf32, #tpu.memory_space<vmem>>, vector<1x28x240xf32>
    %23 = vector.shape_cast %22 : vector<1x28x240xf32> to vector<28x240xf32>
    %cst_14 = arith.constant dense<0.000000e+00> : vector<192x240xf32>
    %24 = tpu.matmul %21, %23, %cst_14 {dimension_numbers = #tpu.dot_dimension_numbers<[1], [0], [0], [1], [0, 0, 1, 1], [], []>} : vector<192x28xf32>, vector<28x240xf32>, vector<192x240xf32> -> vector<192x240xf32>
    %25 = arith.addf %19, %24 : vector<192x240xf32>
    %26 = vector.extract_strided_slice %0 {offsets = [0, 4, 0], sizes = [8, 24, 28], strides = [1, 1, 1]} : vector<8x28x28xf32> to vector<8x24x28xf32>
    %27 = vector.shape_cast %26 : vector<8x24x28xf32> to vector<192x28xf32>
    %c4 = arith.constant 4 : index
    %c0_15 = arith.constant 0 : index
    %c0_16 = arith.constant 0 : index
    %28 = vector.load %arg2[%c4, %c0_15, %c0_16] : memref<5x28x240xf32, #tpu.memory_space<vmem>>, vector<1x28x240xf32>
    %29 = vector.shape_cast %28 : vector<1x28x240xf32> to vector<28x240xf32>
    %cst_17 = arith.constant dense<0.000000e+00> : vector<192x240xf32>
    %30 = tpu.matmul %27, %29, %cst_17 {dimension_numbers = #tpu.dot_dimension_numbers<[1], [0], [0], [1], [0, 0, 1, 1], [], []>} : vector<192x28xf32>, vector<28x240xf32>, vector<192x240xf32> -> vector<192x240xf32>
    %31 = arith.addf %25, %30 : vector<192x240xf32>
    %c0_18 = arith.constant 0 : index
    %c0_19 = arith.constant 0 : index
    %32 = vector.load %arg3[%c0_18, %c0_19] : memref<1x240xf32, #tpu.memory_space<vmem>>, vector<1x240xf32>
    %33 = vector.broadcast %32 : vector<1x240xf32> to vector<192x240xf32>
    %34 = arith.addf %31, %33 : vector<192x240xf32>
    %35 = vector.shape_cast %34 : vector<192x240xf32> to vector<8x12x2x240xf32>
    %36 = vector.extract_strided_slice %35 {offsets = [0, 0, 0, 0], sizes = [8, 12, 1, 240], strides = [1, 1, 1, 1]} : vector<8x12x2x240xf32> to vector<8x12x1x240xf32>
    %37 = vector.shape_cast %36 : vector<8x12x1x240xf32> to vector<8x12x240xf32>
    %38 = vector.extract_strided_slice %35 {offsets = [0, 0, 1, 0], sizes = [8, 12, 1, 240], strides = [1, 1, 1, 1]} : vector<8x12x2x240xf32> to vector<8x12x1x240xf32>
    %39 = vector.shape_cast %38 : vector<8x12x1x240xf32> to vector<8x12x240xf32>
    %40 = arith.maximumf %37, %39 : vector<8x12x240xf32>
    %41 = vector.extract_strided_slice %40 {offsets = [0, 0, 0], sizes = [8, 12, 230], strides = [1, 1, 1]} : vector<8x12x240xf32> to vector<8x12x230xf32>
    %42 = vector.extract_strided_slice %40 {offsets = [0, 0, 10], sizes = [8, 12, 230], strides = [1, 1, 1]} : vector<8x12x240xf32> to vector<8x12x230xf32>
    %43 = arith.maximumf %41, %42 : vector<8x12x230xf32>
    %cst_20 = arith.constant 0.000000e+00 : f32
    %44 = vector.broadcast %cst_20 : f32 to vector<8x12x230xf32>
    %45 = arith.maximumf %43, %44 : vector<8x12x230xf32>
    %cst_21 = arith.constant 0.000000e+00 : f32
    %46 = vector.broadcast %cst_21 : f32 to vector<64x160xf32>
    %47 = vector.extract_strided_slice %45 {offsets = [0, 0, 0], sizes = [8, 8, 230], strides = [1, 1, 1]} : vector<8x12x230xf32> to vector<8x8x230xf32>
    %48 = vector.shape_cast %47 : vector<8x8x230xf32> to vector<64x230xf32>
    %c0_22 = arith.constant 0 : index
    %c0_23 = arith.constant 0 : index
    %c0_24 = arith.constant 0 : index
    %49 = vector.load %arg4[%c0_22, %c0_23, %c0_24] : memref<5x230x160xf32, #tpu.memory_space<vmem>>, vector<1x230x160xf32>
    %50 = vector.shape_cast %49 : vector<1x230x160xf32> to vector<230x160xf32>
    %cst_25 = arith.constant dense<0.000000e+00> : vector<64x160xf32>
    %51 = tpu.matmul %48, %50, %cst_25 {dimension_numbers = #tpu.dot_dimension_numbers<[1], [0], [0], [1], [0, 0, 1, 1], [], []>} : vector<64x230xf32>, vector<230x160xf32>, vector<64x160xf32> -> vector<64x160xf32>
    %52 = arith.addf %46, %51 : vector<64x160xf32>
    %53 = vector.extract_strided_slice %45 {offsets = [0, 1, 0], sizes = [8, 8, 230], strides = [1, 1, 1]} : vector<8x12x230xf32> to vector<8x8x230xf32>
    %54 = vector.shape_cast %53 : vector<8x8x230xf32> to vector<64x230xf32>
    %c1_26 = arith.constant 1 : index
    %c0_27 = arith.constant 0 : index
    %c0_28 = arith.constant 0 : index
    %55 = vector.load %arg4[%c1_26, %c0_27, %c0_28] : memref<5x230x160xf32, #tpu.memory_space<vmem>>, vector<1x230x160xf32>
    %56 = vector.shape_cast %55 : vector<1x230x160xf32> to vector<230x160xf32>
    %cst_29 = arith.constant dense<0.000000e+00> : vector<64x160xf32>
    %57 = tpu.matmul %54, %56, %cst_29 {dimension_numbers = #tpu.dot_dimension_numbers<[1], [0], [0], [1], [0, 0, 1, 1], [], []>} : vector<64x230xf32>, vector<230x160xf32>, vector<64x160xf32> -> vector<64x160xf32>
    %58 = arith.addf %52, %57 : vector<64x160xf32>
    %59 = vector.extract_strided_slice %45 {offsets = [0, 2, 0], sizes = [8, 8, 230], strides = [1, 1, 1]} : vector<8x12x230xf32> to vector<8x8x230xf32>
    %60 = vector.shape_cast %59 : vector<8x8x230xf32> to vector<64x230xf32>
    %c2_30 = arith.constant 2 : index
    %c0_31 = arith.constant 0 : index
    %c0_32 = arith.constant 0 : index
    %61 = vector.load %arg4[%c2_30, %c0_31, %c0_32] : memref<5x230x160xf32, #tpu.memory_space<vmem>>, vector<1x230x160xf32>
    %62 = vector.shape_cast %61 : vector<1x230x160xf32> to vector<230x160xf32>
    %cst_33 = arith.constant dense<0.000000e+00> : vector<64x160xf32>
    %63 = tpu.matmul %60, %62, %cst_33 {dimension_numbers = #tpu.dot_dimension_numbers<[1], [0], [0], [1], [0, 0, 1, 1], [], []>} : vector<64x230xf32>, vector<230x160xf32>, vector<64x160xf32> -> vector<64x160xf32>
    %64 = arith.addf %58, %63 : vector<64x160xf32>
    %65 = vector.extract_strided_slice %45 {offsets = [0, 3, 0], sizes = [8, 8, 230], strides = [1, 1, 1]} : vector<8x12x230xf32> to vector<8x8x230xf32>
    %66 = vector.shape_cast %65 : vector<8x8x230xf32> to vector<64x230xf32>
    %c3_34 = arith.constant 3 : index
    %c0_35 = arith.constant 0 : index
    %c0_36 = arith.constant 0 : index
    %67 = vector.load %arg4[%c3_34, %c0_35, %c0_36] : memref<5x230x160xf32, #tpu.memory_space<vmem>>, vector<1x230x160xf32>
    %68 = vector.shape_cast %67 : vector<1x230x160xf32> to vector<230x160xf32>
    %cst_37 = arith.constant dense<0.000000e+00> : vector<64x160xf32>
    %69 = tpu.matmul %66, %68, %cst_37 {dimension_numbers = #tpu.dot_dimension_numbers<[1], [0], [0], [1], [0, 0, 1, 1], [], []>} : vector<64x230xf32>, vector<230x160xf32>, vector<64x160xf32> -> vector<64x160xf32>
    %70 = arith.addf %64, %69 : vector<64x160xf32>
    %71 = vector.extract_strided_slice %45 {offsets = [0, 4, 0], sizes = [8, 8, 230], strides = [1, 1, 1]} : vector<8x12x230xf32> to vector<8x8x230xf32>
    %72 = vector.shape_cast %71 : vector<8x8x230xf32> to vector<64x230xf32>
    %c4_38 = arith.constant 4 : index
    %c0_39 = arith.constant 0 : index
    %c0_40 = arith.constant 0 : index
    %73 = vector.load %arg4[%c4_38, %c0_39, %c0_40] : memref<5x230x160xf32, #tpu.memory_space<vmem>>, vector<1x230x160xf32>
    %74 = vector.shape_cast %73 : vector<1x230x160xf32> to vector<230x160xf32>
    %cst_41 = arith.constant dense<0.000000e+00> : vector<64x160xf32>
    %75 = tpu.matmul %72, %74, %cst_41 {dimension_numbers = #tpu.dot_dimension_numbers<[1], [0], [0], [1], [0, 0, 1, 1], [], []>} : vector<64x230xf32>, vector<230x160xf32>, vector<64x160xf32> -> vector<64x160xf32>
    %76 = arith.addf %70, %75 : vector<64x160xf32>
    %c0_42 = arith.constant 0 : index
    %c0_43 = arith.constant 0 : index
    %77 = vector.load %arg5[%c0_42, %c0_43] : memref<1x160xf32, #tpu.memory_space<vmem>>, vector<1x160xf32>
    %78 = vector.broadcast %77 : vector<1x160xf32> to vector<64x160xf32>
    %79 = arith.addf %76, %78 : vector<64x160xf32>
    %80 = vector.shape_cast %79 : vector<64x160xf32> to vector<8x4x2x160xf32>
    %81 = vector.extract_strided_slice %80 {offsets = [0, 0, 0, 0], sizes = [8, 4, 1, 160], strides = [1, 1, 1, 1]} : vector<8x4x2x160xf32> to vector<8x4x1x160xf32>
    %82 = vector.shape_cast %81 : vector<8x4x1x160xf32> to vector<8x4x160xf32>
    %83 = vector.extract_strided_slice %80 {offsets = [0, 0, 1, 0], sizes = [8, 4, 1, 160], strides = [1, 1, 1, 1]} : vector<8x4x2x160xf32> to vector<8x4x1x160xf32>
    %84 = vector.shape_cast %83 : vector<8x4x1x160xf32> to vector<8x4x160xf32>
    %85 = arith.maximumf %82, %84 : vector<8x4x160xf32>
    %86 = vector.extract_strided_slice %85 {offsets = [0, 0, 0], sizes = [8, 4, 140], strides = [1, 1, 1]} : vector<8x4x160xf32> to vector<8x4x140xf32>
    %87 = vector.extract_strided_slice %85 {offsets = [0, 0, 20], sizes = [8, 4, 140], strides = [1, 1, 1]} : vector<8x4x160xf32> to vector<8x4x140xf32>
    %88 = arith.maximumf %86, %87 : vector<8x4x140xf32>
    %cst_44 = arith.constant 0.000000e+00 : f32
    %89 = vector.broadcast %cst_44 : f32 to vector<8x4x140xf32>
    %90 = arith.maximumf %88, %89 : vector<8x4x140xf32>
    %cst_45 = arith.constant 0.000000e+00 : f32
    %91 = vector.broadcast %cst_45 : f32 to vector<8x50xf32>
    %92 = vector.extract_strided_slice %90 {offsets = [0, 0, 0], sizes = [8, 1, 140], strides = [1, 1, 1]} : vector<8x4x140xf32> to vector<8x1x140xf32>
    %93 = vector.shape_cast %92 : vector<8x1x140xf32> to vector<8x140xf32>
    %c0_46 = arith.constant 0 : index
    %c0_47 = arith.constant 0 : index
    %c0_48 = arith.constant 0 : index
    %94 = vector.load %arg6[%c0_46, %c0_47, %c0_48] : memref<4x140x50xf32, #tpu.memory_space<vmem>>, vector<1x140x50xf32>
    %95 = vector.shape_cast %94 : vector<1x140x50xf32> to vector<140x50xf32>
    %cst_49 = arith.constant dense<0.000000e+00> : vector<8x50xf32>
    %96 = tpu.matmul %93, %95, %cst_49 {dimension_numbers = #tpu.dot_dimension_numbers<[1], [0], [0], [1], [0, 0, 1, 1], [], []>} : vector<8x140xf32>, vector<140x50xf32>, vector<8x50xf32> -> vector<8x50xf32>
    %97 = arith.addf %91, %96 : vector<8x50xf32>
    %98 = vector.extract_strided_slice %90 {offsets = [0, 1, 0], sizes = [8, 1, 140], strides = [1, 1, 1]} : vector<8x4x140xf32> to vector<8x1x140xf32>
    %99 = vector.shape_cast %98 : vector<8x1x140xf32> to vector<8x140xf32>
    %c1_50 = arith.constant 1 : index
    %c0_51 = arith.constant 0 : index
    %c0_52 = arith.constant 0 : index
    %100 = vector.load %arg6[%c1_50, %c0_51, %c0_52] : memref<4x140x50xf32, #tpu.memory_space<vmem>>, vector<1x140x50xf32>
    %101 = vector.shape_cast %100 : vector<1x140x50xf32> to vector<140x50xf32>
    %cst_53 = arith.constant dense<0.000000e+00> : vector<8x50xf32>
    %102 = tpu.matmul %99, %101, %cst_53 {dimension_numbers = #tpu.dot_dimension_numbers<[1], [0], [0], [1], [0, 0, 1, 1], [], []>} : vector<8x140xf32>, vector<140x50xf32>, vector<8x50xf32> -> vector<8x50xf32>
    %103 = arith.addf %97, %102 : vector<8x50xf32>
    %104 = vector.extract_strided_slice %90 {offsets = [0, 2, 0], sizes = [8, 1, 140], strides = [1, 1, 1]} : vector<8x4x140xf32> to vector<8x1x140xf32>
    %105 = vector.shape_cast %104 : vector<8x1x140xf32> to vector<8x140xf32>
    %c2_54 = arith.constant 2 : index
    %c0_55 = arith.constant 0 : index
    %c0_56 = arith.constant 0 : index
    %106 = vector.load %arg6[%c2_54, %c0_55, %c0_56] : memref<4x140x50xf32, #tpu.memory_space<vmem>>, vector<1x140x50xf32>
    %107 = vector.shape_cast %106 : vector<1x140x50xf32> to vector<140x50xf32>
    %cst_57 = arith.constant dense<0.000000e+00> : vector<8x50xf32>
    %108 = tpu.matmul %105, %107, %cst_57 {dimension_numbers = #tpu.dot_dimension_numbers<[1], [0], [0], [1], [0, 0, 1, 1], [], []>} : vector<8x140xf32>, vector<140x50xf32>, vector<8x50xf32> -> vector<8x50xf32>
    %109 = arith.addf %103, %108 : vector<8x50xf32>
    %110 = vector.extract_strided_slice %90 {offsets = [0, 3, 0], sizes = [8, 1, 140], strides = [1, 1, 1]} : vector<8x4x140xf32> to vector<8x1x140xf32>
    %111 = vector.shape_cast %110 : vector<8x1x140xf32> to vector<8x140xf32>
    %c3_58 = arith.constant 3 : index
    %c0_59 = arith.constant 0 : index
    %c0_60 = arith.constant 0 : index
    %112 = vector.load %arg6[%c3_58, %c0_59, %c0_60] : memref<4x140x50xf32, #tpu.memory_space<vmem>>, vector<1x140x50xf32>
    %113 = vector.shape_cast %112 : vector<1x140x50xf32> to vector<140x50xf32>
    %cst_61 = arith.constant dense<0.000000e+00> : vector<8x50xf32>
    %114 = tpu.matmul %111, %113, %cst_61 {dimension_numbers = #tpu.dot_dimension_numbers<[1], [0], [0], [1], [0, 0, 1, 1], [], []>} : vector<8x140xf32>, vector<140x50xf32>, vector<8x50xf32> -> vector<8x50xf32>
    %115 = arith.addf %109, %114 : vector<8x50xf32>
    %c0_62 = arith.constant 0 : index
    %c0_63 = arith.constant 0 : index
    %116 = vector.load %arg7[%c0_62, %c0_63] : memref<1x50xf32, #tpu.memory_space<vmem>>, vector<1x50xf32>
    %117 = vector.broadcast %116 : vector<1x50xf32> to vector<8x50xf32>
    %118 = arith.addf %115, %117 : vector<8x50xf32>
    %cst_64 = arith.constant 0.000000e+00 : f32
    %119 = vector.broadcast %cst_64 : f32 to vector<8x50xf32>
    %120 = arith.maximumf %118, %119 : vector<8x50xf32>
    %c0_65 = arith.constant 0 : index
    %c0_66 = arith.constant 0 : index
    %121 = vector.load %arg8[%c0_65, %c0_66] : memref<50x10xf32, #tpu.memory_space<vmem>>, vector<50x10xf32>
    %cst_67 = arith.constant dense<0.000000e+00> : vector<8x10xf32>
    %122 = tpu.matmul %120, %121, %cst_67 {dimension_numbers = #tpu.dot_dimension_numbers<[1], [0], [0], [1], [0, 0, 1, 1], [], []>} : vector<8x50xf32>, vector<50x10xf32>, vector<8x10xf32> -> vector<8x10xf32>
    %c0_68 = arith.constant 0 : index
    %c0_69 = arith.constant 0 : index
    %123 = vector.load %arg9[%c0_68, %c0_69] : memref<1x10xf32, #tpu.memory_space<vmem>>, vector<1x10xf32>
    %124 = vector.broadcast %123 : vector<1x10xf32> to vector<8x10xf32>
    %125 = arith.addf %122, %124 : vector<8x10xf32>
    %cst_70 = arith.constant dense<0xFF800000> : vector<8xf32>
    %126 = vector.multi_reduction <maximumf>, %125, %cst_70 [1] : vector<8x10xf32> to vector<8xf32>
    %127 = vector.shape_cast %126 : vector<8xf32> to vector<8x1xf32>
    %128 = vector.broadcast %127 : vector<8x1xf32> to vector<8x10xf32>
    %129 = arith.subf %125, %128 : vector<8x10xf32>
    %130 = math.exp %129 : vector<8x10xf32>
    %cst_71 = arith.constant dense<0.000000e+00> : vector<8xf32>
    %131 = vector.multi_reduction <add>, %130, %cst_71 [1] : vector<8x10xf32> to vector<8xf32>
    %132 = vector.shape_cast %131 : vector<8xf32> to vector<8x1xf32>
    %133 = math.log %132 : vector<8x1xf32>
    %134 = vector.broadcast %133 : vector<8x1xf32> to vector<8x10xf32>
    %135 = arith.subf %129, %134 : vector<8x10xf32>
    %c0_72 = arith.constant 0 : index
    %c0_73 = arith.constant 0 : index
    %136 = vector.load %arg10[%c0_72, %c0_73] : memref<8x10xf32, #tpu.memory_space<vmem>>, vector<8x10xf32>
    tpu.vector_store %arg10[%c0_72, %c0_73], %135 {strides = array<i32>} : memref<8x10xf32, #tpu.memory_space<vmem>>, vector<8x10xf32>,
    return
  }
  func.func @transform_0(%arg0: i32) -> (i32, i32, i32) {
    %c0_i32 = arith.constant 0 : i32
    %c0_i32_0 = arith.constant 0 : i32
    %c0_i32_1 = arith.constant 0 : i32
    return %arg0, %c0_i32, %c0_i32_0 : i32, i32, i32
  }
  func.func @transform_1(%arg0: i32) -> (i32, i32, i32) {
    %c0_i32 = arith.constant 0 : i32
    %c0_i32_0 = arith.constant 0 : i32
    %c0_i32_1 = arith.constant 0 : i32
    %c0_i32_2 = arith.constant 0 : i32
    return %c0_i32, %c0_i32_0, %c0_i32_1 : i32, i32, i32
  }
  func.func @transform_2(%arg0: i32) -> (i32, i32) {
    %c0_i32 = arith.constant 0 : i32
    %c0_i32_0 = arith.constant 0 : i32
    %c0_i32_1 = arith.constant 0 : i32
    return %c0_i32, %c0_i32_0 : i32, i32
  }
  func.func @transform_3(%arg0: i32) -> (i32, i32, i32) {
    %c0_i32 = arith.constant 0 : i32
    %c0_i32_0 = arith.constant 0 : i32
    %c0_i32_1 = arith.constant 0 : i32
    %c0_i32_2 = arith.constant 0 : i32
    return %c0_i32, %c0_i32_0, %c0_i32_1 : i32, i32, i32
  }
  func.func @transform_4(%arg0: i32) -> (i32, i32) {
    %c0_i32 = arith.constant 0 : i32
    %c0_i32_0 = arith.constant 0 : i32
    %c0_i32_1 = arith.constant 0 : i32
    return %c0_i32, %c0_i32_0 : i32, i32
  }
  func.func @transform_5(%arg0: i32) -> (i32, i32, i32) {
    %c0_i32 = arith.constant 0 : i32
    %c0_i32_0 = arith.constant 0 : i32
    %c0_i32_1 = arith.constant 0 : i32
    %c0_i32_2 = arith.constant 0 : i32
    return %c0_i32, %c0_i32_0, %c0_i32_1 : i32, i32, i32
  }
  func.func @transform_6(%arg0: i32) -> (i32, i32) {
    %c0_i32 = arith.constant 0 : i32
    %c0_i32_0 = arith.constant 0 : i32
    %c0_i32_1 = arith.constant 0 : i32
    return %c0_i32, %c0_i32_0 : i32, i32
  }
  func.func @transform_7(%arg0: i32) -> (i32, i32) {
    %c0_i32 = arith.constant 0 : i32
    %c0_i32_0 = arith.constant 0 : i32
    %c0_i32_1 = arith.constant 0 : i32
    return %c0_i32, %c0_i32_0 : i32, i32
  }
  func.func @transform_8(%arg0: i32) -> (i32, i32) {
    %c0_i32 = arith.constant 0 : i32
    %c0_i32_0 = arith.constant 0 : i32
    %c0_i32_1 = arith.constant 0 : i32
    return %c0_i32, %c0_i32_0 : i32, i32
  }
  func.func @transform_9(%arg0: i32) -> (i32, i32) {
    %c0_i32 = arith.constant 0 : i32
    %c0_i32_0 = arith.constant 0 : i32
    return %arg0, %c0_i32 : i32, i32
  }
}

</mosaic_0001>

<llo_original>
// kernel: fashion_forward.1
$region0: #{fashion_forward.1}
  #allocation0 [shape = 'u32[]', space=smem, size = 0x4, offset = 0x4, fixed_abs, tag = 'smem constant byte address 0x4 - core index']
  #allocation1 [shape = 'u32[144,128]{1,0:T(1,128)}', space=vmem, size = 0x12000, scoped, tag = 'internal scratch']
  %s0 = inlined_call_operand.vmem [shape: f32[8,28,28], index: 0, kind: input, shape index: {}]
  %s1 = inlined_call_operand.vmem [shape: f32[5,28,240], index: 1, kind: input, shape index: {}]
  %s2 = inlined_call_operand.vmem [shape: f32[1,240], index: 2, kind: input, shape index: {}]
  %s3 = inlined_call_operand.vmem [shape: f32[5,230,160], index: 3, kind: input, shape index: {}]
  %s4 = inlined_call_operand.vmem [shape: f32[1,160], index: 4, kind: input, shape index: {}]
  %s5 = inlined_call_operand.vmem [shape: f32[4,140,50], index: 5, kind: input, shape index: {}]
  %s6 = inlined_call_operand.vmem [shape: f32[1,50], index: 6, kind: input, shape index: {}]
  %s7 = inlined_call_operand.vmem [shape: f32[50,10], index: 7, kind: input, shape index: {}]
  %s8 = inlined_call_operand.vmem [shape: f32[1,10], index: 8, kind: input, shape index: {}]
  %s9 = inlined_call_operand.vmem [shape: f32[8,10], index: 9, kind: output, shape index: {}]
  %s10 = sld [smem:[#allocation0]]
  $region46: #{fashion_forward.1} parent=0
    _
  %s12 = ssub.s32 1, %s10
  %s13 = scalar_select 0, %s12, %s10
  // Predicated region
  $region2: #{fashion_forward.1} parent=0 // pred_check
    _
  $region3: #{fashion_forward.1} parent=0 // pred_check_branch
    %15 = sbr.rel (0) target = $region5
  $region4: #{fashion_forward.1} parent=0 // pred_region
    _
  $region5: #{fashion_forward.1} parent=0 // pred_fallthru
    _
  // Predicated region
  $region6: #{fashion_forward.1} parent=0 // pred_check
    _
  $region7: #{fashion_forward.1} parent=0 // pred_check_branch
    %17 = sbr.rel (0) target = $region9
  $region8: #{fashion_forward.1} parent=0 // pred_region
    _
  $region9: #{fashion_forward.1} parent=0 // pred_fallthru
    _
  // Predicated region
  $region10: #{fashion_forward.1} parent=0 // pred_check
    _
  $region11: #{fashion_forward.1} parent=0 // pred_check_branch
    %19 = sbr.rel (0) target = $region13
  $region12: #{fashion_forward.1} parent=0 // pred_region
    _
  $region13: #{fashion_forward.1} parent=0 // pred_fallthru
    _
  // Predicated region
  $region14: #{fashion_forward.1} parent=0 // pred_check
    _
  $region15: #{fashion_forward.1} parent=0 // pred_check_branch
    %21 = sbr.rel (0) target = $region17
  $region16: #{fashion_forward.1} parent=0 // pred_region
    _
  $region17: #{fashion_forward.1} parent=0 // pred_fallthru
    _
  // Predicated region
  $region18: #{fashion_forward.1} parent=0 // pred_check
    _
  $region19: #{fashion_forward.1} parent=0 // pred_check_branch
    %23 = sbr.rel (0) target = $region21
  $region20: #{fashion_forward.1} parent=0 // pred_region
    _
  $region21: #{fashion_forward.1} parent=0 // pred_fallthru
    _
  // Predicated region
  $region22: #{fashion_forward.1} parent=0 // pred_check
    _
  $region23: #{fashion_forward.1} parent=0 // pred_check_branch
    %25 = sbr.rel (0) target = $region25
  $region24: #{fashion_forward.1} parent=0 // pred_region
    _
  $region25: #{fashion_forward.1} parent=0 // pred_fallthru
    _
  // Predicated region
  $region26: #{fashion_forward.1} parent=0 // pred_check
    _
  $region27: #{fashion_forward.1} parent=0 // pred_check_branch
    %27 = sbr.rel (0) target = $region29
  $region28: #{fashion_forward.1} parent=0 // pred_region
    _
  $region29: #{fashion_forward.1} parent=0 // pred_fallthru
    _
  // Predicated region
  $region30: #{fashion_forward.1} parent=0 // pred_check
    _
  $region31: #{fashion_forward.1} parent=0 // pred_check_branch
    %29 = sbr.rel (0) target = $region33
  $region32: #{fashion_forward.1} parent=0 // pred_region
    _
  $region33: #{fashion_forward.1} parent=0 // pred_fallthru
    _
  // Predicated region
  $region34: #{fashion_forward.1} parent=0 // pred_check
    _
  $region35: #{fashion_forward.1} parent=0 // pred_check_branch
    %31 = sbr.rel (0) target = $region37
  $region36: #{fashion_forward.1} parent=0 // pred_region
    _
  $region37: #{fashion_forward.1} parent=0 // pred_fallthru
    _
  %v32 = vld [vmem:[%s0] sm:$0xff]
  %v33 = vld [vmem:[%s0 + $0x8] sm:$0xff]
  %v34 = vld [vmem:[%s0 + $0x10] sm:$0xff]
  %v35 = vld [vmem:[%s0 + $0x18] sm:$0xf]
  %v36 = vld [vmem:[%s0 + $0x20] sm:$0xff]
  %v37 = vld [vmem:[%s0 + $0x28] sm:$0xff]
  %v38 = vld [vmem:[%s0 + $0x30] sm:$0xff]
  %v39 = vld [vmem:[%s0 + $0x38] sm:$0xf]
  %v40 = vld [vmem:[%s0 + $0x40] sm:$0xff]
  %v41 = vld [vmem:[%s0 + $0x48] sm:$0xff]
  %v42 = vld [vmem:[%s0 + $0x50] sm:$0xff]
  %v43 = vld [vmem:[%s0 + $0x58] sm:$0xf]
  %v44 = vld [vmem:[%s0 + $0x60] sm:$0xff]
  %v45 = vld [vmem:[%s0 + $0x68] sm:$0xff]
  %v46 = vld [vmem:[%s0 + $0x70] sm:$0xff]
  %v47 = vld [vmem:[%s0 + $0x78] sm:$0xf]
  %v48 = vld [vmem:[%s0 + $0x80] sm:$0xff]
  %v49 = vld [vmem:[%s0 + $0x88] sm:$0xff]
  %v50 = vld [vmem:[%s0 + $0x90] sm:$0xff]
  %v51 = vld [vmem:[%s0 + $0x98] sm:$0xf]
  %v52 = vld [vmem:[%s0 + $0xa0] sm:$0xff]
  %v53 = vld [vmem:[%s0 + $0xa8] sm:$0xff]
  %v54 = vld [vmem:[%s0 + $0xb0] sm:$0xff]
  %v55 = vld [vmem:[%s0 + $0xb8] sm:$0xf]
  %v56 = vld [vmem:[%s0 + $0xc0] sm:$0xff]
  %v57 = vld [vmem:[%s0 + $0xc8] sm:$0xff]
  %v58 = vld [vmem:[%s0 + $0xd0] sm:$0xff]
  %v59 = vld [vmem:[%s0 + $0xd8] sm:$0xf]
  %v60 = vld [vmem:[%s0 + $0xe0] sm:$0xff]
  %v61 = vld [vmem:[%s0 + $0xe8] sm:$0xff]
  %v62 = vld [vmem:[%s0 + $0xf0] sm:$0xff]
  %v63 = vld [vmem:[%s0 + $0xf8] sm:$0xf]
  %v64 = vld [vmem:[%s1] sm:$0xff]
  %v65 = vld [vmem:[%s1 + $0x8] sm:$0xff]
  %v66 = vld [vmem:[%s1 + $0x10] sm:$0xff]
  %v67 = vld [vmem:[%s1 + $0x18] sm:$0xff]
  %v68 = vld [vmem:[%s1 + $0x20] sm:$0xff]
  %v69 = vld [vmem:[%s1 + $0x28] sm:$0xff]
  %v70 = vld [vmem:[%s1 + $0x30] sm:$0xf]
  %v71 = vld [vmem:[%s1 + $0x38] sm:$0xf]
  %vm104 = vcmask 1046528
  %v105 = vrot.slane %v32, 1
  %v106 = vrot.slane %v33, 1
  %v107 = vsel %vm104, %v105, %v106
  %v108 = vrot.slane %v34, 1
  %v109 = vsel %vm104, %v106, %v108
  %v110 = vrot.slane %v35, 1
  %v111 = vsel %vm104, %v108, %v110
  %v112 = vrot.slane %v36, 1
  %v113 = vrot.slane %v37, 1
  %v114 = vsel %vm104, %v112, %v113
  %v115 = vrot.slane %v38, 1
  %v116 = vsel %vm104, %v113, %v115
  %v117 = vrot.slane %v39, 1
  %v118 = vsel %vm104, %v115, %v117
  %v119 = vrot.slane %v40, 1
  %v120 = vrot.slane %v41, 1
  %v121 = vsel %vm104, %v119, %v120
  %v122 = vrot.slane %v42, 1
  %v123 = vsel %vm104, %v120, %v122
  %v124 = vrot.slane %v43, 1
  %v125 = vsel %vm104, %v122, %v124
  %v126 = vrot.slane %v44, 1
  %v127 = vrot.slane %v45, 1
  %v128 = vsel %vm104, %v126, %v127
  %v129 = vrot.slane %v46, 1
  %v130 = vsel %vm104, %v127, %v129
  %v131 = vrot.slane %v47, 1
  %v132 = vsel %vm104, %v129, %v131
  %v133 = vrot.slane %v48, 1
  %v134 = vrot.slane %v49, 1
  %v135 = vsel %vm104, %v133, %v134
  %v136 = vrot.slane %v50, 1
  %v137 = vsel %vm104, %v134, %v136
  %v138 = vrot.slane %v51, 1
  %v139 = vsel %vm104, %v136, %v138
  %v140 = vrot.slane %v52, 1
  %v141 = vrot.slane %v53, 1
  %v142 = vsel %vm104, %v140, %v141
  %v143 = vrot.slane %v54, 1
  %v144 = vsel %vm104, %v141, %v143
  %v145 = vrot.slane %v55, 1
  %v146 = vsel %vm104, %v143, %v145
  %v147 = vrot.slane %v56, 1
  %v148 = vrot.slane %v57, 1
  %v149 = vsel %vm104, %v147, %v148
  %v150 = vrot.slane %v58, 1
  %v151 = vsel %vm104, %v148, %v150
  %v152 = vrot.slane %v59, 1
  %v153 = vsel %vm104, %v150, %v152
  %v154 = vrot.slane %v60, 1
  %v155 = vrot.slane %v61, 1
  %v156 = vsel %vm104, %v154, %v155
  %v157 = vrot.slane %v62, 1
  %v158 = vsel %vm104, %v155, %v157
  %v159 = vrot.slane %v63, 1
  %v160 = vsel %vm104, %v157, %v159
  %s161 = scalar_lea.vmem %s1, 64
  %v162 = vld [vmem:[%s161] sm:$0xff]
  %v163 = vld [vmem:[%s161 + $0x8] sm:$0xff]
  %v164 = vld [vmem:[%s161 + $0x10] sm:$0xff]
  %v165 = vld [vmem:[%s161 + $0x18] sm:$0xff]
  %v166 = vld [vmem:[%s161 + $0x20] sm:$0xff]
  %v167 = vld [vmem:[%s161 + $0x28] sm:$0xff]
  %v168 = vld [vmem:[%s161 + $0x30] sm:$0xf]
  %v169 = vld [vmem:[%s161 + $0x38] sm:$0xf]
  %vm170 = vcmask 228352
  %v171 = vsel %vm170, %v107, 0
  %v173 = vsel %vm170, %v109, 0
  %v175 = vsel %vm170, %v111, 0
  %v177 = vsel %vm170, %v114, 0
  %v179 = vsel %vm170, %v116, 0
  %v181 = vsel %vm170, %v118, 0
  %v183 = vsel %vm170, %v121, 0
  %v185 = vsel %vm170, %v123, 0
  %v187 = vsel %vm170, %v125, 0
  %v189 = vsel %vm170, %v128, 0
  %v191 = vsel %vm170, %v130, 0
  %v193 = vsel %vm170, %v132, 0
  %v195 = vsel %vm170, %v135, 0
  %v197 = vsel %vm170, %v137, 0
  %v199 = vsel %vm170, %v139, 0
  %v201 = vsel %vm170, %v142, 0
  %v203 = vsel %vm170, %v144, 0
  %v205 = vsel %vm170, %v146, 0
  %v207 = vsel %vm170, %v149, 0
  %v209 = vsel %vm170, %v151, 0
  %v211 = vsel %vm170, %v153, 0
  %v213 = vsel %vm170, %v156, 0
  %v215 = vsel %vm170, %v158, 0
  %v217 = vsel %vm170, %v160, 0
  %vm219 = vcmask 1043456
  %v221 = vsel %vm219, %v168, 0
  %v224 = vsel %vm219, %v169, 0
  %226 = vmatprep.subr.mxu0 0.0
  %227 = vmatpush1.msra.mxu0 0.0
  %228 = vmatprep.subr.mxu0 0.0
  %229 = vmatpush1.msra.mxu0 0.0
  %230 = vmatprep.subr.mxu0 0.0
  %231 = vmatpush1.msra.mxu0 0.0
  %232 = vmatprep.subr.mxu0 0.0
  %233 = vmatpush1.msra.mxu0 0.0
  %234 = vmatprep.subr.mxu0 0.0
  %235 = vmatpush1.msra.mxu0 0.0
  %236 = vmatprep.subr.mxu0 0.0
  %237 = vmatpush1.msra.mxu0 0.0
  %238 = vmatprep.subr.mxu0 0.0
  %239 = vmatpush1.msra.mxu0 0.0
  %240 = vmatprep.subr.mxu0 0.0
  %241 = vmatpush1.msra.mxu0 0.0
  %242 = vmatprep.subr.mxu0 0.0
  %243 = vmatpush1.msra.mxu0 0.0
  %244 = vmatprep.subr.mxu0 0.0
  %245 = vmatpush1.msra.mxu0 0.0
  %246 = vmatprep.subr.mxu0 0.0
  %247 = vmatpush1.msra.mxu0 0.0
  %248 = vmatprep.subr.mxu0 0.0
  %249 = vmatpush1.msra.mxu0 0.0
  %250 = vmatprep.subr.mxu0 %v224
  %251 = vmatpush1.msra.mxu0 %v221
  %252 = vmatprep.subr.mxu0 %v167
  %253 = vmatpush1.msra.mxu0 %v166
  %254 = vmatprep.subr.mxu0 %v165
  %255 = vmatpush1.msra.mxu0 %v164
  %256 = vmatprep.subr.mxu0 %v163
  %257 = vmatpush1.msra.mxu0 %v162
  %258 = vmatprep.subr.mxu0 0.0
  %259 = vmatpush2.msra.mxu0 0.0
  %260 = vmatprep.subr.mxu0 0.0
  %261 = vmatpush2.msra.mxu0 0.0
  %262 = vmatprep.subr.mxu0 0.0
  %263 = vmatpush2.msra.mxu0 0.0
  %264 = vmatprep.subr.mxu0 0.0
  %265 = vmatpush2.msra.mxu0 0.0
  %266 = vmatprep.subr.mxu0 0.0
  %267 = vmatpush2.msra.mxu0 0.0
  %268 = vmatprep.subr.mxu0 0.0
  %269 = vmatpush2.msra.mxu0 0.0
  %270 = vmatprep.subr.mxu0 0.0
  %271 = vmatpush2.msra.mxu0 0.0
  %272 = vmatprep.subr.mxu0 0.0
  %273 = vmatpush2.msra.mxu0 0.0
  %274 = vmatprep.subr.mxu0 0.0
  %275 = vmatpush2.msra.mxu0 0.0
  %276 = vmatprep.subr.mxu0 0.0
  %277 = vmatpush2.msra.mxu0 0.0
  %278 = vmatprep.subr.mxu0 0.0
  %279 = vmatpush2.msra.mxu0 0.0
  %280 = vmatprep.subr.mxu0 0.0
  %281 = vmatpush2.msra.mxu0 0.0
  %282 = vmatprep.subr.mxu0 0.0
  %283 = vmatpush2.msra.mxu0 0.0
  %284 = vmatprep.subr.mxu0 0.0
  %285 = vmatpush2.msra.mxu0 0.0
  %286 = vmatprep.subr.mxu0 0.0
  %287 = vmatpush2.msra.mxu0 0.0
  %288 = vmatprep.subr.mxu0 0.0
  %289 = vmatpush2.msra.mxu0 0.0
  %290 = vmatprep.mubr.f32.mxu0 0.0
  %291 = vmatmul.mubr.f32.gmra.mxu0 %v171
  %v292 = vpop.f32.mrf.mxu0
  %v293 = vadd.f32 0.0, %v292
  %v294 = vpop.f32.mrf.mxu0
  %v295 = vadd.f32 0.0, %v294
  %296 = vmatprep.mubr.f32.mxu0 0.0
  %297 = vmatmul.mubr.f32.gmra.mxu0 %v173
  %v298 = vpop.f32.mrf.mxu0
  %v299 = vadd.f32 0.0, %v298
  %v300 = vpop.f32.mrf.mxu0
  %v301 = vadd.f32 0.0, %v300
  %302 = vmatprep.mubr.f32.mxu0 0.0
  %303 = vmatmul.mubr.f32.gmra.mxu0 %v175
  %v304 = vpop.f32.mrf.mxu0
  %v305 = vadd.f32 0.0, %v304
  %v306 = vpop.f32.mrf.mxu0
  %v307 = vadd.f32 0.0, %v306
  %308 = vmatprep.mubr.f32.mxu0 0.0
  %309 = vmatmul.mubr.f32.gmra.mxu0 %v177
  %v310 = vpop.f32.mrf.mxu0
  %v311 = vadd.f32 0.0, %v310
  %v312 = vpop.f32.mrf.mxu0
  %v313 = vadd.f32 0.0, %v312
  %314 = vmatprep.mubr.f32.mxu0 0.0
  %315 = vmatmul.mubr.f32.gmra.mxu0 %v179
  %v316 = vpop.f32.mrf.mxu0
  %v317 = vadd.f32 0.0, %v316
  %v318 = vpop.f32.mrf.mxu0
  %v319 = vadd.f32 0.0, %v318
  %320 = vmatprep.mubr.f32.mxu0 0.0
  %321 = vmatmul.mubr.f32.gmra.mxu0 %v181
  %v322 = vpop.f32.mrf.mxu0
  %v323 = vadd.f32 0.0, %v322
  %v324 = vpop.f32.mrf.mxu0
  %v325 = vadd.f32 0.0, %v324
  %326 = vmatprep.mubr.f32.mxu0 0.0
  %327 = vmatmul.mubr.f32.gmra.mxu0 %v183
  %v328 = vpop.f32.mrf.mxu0
  %v329 = vadd.f32 0.0, %v328
  %v330 = vpop.f32.mrf.mxu0
  %v331 = vadd.f32 0.0, %v330
  %332 = vmatprep.mubr.f32.mxu0 0.0
  %333 = vmatmul.mubr.f32.gmra.mxu0 %v185
  %v334 = vpop.f32.mrf.mxu0
  %v335 = vadd.f32 0.0, %v334
  %v336 = vpop.f32.mrf.mxu0
  %v337 = vadd.f32 0.0, %v336
  %338 = vmatprep.mubr.f32.mxu0 0.0
  %339 = vmatmul.mubr.f32.gmra.mxu0 %v187
  %v340 = vpop.f32.mrf.mxu0
  %v341 = vadd.f32 0.0, %v340
  %v342 = vpop.f32.mrf.mxu0
  %v343 = vadd.f32 0.0, %v342
  %344 = vmatprep.mubr.f32.mxu0 0.0
  %345 = vmatmul.mubr.f32.gmra.mxu0 %v189
  %v346 = vpop.f32.mrf.mxu0
  %v347 = vadd.f32 0.0, %v346
  %v348 = vpop.f32.mrf.mxu0
  %v349 = vadd.f32 0.0, %v348
  %350 = vmatprep.mubr.f32.mxu0 0.0
  %351 = vmatmul.mubr.f32.gmra.mxu0 %v191
  %v352 = vpop.f32.mrf.mxu0
  %v353 = vadd.f32 0.0, %v352
  %v354 = vpop.f32.mrf.mxu0
  %v355 = vadd.f32 0.0, %v354
  %356 = vmatprep.mubr.f32.mxu0 0.0
  %357 = vmatmul.mubr.f32.gmra.mxu0 %v193
  %v358 = vpop.f32.mrf.mxu0
  %v359 = vadd.f32 0.0, %v358
  %v360 = vpop.f32.mrf.mxu0
  %v361 = vadd.f32 0.0, %v360
  %362 = vmatprep.mubr.f32.mxu0 0.0
  %363 = vmatmul.mubr.f32.gmra.mxu0 %v195
  %v364 = vpop.f32.mrf.mxu0
  %v365 = vadd.f32 0.0, %v364
  %v366 = vpop.f32.mrf.mxu0
  %v367 = vadd.f32 0.0, %v366
  %368 = vmatprep.mubr.f32.mxu0 0.0
  %369 = vmatmul.mubr.f32.gmra.mxu0 %v197
  %v370 = vpop.f32.mrf.mxu0
  %v371 = vadd.f32 0.0, %v370
  %v372 = vpop.f32.mrf.mxu0
  %v373 = vadd.f32 0.0, %v372
  %374 = vmatprep.mubr.f32.mxu0 0.0
  %375 = vmatmul.mubr.f32.gmra.mxu0 %v199
  %v376 = vpop.f32.mrf.mxu0
  %v377 = vadd.f32 0.0, %v376
  %v378 = vpop.f32.mrf.mxu0
  %v379 = vadd.f32 0.0, %v378
  %380 = vmatprep.mubr.f32.mxu0 0.0
  %381 = vmatmul.mubr.f32.gmra.mxu0 %v201
  %v382 = vpop.f32.mrf.mxu0
  %v383 = vadd.f32 0.0, %v382
  %v384 = vpop.f32.mrf.mxu0
  %v385 = vadd.f32 0.0, %v384
  %386 = vmatprep.mubr.f32.mxu0 0.0
  %387 = vmatmul.mubr.f32.gmra.mxu0 %v203
  %v388 = vpop.f32.mrf.mxu0
  %v389 = vadd.f32 0.0, %v388
  %v390 = vpop.f32.mrf.mxu0
  %v391 = vadd.f32 0.0, %v390
  %392 = vmatprep.mubr.f32.mxu0 0.0
  %393 = vmatmul.mubr.f32.gmra.mxu0 %v205
  %v394 = vpop.f32.mrf.mxu0
  %v395 = vadd.f32 0.0, %v394
  %v396 = vpop.f32.mrf.mxu0
  %v397 = vadd.f32 0.0, %v396
  %398 = vmatprep.mubr.f32.mxu0 0.0
  %399 = vmatmul.mubr.f32.gmra.mxu0 %v207
  %v400 = vpop.f32.mrf.mxu0
  %v401 = vadd.f32 0.0, %v400
  %v402 = vpop.f32.mrf.mxu0
  %v403 = vadd.f32 0.0, %v402
  %404 = vmatprep.mubr.f32.mxu0 0.0
  %405 = vmatmul.mubr.f32.gmra.mxu0 %v209
  %v406 = vpop.f32.mrf.mxu0
  %v407 = vadd.f32 0.0, %v406
  %v408 = vpop.f32.mrf.mxu0
  %v409 = vadd.f32 0.0, %v408
  %410 = vmatprep.mubr.f32.mxu0 0.0
  %411 = vmatmul.mubr.f32.gmra.mxu0 %v211
  %v412 = vpop.f32.mrf.mxu0
  %v413 = vadd.f32 0.0, %v412
  %v414 = vpop.f32.mrf.mxu0
  %v415 = vadd.f32 0.0, %v414
  %416 = vmatprep.mubr.f32.mxu0 0.0
  %417 = vmatmul.mubr.f32.gmra.mxu0 %v213
  %v418 = vpop.f32.mrf.mxu0
  %v419 = vadd.f32 0.0, %v418
  %v420 = vpop.f32.mrf.mxu0
  %v421 = vadd.f32 0.0, %v420
  %422 = vmatprep.mubr.f32.mxu0 0.0
  %423 = vmatmul.mubr.f32.gmra.mxu0 %v215
  %v424 = vpop.f32.mrf.mxu0
  %v425 = vadd.f32 0.0, %v424
  %v426 = vpop.f32.mrf.mxu0
  %v427 = vadd.f32 0.0, %v426
  %428 = vmatprep.mubr.f32.mxu0 0.0
  %429 = vmatmul.mubr.f32.gmra.mxu0 %v217
  %v430 = vpop.f32.mrf.mxu0
  %v431 = vadd.f32 0.0, %v430
  %v432 = vpop.f32.mrf.mxu0
  %v433 = vadd.f32 0.0, %v432
  %434 = vdwg.mxu0
  %v435 = vsel %vm170, %v32, 0
  %v437 = vsel %vm170, %v33, 0
  %v439 = vsel %vm170, %v34, 0
  %v441 = vsel %vm170, %v36, 0
  %v443 = vsel %vm170, %v37, 0
  %v445 = vsel %vm170, %v38, 0
  %v447 = vsel %vm170, %v40, 0
  %v449 = vsel %vm170, %v41, 0
  %v451 = vsel %vm170, %v42, 0
  %v453 = vsel %vm170, %v44, 0
  %v455 = vsel %vm170, %v45, 0
  %v457 = vsel %vm170, %v46, 0
  %v459 = vsel %vm170, %v48, 0
  %v461 = vsel %vm170, %v49, 0
  %v463 = vsel %vm170, %v50, 0
  %v465 = vsel %vm170, %v52, 0
  %v467 = vsel %vm170, %v53, 0
  %v469 = vsel %vm170, %v54, 0
  %v471 = vsel %vm170, %v56, 0
  %v473 = vsel %vm170, %v57, 0
  %v475 = vsel %vm170, %v58, 0
  %v477 = vsel %vm170, %v60, 0
  %v479 = vsel %vm170, %v61, 0
  %v481 = vsel %vm170, %v62, 0
  %v484 = vsel %vm219, %v70, 0
  %v487 = vsel %vm219, %v71, 0
  %489 = vmatprep.subr.mxu0 0.0
  %490 = vmatpush1.msra.mxu0 0.0
  %491 = vmatprep.subr.mxu0 0.0
  %492 = vmatpush1.msra.mxu0 0.0
  %493 = vmatprep.subr.mxu0 0.0
  %494 = vmatpush1.msra.mxu0 0.0
  %495 = vmatprep.subr.mxu0 0.0
  %496 = vmatpush1.msra.mxu0 0.0
  %497 = vmatprep.subr.mxu0 0.0
  %498 = vmatpush1.msra.mxu0 0.0
  %499 = vmatprep.subr.mxu0 0.0
  %500 = vmatpush1.msra.mxu0 0.0
  %501 = vmatprep.subr.mxu0 0.0
  %502 = vmatpush1.msra.mxu0 0.0
  %503 = vmatprep.subr.mxu0 0.0
  %504 = vmatpush1.msra.mxu0 0.0
  %505 = vmatprep.subr.mxu0 0.0
  %506 = vmatpush1.msra.mxu0 0.0
  %507 = vmatprep.subr.mxu0 0.0
  %508 = vmatpush1.msra.mxu0 0.0
  %509 = vmatprep.subr.mxu0 0.0
  %510 = vmatpush1.msra.mxu0 0.0
  %511 = vmatprep.subr.mxu0 0.0
  %512 = vmatpush1.msra.mxu0 0.0
  %513 = vmatprep.subr.mxu0 %v487
  %514 = vmatpush1.msra.mxu0 %v484
  %515 = vmatprep.subr.mxu0 %v69
  %516 = vmatpush1.msra.mxu0 %v68
  %517 = vmatprep.subr.mxu0 %v67
  %518 = vmatpush1.msra.mxu0 %v66
  %519 = vmatprep.subr.mxu0 %v65
  %520 = vmatpush1.msra.mxu0 %v64
  %521 = vmatprep.subr.mxu0 0.0
  %522 = vmatpush2.msra.mxu0 0.0
  %523 = vmatprep.subr.mxu0 0.0
  %524 = vmatpush2.msra.mxu0 0.0
  %525 = vmatprep.subr.mxu0 0.0
  %526 = vmatpush2.msra.mxu0 0.0
  %527 = vmatprep.subr.mxu0 0.0
  %528 = vmatpush2.msra.mxu0 0.0
  %529 = vmatprep.subr.mxu0 0.0
  %530 = vmatpush2.msra.mxu0 0.0
  %531 = vmatprep.subr.mxu0 0.0
  %532 = vmatpush2.msra.mxu0 0.0
  %533 = vmatprep.subr.mxu0 0.0
  %534 = vmatpush2.msra.mxu0 0.0
  %535 = vmatprep.subr.mxu0 0.0
  %536 = vmatpush2.msra.mxu0 0.0
  %537 = vmatprep.subr.mxu0 0.0
  %538 = vmatpush2.msra.mxu0 0.0
  %539 = vmatprep.subr.mxu0 0.0
  %540 = vmatpush2.msra.mxu0 0.0
  %541 = vmatprep.subr.mxu0 0.0
  %542 = vmatpush2.msra.mxu0 0.0
  %543 = vmatprep.subr.mxu0 0.0
  %544 = vmatpush2.msra.mxu0 0.0
  %545 = vmatprep.subr.mxu0 0.0
  %546 = vmatpush2.msra.mxu0 0.0
  %547 = vmatprep.subr.mxu0 0.0
  %548 = vmatpush2.msra.mxu0 0.0
  %549 = vmatprep.subr.mxu0 0.0
  %550 = vmatpush2.msra.mxu0 0.0
  %551 = vmatprep.subr.mxu0 0.0
  %552 = vmatpush2.msra.mxu0 0.0
  %553 = vmatprep.mubr.f32.mxu0 0.0
  %554 = vmatmul.mubr.f32.gmra.mxu0 %v435
  %v555 = vpop.f32.mrf.mxu0
  %v556 = vadd.f32 %v293, %v555
  %v557 = vpop.f32.mrf.mxu0
  %v558 = vadd.f32 %v295, %v557
  %559 = vmatprep.mubr.f32.mxu0 0.0
  %560 = vmatmul.mubr.f32.gmra.mxu0 %v437
  %v561 = vpop.f32.mrf.mxu0
  %v562 = vadd.f32 %v299, %v561
  %v563 = vpop.f32.mrf.mxu0
  %v564 = vadd.f32 %v301, %v563
  %565 = vmatprep.mubr.f32.mxu0 0.0
  %566 = vmatmul.mubr.f32.gmra.mxu0 %v439
  %v567 = vpop.f32.mrf.mxu0
  %v568 = vadd.f32 %v305, %v567
  %v569 = vpop.f32.mrf.mxu0
  %v570 = vadd.f32 %v307, %v569
  %571 = vmatprep.mubr.f32.mxu0 0.0
  %572 = vmatmul.mubr.f32.gmra.mxu0 %v441
  %v573 = vpop.f32.mrf.mxu0
  %v574 = vadd.f32 %v311, %v573
  %v575 = vpop.f32.mrf.mxu0
  %v576 = vadd.f32 %v313, %v575
  %577 = vmatprep.mubr.f32.mxu0 0.0
  %578 = vmatmul.mubr.f32.gmra.mxu0 %v443
  %v579 = vpop.f32.mrf.mxu0
  %v580 = vadd.f32 %v317, %v579
  %v581 = vpop.f32.mrf.mxu0
  %v582 = vadd.f32 %v319, %v581
  %583 = vmatprep.mubr.f32.mxu0 0.0
  %584 = vmatmul.mubr.f32.gmra.mxu0 %v445
  %v585 = vpop.f32.mrf.mxu0
  %v586 = vadd.f32 %v323, %v585
  %v587 = vpop.f32.mrf.mxu0
  %v588 = vadd.f32 %v325, %v587
  %589 = vmatprep.mubr.f32.mxu0 0.0
  %590 = vmatmul.mubr.f32.gmra.mxu0 %v447
  %v591 = vpop.f32.mrf.mxu0
  %v592 = vadd.f32 %v329, %v591
  %v593 = vpop.f32.mrf.mxu0
  %v594 = vadd.f32 %v331, %v593
  %595 = vmatprep.mubr.f32.mxu0 0.0
  %596 = vmatmul.mubr.f32.gmra.mxu0 %v449
  %v597 = vpop.f32.mrf.mxu0
  %v598 = vadd.f32 %v335, %v597
  %v599 = vpop.f32.mrf.mxu0
  %v600 = vadd.f32 %v337, %v599
  %601 = vmatprep.mubr.f32.mxu0 0.0
  %602 = vmatmul.mubr.f32.gmra.mxu0 %v451
  %v603 = vpop.f32.mrf.mxu0
  %v604 = vadd.f32 %v341, %v603
  %v605 = vpop.f32.mrf.mxu0
  %v606 = vadd.f32 %v343, %v605
  %607 = vmatprep.mubr.f32.mxu0 0.0
  %608 = vmatmul.mubr.f32.gmra.mxu0 %v453
  %v609 = vpop.f32.mrf.mxu0
  %v610 = vadd.f32 %v347, %v609
  %v611 = vpop.f32.mrf.mxu0
  %v612 = vadd.f32 %v349, %v611
  %613 = vmatprep.mubr.f32.mxu0 0.0
  %614 = vmatmul.mubr.f32.gmra.mxu0 %v455
  %v615 = vpop.f32.mrf.mxu0
  %v616 = vadd.f32 %v353, %v615
  %v617 = vpop.f32.mrf.mxu0
  %v618 = vadd.f32 %v355, %v617
  %619 = vmatprep.mubr.f32.mxu0 0.0
  %620 = vmatmul.mubr.f32.gmra.mxu0 %v457
  %v621 = vpop.f32.mrf.mxu0
  %v622 = vadd.f32 %v359, %v621
  %v623 = vpop.f32.mrf.mxu0
  %v624 = vadd.f32 %v361, %v623
  %625 = vmatprep.mubr.f32.mxu0 0.0
  %626 = vmatmul.mubr.f32.gmra.mxu0 %v459
  %v627 = vpop.f32.mrf.mxu0
  %v628 = vadd.f32 %v365, %v627
  %v629 = vpop.f32.mrf.mxu0
  %v630 = vadd.f32 %v367, %v629
  %631 = vmatprep.mubr.f32.mxu0 0.0
  %632 = vmatmul.mubr.f32.gmra.mxu0 %v461
  %v633 = vpop.f32.mrf.mxu0
  %v634 = vadd.f32 %v371, %v633
  %v635 = vpop.f32.mrf.mxu0
  %v636 = vadd.f32 %v373, %v635
  %637 = vmatprep.mubr.f32.mxu0 0.0
  %638 = vmatmul.mubr.f32.gmra.mxu0 %v463
  %v639 = vpop.f32.mrf.mxu0
  %v640 = vadd.f32 %v377, %v639
  %v641 = vpop.f32.mrf.mxu0
  %v642 = vadd.f32 %v379, %v641
  %643 = vmatprep.mubr.f32.mxu0 0.0
  %644 = vmatmul.mubr.f32.gmra.mxu0 %v465
  %v645 = vpop.f32.mrf.mxu0
  %v646 = vadd.f32 %v383, %v645
  %v647 = vpop.f32.mrf.mxu0
  %v648 = vadd.f32 %v385, %v647
  %649 = vmatprep.mubr.f32.mxu0 0.0
  %650 = vmatmul.mubr.f32.gmra.mxu0 %v467
  %v651 = vpop.f32.mrf.mxu0
  %v652 = vadd.f32 %v389, %v651
  %v653 = vpop.f32.mrf.mxu0
  %v654 = vadd.f32 %v391, %v653
  %655 = vmatprep.mubr.f32.mxu0 0.0
  %656 = vmatmul.mubr.f32.gmra.mxu0 %v469
  %v657 = vpop.f32.mrf.mxu0
  %v658 = vadd.f32 %v395, %v657
  %v659 = vpop.f32.mrf.mxu0
  %v660 = vadd.f32 %v397, %v659
  %661 = vmatprep.mubr.f32.mxu0 0.0
  %662 = vmatmul.mubr.f32.gmra.mxu0 %v471
  %v663 = vpop.f32.mrf.mxu0
  %v664 = vadd.f32 %v401, %v663
  %v665 = vpop.f32.mrf.mxu0
  %v666 = vadd.f32 %v403, %v665
  %667 = vmatprep.mubr.f32.mxu0 0.0
  %668 = vmatmul.mubr.f32.gmra.mxu0 %v473
  %v669 = vpop.f32.mrf.mxu0
  %v670 = vadd.f32 %v407, %v669
  %v671 = vpop.f32.mrf.mxu0
  %v672 = vadd.f32 %v409, %v671
  %673 = vmatprep.mubr.f32.mxu0 0.0
  %674 = vmatmul.mubr.f32.gmra.mxu0 %v475
  %v675 = vpop.f32.mrf.mxu0
  %v676 = vadd.f32 %v413, %v675
  %v677 = vpop.f32.mrf.mxu0
  %v678 = vadd.f32 %v415, %v677
  %679 = vmatprep.mubr.f32.mxu0 0.0
  %680 = vmatmul.mubr.f32.gmra.mxu0 %v477
  %v681 = vpop.f32.mrf.mxu0
  %v682 = vadd.f32 %v419, %v681
  %v683 = vpop.f32.mrf.mxu0
  %v684 = vadd.f32 %v421, %v683
  %685 = vmatprep.mubr.f32.mxu0 0.0
  %686 = vmatmul.mubr.f32.gmra.mxu0 %v479
  %v687 = vpop.f32.mrf.mxu0
  %v688 = vadd.f32 %v425, %v687
  %v689 = vpop.f32.mrf.mxu0
  %v690 = vadd.f32 %v427, %v689
  %691 = vmatprep.mubr.f32.mxu0 0.0
  %692 = vmatmul.mubr.f32.gmra.mxu0 %v481
  %v693 = vpop.f32.mrf.mxu0
  %v694 = vadd.f32 %v431, %v693
  %v695 = vpop.f32.mrf.mxu0
  %v696 = vadd.f32 %v433, %v695
  %697 = vdwg.mxu0
  %vm698 = vcmask 1045504
  %v699 = vrot.slane %v32, 2
  %v700 = vrot.slane %v33, 2
  %v701 = vsel %vm698, %v699, %v700
  %v702 = vrot.slane %v34, 2
  %v703 = vsel %vm698, %v700, %v702
  %v704 = vrot.slane %v35, 2
  %v705 = vsel %vm698, %v702, %v704
  %v706 = vrot.slane %v36, 2
  %v707 = vrot.slane %v37, 2
  %v708 = vsel %vm698, %v706, %v707
  %v709 = vrot.slane %v38, 2
  %v710 = vsel %vm698, %v707, %v709
  %v711 = vrot.slane %v39, 2
  %v712 = vsel %vm698, %v709, %v711
  %v713 = vrot.slane %v40, 2
  %v714 = vrot.slane %v41, 2
  %v715 = vsel %vm698, %v713, %v714
  %v716 = vrot.slane %v42, 2
  %v717 = vsel %vm698, %v714, %v716
  %v718 = vrot.slane %v43, 2
  %v719 = vsel %vm698, %v716, %v718
  %v720 = vrot.slane %v44, 2
  %v721 = vrot.slane %v45, 2
  %v722 = vsel %vm698, %v720, %v721
  %v723 = vrot.slane %v46, 2
  %v724 = vsel %vm698, %v721, %v723
  %v725 = vrot.slane %v47, 2
  %v726 = vsel %vm698, %v723, %v725
  %v727 = vrot.slane %v48, 2
  %v728 = vrot.slane %v49, 2
  %v729 = vsel %vm698, %v727, %v728
  %v730 = vrot.slane %v50, 2
  %v731 = vsel %vm698, %v728, %v730
  %v732 = vrot.slane %v51, 2
  %v733 = vsel %vm698, %v730, %v732
  %v734 = vrot.slane %v52, 2
  %v735 = vrot.slane %v53, 2
  %v736 = vsel %vm698, %v734, %v735
  %v737 = vrot.slane %v54, 2
  %v738 = vsel %vm698, %v735, %v737
  %v739 = vrot.slane %v55, 2
  %v740 = vsel %vm698, %v737, %v739
  %v741 = vrot.slane %v56, 2
  %v742 = vrot.slane %v57, 2
  %v743 = vsel %vm698, %v741, %v742
  %v744 = vrot.slane %v58, 2
  %v745 = vsel %vm698, %v742, %v744
  %v746 = vrot.slane %v59, 2
  %v747 = vsel %vm698, %v744, %v746
  %v748 = vrot.slane %v60, 2
  %v749 = vrot.slane %v61, 2
  %v750 = vsel %vm698, %v748, %v749
  %v751 = vrot.slane %v62, 2
  %v752 = vsel %vm698, %v749, %v751
  %v753 = vrot.slane %v63, 2
  %v754 = vsel %vm698, %v751, %v753
  %s755 = scalar_lea.vmem %s1, 128
  %v756 = vld [vmem:[%s755] sm:$0xff]
  %v757 = vld [vmem:[%s755 + $0x8] sm:$0xff]
  %v758 = vld [vmem:[%s755 + $0x10] sm:$0xff]
  %v759 = vld [vmem:[%s755 + $0x18] sm:$0xff]
  %v760 = vld [vmem:[%s755 + $0x20] sm:$0xff]
  %v761 = vld [vmem:[%s755 + $0x28] sm:$0xff]
  %v762 = vld [vmem:[%s755 + $0x30] sm:$0xf]
  %v763 = vld [vmem:[%s755 + $0x38] sm:$0xf]
  %v764 = vsel %vm170, %v701, 0
  %v766 = vsel %vm170, %v703, 0
  %v768 = vsel %vm170, %v705, 0
  %v770 = vsel %vm170, %v708, 0
  %v772 = vsel %vm170, %v710, 0
  %v774 = vsel %vm170, %v712, 0
  %v776 = vsel %vm170, %v715, 0
  %v778 = vsel %vm170, %v717, 0
  %v780 = vsel %vm170, %v719, 0
  %v782 = vsel %vm170, %v722, 0
  %v784 = vsel %vm170, %v724, 0
  %v786 = vsel %vm170, %v726, 0
  %v788 = vsel %vm170, %v729, 0
  %v790 = vsel %vm170, %v731, 0
  %v792 = vsel %vm170, %v733, 0
  %v794 = vsel %vm170, %v736, 0
  %v796 = vsel %vm170, %v738, 0
  %v798 = vsel %vm170, %v740, 0
  %v800 = vsel %vm170, %v743, 0
  %v802 = vsel %vm170, %v745, 0
  %v804 = vsel %vm170, %v747, 0
  %v806 = vsel %vm170, %v750, 0
  %v808 = vsel %vm170, %v752, 0
  %v810 = vsel %vm170, %v754, 0
  %v813 = vsel %vm219, %v762, 0
  %v816 = vsel %vm219, %v763, 0
  %818 = vmatprep.subr.mxu0 0.0
  %819 = vmatpush1.msra.mxu0 0.0
  %820 = vmatprep.subr.mxu0 0.0
  %821 = vmatpush1.msra.mxu0 0.0
  %822 = vmatprep.subr.mxu0 0.0
  %823 = vmatpush1.msra.mxu0 0.0
  %824 = vmatprep.subr.mxu0 0.0
  %825 = vmatpush1.msra.mxu0 0.0
  %826 = vmatprep.subr.mxu0 0.0
  %827 = vmatpush1.msra.mxu0 0.0
  %828 = vmatprep.subr.mxu0 0.0
  %829 = vmatpush1.msra.mxu0 0.0
  %830 = vmatprep.subr.mxu0 0.0
  %831 = vmatpush1.msra.mxu0 0.0
  %832 = vmatprep.subr.mxu0 0.0
  %833 = vmatpush1.msra.mxu0 0.0
  %834 = vmatprep.subr.mxu0 0.0
  %835 = vmatpush1.msra.mxu0 0.0
  %836 = vmatprep.subr.mxu0 0.0
  %837 = vmatpush1.msra.mxu0 0.0
  %838 = vmatprep.subr.mxu0 0.0
  %839 = vmatpush1.msra.mxu0 0.0
  %840 = vmatprep.subr.mxu0 0.0
  %841 = vmatpush1.msra.mxu0 0.0
  %842 = vmatprep.subr.mxu0 %v816
  %843 = vmatpush1.msra.mxu0 %v813
  %844 = vmatprep.subr.mxu0 %v761
  %845 = vmatpush1.msra.mxu0 %v760
  %846 = vmatprep.subr.mxu0 %v759
  %847 = vmatpush1.msra.mxu0 %v758
  %848 = vmatprep.subr.mxu0 %v757
  %849 = vmatpush1.msra.mxu0 %v756
  %850 = vmatprep.subr.mxu0 0.0
  %851 = vmatpush2.msra.mxu0 0.0
  %852 = vmatprep.subr.mxu0 0.0
  %853 = vmatpush2.msra.mxu0 0.0
  %854 = vmatprep.subr.mxu0 0.0
  %855 = vmatpush2.msra.mxu0 0.0
  %856 = vmatprep.subr.mxu0 0.0
  %857 = vmatpush2.msra.mxu0 0.0
  %858 = vmatprep.subr.mxu0 0.0
  %859 = vmatpush2.msra.mxu0 0.0
  %860 = vmatprep.subr.mxu0 0.0
  %861 = vmatpush2.msra.mxu0 0.0
  %862 = vmatprep.subr.mxu0 0.0
  %863 = vmatpush2.msra.mxu0 0.0
  %864 = vmatprep.subr.mxu0 0.0
  %865 = vmatpush2.msra.mxu0 0.0
  %866 = vmatprep.subr.mxu0 0.0
  %867 = vmatpush2.msra.mxu0 0.0
  %868 = vmatprep.subr.mxu0 0.0
  %869 = vmatpush2.msra.mxu0 0.0
  %870 = vmatprep.subr.mxu0 0.0
  %871 = vmatpush2.msra.mxu0 0.0
  %872 = vmatprep.subr.mxu0 0.0
  %873 = vmatpush2.msra.mxu0 0.0
  %874 = vmatprep.subr.mxu0 0.0
  %875 = vmatpush2.msra.mxu0 0.0
  %876 = vmatprep.subr.mxu0 0.0
  %877 = vmatpush2.msra.mxu0 0.0
  %878 = vmatprep.subr.mxu0 0.0
  %879 = vmatpush2.msra.mxu0 0.0
  %880 = vmatprep.subr.mxu0 0.0
  %881 = vmatpush2.msra.mxu0 0.0
  %882 = vmatprep.mubr.f32.mxu0 0.0
  %883 = vmatmul.mubr.f32.gmra.mxu0 %v764
  %v884 = vpop.f32.mrf.mxu0
  %v885 = vadd.f32 0.0, %v884
  %v886 = vpop.f32.mrf.mxu0
  %v887 = vadd.f32 0.0, %v886
  %888 = vmatprep.mubr.f32.mxu0 0.0
  %889 = vmatmul.mubr.f32.gmra.mxu0 %v766
  %v890 = vpop.f32.mrf.mxu0
  %v891 = vadd.f32 0.0, %v890
  %v892 = vpop.f32.mrf.mxu0
  %v893 = vadd.f32 0.0, %v892
  %894 = vmatprep.mubr.f32.mxu0 0.0
  %895 = vmatmul.mubr.f32.gmra.mxu0 %v768
  %v896 = vpop.f32.mrf.mxu0
  %v897 = vadd.f32 0.0, %v896
  %v898 = vpop.f32.mrf.mxu0
  %v899 = vadd.f32 0.0, %v898
  %900 = vmatprep.mubr.f32.mxu0 0.0
  %901 = vmatmul.mubr.f32.gmra.mxu0 %v770
  %v902 = vpop.f32.mrf.mxu0
  %v903 = vadd.f32 0.0, %v902
  %v904 = vpop.f32.mrf.mxu0
  %v905 = vadd.f32 0.0, %v904
  %906 = vmatprep.mubr.f32.mxu0 0.0
  %907 = vmatmul.mubr.f32.gmra.mxu0 %v772
  %v908 = vpop.f32.mrf.mxu0
  %v909 = vadd.f32 0.0, %v908
  %v910 = vpop.f32.mrf.mxu0
  %v911 = vadd.f32 0.0, %v910
  %912 = vmatprep.mubr.f32.mxu0 0.0
  %913 = vmatmul.mubr.f32.gmra.mxu0 %v774
  %v914 = vpop.f32.mrf.mxu0
  %v915 = vadd.f32 0.0, %v914
  %v916 = vpop.f32.mrf.mxu0
  %v917 = vadd.f32 0.0, %v916
  %918 = vmatprep.mubr.f32.mxu0 0.0
  %919 = vmatmul.mubr.f32.gmra.mxu0 %v776
  %v920 = vpop.f32.mrf.mxu0
  %v921 = vadd.f32 0.0, %v920
  %v922 = vpop.f32.mrf.mxu0
  %v923 = vadd.f32 0.0, %v922
  %924 = vmatprep.mubr.f32.mxu0 0.0
  %925 = vmatmul.mubr.f32.gmra.mxu0 %v778
  %v926 = vpop.f32.mrf.mxu0
  %v927 = vadd.f32 0.0, %v926
  %v928 = vpop.f32.mrf.mxu0
  %v929 = vadd.f32 0.0, %v928
  %930 = vmatprep.mubr.f32.mxu0 0.0
  %931 = vmatmul.mubr.f32.gmra.mxu0 %v780
  %v932 = vpop.f32.mrf.mxu0
  %v933 = vadd.f32 0.0, %v932
  %v934 = vpop.f32.mrf.mxu0
  %v935 = vadd.f32 0.0, %v934
  %936 = vmatprep.mubr.f32.mxu0 0.0
  %937 = vmatmul.mubr.f32.gmra.mxu0 %v782
  %v938 = vpop.f32.mrf.mxu0
  %v939 = vadd.f32 0.0, %v938
  %v940 = vpop.f32.mrf.mxu0
  %v941 = vadd.f32 0.0, %v940
  %942 = vmatprep.mubr.f32.mxu0 0.0
  %943 = vmatmul.mubr.f32.gmra.mxu0 %v784
  %v944 = vpop.f32.mrf.mxu0
  %v945 = vadd.f32 0.0, %v944
  %v946 = vpop.f32.mrf.mxu0
  %v947 = vadd.f32 0.0, %v946
  %948 = vmatprep.mubr.f32.mxu0 0.0
  %949 = vmatmul.mubr.f32.gmra.mxu0 %v786
  %v950 = vpop.f32.mrf.mxu0
  %v951 = vadd.f32 0.0, %v950
  %v952 = vpop.f32.mrf.mxu0
  %v953 = vadd.f32 0.0, %v952
  %954 = vmatprep.mubr.f32.mxu0 0.0
  %955 = vmatmul.mubr.f32.gmra.mxu0 %v788
  %v956 = vpop.f32.mrf.mxu0
  %v957 = vadd.f32 0.0, %v956
  %v958 = vpop.f32.mrf.mxu0
  %v959 = vadd.f32 0.0, %v958
  %960 = vmatprep.mubr.f32.mxu0 0.0
  %961 = vmatmul.mubr.f32.gmra.mxu0 %v790
  %v962 = vpop.f32.mrf.mxu0
  %v963 = vadd.f32 0.0, %v962
  %v964 = vpop.f32.mrf.mxu0
  %v965 = vadd.f32 0.0, %v964
  %966 = vmatprep.mubr.f32.mxu0 0.0
  %967 = vmatmul.mubr.f32.gmra.mxu0 %v792
  %v968 = vpop.f32.mrf.mxu0
  %v969 = vadd.f32 0.0, %v968
  %v970 = vpop.f32.mrf.mxu0
  %v971 = vadd.f32 0.0, %v970
  %972 = vmatprep.mubr.f32.mxu0 0.0
  %973 = vmatmul.mubr.f32.gmra.mxu0 %v794
  %v974 = vpop.f32.mrf.mxu0
  %v975 = vadd.f32 0.0, %v974
  %v976 = vpop.f32.mrf.mxu0
  %v977 = vadd.f32 0.0, %v976
  %978 = vmatprep.mubr.f32.mxu0 0.0
  %979 = vmatmul.mubr.f32.gmra.mxu0 %v796
  %v980 = vpop.f32.mrf.mxu0
  %v981 = vadd.f32 0.0, %v980
  %v982 = vpop.f32.mrf.mxu0
  %v983 = vadd.f32 0.0, %v982
  %984 = vmatprep.mubr.f32.mxu0 0.0
  %985 = vmatmul.mubr.f32.gmra.mxu0 %v798
  %v986 = vpop.f32.mrf.mxu0
  %v987 = vadd.f32 0.0, %v986
  %v988 = vpop.f32.mrf.mxu0
  %v989 = vadd.f32 0.0, %v988
  %990 = vmatprep.mubr.f32.mxu0 0.0
  %991 = vmatmul.mubr.f32.gmra.mxu0 %v800
  %v992 = vpop.f32.mrf.mxu0
  %v993 = vadd.f32 0.0, %v992
  %v994 = vpop.f32.mrf.mxu0
  %v995 = vadd.f32 0.0, %v994
  %996 = vmatprep.mubr.f32.mxu0 0.0
  %997 = vmatmul.mubr.f32.gmra.mxu0 %v802
  %v998 = vpop.f32.mrf.mxu0
  %v999 = vadd.f32 0.0, %v998
  %v1000 = vpop.f32.mrf.mxu0
  %v1001 = vadd.f32 0.0, %v1000
  %1002 = vmatprep.mubr.f32.mxu0 0.0
  %1003 = vmatmul.mubr.f32.gmra.mxu0 %v804
  %v1004 = vpop.f32.mrf.mxu0
  %v1005 = vadd.f32 0.0, %v1004
  %v1006 = vpop.f32.mrf.mxu0
  %v1007 = vadd.f32 0.0, %v1006
  %1008 = vmatprep.mubr.f32.mxu0 0.0
  %1009 = vmatmul.mubr.f32.gmra.mxu0 %v806
  %v1010 = vpop.f32.mrf.mxu0
  %v1011 = vadd.f32 0.0, %v1010
  %v1012 = vpop.f32.mrf.mxu0
  %v1013 = vadd.f32 0.0, %v1012
  %1014 = vmatprep.mubr.f32.mxu0 0.0
  %1015 = vmatmul.mubr.f32.gmra.mxu0 %v808
  %v1016 = vpop.f32.mrf.mxu0
  %v1017 = vadd.f32 0.0, %v1016
  %v1018 = vpop.f32.mrf.mxu0
  %v1019 = vadd.f32 0.0, %v1018
  %1020 = vmatprep.mubr.f32.mxu0 0.0
  %1021 = vmatmul.mubr.f32.gmra.mxu0 %v810
  %v1022 = vpop.f32.mrf.mxu0
  %v1023 = vadd.f32 0.0, %v1022
  %v1024 = vpop.f32.mrf.mxu0
  %v1025 = vadd.f32 0.0, %v1024
  %1026 = vdwg.mxu0
  %v1027 = vadd.f32 %v556, %v885
  %v1028 = vadd.f32 %v558, %v887
  %v1029 = vadd.f32 %v562, %v891
  %v1030 = vadd.f32 %v564, %v893
  %v1031 = vadd.f32 %v568, %v897
  %v1032 = vadd.f32 %v570, %v899
  %v1033 = vadd.f32 %v574, %v903
  %v1034 = vadd.f32 %v576, %v905
  %v1035 = vadd.f32 %v580, %v909
  %v1036 = vadd.f32 %v582, %v911
  %v1037 = vadd.f32 %v586, %v915
  %v1038 = vadd.f32 %v588, %v917
  %v1039 = vadd.f32 %v592, %v921
  %v1040 = vadd.f32 %v594, %v923
  %v1041 = vadd.f32 %v598, %v927
  %v1042 = vadd.f32 %v600, %v929
  %v1043 = vadd.f32 %v604, %v933
  %v1044 = vadd.f32 %v606, %v935
  %v1045 = vadd.f32 %v610, %v939
  %v1046 = vadd.f32 %v612, %v941
  %v1047 = vadd.f32 %v616, %v945
  %v1048 = vadd.f32 %v618, %v947
  %v1049 = vadd.f32 %v622, %v951
  %v1050 = vadd.f32 %v624, %v953
  %v1051 = vadd.f32 %v628, %v957
  %v1052 = vadd.f32 %v630, %v959
  %v1053 = vadd.f32 %v634, %v963
  %v1054 = vadd.f32 %v636, %v965
  %v1055 = vadd.f32 %v640, %v969
  %v1056 = vadd.f32 %v642, %v971
  %v1057 = vadd.f32 %v646, %v975
  %v1058 = vadd.f32 %v648, %v977
  %v1059 = vadd.f32 %v652, %v981
  %v1060 = vadd.f32 %v654, %v983
  %v1061 = vadd.f32 %v658, %v987
  %v1062 = vadd.f32 %v660, %v989
  %v1063 = vadd.f32 %v664, %v993
  %v1064 = vadd.f32 %v666, %v995
  %v1065 = vadd.f32 %v670, %v999
  %v1066 = vadd.f32 %v672, %v1001
  %v1067 = vadd.f32 %v676, %v1005
  %v1068 = vadd.f32 %v678, %v1007
  %v1069 = vadd.f32 %v682, %v1011
  %v1070 = vadd.f32 %v684, %v1013
  %v1071 = vadd.f32 %v688, %v1017
  %v1072 = vadd.f32 %v690, %v1019
  %v1073 = vadd.f32 %v694, %v1023
  %v1074 = vadd.f32 %v696, %v1025
  %vm1075 = vcmask 1044480
  %v1076 = vrot.slane %v32, 3
  %v1077 = vrot.slane %v33, 3
  %v1078 = vsel %vm1075, %v1076, %v1077
  %v1079 = vrot.slane %v34, 3
  %v1080 = vsel %vm1075, %v1077, %v1079
  %v1081 = vrot.slane %v35, 3
  %v1082 = vsel %vm1075, %v1079, %v1081
  %v1083 = vrot.slane %v36, 3
  %v1084 = vrot.slane %v37, 3
  %v1085 = vsel %vm1075, %v1083, %v1084
  %v1086 = vrot.slane %v38, 3
  %v1087 = vsel %vm1075, %v1084, %v1086
  %v1088 = vrot.slane %v39, 3
  %v1089 = vsel %vm1075, %v1086, %v1088
  %v1090 = vrot.slane %v40, 3
  %v1091 = vrot.slane %v41, 3
  %v1092 = vsel %vm1075, %v1090, %v1091
  %v1093 = vrot.slane %v42, 3
  %v1094 = vsel %vm1075, %v1091, %v1093
  %v1095 = vrot.slane %v43, 3
  %v1096 = vsel %vm1075, %v1093, %v1095
  %v1097 = vrot.slane %v44, 3
  %v1098 = vrot.slane %v45, 3
  %v1099 = vsel %vm1075, %v1097, %v1098
  %v1100 = vrot.slane %v46, 3
  %v1101 = vsel %vm1075, %v1098, %v1100
  %v1102 = vrot.slane %v47, 3
  %v1103 = vsel %vm1075, %v1100, %v1102
  %v1104 = vrot.slane %v48, 3
  %v1105 = vrot.slane %v49, 3
  %v1106 = vsel %vm1075, %v1104, %v1105
  %v1107 = vrot.slane %v50, 3
  %v1108 = vsel %vm1075, %v1105, %v1107
  %v1109 = vrot.slane %v51, 3
  %v1110 = vsel %vm1075, %v1107, %v1109
  %v1111 = vrot.slane %v52, 3
  %v1112 = vrot.slane %v53, 3
  %v1113 = vsel %vm1075, %v1111, %v1112
  %v1114 = vrot.slane %v54, 3
  %v1115 = vsel %vm1075, %v1112, %v1114
  %v1116 = vrot.slane %v55, 3
  %v1117 = vsel %vm1075, %v1114, %v1116
  %v1118 = vrot.slane %v56, 3
  %v1119 = vrot.slane %v57, 3
  %v1120 = vsel %vm1075, %v1118, %v1119
  %v1121 = vrot.slane %v58, 3
  %v1122 = vsel %vm1075, %v1119, %v1121
  %v1123 = vrot.slane %v59, 3
  %v1124 = vsel %vm1075, %v1121, %v1123
  %v1125 = vrot.slane %v60, 3
  %v1126 = vrot.slane %v61, 3
  %v1127 = vsel %vm1075, %v1125, %v1126
  %v1128 = vrot.slane %v62, 3
  %v1129 = vsel %vm1075, %v1126, %v1128
  %v1130 = vrot.slane %v63, 3
  %v1131 = vsel %vm1075, %v1128, %v1130
  %s1132 = scalar_lea.vmem %s1, 192
  %v1133 = vld [vmem:[%s1132] sm:$0xff]
  %v1134 = vld [vmem:[%s1132 + $0x8] sm:$0xff]
  %v1135 = vld [vmem:[%s1132 + $0x10] sm:$0xff]
  %v1136 = vld [vmem:[%s1132 + $0x18] sm:$0xff]
  %v1137 = vld [vmem:[%s1132 + $0x20] sm:$0xff]
  %v1138 = vld [vmem:[%s1132 + $0x28] sm:$0xff]
  %v1139 = vld [vmem:[%s1132 + $0x30] sm:$0xf]
  %v1140 = vld [vmem:[%s1132 + $0x38] sm:$0xf]
  %v1141 = vsel %vm170, %v1078, 0
  %v1143 = vsel %vm170, %v1080, 0
  %v1145 = vsel %vm170, %v1082, 0
  %v1147 = vsel %vm170, %v1085, 0
  %v1149 = vsel %vm170, %v1087, 0
  %v1151 = vsel %vm170, %v1089, 0
  %v1153 = vsel %vm170, %v1092, 0
  %v1155 = vsel %vm170, %v1094, 0
  %v1157 = vsel %vm170, %v1096, 0
  %v1159 = vsel %vm170, %v1099, 0
  %v1161 = vsel %vm170, %v1101, 0
  %v1163 = vsel %vm170, %v1103, 0
  %v1165 = vsel %vm170, %v1106, 0
  %v1167 = vsel %vm170, %v1108, 0
  %v1169 = vsel %vm170, %v1110, 0
  %v1171 = vsel %vm170, %v1113, 0
  %v1173 = vsel %vm170, %v1115, 0
  %v1175 = vsel %vm170, %v1117, 0
  %v1177 = vsel %vm170, %v1120, 0
  %v1179 = vsel %vm170, %v1122, 0
  %v1181 = vsel %vm170, %v1124, 0
  %v1183 = vsel %vm170, %v1127, 0
  %v1185 = vsel %vm170, %v1129, 0
  %v1187 = vsel %vm170, %v1131, 0
  %v1190 = vsel %vm219, %v1139, 0
  %v1193 = vsel %vm219, %v1140, 0
  %1195 = vmatprep.subr.mxu0 0.0
  %1196 = vmatpush1.msra.mxu0 0.0
  %1197 = vmatprep.subr.mxu0 0.0
  %1198 = vmatpush1.msra.mxu0 0.0
  %1199 = vmatprep.subr.mxu0 0.0
  %1200 = vmatpush1.msra.mxu0 0.0
  %1201 = vmatprep.subr.mxu0 0.0
  %1202 = vmatpush1.msra.mxu0 0.0
  %1203 = vmatprep.subr.mxu0 0.0
  %1204 = vmatpush1.msra.mxu0 0.0
  %1205 = vmatprep.subr.mxu0 0.0
  %1206 = vmatpush1.msra.mxu0 0.0
  %1207 = vmatprep.subr.mxu0 0.0
  %1208 = vmatpush1.msra.mxu0 0.0
  %1209 = vmatprep.subr.mxu0 0.0
  %1210 = vmatpush1.msra.mxu0 0.0
  %1211 = vmatprep.subr.mxu0 0.0
  %1212 = vmatpush1.msra.mxu0 0.0
  %1213 = vmatprep.subr.mxu0 0.0
  %1214 = vmatpush1.msra.mxu0 0.0
  %1215 = vmatprep.subr.mxu0 0.0
  %1216 = vmatpush1.msra.mxu0 0.0
  %1217 = vmatprep.subr.mxu0 0.0
  %1218 = vmatpush1.msra.mxu0 0.0
  %1219 = vmatprep.subr.mxu0 %v1193
  %1220 = vmatpush1.msra.mxu0 %v1190
  %1221 = vmatprep.subr.mxu0 %v1138
  %1222 = vmatpush1.msra.mxu0 %v1137
  %1223 = vmatprep.subr.mxu0 %v1136
  %1224 = vmatpush1.msra.mxu0 %v1135
  %1225 = vmatprep.subr.mxu0 %v1134
  %1226 = vmatpush1.msra.mxu0 %v1133
  %1227 = vmatprep.subr.mxu0 0.0
  %1228 = vmatpush2.msra.mxu0 0.0
  %1229 = vmatprep.subr.mxu0 0.0
  %1230 = vmatpush2.msra.mxu0 0.0
  %1231 = vmatprep.subr.mxu0 0.0
  %1232 = vmatpush2.msra.mxu0 0.0
  %1233 = vmatprep.subr.mxu0 0.0
  %1234 = vmatpush2.msra.mxu0 0.0
  %1235 = vmatprep.subr.mxu0 0.0
  %1236 = vmatpush2.msra.mxu0 0.0
  %1237 = vmatprep.subr.mxu0 0.0
  %1238 = vmatpush2.msra.mxu0 0.0
  %1239 = vmatprep.subr.mxu0 0.0
  %1240 = vmatpush2.msra.mxu0 0.0
  %1241 = vmatprep.subr.mxu0 0.0
  %1242 = vmatpush2.msra.mxu0 0.0
  %1243 = vmatprep.subr.mxu0 0.0
  %1244 = vmatpush2.msra.mxu0 0.0
  %1245 = vmatprep.subr.mxu0 0.0
  %1246 = vmatpush2.msra.mxu0 0.0
  %1247 = vmatprep.subr.mxu0 0.0
  %1248 = vmatpush2.msra.mxu0 0.0
  %1249 = vmatprep.subr.mxu0 0.0
  %1250 = vmatpush2.msra.mxu0 0.0
  %1251 = vmatprep.subr.mxu0 0.0
  %1252 = vmatpush2.msra.mxu0 0.0
  %1253 = vmatprep.subr.mxu0 0.0
  %1254 = vmatpush2.msra.mxu0 0.0
  %1255 = vmatprep.subr.mxu0 0.0
  %1256 = vmatpush2.msra.mxu0 0.0
  %1257 = vmatprep.subr.mxu0 0.0
  %1258 = vmatpush2.msra.mxu0 0.0
  %1259 = vmatprep.mubr.f32.mxu0 0.0
  %1260 = vmatmul.mubr.f32.gmra.mxu0 %v1141
  %v1261 = vpop.f32.mrf.mxu0
  %v1262 = vadd.f32 0.0, %v1261
  %v1263 = vpop.f32.mrf.mxu0
  %v1264 = vadd.f32 0.0, %v1263
  %1265 = vmatprep.mubr.f32.mxu0 0.0
  %1266 = vmatmul.mubr.f32.gmra.mxu0 %v1143
  %v1267 = vpop.f32.mrf.mxu0
  %v1268 = vadd.f32 0.0, %v1267
  %v1269 = vpop.f32.mrf.mxu0
  %v1270 = vadd.f32 0.0, %v1269
  %1271 = vmatprep.mubr.f32.mxu0 0.0
  %1272 = vmatmul.mubr.f32.gmra.mxu0 %v1145
  %v1273 = vpop.f32.mrf.mxu0
  %v1274 = vadd.f32 0.0, %v1273
  %v1275 = vpop.f32.mrf.mxu0
  %v1276 = vadd.f32 0.0, %v1275
  %1277 = vmatprep.mubr.f32.mxu0 0.0
  %1278 = vmatmul.mubr.f32.gmra.mxu0 %v1147
  %v1279 = vpop.f32.mrf.mxu0
  %v1280 = vadd.f32 0.0, %v1279
  %v1281 = vpop.f32.mrf.mxu0
  %v1282 = vadd.f32 0.0, %v1281
  %1283 = vmatprep.mubr.f32.mxu0 0.0
  %1284 = vmatmul.mubr.f32.gmra.mxu0 %v1149
  %v1285 = vpop.f32.mrf.mxu0
  %v1286 = vadd.f32 0.0, %v1285
  %v1287 = vpop.f32.mrf.mxu0
  %v1288 = vadd.f32 0.0, %v1287
  %1289 = vmatprep.mubr.f32.mxu0 0.0
  %1290 = vmatmul.mubr.f32.gmra.mxu0 %v1151
  %v1291 = vpop.f32.mrf.mxu0
  %v1292 = vadd.f32 0.0, %v1291
  %v1293 = vpop.f32.mrf.mxu0
  %v1294 = vadd.f32 0.0, %v1293
  %1295 = vmatprep.mubr.f32.mxu0 0.0
  %1296 = vmatmul.mubr.f32.gmra.mxu0 %v1153
  %v1297 = vpop.f32.mrf.mxu0
  %v1298 = vadd.f32 0.0, %v1297
  %v1299 = vpop.f32.mrf.mxu0
  %v1300 = vadd.f32 0.0, %v1299
  %1301 = vmatprep.mubr.f32.mxu0 0.0
  %1302 = vmatmul.mubr.f32.gmra.mxu0 %v1155
  %v1303 = vpop.f32.mrf.mxu0
  %v1304 = vadd.f32 0.0, %v1303
  %v1305 = vpop.f32.mrf.mxu0
  %v1306 = vadd.f32 0.0, %v1305
  %1307 = vmatprep.mubr.f32.mxu0 0.0
  %1308 = vmatmul.mubr.f32.gmra.mxu0 %v1157
  %v1309 = vpop.f32.mrf.mxu0
  %v1310 = vadd.f32 0.0, %v1309
  %v1311 = vpop.f32.mrf.mxu0
  %v1312 = vadd.f32 0.0, %v1311
  %1313 = vmatprep.mubr.f32.mxu0 0.0
  %1314 = vmatmul.mubr.f32.gmra.mxu0 %v1159
  %v1315 = vpop.f32.mrf.mxu0
  %v1316 = vadd.f32 0.0, %v1315
  %v1317 = vpop.f32.mrf.mxu0
  %v1318 = vadd.f32 0.0, %v1317
  %1319 = vmatprep.mubr.f32.mxu0 0.0
  %1320 = vmatmul.mubr.f32.gmra.mxu0 %v1161
  %v1321 = vpop.f32.mrf.mxu0
  %v1322 = vadd.f32 0.0, %v1321
  %v1323 = vpop.f32.mrf.mxu0
  %v1324 = vadd.f32 0.0, %v1323
  %1325 = vmatprep.mubr.f32.mxu0 0.0
  %1326 = vmatmul.mubr.f32.gmra.mxu0 %v1163
  %v1327 = vpop.f32.mrf.mxu0
  %v1328 = vadd.f32 0.0, %v1327
  %v1329 = vpop.f32.mrf.mxu0
  %v1330 = vadd.f32 0.0, %v1329
  %1331 = vmatprep.mubr.f32.mxu0 0.0
  %1332 = vmatmul.mubr.f32.gmra.mxu0 %v1165
  %v1333 = vpop.f32.mrf.mxu0
  %v1334 = vadd.f32 0.0, %v1333
  %v1335 = vpop.f32.mrf.mxu0
  %v1336 = vadd.f32 0.0, %v1335
  %1337 = vmatprep.mubr.f32.mxu0 0.0
  %1338 = vmatmul.mubr.f32.gmra.mxu0 %v1167
  %v1339 = vpop.f32.mrf.mxu0
  %v1340 = vadd.f32 0.0, %v1339
  %v1341 = vpop.f32.mrf.mxu0
  %v1342 = vadd.f32 0.0, %v1341
  %1343 = vmatprep.mubr.f32.mxu0 0.0
  %1344 = vmatmul.mubr.f32.gmra.mxu0 %v1169
  %v1345 = vpop.f32.mrf.mxu0
  %v1346 = vadd.f32 0.0, %v1345
  %v1347 = vpop.f32.mrf.mxu0
  %v1348 = vadd.f32 0.0, %v1347
  %1349 = vmatprep.mubr.f32.mxu0 0.0
  %1350 = vmatmul.mubr.f32.gmra.mxu0 %v1171
  %v1351 = vpop.f32.mrf.mxu0
  %v1352 = vadd.f32 0.0, %v1351
  %v1353 = vpop.f32.mrf.mxu0
  %v1354 = vadd.f32 0.0, %v1353
  %1355 = vmatprep.mubr.f32.mxu0 0.0
  %1356 = vmatmul.mubr.f32.gmra.mxu0 %v1173
  %v1357 = vpop.f32.mrf.mxu0
  %v1358 = vadd.f32 0.0, %v1357
  %v1359 = vpop.f32.mrf.mxu0
  %v1360 = vadd.f32 0.0, %v1359
  %1361 = vmatprep.mubr.f32.mxu0 0.0
  %1362 = vmatmul.mubr.f32.gmra.mxu0 %v1175
  %v1363 = vpop.f32.mrf.mxu0
  %v1364 = vadd.f32 0.0, %v1363
  %v1365 = vpop.f32.mrf.mxu0
  %v1366 = vadd.f32 0.0, %v1365
  %1367 = vmatprep.mubr.f32.mxu0 0.0
  %1368 = vmatmul.mubr.f32.gmra.mxu0 %v1177
  %v1369 = vpop.f32.mrf.mxu0
  %v1370 = vadd.f32 0.0, %v1369
  %v1371 = vpop.f32.mrf.mxu0
  %v1372 = vadd.f32 0.0, %v1371
  %1373 = vmatprep.mubr.f32.mxu0 0.0
  %1374 = vmatmul.mubr.f32.gmra.mxu0 %v1179
  %v1375 = vpop.f32.mrf.mxu0
  %v1376 = vadd.f32 0.0, %v1375
  %v1377 = vpop.f32.mrf.mxu0
  %v1378 = vadd.f32 0.0, %v1377
  %1379 = vmatprep.mubr.f32.mxu0 0.0
  %1380 = vmatmul.mubr.f32.gmra.mxu0 %v1181
  %v1381 = vpop.f32.mrf.mxu0
  %v1382 = vadd.f32 0.0, %v1381
  %v1383 = vpop.f32.mrf.mxu0
  %v1384 = vadd.f32 0.0, %v1383
  %1385 = vmatprep.mubr.f32.mxu0 0.0
  %1386 = vmatmul.mubr.f32.gmra.mxu0 %v1183
  %v1387 = vpop.f32.mrf.mxu0
  %v1388 = vadd.f32 0.0, %v1387
  %v1389 = vpop.f32.mrf.mxu0
  %v1390 = vadd.f32 0.0, %v1389
  %1391 = vmatprep.mubr.f32.mxu0 0.0
  %1392 = vmatmul.mubr.f32.gmra.mxu0 %v1185
  %v1393 = vpop.f32.mrf.mxu0
  %v1394 = vadd.f32 0.0, %v1393
  %v1395 = vpop.f32.mrf.mxu0
  %v1396 = vadd.f32 0.0, %v1395
  %1397 = vmatprep.mubr.f32.mxu0 0.0
  %1398 = vmatmul.mubr.f32.gmra.mxu0 %v1187
  %v1399 = vpop.f32.mrf.mxu0
  %v1400 = vadd.f32 0.0, %v1399
  %v1401 = vpop.f32.mrf.mxu0
  %v1402 = vadd.f32 0.0, %v1401
  %1403 = vdwg.mxu0
  %v1404 = vadd.f32 %v1027, %v1262
  %v1405 = vadd.f32 %v1028, %v1264
  %v1406 = vadd.f32 %v1029, %v1268
  %v1407 = vadd.f32 %v1030, %v1270
  %v1408 = vadd.f32 %v1031, %v1274
  %v1409 = vadd.f32 %v1032, %v1276
  %v1410 = vadd.f32 %v1033, %v1280
  %v1411 = vadd.f32 %v1034, %v1282
  %v1412 = vadd.f32 %v1035, %v1286
  %v1413 = vadd.f32 %v1036, %v1288
  %v1414 = vadd.f32 %v1037, %v1292
  %v1415 = vadd.f32 %v1038, %v1294
  %v1416 = vadd.f32 %v1039, %v1298
  %v1417 = vadd.f32 %v1040, %v1300
  %v1418 = vadd.f32 %v1041, %v1304
  %v1419 = vadd.f32 %v1042, %v1306
  %v1420 = vadd.f32 %v1043, %v1310
  %v1421 = vadd.f32 %v1044, %v1312
  %v1422 = vadd.f32 %v1045, %v1316
  %v1423 = vadd.f32 %v1046, %v1318
  %v1424 = vadd.f32 %v1047, %v1322
  %v1425 = vadd.f32 %v1048, %v1324
  %v1426 = vadd.f32 %v1049, %v1328
  %v1427 = vadd.f32 %v1050, %v1330
  %v1428 = vadd.f32 %v1051, %v1334
  %v1429 = vadd.f32 %v1052, %v1336
  %v1430 = vadd.f32 %v1053, %v1340
  %v1431 = vadd.f32 %v1054, %v1342
  %v1432 = vadd.f32 %v1055, %v1346
  %v1433 = vadd.f32 %v1056, %v1348
  %v1434 = vadd.f32 %v1057, %v1352
  %v1435 = vadd.f32 %v1058, %v1354
  %v1436 = vadd.f32 %v1059, %v1358
  %v1437 = vadd.f32 %v1060, %v1360
  %v1438 = vadd.f32 %v1061, %v1364
  %v1439 = vadd.f32 %v1062, %v1366
  %v1440 = vadd.f32 %v1063, %v1370
  %v1441 = vadd.f32 %v1064, %v1372
  %v1442 = vadd.f32 %v1065, %v1376
  %v1443 = vadd.f32 %v1066, %v1378
  %v1444 = vadd.f32 %v1067, %v1382
  %v1445 = vadd.f32 %v1068, %v1384
  %v1446 = vadd.f32 %v1069, %v1388
  %v1447 = vadd.f32 %v1070, %v1390
  %v1448 = vadd.f32 %v1071, %v1394
  %v1449 = vadd.f32 %v1072, %v1396
  %v1450 = vadd.f32 %v1073, %v1400
  %v1451 = vadd.f32 %v1074, %v1402
  %v1452 = vrot.slane %v32, 4
  %v1453 = vrot.slane %v33, 4
  %v1454 = vsel %vm219, %v1452, %v1453
  %v1455 = vrot.slane %v34, 4
  %v1456 = vsel %vm219, %v1453, %v1455
  %v1457 = vrot.slane %v35, 4
  %v1458 = vsel %vm219, %v1455, %v1457
  %v1459 = vrot.slane %v36, 4
  %v1460 = vrot.slane %v37, 4
  %v1461 = vsel %vm219, %v1459, %v1460
  %v1462 = vrot.slane %v38, 4
  %v1463 = vsel %vm219, %v1460, %v1462
  %v1464 = vrot.slane %v39, 4
  %v1465 = vsel %vm219, %v1462, %v1464
  %v1466 = vrot.slane %v40, 4
  %v1467 = vrot.slane %v41, 4
  %v1468 = vsel %vm219, %v1466, %v1467
  %v1469 = vrot.slane %v42, 4
  %v1470 = vsel %vm219, %v1467, %v1469
  %v1471 = vrot.slane %v43, 4
  %v1472 = vsel %vm219, %v1469, %v1471
  %v1473 = vrot.slane %v44, 4
  %v1474 = vrot.slane %v45, 4
  %v1475 = vsel %vm219, %v1473, %v1474
  %v1476 = vrot.slane %v46, 4
  %v1477 = vsel %vm219, %v1474, %v1476
  %v1478 = vrot.slane %v47, 4
  %v1479 = vsel %vm219, %v1476, %v1478
  %v1480 = vrot.slane %v48, 4
  %v1481 = vrot.slane %v49, 4
  %v1482 = vsel %vm219, %v1480, %v1481
  %v1483 = vrot.slane %v50, 4
  %v1484 = vsel %vm219, %v1481, %v1483
  %v1485 = vrot.slane %v51, 4
  %v1486 = vsel %vm219, %v1483, %v1485
  %v1487 = vrot.slane %v52, 4
  %v1488 = vrot.slane %v53, 4
  %v1489 = vsel %vm219, %v1487, %v1488
  %v1490 = vrot.slane %v54, 4
  %v1491 = vsel %vm219, %v1488, %v1490
  %v1492 = vrot.slane %v55, 4
  %v1493 = vsel %vm219, %v1490, %v1492
  %v1494 = vrot.slane %v56, 4
  %v1495 = vrot.slane %v57, 4
  %v1496 = vsel %vm219, %v1494, %v1495
  %v1497 = vrot.slane %v58, 4
  %v1498 = vsel %vm219, %v1495, %v1497
  %v1499 = vrot.slane %v59, 4
  %v1500 = vsel %vm219, %v1497, %v1499
  %v1501 = vrot.slane %v60, 4
  %v1502 = vrot.slane %v61, 4
  %v1503 = vsel %vm219, %v1501, %v1502
  %v1504 = vrot.slane %v62, 4
  %v1505 = vsel %vm219, %v1502, %v1504
  %v1506 = vrot.slane %v63, 4
  %v1507 = vsel %vm219, %v1504, %v1506
  %s1508 = scalar_lea.vmem %s1, 256
  %v1509 = vld [vmem:[%s1508] sm:$0xff]
  %v1510 = vld [vmem:[%s1508 + $0x8] sm:$0xff]
  %v1511 = vld [vmem:[%s1508 + $0x10] sm:$0xff]
  %v1512 = vld [vmem:[%s1508 + $0x18] sm:$0xff]
  %v1513 = vld [vmem:[%s1508 + $0x20] sm:$0xff]
  %v1514 = vld [vmem:[%s1508 + $0x28] sm:$0xff]
  %v1515 = vld [vmem:[%s1508 + $0x30] sm:$0xf]
  %v1516 = vld [vmem:[%s1508 + $0x38] sm:$0xf]
  %v1517 = vsel %vm170, %v1454, 0
  %v1519 = vsel %vm170, %v1456, 0
  %v1521 = vsel %vm170, %v1458, 0
  %v1523 = vsel %vm170, %v1461, 0
  %v1525 = vsel %vm170, %v1463, 0
  %v1527 = vsel %vm170, %v1465, 0
  %v1529 = vsel %vm170, %v1468, 0
  %v1531 = vsel %vm170, %v1470, 0
  %v1533 = vsel %vm170, %v1472, 0
  %v1535 = vsel %vm170, %v1475, 0
  %v1537 = vsel %vm170, %v1477, 0
  %v1539 = vsel %vm170, %v1479, 0
  %v1541 = vsel %vm170, %v1482, 0
  %v1543 = vsel %vm170, %v1484, 0
  %v1545 = vsel %vm170, %v1486, 0
  %v1547 = vsel %vm170, %v1489, 0
  %v1549 = vsel %vm170, %v1491, 0
  %v1551 = vsel %vm170, %v1493, 0
  %v1553 = vsel %vm170, %v1496, 0
  %v1555 = vsel %vm170, %v1498, 0
  %v1557 = vsel %vm170, %v1500, 0
  %v1559 = vsel %vm170, %v1503, 0
  %v1561 = vsel %vm170, %v1505, 0
  %v1563 = vsel %vm170, %v1507, 0
  %v1566 = vsel %vm219, %v1515, 0
  %v1569 = vsel %vm219, %v1516, 0
  %1571 = vmatprep.subr.mxu0 0.0
  %1572 = vmatpush1.msra.mxu0 0.0
  %1573 = vmatprep.subr.mxu0 0.0
  %1574 = vmatpush1.msra.mxu0 0.0
  %1575 = vmatprep.subr.mxu0 0.0
  %1576 = vmatpush1.msra.mxu0 0.0
  %1577 = vmatprep.subr.mxu0 0.0
  %1578 = vmatpush1.msra.mxu0 0.0
  %1579 = vmatprep.subr.mxu0 0.0
  %1580 = vmatpush1.msra.mxu0 0.0
  %1581 = vmatprep.subr.mxu0 0.0
  %1582 = vmatpush1.msra.mxu0 0.0
  %1583 = vmatprep.subr.mxu0 0.0
  %1584 = vmatpush1.msra.mxu0 0.0
  %1585 = vmatprep.subr.mxu0 0.0
  %1586 = vmatpush1.msra.mxu0 0.0
  %1587 = vmatprep.subr.mxu0 0.0
  %1588 = vmatpush1.msra.mxu0 0.0
  %1589 = vmatprep.subr.mxu0 0.0
  %1590 = vmatpush1.msra.mxu0 0.0
  %1591 = vmatprep.subr.mxu0 0.0
  %1592 = vmatpush1.msra.mxu0 0.0
  %1593 = vmatprep.subr.mxu0 0.0
  %1594 = vmatpush1.msra.mxu0 0.0
  %1595 = vmatprep.subr.mxu0 %v1569
  %1596 = vmatpush1.msra.mxu0 %v1566
  %1597 = vmatprep.subr.mxu0 %v1514
  %1598 = vmatpush1.msra.mxu0 %v1513
  %1599 = vmatprep.subr.mxu0 %v1512
  %1600 = vmatpush1.msra.mxu0 %v1511
  %1601 = vmatprep.subr.mxu0 %v1510
  %1602 = vmatpush1.msra.mxu0 %v1509
  %1603 = vmatprep.subr.mxu0 0.0
  %1604 = vmatpush2.msra.mxu0 0.0
  %1605 = vmatprep.subr.mxu0 0.0
  %1606 = vmatpush2.msra.mxu0 0.0
  %1607 = vmatprep.subr.mxu0 0.0
  %1608 = vmatpush2.msra.mxu0 0.0
  %1609 = vmatprep.subr.mxu0 0.0
  %1610 = vmatpush2.msra.mxu0 0.0
  %1611 = vmatprep.subr.mxu0 0.0
  %1612 = vmatpush2.msra.mxu0 0.0
  %1613 = vmatprep.subr.mxu0 0.0
  %1614 = vmatpush2.msra.mxu0 0.0
  %1615 = vmatprep.subr.mxu0 0.0
  %1616 = vmatpush2.msra.mxu0 0.0
  %1617 = vmatprep.subr.mxu0 0.0
  %1618 = vmatpush2.msra.mxu0 0.0
  %1619 = vmatprep.subr.mxu0 0.0
  %1620 = vmatpush2.msra.mxu0 0.0
  %1621 = vmatprep.subr.mxu0 0.0
  %1622 = vmatpush2.msra.mxu0 0.0
  %1623 = vmatprep.subr.mxu0 0.0
  %1624 = vmatpush2.msra.mxu0 0.0
  %1625 = vmatprep.subr.mxu0 0.0
  %1626 = vmatpush2.msra.mxu0 0.0
  %1627 = vmatprep.subr.mxu0 0.0
  %1628 = vmatpush2.msra.mxu0 0.0
  %1629 = vmatprep.subr.mxu0 0.0
  %1630 = vmatpush2.msra.mxu0 0.0
  %1631 = vmatprep.subr.mxu0 0.0
  %1632 = vmatpush2.msra.mxu0 0.0
  %1633 = vmatprep.subr.mxu0 0.0
  %1634 = vmatpush2.msra.mxu0 0.0
  %1635 = vmatprep.mubr.f32.mxu0 0.0
  %1636 = vmatmul.mubr.f32.gmra.mxu0 %v1517
  %v1637 = vpop.f32.mrf.mxu0
  %v1638 = vadd.f32 0.0, %v1637
  %v1639 = vpop.f32.mrf.mxu0
  %v1640 = vadd.f32 0.0, %v1639
  %1641 = vmatprep.mubr.f32.mxu0 0.0
  %1642 = vmatmul.mubr.f32.gmra.mxu0 %v1519
  %v1643 = vpop.f32.mrf.mxu0
  %v1644 = vadd.f32 0.0, %v1643
  %v1645 = vpop.f32.mrf.mxu0
  %v1646 = vadd.f32 0.0, %v1645
  %1647 = vmatprep.mubr.f32.mxu0 0.0
  %1648 = vmatmul.mubr.f32.gmra.mxu0 %v1521
  %v1649 = vpop.f32.mrf.mxu0
  %v1650 = vadd.f32 0.0, %v1649
  %v1651 = vpop.f32.mrf.mxu0
  %v1652 = vadd.f32 0.0, %v1651
  %1653 = vmatprep.mubr.f32.mxu0 0.0
  %1654 = vmatmul.mubr.f32.gmra.mxu0 %v1523
  %v1655 = vpop.f32.mrf.mxu0
  %v1656 = vadd.f32 0.0, %v1655
  %v1657 = vpop.f32.mrf.mxu0
  %v1658 = vadd.f32 0.0, %v1657
  %1659 = vmatprep.mubr.f32.mxu0 0.0
  %1660 = vmatmul.mubr.f32.gmra.mxu0 %v1525
  %v1661 = vpop.f32.mrf.mxu0
  %v1662 = vadd.f32 0.0, %v1661
  %v1663 = vpop.f32.mrf.mxu0
  %v1664 = vadd.f32 0.0, %v1663
  %1665 = vmatprep.mubr.f32.mxu0 0.0
  %1666 = vmatmul.mubr.f32.gmra.mxu0 %v1527
  %v1667 = vpop.f32.mrf.mxu0
  %v1668 = vadd.f32 0.0, %v1667
  %v1669 = vpop.f32.mrf.mxu0
  %v1670 = vadd.f32 0.0, %v1669
  %1671 = vmatprep.mubr.f32.mxu0 0.0
  %1672 = vmatmul.mubr.f32.gmra.mxu0 %v1529
  %v1673 = vpop.f32.mrf.mxu0
  %v1674 = vadd.f32 0.0, %v1673
  %v1675 = vpop.f32.mrf.mxu0
  %v1676 = vadd.f32 0.0, %v1675
  %1677 = vmatprep.mubr.f32.mxu0 0.0
  %1678 = vmatmul.mubr.f32.gmra.mxu0 %v1531
  %v1679 = vpop.f32.mrf.mxu0
  %v1680 = vadd.f32 0.0, %v1679
  %v1681 = vpop.f32.mrf.mxu0
  %v1682 = vadd.f32 0.0, %v1681
  %1683 = vmatprep.mubr.f32.mxu0 0.0
  %1684 = vmatmul.mubr.f32.gmra.mxu0 %v1533
  %v1685 = vpop.f32.mrf.mxu0
  %v1686 = vadd.f32 0.0, %v1685
  %v1687 = vpop.f32.mrf.mxu0
  %v1688 = vadd.f32 0.0, %v1687
  %1689 = vmatprep.mubr.f32.mxu0 0.0
  %1690 = vmatmul.mubr.f32.gmra.mxu0 %v1535
  %v1691 = vpop.f32.mrf.mxu0
  %v1692 = vadd.f32 0.0, %v1691
  %v1693 = vpop.f32.mrf.mxu0
  %v1694 = vadd.f32 0.0, %v1693
  %1695 = vmatprep.mubr.f32.mxu0 0.0
  %1696 = vmatmul.mubr.f32.gmra.mxu0 %v1537
  %v1697 = vpop.f32.mrf.mxu0
  %v1698 = vadd.f32 0.0, %v1697
  %v1699 = vpop.f32.mrf.mxu0
  %v1700 = vadd.f32 0.0, %v1699
  %1701 = vmatprep.mubr.f32.mxu0 0.0
  %1702 = vmatmul.mubr.f32.gmra.mxu0 %v1539
  %v1703 = vpop.f32.mrf.mxu0
  %v1704 = vadd.f32 0.0, %v1703
  %v1705 = vpop.f32.mrf.mxu0
  %v1706 = vadd.f32 0.0, %v1705
  %1707 = vmatprep.mubr.f32.mxu0 0.0
  %1708 = vmatmul.mubr.f32.gmra.mxu0 %v1541
  %v1709 = vpop.f32.mrf.mxu0
  %v1710 = vadd.f32 0.0, %v1709
  %v1711 = vpop.f32.mrf.mxu0
  %v1712 = vadd.f32 0.0, %v1711
  %1713 = vmatprep.mubr.f32.mxu0 0.0
  %1714 = vmatmul.mubr.f32.gmra.mxu0 %v1543
  %v1715 = vpop.f32.mrf.mxu0
  %v1716 = vadd.f32 0.0, %v1715
  %v1717 = vpop.f32.mrf.mxu0
  %v1718 = vadd.f32 0.0, %v1717
  %1719 = vmatprep.mubr.f32.mxu0 0.0
  %1720 = vmatmul.mubr.f32.gmra.mxu0 %v1545
  %v1721 = vpop.f32.mrf.mxu0
  %v1722 = vadd.f32 0.0, %v1721
  %v1723 = vpop.f32.mrf.mxu0
  %v1724 = vadd.f32 0.0, %v1723
  %1725 = vmatprep.mubr.f32.mxu0 0.0
  %1726 = vmatmul.mubr.f32.gmra.mxu0 %v1547
  %v1727 = vpop.f32.mrf.mxu0
  %v1728 = vadd.f32 0.0, %v1727
  %v1729 = vpop.f32.mrf.mxu0
  %v1730 = vadd.f32 0.0, %v1729
  %1731 = vmatprep.mubr.f32.mxu0 0.0
  %1732 = vmatmul.mubr.f32.gmra.mxu0 %v1549
  %v1733 = vpop.f32.mrf.mxu0
  %v1734 = vadd.f32 0.0, %v1733
  %v1735 = vpop.f32.mrf.mxu0
  %v1736 = vadd.f32 0.0, %v1735
  %1737 = vmatprep.mubr.f32.mxu0 0.0
  %1738 = vmatmul.mubr.f32.gmra.mxu0 %v1551
  %v1739 = vpop.f32.mrf.mxu0
  %v1740 = vadd.f32 0.0, %v1739
  %v1741 = vpop.f32.mrf.mxu0
  %v1742 = vadd.f32 0.0, %v1741
  %1743 = vmatprep.mubr.f32.mxu0 0.0
  %1744 = vmatmul.mubr.f32.gmra.mxu0 %v1553
  %v1745 = vpop.f32.mrf.mxu0
  %v1746 = vadd.f32 0.0, %v1745
  %v1747 = vpop.f32.mrf.mxu0
  %v1748 = vadd.f32 0.0, %v1747
  %1749 = vmatprep.mubr.f32.mxu0 0.0
  %1750 = vmatmul.mubr.f32.gmra.mxu0 %v1555
  %v1751 = vpop.f32.mrf.mxu0
  %v1752 = vadd.f32 0.0, %v1751
  %v1753 = vpop.f32.mrf.mxu0
  %v1754 = vadd.f32 0.0, %v1753
  %1755 = vmatprep.mubr.f32.mxu0 0.0
  %1756 = vmatmul.mubr.f32.gmra.mxu0 %v1557
  %v1757 = vpop.f32.mrf.mxu0
  %v1758 = vadd.f32 0.0, %v1757
  %v1759 = vpop.f32.mrf.mxu0
  %v1760 = vadd.f32 0.0, %v1759
  %1761 = vmatprep.mubr.f32.mxu0 0.0
  %1762 = vmatmul.mubr.f32.gmra.mxu0 %v1559
  %v1763 = vpop.f32.mrf.mxu0
  %v1764 = vadd.f32 0.0, %v1763
  %v1765 = vpop.f32.mrf.mxu0
  %v1766 = vadd.f32 0.0, %v1765
  %1767 = vmatprep.mubr.f32.mxu0 0.0
  %1768 = vmatmul.mubr.f32.gmra.mxu0 %v1561
  %v1769 = vpop.f32.mrf.mxu0
  %v1770 = vadd.f32 0.0, %v1769
  %v1771 = vpop.f32.mrf.mxu0
  %v1772 = vadd.f32 0.0, %v1771
  %1773 = vmatprep.mubr.f32.mxu0 0.0
  %1774 = vmatmul.mubr.f32.gmra.mxu0 %v1563
  %v1775 = vpop.f32.mrf.mxu0
  %v1776 = vadd.f32 0.0, %v1775
  %v1777 = vpop.f32.mrf.mxu0
  %v1778 = vadd.f32 0.0, %v1777
  %1779 = vdwg.mxu0
  %v1780 = vadd.f32 %v1404, %v1638
  %v1781 = vadd.f32 %v1405, %v1640
  %v1782 = vadd.f32 %v1406, %v1644
  %v1783 = vadd.f32 %v1407, %v1646
  %v1784 = vadd.f32 %v1408, %v1650
  %v1785 = vadd.f32 %v1409, %v1652
  %v1786 = vadd.f32 %v1410, %v1656
  %v1787 = vadd.f32 %v1411, %v1658
  %v1788 = vadd.f32 %v1412, %v1662
  %v1789 = vadd.f32 %v1413, %v1664
  %v1790 = vadd.f32 %v1414, %v1668
  %v1791 = vadd.f32 %v1415, %v1670
  %v1792 = vadd.f32 %v1416, %v1674
  %v1793 = vadd.f32 %v1417, %v1676
  %v1794 = vadd.f32 %v1418, %v1680
  %v1795 = vadd.f32 %v1419, %v1682
  %v1796 = vadd.f32 %v1420, %v1686
  %v1797 = vadd.f32 %v1421, %v1688
  %v1798 = vadd.f32 %v1422, %v1692
  %v1799 = vadd.f32 %v1423, %v1694
  %v1800 = vadd.f32 %v1424, %v1698
  %v1801 = vadd.f32 %v1425, %v1700
  %v1802 = vadd.f32 %v1426, %v1704
  %v1803 = vadd.f32 %v1427, %v1706
  %v1804 = vadd.f32 %v1428, %v1710
  %v1805 = vadd.f32 %v1429, %v1712
  %v1806 = vadd.f32 %v1430, %v1716
  %v1807 = vadd.f32 %v1431, %v1718
  %v1808 = vadd.f32 %v1432, %v1722
  %v1809 = vadd.f32 %v1433, %v1724
  %v1810 = vadd.f32 %v1434, %v1728
  %v1811 = vadd.f32 %v1435, %v1730
  %v1812 = vadd.f32 %v1436, %v1734
  %v1813 = vadd.f32 %v1437, %v1736
  %v1814 = vadd.f32 %v1438, %v1740
  %v1815 = vadd.f32 %v1439, %v1742
  %v1816 = vadd.f32 %v1440, %v1746
  %v1817 = vadd.f32 %v1441, %v1748
  %v1818 = vadd.f32 %v1442, %v1752
  %v1819 = vadd.f32 %v1443, %v1754
  %v1820 = vadd.f32 %v1444, %v1758
  %v1821 = vadd.f32 %v1445, %v1760
  %v1822 = vadd.f32 %v1446, %v1764
  %v1823 = vadd.f32 %v1447, %v1766
  %v1824 = vadd.f32 %v1448, %v1770
  %v1825 = vadd.f32 %v1449, %v1772
  %v1826 = vadd.f32 %v1450, %v1776
  %v1827 = vadd.f32 %v1451, %v1778
  %v1828 = vld [vmem:[%s2] sm:$0x3]
  %v1830 = vlaneseq
  %v1831 = vshrl.u32 %v1830, 7
  %v1832 = vsub.s32 0, %v1831
  %v1833 = vrot.slane %v1828, %v1832
  %v1834 = vlaneseq
  %v1835 = vshrl.u32 %v1834, 7
  %v1836 = vsub.s32 1, %v1835
  %v1837 = vrot.slane %v1828, %v1836
  %v1840 = vadd.f32 %v1780, %v1833
  %v1841 = vadd.f32 %v1781, %v1837
  %v1842 = vadd.f32 %v1782, %v1833
  %v1843 = vadd.f32 %v1783, %v1837
  %v1844 = vadd.f32 %v1784, %v1833
  %v1845 = vadd.f32 %v1785, %v1837
  %v1846 = vadd.f32 %v1786, %v1833
  %v1847 = vadd.f32 %v1787, %v1837
  %v1848 = vadd.f32 %v1788, %v1833
  %v1849 = vadd.f32 %v1789, %v1837
  %v1850 = vadd.f32 %v1790, %v1833
  %v1851 = vadd.f32 %v1791, %v1837
  %v1852 = vadd.f32 %v1792, %v1833
  %v1853 = vadd.f32 %v1793, %v1837
  %v1854 = vadd.f32 %v1794, %v1833
  %v1855 = vadd.f32 %v1795, %v1837
  %v1856 = vadd.f32 %v1796, %v1833
  %v1857 = vadd.f32 %v1797, %v1837
  %v1858 = vadd.f32 %v1798, %v1833
  %v1859 = vadd.f32 %v1799, %v1837
  %v1860 = vadd.f32 %v1800, %v1833
  %v1861 = vadd.f32 %v1801, %v1837
  %v1862 = vadd.f32 %v1802, %v1833
  %v1863 = vadd.f32 %v1803, %v1837
  %v1864 = vadd.f32 %v1804, %v1833
  %v1865 = vadd.f32 %v1805, %v1837
  %v1866 = vadd.f32 %v1806, %v1833
  %v1867 = vadd.f32 %v1807, %v1837
  %v1868 = vadd.f32 %v1808, %v1833
  %v1869 = vadd.f32 %v1809, %v1837
  %v1870 = vadd.f32 %v1810, %v1833
  %v1871 = vadd.f32 %v1811, %v1837
  %v1872 = vadd.f32 %v1812, %v1833
  %v1873 = vadd.f32 %v1813, %v1837
  %v1874 = vadd.f32 %v1814, %v1833
  %v1875 = vadd.f32 %v1815, %v1837
  %v1876 = vadd.f32 %v1816, %v1833
  %v1877 = vadd.f32 %v1817, %v1837
  %v1878 = vadd.f32 %v1818, %v1833
  %v1879 = vadd.f32 %v1819, %v1837
  %v1880 = vadd.f32 %v1820, %v1833
  %v1881 = vadd.f32 %v1821, %v1837
  %v1882 = vadd.f32 %v1822, %v1833
  %v1883 = vadd.f32 %v1823, %v1837
  %v1884 = vadd.f32 %v1824, %v1833
  %v1885 = vadd.f32 %v1825, %v1837
  %v1886 = vadd.f32 %v1826, %v1833
  %v1887 = vadd.f32 %v1827, %v1837
  %v1936 = vcombine.low %v1840, %v1841
  %v1937 = vcombine.high %v1840, %v1841
  %v1939 = vunpack.c.l.s4 1983009808
  %v1940 = vunpack.c.0.s8 %v1939
  %v1941 = vlaneseq
  %v1942 = vshrl.u32 %v1941, 7
  %v1943 = vsub.s32 %v1940, %v1942
  %v1944 = vrot.slane %v1936, %v1943
  %v1946 = vunpack.c.l.s4 1983009808
  %v1947 = vunpack.c.0.s8 %v1946
  %v1948 = vlaneseq
  %v1949 = vshrl.u32 %v1948, 7
  %v1950 = vsub.s32 %v1947, %v1949
  %v1951 = vrot.slane %v1937, %v1950
  %v1952 = vcombine.high %v1944, %v1944
  %v1953 = vcombine.high %v1951, %v1951
  %v1954 = vcombine.low %v1842, %v1843
  %v1955 = vcombine.high %v1842, %v1843
  %v1957 = vunpack.c.l.s4 1983009808
  %v1958 = vunpack.c.0.s8 %v1957
  %v1959 = vlaneseq
  %v1960 = vshrl.u32 %v1959, 7
  %v1961 = vsub.s32 %v1958, %v1960
  %v1962 = vrot.slane %v1954, %v1961
  %v1964 = vunpack.c.l.s4 1983009808
  %v1965 = vunpack.c.0.s8 %v1964
  %v1966 = vlaneseq
  %v1967 = vshrl.u32 %v1966, 7
  %v1968 = vsub.s32 %v1965, %v1967
  %v1969 = vrot.slane %v1955, %v1968
  %v1970 = vcombine.high %v1962, %v1962
  %v1971 = vcombine.high %v1969, %v1969
  %v1972 = vcombine.low %v1844, %v1845
  %v1973 = vcombine.high %v1844, %v1845
  %v1975 = vunpack.c.l.s4 1983009808
  %v1976 = vunpack.c.0.s8 %v1975
  %v1977 = vlaneseq
  %v1978 = vshrl.u32 %v1977, 7
  %v1979 = vsub.s32 %v1976, %v1978
  %v1980 = vrot.slane %v1972, %v1979
  %v1982 = vunpack.c.l.s4 1983009808
  %v1983 = vunpack.c.0.s8 %v1982
  %v1984 = vlaneseq
  %v1985 = vshrl.u32 %v1984, 7
  %v1986 = vsub.s32 %v1983, %v1985
  %v1987 = vrot.slane %v1973, %v1986
  %v1988 = vcombine.high %v1980, %v1980
  %v1989 = vcombine.high %v1987, %v1987
  %v1990 = vcombine.low %v1846, %v1847
  %v1991 = vcombine.high %v1846, %v1847
  %v1993 = vunpack.c.l.s4 1983009808
  %v1994 = vunpack.c.0.s8 %v1993
  %v1995 = vlaneseq
  %v1996 = vshrl.u32 %v1995, 7
  %v1997 = vsub.s32 %v1994, %v1996
  %v1998 = vrot.slane %v1990, %v1997
  %v2000 = vunpack.c.l.s4 1983009808
  %v2001 = vunpack.c.0.s8 %v2000
  %v2002 = vlaneseq
  %v2003 = vshrl.u32 %v2002, 7
  %v2004 = vsub.s32 %v2001, %v2003
  %v2005 = vrot.slane %v1991, %v2004
  %v2006 = vcombine.high %v1998, %v1998
  %v2007 = vcombine.high %v2005, %v2005
  %v2008 = vcombine.low %v1848, %v1849
  %v2009 = vcombine.high %v1848, %v1849
  %v2011 = vunpack.c.l.s4 1983009808
  %v2012 = vunpack.c.0.s8 %v2011
  %v2013 = vlaneseq
  %v2014 = vshrl.u32 %v2013, 7
  %v2015 = vsub.s32 %v2012, %v2014
  %v2016 = vrot.slane %v2008, %v2015
  %v2018 = vunpack.c.l.s4 1983009808
  %v2019 = vunpack.c.0.s8 %v2018
  %v2020 = vlaneseq
  %v2021 = vshrl.u32 %v2020, 7
  %v2022 = vsub.s32 %v2019, %v2021
  %v2023 = vrot.slane %v2009, %v2022
  %v2024 = vcombine.high %v2016, %v2016
  %v2025 = vcombine.high %v2023, %v2023
  %v2026 = vcombine.low %v1850, %v1851
  %v2027 = vcombine.high %v1850, %v1851
  %v2029 = vunpack.c.l.s4 1983009808
  %v2030 = vunpack.c.0.s8 %v2029
  %v2031 = vlaneseq
  %v2032 = vshrl.u32 %v2031, 7
  %v2033 = vsub.s32 %v2030, %v2032
  %v2034 = vrot.slane %v2026, %v2033
  %v2036 = vunpack.c.l.s4 1983009808
  %v2037 = vunpack.c.0.s8 %v2036
  %v2038 = vlaneseq
  %v2039 = vshrl.u32 %v2038, 7
  %v2040 = vsub.s32 %v2037, %v2039
  %v2041 = vrot.slane %v2027, %v2040
  %v2042 = vcombine.high %v2034, %v2034
  %v2043 = vcombine.high %v2041, %v2041
  %v2044 = vcombine.low %v1852, %v1853
  %v2045 = vcombine.high %v1852, %v1853
  %v2047 = vunpack.c.l.s4 1983009808
  %v2048 = vunpack.c.0.s8 %v2047
  %v2049 = vlaneseq
  %v2050 = vshrl.u32 %v2049, 7
  %v2051 = vsub.s32 %v2048, %v2050
  %v2052 = vrot.slane %v2044, %v2051
  %v2054 = vunpack.c.l.s4 1983009808
  %v2055 = vunpack.c.0.s8 %v2054
  %v2056 = vlaneseq
  %v2057 = vshrl.u32 %v2056, 7
  %v2058 = vsub.s32 %v2055, %v2057
  %v2059 = vrot.slane %v2045, %v2058
  %v2060 = vcombine.high %v2052, %v2052
  %v2061 = vcombine.high %v2059, %v2059
  %v2062 = vcombine.low %v1854, %v1855
  %v2063 = vcombine.high %v1854, %v1855
  %v2065 = vunpack.c.l.s4 1983009808
  %v2066 = vunpack.c.0.s8 %v2065
  %v2067 = vlaneseq
  %v2068 = vshrl.u32 %v2067, 7
  %v2069 = vsub.s32 %v2066, %v2068
  %v2070 = vrot.slane %v2062, %v2069
  %v2072 = vunpack.c.l.s4 1983009808
  %v2073 = vunpack.c.0.s8 %v2072
  %v2074 = vlaneseq
  %v2075 = vshrl.u32 %v2074, 7
  %v2076 = vsub.s32 %v2073, %v2075
  %v2077 = vrot.slane %v2063, %v2076
  %v2078 = vcombine.high %v2070, %v2070
  %v2079 = vcombine.high %v2077, %v2077
  %v2080 = vcombine.low %v1856, %v1857
  %v2081 = vcombine.high %v1856, %v1857
  %v2083 = vunpack.c.l.s4 1983009808
  %v2084 = vunpack.c.0.s8 %v2083
  %v2085 = vlaneseq
  %v2086 = vshrl.u32 %v2085, 7
  %v2087 = vsub.s32 %v2084, %v2086
  %v2088 = vrot.slane %v2080, %v2087
  %v2090 = vunpack.c.l.s4 1983009808
  %v2091 = vunpack.c.0.s8 %v2090
  %v2092 = vlaneseq
  %v2093 = vshrl.u32 %v2092, 7
  %v2094 = vsub.s32 %v2091, %v2093
  %v2095 = vrot.slane %v2081, %v2094
  %v2096 = vcombine.high %v2088, %v2088
  %v2097 = vcombine.high %v2095, %v2095
  %v2098 = vcombine.low %v1858, %v1859
  %v2099 = vcombine.high %v1858, %v1859
  %v2101 = vunpack.c.l.s4 1983009808
  %v2102 = vunpack.c.0.s8 %v2101
  %v2103 = vlaneseq
  %v2104 = vshrl.u32 %v2103, 7
  %v2105 = vsub.s32 %v2102, %v2104
  %v2106 = vrot.slane %v2098, %v2105
  %v2108 = vunpack.c.l.s4 1983009808
  %v2109 = vunpack.c.0.s8 %v2108
  %v2110 = vlaneseq
  %v2111 = vshrl.u32 %v2110, 7
  %v2112 = vsub.s32 %v2109, %v2111
  %v2113 = vrot.slane %v2099, %v2112
  %v2114 = vcombine.high %v2106, %v2106
  %v2115 = vcombine.high %v2113, %v2113
  %v2116 = vcombine.low %v1860, %v1861
  %v2117 = vcombine.high %v1860, %v1861
  %v2119 = vunpack.c.l.s4 1983009808
  %v2120 = vunpack.c.0.s8 %v2119
  %v2121 = vlaneseq
  %v2122 = vshrl.u32 %v2121, 7
  %v2123 = vsub.s32 %v2120, %v2122
  %v2124 = vrot.slane %v2116, %v2123
  %v2126 = vunpack.c.l.s4 1983009808
  %v2127 = vunpack.c.0.s8 %v2126
  %v2128 = vlaneseq
  %v2129 = vshrl.u32 %v2128, 7
  %v2130 = vsub.s32 %v2127, %v2129
  %v2131 = vrot.slane %v2117, %v2130
  %v2132 = vcombine.high %v2124, %v2124
  %v2133 = vcombine.high %v2131, %v2131
  %v2134 = vcombine.low %v1862, %v1863
  %v2135 = vcombine.high %v1862, %v1863
  %v2137 = vunpack.c.l.s4 1983009808
  %v2138 = vunpack.c.0.s8 %v2137
  %v2139 = vlaneseq
  %v2140 = vshrl.u32 %v2139, 7
  %v2141 = vsub.s32 %v2138, %v2140
  %v2142 = vrot.slane %v2134, %v2141
  %v2144 = vunpack.c.l.s4 1983009808
  %v2145 = vunpack.c.0.s8 %v2144
  %v2146 = vlaneseq
  %v2147 = vshrl.u32 %v2146, 7
  %v2148 = vsub.s32 %v2145, %v2147
  %v2149 = vrot.slane %v2135, %v2148
  %v2150 = vcombine.high %v2142, %v2142
  %v2151 = vcombine.high %v2149, %v2149
  %v2152 = vcombine.low %v1864, %v1865
  %v2153 = vcombine.high %v1864, %v1865
  %v2155 = vunpack.c.l.s4 1983009808
  %v2156 = vunpack.c.0.s8 %v2155
  %v2157 = vlaneseq
  %v2158 = vshrl.u32 %v2157, 7
  %v2159 = vsub.s32 %v2156, %v2158
  %v2160 = vrot.slane %v2152, %v2159
  %v2162 = vunpack.c.l.s4 1983009808
  %v2163 = vunpack.c.0.s8 %v2162
  %v2164 = vlaneseq
  %v2165 = vshrl.u32 %v2164, 7
  %v2166 = vsub.s32 %v2163, %v2165
  %v2167 = vrot.slane %v2153, %v2166
  %v2168 = vcombine.high %v2160, %v2160
  %v2169 = vcombine.high %v2167, %v2167
  %v2170 = vcombine.low %v1866, %v1867
  %v2171 = vcombine.high %v1866, %v1867
  %v2173 = vunpack.c.l.s4 1983009808
  %v2174 = vunpack.c.0.s8 %v2173
  %v2175 = vlaneseq
  %v2176 = vshrl.u32 %v2175, 7
  %v2177 = vsub.s32 %v2174, %v2176
  %v2178 = vrot.slane %v2170, %v2177
  %v2180 = vunpack.c.l.s4 1983009808
  %v2181 = vunpack.c.0.s8 %v2180
  %v2182 = vlaneseq
  %v2183 = vshrl.u32 %v2182, 7
  %v2184 = vsub.s32 %v2181, %v2183
  %v2185 = vrot.slane %v2171, %v2184
  %v2186 = vcombine.high %v2178, %v2178
  %v2187 = vcombine.high %v2185, %v2185
  %v2188 = vcombine.low %v1868, %v1869
  %v2189 = vcombine.high %v1868, %v1869
  %v2191 = vunpack.c.l.s4 1983009808
  %v2192 = vunpack.c.0.s8 %v2191
  %v2193 = vlaneseq
  %v2194 = vshrl.u32 %v2193, 7
  %v2195 = vsub.s32 %v2192, %v2194
  %v2196 = vrot.slane %v2188, %v2195
  %v2198 = vunpack.c.l.s4 1983009808
  %v2199 = vunpack.c.0.s8 %v2198
  %v2200 = vlaneseq
  %v2201 = vshrl.u32 %v2200, 7
  %v2202 = vsub.s32 %v2199, %v2201
  %v2203 = vrot.slane %v2189, %v2202
  %v2204 = vcombine.high %v2196, %v2196
  %v2205 = vcombine.high %v2203, %v2203
  %v2206 = vcombine.low %v1870, %v1871
  %v2207 = vcombine.high %v1870, %v1871
  %v2209 = vunpack.c.l.s4 1983009808
  %v2210 = vunpack.c.0.s8 %v2209
  %v2211 = vlaneseq
  %v2212 = vshrl.u32 %v2211, 7
  %v2213 = vsub.s32 %v2210, %v2212
  %v2214 = vrot.slane %v2206, %v2213
  %v2216 = vunpack.c.l.s4 1983009808
  %v2217 = vunpack.c.0.s8 %v2216
  %v2218 = vlaneseq
  %v2219 = vshrl.u32 %v2218, 7
  %v2220 = vsub.s32 %v2217, %v2219
  %v2221 = vrot.slane %v2207, %v2220
  %v2222 = vcombine.high %v2214, %v2214
  %v2223 = vcombine.high %v2221, %v2221
  %v2224 = vcombine.low %v1872, %v1873
  %v2225 = vcombine.high %v1872, %v1873
  %v2227 = vunpack.c.l.s4 1983009808
  %v2228 = vunpack.c.0.s8 %v2227
  %v2229 = vlaneseq
  %v2230 = vshrl.u32 %v2229, 7
  %v2231 = vsub.s32 %v2228, %v2230
  %v2232 = vrot.slane %v2224, %v2231
  %v2234 = vunpack.c.l.s4 1983009808
  %v2235 = vunpack.c.0.s8 %v2234
  %v2236 = vlaneseq
  %v2237 = vshrl.u32 %v2236, 7
  %v2238 = vsub.s32 %v2235, %v2237
  %v2239 = vrot.slane %v2225, %v2238
  %v2240 = vcombine.high %v2232, %v2232
  %v2241 = vcombine.high %v2239, %v2239
  %v2242 = vcombine.low %v1874, %v1875
  %v2243 = vcombine.high %v1874, %v1875
  %v2245 = vunpack.c.l.s4 1983009808
  %v2246 = vunpack.c.0.s8 %v2245
  %v2247 = vlaneseq
  %v2248 = vshrl.u32 %v2247, 7
  %v2249 = vsub.s32 %v2246, %v2248
  %v2250 = vrot.slane %v2242, %v2249
  %v2252 = vunpack.c.l.s4 1983009808
  %v2253 = vunpack.c.0.s8 %v2252
  %v2254 = vlaneseq
  %v2255 = vshrl.u32 %v2254, 7
  %v2256 = vsub.s32 %v2253, %v2255
  %v2257 = vrot.slane %v2243, %v2256
  %v2258 = vcombine.high %v2250, %v2250
  %v2259 = vcombine.high %v2257, %v2257
  %v2260 = vcombine.low %v1876, %v1877
  %v2261 = vcombine.high %v1876, %v1877
  %v2263 = vunpack.c.l.s4 1983009808
  %v2264 = vunpack.c.0.s8 %v2263
  %v2265 = vlaneseq
  %v2266 = vshrl.u32 %v2265, 7
  %v2267 = vsub.s32 %v2264, %v2266
  %v2268 = vrot.slane %v2260, %v2267
  %v2270 = vunpack.c.l.s4 1983009808
  %v2271 = vunpack.c.0.s8 %v2270
  %v2272 = vlaneseq
  %v2273 = vshrl.u32 %v2272, 7
  %v2274 = vsub.s32 %v2271, %v2273
  %v2275 = vrot.slane %v2261, %v2274
  %v2276 = vcombine.high %v2268, %v2268
  %v2277 = vcombine.high %v2275, %v2275
  %v2278 = vcombine.low %v1878, %v1879
  %v2279 = vcombine.high %v1878, %v1879
  %v2281 = vunpack.c.l.s4 1983009808
  %v2282 = vunpack.c.0.s8 %v2281
  %v2283 = vlaneseq
  %v2284 = vshrl.u32 %v2283, 7
  %v2285 = vsub.s32 %v2282, %v2284
  %v2286 = vrot.slane %v2278, %v2285
  %v2288 = vunpack.c.l.s4 1983009808
  %v2289 = vunpack.c.0.s8 %v2288
  %v2290 = vlaneseq
  %v2291 = vshrl.u32 %v2290, 7
  %v2292 = vsub.s32 %v2289, %v2291
  %v2293 = vrot.slane %v2279, %v2292
  %v2294 = vcombine.high %v2286, %v2286
  %v2295 = vcombine.high %v2293, %v2293
  %v2296 = vcombine.low %v1880, %v1881
  %v2297 = vcombine.high %v1880, %v1881
  %v2299 = vunpack.c.l.s4 1983009808
  %v2300 = vunpack.c.0.s8 %v2299
  %v2301 = vlaneseq
  %v2302 = vshrl.u32 %v2301, 7
  %v2303 = vsub.s32 %v2300, %v2302
  %v2304 = vrot.slane %v2296, %v2303
  %v2306 = vunpack.c.l.s4 1983009808
  %v2307 = vunpack.c.0.s8 %v2306
  %v2308 = vlaneseq
  %v2309 = vshrl.u32 %v2308, 7
  %v2310 = vsub.s32 %v2307, %v2309
  %v2311 = vrot.slane %v2297, %v2310
  %v2312 = vcombine.high %v2304, %v2304
  %v2313 = vcombine.high %v2311, %v2311
  %v2314 = vcombine.low %v1882, %v1883
  %v2315 = vcombine.high %v1882, %v1883
  %v2317 = vunpack.c.l.s4 1983009808
  %v2318 = vunpack.c.0.s8 %v2317
  %v2319 = vlaneseq
  %v2320 = vshrl.u32 %v2319, 7
  %v2321 = vsub.s32 %v2318, %v2320
  %v2322 = vrot.slane %v2314, %v2321
  %v2324 = vunpack.c.l.s4 1983009808
  %v2325 = vunpack.c.0.s8 %v2324
  %v2326 = vlaneseq
  %v2327 = vshrl.u32 %v2326, 7
  %v2328 = vsub.s32 %v2325, %v2327
  %v2329 = vrot.slane %v2315, %v2328
  %v2330 = vcombine.high %v2322, %v2322
  %v2331 = vcombine.high %v2329, %v2329
  %v2332 = vcombine.low %v1884, %v1885
  %v2333 = vcombine.high %v1884, %v1885
  %v2335 = vunpack.c.l.s4 1983009808
  %v2336 = vunpack.c.0.s8 %v2335
  %v2337 = vlaneseq
  %v2338 = vshrl.u32 %v2337, 7
  %v2339 = vsub.s32 %v2336, %v2338
  %v2340 = vrot.slane %v2332, %v2339
  %v2342 = vunpack.c.l.s4 1983009808
  %v2343 = vunpack.c.0.s8 %v2342
  %v2344 = vlaneseq
  %v2345 = vshrl.u32 %v2344, 7
  %v2346 = vsub.s32 %v2343, %v2345
  %v2347 = vrot.slane %v2333, %v2346
  %v2348 = vcombine.high %v2340, %v2340
  %v2349 = vcombine.high %v2347, %v2347
  %v2350 = vcombine.low %v1886, %v1887
  %v2351 = vcombine.high %v1886, %v1887
  %v2353 = vunpack.c.l.s4 1983009808
  %v2354 = vunpack.c.0.s8 %v2353
  %v2355 = vlaneseq
  %v2356 = vshrl.u32 %v2355, 7
  %v2357 = vsub.s32 %v2354, %v2356
  %v2358 = vrot.slane %v2350, %v2357
  %v2360 = vunpack.c.l.s4 1983009808
  %v2361 = vunpack.c.0.s8 %v2360
  %v2362 = vlaneseq
  %v2363 = vshrl.u32 %v2362, 7
  %v2364 = vsub.s32 %v2361, %v2363
  %v2365 = vrot.slane %v2351, %v2364
  %v2366 = vcombine.high %v2358, %v2358
  %v2367 = vcombine.high %v2365, %v2365
  %v2464 = vrot.slane %v1944, 7
  %v2465 = vrot.slane %v2464, 2
  %v2466 = vrot.slane %v1952, 7
  %v2467 = vrot.slane %v2466, 2
  %v2468 = vrot.slane %v1951, 7
  %v2469 = vrot.slane %v2468, 2
  %v2470 = vrot.slane %v1953, 7
  %v2471 = vrot.slane %v2470, 2
  %v2472 = vrot.slane %v1962, 7
  %v2473 = vrot.slane %v2472, 2
  %v2474 = vrot.slane %v1970, 7
  %v2475 = vrot.slane %v2474, 2
  %v2476 = vrot.slane %v1969, 7
  %v2477 = vrot.slane %v2476, 2
  %v2478 = vrot.slane %v1971, 7
  %v2479 = vrot.slane %v2478, 2
  %v2480 = vrot.slane %v1980, 7
  %v2481 = vrot.slane %v2480, 2
  %v2482 = vrot.slane %v1988, 7
  %v2483 = vrot.slane %v2482, 2
  %v2484 = vrot.slane %v1987, 7
  %v2485 = vrot.slane %v2484, 2
  %v2486 = vrot.slane %v1989, 7
  %v2487 = vrot.slane %v2486, 2
  %v2488 = vrot.slane %v1998, 7
  %v2489 = vrot.slane %v2488, 2
  %v2490 = vrot.slane %v2006, 7
  %v2491 = vrot.slane %v2490, 2
  %v2492 = vrot.slane %v2005, 7
  %v2493 = vrot.slane %v2492, 2
  %v2494 = vrot.slane %v2007, 7
  %v2495 = vrot.slane %v2494, 2
  %v2496 = vrot.slane %v2016, 7
  %v2497 = vrot.slane %v2496, 2
  %v2498 = vrot.slane %v2024, 7
  %v2499 = vrot.slane %v2498, 2
  %v2500 = vrot.slane %v2023, 7
  %v2501 = vrot.slane %v2500, 2
  %v2502 = vrot.slane %v2025, 7
  %v2503 = vrot.slane %v2502, 2
  %v2504 = vrot.slane %v2034, 7
  %v2505 = vrot.slane %v2504, 2
  %v2506 = vrot.slane %v2042, 7
  %v2507 = vrot.slane %v2506, 2
  %v2508 = vrot.slane %v2041, 7
  %v2509 = vrot.slane %v2508, 2
  %v2510 = vrot.slane %v2043, 7
  %v2511 = vrot.slane %v2510, 2
  %v2512 = vrot.slane %v2052, 7
  %v2513 = vrot.slane %v2512, 2
  %v2514 = vrot.slane %v2060, 7
  %v2515 = vrot.slane %v2514, 2
  %v2516 = vrot.slane %v2059, 7
  %v2517 = vrot.slane %v2516, 2
  %v2518 = vrot.slane %v2061, 7
  %v2519 = vrot.slane %v2518, 2
  %v2520 = vrot.slane %v2070, 7
  %v2521 = vrot.slane %v2520, 2
  %v2522 = vrot.slane %v2078, 7
  %v2523 = vrot.slane %v2522, 2
  %v2524 = vrot.slane %v2077, 7
  %v2525 = vrot.slane %v2524, 2
  %v2526 = vrot.slane %v2079, 7
  %v2527 = vrot.slane %v2526, 2
  %v2528 = vrot.slane %v2088, 7
  %v2529 = vrot.slane %v2528, 2
  %v2530 = vrot.slane %v2096, 7
  %v2531 = vrot.slane %v2530, 2
  %v2532 = vrot.slane %v2095, 7
  %v2533 = vrot.slane %v2532, 2
  %v2534 = vrot.slane %v2097, 7
  %v2535 = vrot.slane %v2534, 2
  %v2536 = vrot.slane %v2106, 7
  %v2537 = vrot.slane %v2536, 2
  %v2538 = vrot.slane %v2114, 7
  %v2539 = vrot.slane %v2538, 2
  %v2540 = vrot.slane %v2113, 7
  %v2541 = vrot.slane %v2540, 2
  %v2542 = vrot.slane %v2115, 7
  %v2543 = vrot.slane %v2542, 2
  %v2544 = vrot.slane %v2124, 7
  %v2545 = vrot.slane %v2544, 2
  %v2546 = vrot.slane %v2132, 7
  %v2547 = vrot.slane %v2546, 2
  %v2548 = vrot.slane %v2131, 7
  %v2549 = vrot.slane %v2548, 2
  %v2550 = vrot.slane %v2133, 7
  %v2551 = vrot.slane %v2550, 2
  %v2552 = vrot.slane %v2142, 7
  %v2553 = vrot.slane %v2552, 2
  %v2554 = vrot.slane %v2150, 7
  %v2555 = vrot.slane %v2554, 2
  %v2556 = vrot.slane %v2149, 7
  %v2557 = vrot.slane %v2556, 2
  %v2558 = vrot.slane %v2151, 7
  %v2559 = vrot.slane %v2558, 2
  %v2560 = vrot.slane %v2160, 7
  %v2561 = vrot.slane %v2560, 2
  %v2562 = vrot.slane %v2168, 7
  %v2563 = vrot.slane %v2562, 2
  %v2564 = vrot.slane %v2167, 7
  %v2565 = vrot.slane %v2564, 2
  %v2566 = vrot.slane %v2169, 7
  %v2567 = vrot.slane %v2566, 2
  %v2568 = vrot.slane %v2178, 7
  %v2569 = vrot.slane %v2568, 2
  %v2570 = vrot.slane %v2186, 7
  %v2571 = vrot.slane %v2570, 2
  %v2572 = vrot.slane %v2185, 7
  %v2573 = vrot.slane %v2572, 2
  %v2574 = vrot.slane %v2187, 7
  %v2575 = vrot.slane %v2574, 2
  %v2576 = vrot.slane %v2196, 7
  %v2577 = vrot.slane %v2576, 2
  %v2578 = vrot.slane %v2204, 7
  %v2579 = vrot.slane %v2578, 2
  %v2580 = vrot.slane %v2203, 7
  %v2581 = vrot.slane %v2580, 2
  %v2582 = vrot.slane %v2205, 7
  %v2583 = vrot.slane %v2582, 2
  %v2584 = vrot.slane %v2214, 7
  %v2585 = vrot.slane %v2584, 2
  %v2586 = vrot.slane %v2222, 7
  %v2587 = vrot.slane %v2586, 2
  %v2588 = vrot.slane %v2221, 7
  %v2589 = vrot.slane %v2588, 2
  %v2590 = vrot.slane %v2223, 7
  %v2591 = vrot.slane %v2590, 2
  %v2592 = vrot.slane %v2232, 7
  %v2593 = vrot.slane %v2592, 2
  %v2594 = vrot.slane %v2240, 7
  %v2595 = vrot.slane %v2594, 2
  %v2596 = vrot.slane %v2239, 7
  %v2597 = vrot.slane %v2596, 2
  %v2598 = vrot.slane %v2241, 7
  %v2599 = vrot.slane %v2598, 2
  %v2600 = vrot.slane %v2250, 7
  %v2601 = vrot.slane %v2600, 2
  %v2602 = vrot.slane %v2258, 7
  %v2603 = vrot.slane %v2602, 2
  %v2604 = vrot.slane %v2257, 7
  %v2605 = vrot.slane %v2604, 2
  %v2606 = vrot.slane %v2259, 7
  %v2607 = vrot.slane %v2606, 2
  %v2608 = vrot.slane %v2268, 7
  %v2609 = vrot.slane %v2608, 2
  %v2610 = vrot.slane %v2276, 7
  %v2611 = vrot.slane %v2610, 2
  %v2612 = vrot.slane %v2275, 7
  %v2613 = vrot.slane %v2612, 2
  %v2614 = vrot.slane %v2277, 7
  %v2615 = vrot.slane %v2614, 2
  %v2616 = vrot.slane %v2286, 7
  %v2617 = vrot.slane %v2616, 2
  %v2618 = vrot.slane %v2294, 7
  %v2619 = vrot.slane %v2618, 2
  %v2620 = vrot.slane %v2293, 7
  %v2621 = vrot.slane %v2620, 2
  %v2622 = vrot.slane %v2295, 7
  %v2623 = vrot.slane %v2622, 2
  %v2624 = vrot.slane %v2304, 7
  %v2625 = vrot.slane %v2624, 2
  %v2626 = vrot.slane %v2312, 7
  %v2627 = vrot.slane %v2626, 2
  %v2628 = vrot.slane %v2311, 7
  %v2629 = vrot.slane %v2628, 2
  %v2630 = vrot.slane %v2313, 7
  %v2631 = vrot.slane %v2630, 2
  %v2632 = vrot.slane %v2322, 7
  %v2633 = vrot.slane %v2632, 2
  %v2634 = vrot.slane %v2330, 7
  %v2635 = vrot.slane %v2634, 2
  %v2636 = vrot.slane %v2329, 7
  %v2637 = vrot.slane %v2636, 2
  %v2638 = vrot.slane %v2331, 7
  %v2639 = vrot.slane %v2638, 2
  %v2640 = vrot.slane %v2340, 7
  %v2641 = vrot.slane %v2640, 2
  %v2642 = vrot.slane %v2348, 7
  %v2643 = vrot.slane %v2642, 2
  %v2644 = vrot.slane %v2347, 7
  %v2645 = vrot.slane %v2644, 2
  %v2646 = vrot.slane %v2349, 7
  %v2647 = vrot.slane %v2646, 2
  %v2648 = vrot.slane %v2358, 7
  %v2649 = vrot.slane %v2648, 2
  %v2650 = vrot.slane %v2366, 7
  %v2651 = vrot.slane %v2650, 2
  %v2652 = vrot.slane %v2365, 7
  %v2653 = vrot.slane %v2652, 2
  %v2654 = vrot.slane %v2367, 7
  %v2655 = vrot.slane %v2654, 2
  %v2752 = vmax.f32 %v1944, %v2465
  %v2753 = vmax.f32 %v1952, %v2467
  %v2754 = vmax.f32 %v1951, %v2469
  %v2755 = vmax.f32 %v1953, %v2471
  %v2756 = vmax.f32 %v1962, %v2473
  %v2757 = vmax.f32 %v1970, %v2475
  %v2758 = vmax.f32 %v1969, %v2477
  %v2759 = vmax.f32 %v1971, %v2479
  %v2760 = vmax.f32 %v1980, %v2481
  %v2761 = vmax.f32 %v1988, %v2483
  %v2762 = vmax.f32 %v1987, %v2485
  %v2763 = vmax.f32 %v1989, %v2487
  %v2764 = vmax.f32 %v1998, %v2489
  %v2765 = vmax.f32 %v2006, %v2491
  %v2766 = vmax.f32 %v2005, %v2493
  %v2767 = vmax.f32 %v2007, %v2495
  %v2768 = vmax.f32 %v2016, %v2497
  %v2769 = vmax.f32 %v2024, %v2499
  %v2770 = vmax.f32 %v2023, %v2501
  %v2771 = vmax.f32 %v2025, %v2503
  %v2772 = vmax.f32 %v2034, %v2505
  %v2773 = vmax.f32 %v2042, %v2507
  %v2774 = vmax.f32 %v2041, %v2509
  %v2775 = vmax.f32 %v2043, %v2511
  %v2776 = vmax.f32 %v2052, %v2513
  %v2777 = vmax.f32 %v2060, %v2515
  %v2778 = vmax.f32 %v2059, %v2517
  %v2779 = vmax.f32 %v2061, %v2519
  %v2780 = vmax.f32 %v2070, %v2521
  %v2781 = vmax.f32 %v2078, %v2523
  %v2782 = vmax.f32 %v2077, %v2525
  %v2783 = vmax.f32 %v2079, %v2527
  %v2784 = vmax.f32 %v2088, %v2529
  %v2785 = vmax.f32 %v2096, %v2531
  %v2786 = vmax.f32 %v2095, %v2533
  %v2787 = vmax.f32 %v2097, %v2535
  %v2788 = vmax.f32 %v2106, %v2537
  %v2789 = vmax.f32 %v2114, %v2539
  %v2790 = vmax.f32 %v2113, %v2541
  %v2791 = vmax.f32 %v2115, %v2543
  %v2792 = vmax.f32 %v2124, %v2545
  %v2793 = vmax.f32 %v2132, %v2547
  %v2794 = vmax.f32 %v2131, %v2549
  %v2795 = vmax.f32 %v2133, %v2551
  %v2796 = vmax.f32 %v2142, %v2553
  %v2797 = vmax.f32 %v2150, %v2555
  %v2798 = vmax.f32 %v2149, %v2557
  %v2799 = vmax.f32 %v2151, %v2559
  %v2800 = vmax.f32 %v2160, %v2561
  %v2801 = vmax.f32 %v2168, %v2563
  %v2802 = vmax.f32 %v2167, %v2565
  %v2803 = vmax.f32 %v2169, %v2567
  %v2804 = vmax.f32 %v2178, %v2569
  %v2805 = vmax.f32 %v2186, %v2571
  %v2806 = vmax.f32 %v2185, %v2573
  %v2807 = vmax.f32 %v2187, %v2575
  %v2808 = vmax.f32 %v2196, %v2577
  %v2809 = vmax.f32 %v2204, %v2579
  %v2810 = vmax.f32 %v2203, %v2581
  %v2811 = vmax.f32 %v2205, %v2583
  %v2812 = vmax.f32 %v2214, %v2585
  %v2813 = vmax.f32 %v2222, %v2587
  %v2814 = vmax.f32 %v2221, %v2589
  %v2815 = vmax.f32 %v2223, %v2591
  %v2816 = vmax.f32 %v2232, %v2593
  %v2817 = vmax.f32 %v2240, %v2595
  %v2818 = vmax.f32 %v2239, %v2597
  %v2819 = vmax.f32 %v2241, %v2599
  %v2820 = vmax.f32 %v2250, %v2601
  %v2821 = vmax.f32 %v2258, %v2603
  %v2822 = vmax.f32 %v2257, %v2605
  %v2823 = vmax.f32 %v2259, %v2607
  %v2824 = vmax.f32 %v2268, %v2609
  %v2825 = vmax.f32 %v2276, %v2611
  %v2826 = vmax.f32 %v2275, %v2613
  %v2827 = vmax.f32 %v2277, %v2615
  %v2828 = vmax.f32 %v2286, %v2617
  %v2829 = vmax.f32 %v2294, %v2619
  %v2830 = vmax.f32 %v2293, %v2621
  %v2831 = vmax.f32 %v2295, %v2623
  %v2832 = vmax.f32 %v2304, %v2625
  %v2833 = vmax.f32 %v2312, %v2627
  %v2834 = vmax.f32 %v2311, %v2629
  %v2835 = vmax.f32 %v2313, %v2631
  %v2836 = vmax.f32 %v2322, %v2633
  %v2837 = vmax.f32 %v2330, %v2635
  %v2838 = vmax.f32 %v2329, %v2637
  %v2839 = vmax.f32 %v2331, %v2639
  %v2840 = vmax.f32 %v2340, %v2641
  %v2841 = vmax.f32 %v2348, %v2643
  %v2842 = vmax.f32 %v2347, %v2645
  %v2843 = vmax.f32 %v2349, %v2647
  %v2844 = vmax.f32 %v2358, %v2649
  %v2845 = vmax.f32 %v2366, %v2651
  %v2846 = vmax.f32 %v2365, %v2653
  %v2847 = vmax.f32 %v2367, %v2655
  %2944 = vrot.lane.b32.xlu0 %v2752, 118
  %v2945 = vpop.permute.xlu0 %2944
  %2946 = vrot.lane.b32.xlu0 %v2753, 118
  %v2947 = vpop.permute.xlu0 %2946
  %2948 = vrot.lane.b32.xlu0 %v2754, 118
  %v2949 = vpop.permute.xlu0 %2948
  %2950 = vrot.lane.b32.xlu0 %v2755, 118
  %v2951 = vpop.permute.xlu0 %2950
  %2952 = vrot.lane.b32.xlu0 %v2756, 118
  %v2953 = vpop.permute.xlu0 %2952
  %2954 = vrot.lane.b32.xlu0 %v2757, 118
  %v2955 = vpop.permute.xlu0 %2954
  %2956 = vrot.lane.b32.xlu0 %v2758, 118
  %v2957 = vpop.permute.xlu0 %2956
  %2958 = vrot.lane.b32.xlu0 %v2759, 118
  %v2959 = vpop.permute.xlu0 %2958
  %2960 = vrot.lane.b32.xlu0 %v2760, 118
  %v2961 = vpop.permute.xlu0 %2960
  %2962 = vrot.lane.b32.xlu0 %v2761, 118
  %v2963 = vpop.permute.xlu0 %2962
  %2964 = vrot.lane.b32.xlu0 %v2762, 118
  %v2965 = vpop.permute.xlu0 %2964
  %2966 = vrot.lane.b32.xlu0 %v2763, 118
  %v2967 = vpop.permute.xlu0 %2966
  %2968 = vrot.lane.b32.xlu0 %v2764, 118
  %v2969 = vpop.permute.xlu0 %2968
  %2970 = vrot.lane.b32.xlu0 %v2765, 118
  %v2971 = vpop.permute.xlu0 %2970
  %2972 = vrot.lane.b32.xlu0 %v2766, 118
  %v2973 = vpop.permute.xlu0 %2972
  %2974 = vrot.lane.b32.xlu0 %v2767, 118
  %v2975 = vpop.permute.xlu0 %2974
  %2976 = vrot.lane.b32.xlu0 %v2768, 118
  %v2977 = vpop.permute.xlu0 %2976
  %2978 = vrot.lane.b32.xlu0 %v2769, 118
  %v2979 = vpop.permute.xlu0 %2978
  %2980 = vrot.lane.b32.xlu0 %v2770, 118
  %v2981 = vpop.permute.xlu0 %2980
  %2982 = vrot.lane.b32.xlu0 %v2771, 118
  %v2983 = vpop.permute.xlu0 %2982
  %2984 = vrot.lane.b32.xlu0 %v2772, 118
  %v2985 = vpop.permute.xlu0 %2984
  %2986 = vrot.lane.b32.xlu0 %v2773, 118
  %v2987 = vpop.permute.xlu0 %2986
  %2988 = vrot.lane.b32.xlu0 %v2774, 118
  %v2989 = vpop.permute.xlu0 %2988
  %2990 = vrot.lane.b32.xlu0 %v2775, 118
  %v2991 = vpop.permute.xlu0 %2990
  %2992 = vrot.lane.b32.xlu0 %v2776, 118
  %v2993 = vpop.permute.xlu0 %2992
  %2994 = vrot.lane.b32.xlu0 %v2777, 118
  %v2995 = vpop.permute.xlu0 %2994
  %2996 = vrot.lane.b32.xlu0 %v2778, 118
  %v2997 = vpop.permute.xlu0 %2996
  %2998 = vrot.lane.b32.xlu0 %v2779, 118
  %v2999 = vpop.permute.xlu0 %2998
  %3000 = vrot.lane.b32.xlu0 %v2780, 118
  %v3001 = vpop.permute.xlu0 %3000
  %3002 = vrot.lane.b32.xlu0 %v2781, 118
  %v3003 = vpop.permute.xlu0 %3002
  %3004 = vrot.lane.b32.xlu0 %v2782, 118
  %v3005 = vpop.permute.xlu0 %3004
  %3006 = vrot.lane.b32.xlu0 %v2783, 118
  %v3007 = vpop.permute.xlu0 %3006
  %3008 = vrot.lane.b32.xlu0 %v2784, 118
  %v3009 = vpop.permute.xlu0 %3008
  %3010 = vrot.lane.b32.xlu0 %v2785, 118
  %v3011 = vpop.permute.xlu0 %3010
  %3012 = vrot.lane.b32.xlu0 %v2786, 118
  %v3013 = vpop.permute.xlu0 %3012
  %3014 = vrot.lane.b32.xlu0 %v2787, 118
  %v3015 = vpop.permute.xlu0 %3014
  %3016 = vrot.lane.b32.xlu0 %v2788, 118
  %v3017 = vpop.permute.xlu0 %3016
  %3018 = vrot.lane.b32.xlu0 %v2789, 118
  %v3019 = vpop.permute.xlu0 %3018
  %3020 = vrot.lane.b32.xlu0 %v2790, 118
  %v3021 = vpop.permute.xlu0 %3020
  %3022 = vrot.lane.b32.xlu0 %v2791, 118
  %v3023 = vpop.permute.xlu0 %3022
  %3024 = vrot.lane.b32.xlu0 %v2792, 118
  %v3025 = vpop.permute.xlu0 %3024
  %3026 = vrot.lane.b32.xlu0 %v2793, 118
  %v3027 = vpop.permute.xlu0 %3026
  %3028 = vrot.lane.b32.xlu0 %v2794, 118
  %v3029 = vpop.permute.xlu0 %3028
  %3030 = vrot.lane.b32.xlu0 %v2795, 118
  %v3031 = vpop.permute.xlu0 %3030
  %3032 = vrot.lane.b32.xlu0 %v2796, 118
  %v3033 = vpop.permute.xlu0 %3032
  %3034 = vrot.lane.b32.xlu0 %v2797, 118
  %v3035 = vpop.permute.xlu0 %3034
  %3036 = vrot.lane.b32.xlu0 %v2798, 118
  %v3037 = vpop.permute.xlu0 %3036
  %3038 = vrot.lane.b32.xlu0 %v2799, 118
  %v3039 = vpop.permute.xlu0 %3038
  %3040 = vrot.lane.b32.xlu0 %v2800, 118
  %v3041 = vpop.permute.xlu0 %3040
  %3042 = vrot.lane.b32.xlu0 %v2801, 118
  %v3043 = vpop.permute.xlu0 %3042
  %3044 = vrot.lane.b32.xlu0 %v2802, 118
  %v3045 = vpop.permute.xlu0 %3044
  %3046 = vrot.lane.b32.xlu0 %v2803, 118
  %v3047 = vpop.permute.xlu0 %3046
  %3048 = vrot.lane.b32.xlu0 %v2804, 118
  %v3049 = vpop.permute.xlu0 %3048
  %3050 = vrot.lane.b32.xlu0 %v2805, 118
  %v3051 = vpop.permute.xlu0 %3050
  %3052 = vrot.lane.b32.xlu0 %v2806, 118
  %v3053 = vpop.permute.xlu0 %3052
  %3054 = vrot.lane.b32.xlu0 %v2807, 118
  %v3055 = vpop.permute.xlu0 %3054
  %3056 = vrot.lane.b32.xlu0 %v2808, 118
  %v3057 = vpop.permute.xlu0 %3056
  %3058 = vrot.lane.b32.xlu0 %v2809, 118
  %v3059 = vpop.permute.xlu0 %3058
  %3060 = vrot.lane.b32.xlu0 %v2810, 118
  %v3061 = vpop.permute.xlu0 %3060
  %3062 = vrot.lane.b32.xlu0 %v2811, 118
  %v3063 = vpop.permute.xlu0 %3062
  %3064 = vrot.lane.b32.xlu0 %v2812, 118
  %v3065 = vpop.permute.xlu0 %3064
  %3066 = vrot.lane.b32.xlu0 %v2813, 118
  %v3067 = vpop.permute.xlu0 %3066
  %3068 = vrot.lane.b32.xlu0 %v2814, 118
  %v3069 = vpop.permute.xlu0 %3068
  %3070 = vrot.lane.b32.xlu0 %v2815, 118
  %v3071 = vpop.permute.xlu0 %3070
  %3072 = vrot.lane.b32.xlu0 %v2816, 118
  %v3073 = vpop.permute.xlu0 %3072
  %3074 = vrot.lane.b32.xlu0 %v2817, 118
  %v3075 = vpop.permute.xlu0 %3074
  %3076 = vrot.lane.b32.xlu0 %v2818, 118
  %v3077 = vpop.permute.xlu0 %3076
  %3078 = vrot.lane.b32.xlu0 %v2819, 118
  %v3079 = vpop.permute.xlu0 %3078
  %3080 = vrot.lane.b32.xlu0 %v2820, 118
  %v3081 = vpop.permute.xlu0 %3080
  %3082 = vrot.lane.b32.xlu0 %v2821, 118
  %v3083 = vpop.permute.xlu0 %3082
  %3084 = vrot.lane.b32.xlu0 %v2822, 118
  %v3085 = vpop.permute.xlu0 %3084
  %3086 = vrot.lane.b32.xlu0 %v2823, 118
  %v3087 = vpop.permute.xlu0 %3086
  %3088 = vrot.lane.b32.xlu0 %v2824, 118
  %v3089 = vpop.permute.xlu0 %3088
  %3090 = vrot.lane.b32.xlu0 %v2825, 118
  %v3091 = vpop.permute.xlu0 %3090
  %3092 = vrot.lane.b32.xlu0 %v2826, 118
  %v3093 = vpop.permute.xlu0 %3092
  %3094 = vrot.lane.b32.xlu0 %v2827, 118
  %v3095 = vpop.permute.xlu0 %3094
  %3096 = vrot.lane.b32.xlu0 %v2828, 118
  %v3097 = vpop.permute.xlu0 %3096
  %3098 = vrot.lane.b32.xlu0 %v2829, 118
  %v3099 = vpop.permute.xlu0 %3098
  %3100 = vrot.lane.b32.xlu0 %v2830, 118
  %v3101 = vpop.permute.xlu0 %3100
  %3102 = vrot.lane.b32.xlu0 %v2831, 118
  %v3103 = vpop.permute.xlu0 %3102
  %3104 = vrot.lane.b32.xlu0 %v2832, 118
  %v3105 = vpop.permute.xlu0 %3104
  %3106 = vrot.lane.b32.xlu0 %v2833, 118
  %v3107 = vpop.permute.xlu0 %3106
  %3108 = vrot.lane.b32.xlu0 %v2834, 118
  %v3109 = vpop.permute.xlu0 %3108
  %3110 = vrot.lane.b32.xlu0 %v2835, 118
  %v3111 = vpop.permute.xlu0 %3110
  %3112 = vrot.lane.b32.xlu0 %v2836, 118
  %v3113 = vpop.permute.xlu0 %3112
  %3114 = vrot.lane.b32.xlu0 %v2837, 118
  %v3115 = vpop.permute.xlu0 %3114
  %3116 = vrot.lane.b32.xlu0 %v2838, 118
  %v3117 = vpop.permute.xlu0 %3116
  %3118 = vrot.lane.b32.xlu0 %v2839, 118
  %v3119 = vpop.permute.xlu0 %3118
  %3120 = vrot.lane.b32.xlu0 %v2840, 118
  %v3121 = vpop.permute.xlu0 %3120
  %3122 = vrot.lane.b32.xlu0 %v2841, 118
  %v3123 = vpop.permute.xlu0 %3122
  %3124 = vrot.lane.b32.xlu0 %v2842, 118
  %v3125 = vpop.permute.xlu0 %3124
  %3126 = vrot.lane.b32.xlu0 %v2843, 118
  %v3127 = vpop.permute.xlu0 %3126
  %3128 = vrot.lane.b32.xlu0 %v2844, 118
  %v3129 = vpop.permute.xlu0 %3128
  %3130 = vrot.lane.b32.xlu0 %v2845, 118
  %v3131 = vpop.permute.xlu0 %3130
  %3132 = vrot.lane.b32.xlu0 %v2846, 118
  %v3133 = vpop.permute.xlu0 %3132
  %3134 = vrot.lane.b32.xlu0 %v2847, 118
  %v3135 = vpop.permute.xlu0 %3134
  %v3136 = vrot.slane %v2945, 2
  %v3137 = vrot.slane %v2947, 2
  %v3138 = vrot.slane %v2949, 2
  %v3139 = vrot.slane %v2951, 2
  %v3140 = vrot.slane %v2953, 2
  %v3141 = vrot.slane %v2955, 2
  %v3142 = vrot.slane %v2957, 2
  %v3143 = vrot.slane %v2959, 2
  %v3144 = vrot.slane %v2961, 2
  %v3145 = vrot.slane %v2963, 2
  %v3146 = vrot.slane %v2965, 2
  %v3147 = vrot.slane %v2967, 2
  %v3148 = vrot.slane %v2969, 2
  %v3149 = vrot.slane %v2971, 2
  %v3150 = vrot.slane %v2973, 2
  %v3151 = vrot.slane %v2975, 2
  %v3152 = vrot.slane %v2977, 2
  %v3153 = vrot.slane %v2979, 2
  %v3154 = vrot.slane %v2981, 2
  %v3155 = vrot.slane %v2983, 2
  %v3156 = vrot.slane %v2985, 2
  %v3157 = vrot.slane %v2987, 2
  %v3158 = vrot.slane %v2989, 2
  %v3159 = vrot.slane %v2991, 2
  %v3160 = vrot.slane %v2993, 2
  %v3161 = vrot.slane %v2995, 2
  %v3162 = vrot.slane %v2997, 2
  %v3163 = vrot.slane %v2999, 2
  %v3164 = vrot.slane %v3001, 2
  %v3165 = vrot.slane %v3003, 2
  %v3166 = vrot.slane %v3005, 2
  %v3167 = vrot.slane %v3007, 2
  %v3168 = vrot.slane %v3009, 2
  %v3169 = vrot.slane %v3011, 2
  %v3170 = vrot.slane %v3013, 2
  %v3171 = vrot.slane %v3015, 2
  %v3172 = vrot.slane %v3017, 2
  %v3173 = vrot.slane %v3019, 2
  %v3174 = vrot.slane %v3021, 2
  %v3175 = vrot.slane %v3023, 2
  %v3176 = vrot.slane %v3025, 2
  %v3177 = vrot.slane %v3027, 2
  %v3178 = vrot.slane %v3029, 2
  %v3179 = vrot.slane %v3031, 2
  %v3180 = vrot.slane %v3033, 2
  %v3181 = vrot.slane %v3035, 2
  %v3182 = vrot.slane %v3037, 2
  %v3183 = vrot.slane %v3039, 2
  %v3184 = vrot.slane %v3041, 2
  %v3185 = vrot.slane %v3043, 2
  %v3186 = vrot.slane %v3045, 2
  %v3187 = vrot.slane %v3047, 2
  %v3188 = vrot.slane %v3049, 2
  %v3189 = vrot.slane %v3051, 2
  %v3190 = vrot.slane %v3053, 2
  %v3191 = vrot.slane %v3055, 2
  %v3192 = vrot.slane %v3057, 2
  %v3193 = vrot.slane %v3059, 2
  %v3194 = vrot.slane %v3061, 2
  %v3195 = vrot.slane %v3063, 2
  %v3196 = vrot.slane %v3065, 2
  %v3197 = vrot.slane %v3067, 2
  %v3198 = vrot.slane %v3069, 2
  %v3199 = vrot.slane %v3071, 2
  %v3200 = vrot.slane %v3073, 2
  %v3201 = vrot.slane %v3075, 2
  %v3202 = vrot.slane %v3077, 2
  %v3203 = vrot.slane %v3079, 2
  %v3204 = vrot.slane %v3081, 2
  %v3205 = vrot.slane %v3083, 2
  %v3206 = vrot.slane %v3085, 2
  %v3207 = vrot.slane %v3087, 2
  %v3208 = vrot.slane %v3089, 2
  %v3209 = vrot.slane %v3091, 2
  %v3210 = vrot.slane %v3093, 2
  %v3211 = vrot.slane %v3095, 2
  %v3212 = vrot.slane %v3097, 2
  %v3213 = vrot.slane %v3099, 2
  %v3214 = vrot.slane %v3101, 2
  %v3215 = vrot.slane %v3103, 2
  %v3216 = vrot.slane %v3105, 2
  %v3217 = vrot.slane %v3107, 2
  %v3218 = vrot.slane %v3109, 2
  %v3219 = vrot.slane %v3111, 2
  %v3220 = vrot.slane %v3113, 2
  %v3221 = vrot.slane %v3115, 2
  %v3222 = vrot.slane %v3117, 2
  %v3223 = vrot.slane %v3119, 2
  %v3224 = vrot.slane %v3121, 2
  %v3225 = vrot.slane %v3123, 2
  %v3226 = vrot.slane %v3125, 2
  %v3227 = vrot.slane %v3127, 2
  %v3228 = vrot.slane %v3129, 2
  %v3229 = vrot.slane %v3131, 2
  %v3230 = vrot.slane %v3133, 2
  %v3231 = vrot.slane %v3135, 2
  %vm3232 = vcmask 965632
  %v3233 = vsel %vm3232, %v2945, %v3136
  %v3234 = vsel %vm3232, %v2947, %v3137
  %v3235 = vsel %vm3232, %v2949, %v3138
  %v3236 = vsel %vm3232, %v2951, %v3139
  %v3237 = vsel %vm3232, %v2953, %v3140
  %v3238 = vsel %vm3232, %v2955, %v3141
  %v3239 = vsel %vm3232, %v2957, %v3142
  %v3240 = vsel %vm3232, %v2959, %v3143
  %v3241 = vsel %vm3232, %v2961, %v3144
  %v3242 = vsel %vm3232, %v2963, %v3145
  %v3243 = vsel %vm3232, %v2965, %v3146
  %v3244 = vsel %vm3232, %v2967, %v3147
  %v3245 = vsel %vm3232, %v2969, %v3148
  %v3246 = vsel %vm3232, %v2971, %v3149
  %v3247 = vsel %vm3232, %v2973, %v3150
  %v3248 = vsel %vm3232, %v2975, %v3151
  %v3249 = vsel %vm3232, %v2977, %v3152
  %v3250 = vsel %vm3232, %v2979, %v3153
  %v3251 = vsel %vm3232, %v2981, %v3154
  %v3252 = vsel %vm3232, %v2983, %v3155
  %v3253 = vsel %vm3232, %v2985, %v3156
  %v3254 = vsel %vm3232, %v2987, %v3157
  %v3255 = vsel %vm3232, %v2989, %v3158
  %v3256 = vsel %vm3232, %v2991, %v3159
  %v3257 = vsel %vm3232, %v2993, %v3160
  %v3258 = vsel %vm3232, %v2995, %v3161
  %v3259 = vsel %vm3232, %v2997, %v3162
  %v3260 = vsel %vm3232, %v2999, %v3163
  %v3261 = vsel %vm3232, %v3001, %v3164
  %v3262 = vsel %vm3232, %v3003, %v3165
  %v3263 = vsel %vm3232, %v3005, %v3166
  %v3264 = vsel %vm3232, %v3007, %v3167
  %v3265 = vsel %vm3232, %v3009, %v3168
  %v3266 = vsel %vm3232, %v3011, %v3169
  %v3267 = vsel %vm3232, %v3013, %v3170
  %v3268 = vsel %vm3232, %v3015, %v3171
  %v3269 = vsel %vm3232, %v3017, %v3172
  %v3270 = vsel %vm3232, %v3019, %v3173
  %v3271 = vsel %vm3232, %v3021, %v3174
  %v3272 = vsel %vm3232, %v3023, %v3175
  %v3273 = vsel %vm3232, %v3025, %v3176
  %v3274 = vsel %vm3232, %v3027, %v3177
  %v3275 = vsel %vm3232, %v3029, %v3178
  %v3276 = vsel %vm3232, %v3031, %v3179
  %v3277 = vsel %vm3232, %v3033, %v3180
  %v3278 = vsel %vm3232, %v3035, %v3181
  %v3279 = vsel %vm3232, %v3037, %v3182
  %v3280 = vsel %vm3232, %v3039, %v3183
  %v3281 = vsel %vm3232, %v3041, %v3184
  %v3282 = vsel %vm3232, %v3043, %v3185
  %v3283 = vsel %vm3232, %v3045, %v3186
  %v3284 = vsel %vm3232, %v3047, %v3187
  %v3285 = vsel %vm3232, %v3049, %v3188
  %v3286 = vsel %vm3232, %v3051, %v3189
  %v3287 = vsel %vm3232, %v3053, %v3190
  %v3288 = vsel %vm3232, %v3055, %v3191
  %v3289 = vsel %vm3232, %v3057, %v3192
  %v3290 = vsel %vm3232, %v3059, %v3193
  %v3291 = vsel %vm3232, %v3061, %v3194
  %v3292 = vsel %vm3232, %v3063, %v3195
  %v3293 = vsel %vm3232, %v3065, %v3196
  %v3294 = vsel %vm3232, %v3067, %v3197
  %v3295 = vsel %vm3232, %v3069, %v3198
  %v3296 = vsel %vm3232, %v3071, %v3199
  %v3297 = vsel %vm3232, %v3073, %v3200
  %v3298 = vsel %vm3232, %v3075, %v3201
  %v3299 = vsel %vm3232, %v3077, %v3202
  %v3300 = vsel %vm3232, %v3079, %v3203
  %v3301 = vsel %vm3232, %v3081, %v3204
  %v3302 = vsel %vm3232, %v3083, %v3205
  %v3303 = vsel %vm3232, %v3085, %v3206
  %v3304 = vsel %vm3232, %v3087, %v3207
  %v3305 = vsel %vm3232, %v3089, %v3208
  %v3306 = vsel %vm3232, %v3091, %v3209
  %v3307 = vsel %vm3232, %v3093, %v3210
  %v3308 = vsel %vm3232, %v3095, %v3211
  %v3309 = vsel %vm3232, %v3097, %v3212
  %v3310 = vsel %vm3232, %v3099, %v3213
  %v3311 = vsel %vm3232, %v3101, %v3214
  %v3312 = vsel %vm3232, %v3103, %v3215
  %v3313 = vsel %vm3232, %v3105, %v3216
  %v3314 = vsel %vm3232, %v3107, %v3217
  %v3315 = vsel %vm3232, %v3109, %v3218
  %v3316 = vsel %vm3232, %v3111, %v3219
  %v3317 = vsel %vm3232, %v3113, %v3220
  %v3318 = vsel %vm3232, %v3115, %v3221
  %v3319 = vsel %vm3232, %v3117, %v3222
  %v3320 = vsel %vm3232, %v3119, %v3223
  %v3321 = vsel %vm3232, %v3121, %v3224
  %v3322 = vsel %vm3232, %v3123, %v3225
  %v3323 = vsel %vm3232, %v3125, %v3226
  %v3324 = vsel %vm3232, %v3127, %v3227
  %v3325 = vsel %vm3232, %v3129, %v3228
  %v3326 = vsel %vm3232, %v3131, %v3229
  %v3327 = vsel %vm3232, %v3133, %v3230
  %v3328 = vsel %vm3232, %v3135, %v3231
  %v3425 = vmax.f32 %v2752, %v3233
  %v3426 = vmax.f32 %v2753, %v3234
  %v3427 = vmax.f32 %v2754, %v3235
  %v3428 = vmax.f32 %v2755, %v3236
  %v3429 = vmax.f32 %v2756, %v3237
  %v3430 = vmax.f32 %v2757, %v3238
  %v3431 = vmax.f32 %v2758, %v3239
  %v3432 = vmax.f32 %v2759, %v3240
  %v3433 = vmax.f32 %v2760, %v3241
  %v3434 = vmax.f32 %v2761, %v3242
  %v3435 = vmax.f32 %v2762, %v3243
  %v3436 = vmax.f32 %v2763, %v3244
  %v3437 = vmax.f32 %v2764, %v3245
  %v3438 = vmax.f32 %v2765, %v3246
  %v3439 = vmax.f32 %v2766, %v3247
  %v3440 = vmax.f32 %v2767, %v3248
  %v3441 = vmax.f32 %v2768, %v3249
  %v3442 = vmax.f32 %v2769, %v3250
  %v3443 = vmax.f32 %v2770, %v3251
  %v3444 = vmax.f32 %v2771, %v3252
  %v3445 = vmax.f32 %v2772, %v3253
  %v3446 = vmax.f32 %v2773, %v3254
  %v3447 = vmax.f32 %v2774, %v3255
  %v3448 = vmax.f32 %v2775, %v3256
  %v3449 = vmax.f32 %v2776, %v3257
  %v3450 = vmax.f32 %v2777, %v3258
  %v3451 = vmax.f32 %v2778, %v3259
  %v3452 = vmax.f32 %v2779, %v3260
  %v3453 = vmax.f32 %v2780, %v3261
  %v3454 = vmax.f32 %v2781, %v3262
  %v3455 = vmax.f32 %v2782, %v3263
  %v3456 = vmax.f32 %v2783, %v3264
  %v3457 = vmax.f32 %v2784, %v3265
  %v3458 = vmax.f32 %v2785, %v3266
  %v3459 = vmax.f32 %v2786, %v3267
  %v3460 = vmax.f32 %v2787, %v3268
  %v3461 = vmax.f32 %v2788, %v3269
  %v3462 = vmax.f32 %v2789, %v3270
  %v3463 = vmax.f32 %v2790, %v3271
  %v3464 = vmax.f32 %v2791, %v3272
  %v3465 = vmax.f32 %v2792, %v3273
  %v3466 = vmax.f32 %v2793, %v3274
  %v3467 = vmax.f32 %v2794, %v3275
  %v3468 = vmax.f32 %v2795, %v3276
  %v3469 = vmax.f32 %v2796, %v3277
  %v3470 = vmax.f32 %v2797, %v3278
  %v3471 = vmax.f32 %v2798, %v3279
  %v3472 = vmax.f32 %v2799, %v3280
  %v3473 = vmax.f32 %v2800, %v3281
  %v3474 = vmax.f32 %v2801, %v3282
  %v3475 = vmax.f32 %v2802, %v3283
  %v3476 = vmax.f32 %v2803, %v3284
  %v3477 = vmax.f32 %v2804, %v3285
  %v3478 = vmax.f32 %v2805, %v3286
  %v3479 = vmax.f32 %v2806, %v3287
  %v3480 = vmax.f32 %v2807, %v3288
  %v3481 = vmax.f32 %v2808, %v3289
  %v3482 = vmax.f32 %v2809, %v3290
  %v3483 = vmax.f32 %v2810, %v3291
  %v3484 = vmax.f32 %v2811, %v3292
  %v3485 = vmax.f32 %v2812, %v3293
  %v3486 = vmax.f32 %v2813, %v3294
  %v3487 = vmax.f32 %v2814, %v3295
  %v3488 = vmax.f32 %v2815, %v3296
  %v3489 = vmax.f32 %v2816, %v3297
  %v3490 = vmax.f32 %v2817, %v3298
  %v3491 = vmax.f32 %v2818, %v3299
  %v3492 = vmax.f32 %v2819, %v3300
  %v3493 = vmax.f32 %v2820, %v3301
  %v3494 = vmax.f32 %v2821, %v3302
  %v3495 = vmax.f32 %v2822, %v3303
  %v3496 = vmax.f32 %v2823, %v3304
  %v3497 = vmax.f32 %v2824, %v3305
  %v3498 = vmax.f32 %v2825, %v3306
  %v3499 = vmax.f32 %v2826, %v3307
  %v3500 = vmax.f32 %v2827, %v3308
  %v3501 = vmax.f32 %v2828, %v3309
  %v3502 = vmax.f32 %v2829, %v3310
  %v3503 = vmax.f32 %v2830, %v3311
  %v3504 = vmax.f32 %v2831, %v3312
  %v3505 = vmax.f32 %v2832, %v3313
  %v3506 = vmax.f32 %v2833, %v3314
  %v3507 = vmax.f32 %v2834, %v3315
  %v3508 = vmax.f32 %v2835, %v3316
  %v3509 = vmax.f32 %v2836, %v3317
  %v3510 = vmax.f32 %v2837, %v3318
  %v3511 = vmax.f32 %v2838, %v3319
  %v3512 = vmax.f32 %v2839, %v3320
  %v3513 = vmax.f32 %v2840, %v3321
  %v3514 = vmax.f32 %v2841, %v3322
  %v3515 = vmax.f32 %v2842, %v3323
  %v3516 = vmax.f32 %v2843, %v3324
  %v3517 = vmax.f32 %v2844, %v3325
  %v3518 = vmax.f32 %v2845, %v3326
  %v3519 = vmax.f32 %v2846, %v3327
  %v3520 = vmax.f32 %v2847, %v3328
  %v3521 = vmax.f32 %v3425, 0.0
  %v3522 = vmax.f32 %v3426, 0.0
  %v3523 = vmax.f32 %v3427, 0.0
  %v3524 = vmax.f32 %v3428, 0.0
  %v3525 = vmax.f32 %v3429, 0.0
  %v3526 = vmax.f32 %v3430, 0.0
  %v3527 = vmax.f32 %v3431, 0.0
  %v3528 = vmax.f32 %v3432, 0.0
  %v3529 = vmax.f32 %v3433, 0.0
  %v3530 = vmax.f32 %v3434, 0.0
  %v3531 = vmax.f32 %v3435, 0.0
  %v3532 = vmax.f32 %v3436, 0.0
  %v3533 = vmax.f32 %v3437, 0.0
  %v3534 = vmax.f32 %v3438, 0.0
  %v3535 = vmax.f32 %v3439, 0.0
  %v3536 = vmax.f32 %v3440, 0.0
  %v3537 = vmax.f32 %v3441, 0.0
  %v3538 = vmax.f32 %v3442, 0.0
  %v3539 = vmax.f32 %v3443, 0.0
  %v3540 = vmax.f32 %v3444, 0.0
  %v3541 = vmax.f32 %v3445, 0.0
  %v3542 = vmax.f32 %v3446, 0.0
  %v3543 = vmax.f32 %v3447, 0.0
  %v3544 = vmax.f32 %v3448, 0.0
  %v3545 = vmax.f32 %v3449, 0.0
  %v3546 = vmax.f32 %v3450, 0.0
  %v3547 = vmax.f32 %v3451, 0.0
  %v3548 = vmax.f32 %v3452, 0.0
  %v3549 = vmax.f32 %v3453, 0.0
  %v3550 = vmax.f32 %v3454, 0.0
  %v3551 = vmax.f32 %v3455, 0.0
  %v3552 = vmax.f32 %v3456, 0.0
  %v3553 = vmax.f32 %v3457, 0.0
  %v3554 = vmax.f32 %v3458, 0.0
  %v3555 = vmax.f32 %v3459, 0.0
  %v3556 = vmax.f32 %v3460, 0.0
  %v3557 = vmax.f32 %v3461, 0.0
  %v3558 = vmax.f32 %v3462, 0.0
  %v3559 = vmax.f32 %v3463, 0.0
  %v3560 = vmax.f32 %v3464, 0.0
  %v3561 = vmax.f32 %v3465, 0.0
  %v3562 = vmax.f32 %v3466, 0.0
  %v3563 = vmax.f32 %v3467, 0.0
  %v3564 = vmax.f32 %v3468, 0.0
  %v3565 = vmax.f32 %v3469, 0.0
  %v3566 = vmax.f32 %v3470, 0.0
  %v3567 = vmax.f32 %v3471, 0.0
  %v3568 = vmax.f32 %v3472, 0.0
  %v3569 = vmax.f32 %v3473, 0.0
  %v3570 = vmax.f32 %v3474, 0.0
  %v3571 = vmax.f32 %v3475, 0.0
  %v3572 = vmax.f32 %v3476, 0.0
  %v3573 = vmax.f32 %v3477, 0.0
  %v3574 = vmax.f32 %v3478, 0.0
  %v3575 = vmax.f32 %v3479, 0.0
  %v3576 = vmax.f32 %v3480, 0.0
  %v3577 = vmax.f32 %v3481, 0.0
  %v3578 = vmax.f32 %v3482, 0.0
  %v3579 = vmax.f32 %v3483, 0.0
  %v3580 = vmax.f32 %v3484, 0.0
  %v3581 = vmax.f32 %v3485, 0.0
  %v3582 = vmax.f32 %v3486, 0.0
  %v3583 = vmax.f32 %v3487, 0.0
  %v3584 = vmax.f32 %v3488, 0.0
  %v3585 = vmax.f32 %v3489, 0.0
  %v3586 = vmax.f32 %v3490, 0.0
  %v3587 = vmax.f32 %v3491, 0.0
  %v3588 = vmax.f32 %v3492, 0.0
  %v3589 = vmax.f32 %v3493, 0.0
  %v3590 = vmax.f32 %v3494, 0.0
  %v3591 = vmax.f32 %v3495, 0.0
  %v3592 = vmax.f32 %v3496, 0.0
  %v3593 = vmax.f32 %v3497, 0.0
  %v3594 = vmax.f32 %v3498, 0.0
  %v3595 = vmax.f32 %v3499, 0.0
  %v3596 = vmax.f32 %v3500, 0.0
  %v3597 = vmax.f32 %v3501, 0.0
  %v3598 = vmax.f32 %v3502, 0.0
  %v3599 = vmax.f32 %v3503, 0.0
  %v3600 = vmax.f32 %v3504, 0.0
  %v3601 = vmax.f32 %v3505, 0.0
  %v3602 = vmax.f32 %v3506, 0.0
  %v3603 = vmax.f32 %v3507, 0.0
  %v3604 = vmax.f32 %v3508, 0.0
  %v3605 = vmax.f32 %v3509, 0.0
  %v3606 = vmax.f32 %v3510, 0.0
  %v3607 = vmax.f32 %v3511, 0.0
  %v3608 = vmax.f32 %v3512, 0.0
  %v3609 = vmax.f32 %v3513, 0.0
  %v3610 = vmax.f32 %v3514, 0.0
  %v3611 = vmax.f32 %v3515, 0.0
  %v3612 = vmax.f32 %v3516, 0.0
  %v3613 = vmax.f32 %v3517, 0.0
  %v3614 = vmax.f32 %v3518, 0.0
  %v3615 = vmax.f32 %v3519, 0.0
  %v3616 = vmax.f32 %v3520, 0.0
  %v3617 = vld [vmem:[%s3] sm:$0xff]
  %v3618 = vld [vmem:[%s3 + $0x8] sm:$0xff]
  %v3619 = vld [vmem:[%s3 + $0x10] sm:$0xff]
  %v3620 = vld [vmem:[%s3 + $0x18] sm:$0xff]
  %v3621 = vld [vmem:[%s3 + $0x20] sm:$0xff]
  %v3622 = vld [vmem:[%s3 + $0x28] sm:$0xff]
  %v3623 = vld [vmem:[%s3 + $0x30] sm:$0xff]
  %v3624 = vld [vmem:[%s3 + $0x38] sm:$0xff]
  %v3625 = vld [vmem:[%s3 + $0x40] sm:$0xff]
  %v3626 = vld [vmem:[%s3 + $0x48] sm:$0xff]
  %v3627 = vld [vmem:[%s3 + $0x50] sm:$0xff]
  %v3628 = vld [vmem:[%s3 + $0x58] sm:$0xff]
  %v3629 = vld [vmem:[%s3 + $0x60] sm:$0xff]
  %v3630 = vld [vmem:[%s3 + $0x68] sm:$0xff]
  %v3631 = vld [vmem:[%s3 + $0x70] sm:$0xff]
  %v3632 = vld [vmem:[%s3 + $0x78] sm:$0xff]
  %v3633 = vld [vmem:[%s3 + $0x80] sm:$0xff]
  %v3634 = vld [vmem:[%s3 + $0x88] sm:$0xff]
  %v3635 = vld [vmem:[%s3 + $0x90] sm:$0xff]
  %v3636 = vld [vmem:[%s3 + $0x98] sm:$0xff]
  %v3637 = vld [vmem:[%s3 + $0xa0] sm:$0xff]
  %v3638 = vld [vmem:[%s3 + $0xa8] sm:$0xff]
  %v3639 = vld [vmem:[%s3 + $0xb0] sm:$0xff]
  %v3640 = vld [vmem:[%s3 + $0xb8] sm:$0xff]
  %v3641 = vld [vmem:[%s3 + $0xc0] sm:$0xff]
  %v3642 = vld [vmem:[%s3 + $0xc8] sm:$0xff]
  %v3643 = vld [vmem:[%s3 + $0xd0] sm:$0xff]
  %v3644 = vld [vmem:[%s3 + $0xd8] sm:$0xff]
  %v3645 = vld [vmem:[%s3 + $0xe0] sm:$0xff]
  %v3646 = vld [vmem:[%s3 + $0xe8] sm:$0xff]
  %v3647 = vld [vmem:[%s3 + $0xf0] sm:$0xff]
  %v3648 = vld [vmem:[%s3 + $0xf8] sm:$0xff]
  %v3649 = vld [vmem:[%s3 + $0x100] sm:$0xff]
  %v3650 = vld [vmem:[%s3 + $0x108] sm:$0xff]
  %v3651 = vld [vmem:[%s3 + $0x110] sm:$0xff]
  %v3652 = vld [vmem:[%s3 + $0x118] sm:$0xff]
  %v3653 = vld [vmem:[%s3 + $0x120] sm:$0xff]
  %v3654 = vld [vmem:[%s3 + $0x128] sm:$0xff]
  %v3655 = vld [vmem:[%s3 + $0x130] sm:$0xff]
  %v3656 = vld [vmem:[%s3 + $0x138] sm:$0xff]
  %v3657 = vld [vmem:[%s3 + $0x140] sm:$0xff]
  %v3658 = vld [vmem:[%s3 + $0x148] sm:$0xff]
  %v3659 = vld [vmem:[%s3 + $0x150] sm:$0xff]
  %v3660 = vld [vmem:[%s3 + $0x158] sm:$0xff]
  %v3661 = vld [vmem:[%s3 + $0x160] sm:$0xff]
  %v3662 = vld [vmem:[%s3 + $0x168] sm:$0xff]
  %v3663 = vld [vmem:[%s3 + $0x170] sm:$0xff]
  %v3664 = vld [vmem:[%s3 + $0x178] sm:$0xff]
  %v3665 = vld [vmem:[%s3 + $0x180] sm:$0xff]
  %v3666 = vld [vmem:[%s3 + $0x188] sm:$0xff]
  %v3667 = vld [vmem:[%s3 + $0x190] sm:$0xff]
  %v3668 = vld [vmem:[%s3 + $0x198] sm:$0xff]
  %v3669 = vld [vmem:[%s3 + $0x1a0] sm:$0xff]
  %v3670 = vld [vmem:[%s3 + $0x1a8] sm:$0xff]
  %v3671 = vld [vmem:[%s3 + $0x1b0] sm:$0xff]
  %v3672 = vld [vmem:[%s3 + $0x1b8] sm:$0xff]
  %v3673 = vld [vmem:[%s3 + $0x1c0] sm:$0x3f]
  %v3674 = vld [vmem:[%s3 + $0x1c8] sm:$0x3f]
  %s3675 = scalar_lea.vmem %s3, 464
  %v3676 = vld [vmem:[%s3675] sm:$0xff]
  %v3677 = vld [vmem:[%s3675 + $0x8] sm:$0xff]
  %v3678 = vld [vmem:[%s3675 + $0x10] sm:$0xff]
  %v3679 = vld [vmem:[%s3675 + $0x18] sm:$0xff]
  %v3680 = vld [vmem:[%s3675 + $0x20] sm:$0xff]
  %v3681 = vld [vmem:[%s3675 + $0x28] sm:$0xff]
  %v3682 = vld [vmem:[%s3675 + $0x30] sm:$0xff]
  %v3683 = vld [vmem:[%s3675 + $0x38] sm:$0xff]
  %v3684 = vld [vmem:[%s3675 + $0x40] sm:$0xff]
  %v3685 = vld [vmem:[%s3675 + $0x48] sm:$0xff]
  %v3686 = vld [vmem:[%s3675 + $0x50] sm:$0xff]
  %v3687 = vld [vmem:[%s3675 + $0x58] sm:$0xff]
  %v3688 = vld [vmem:[%s3675 + $0x60] sm:$0xff]
  %v3689 = vld [vmem:[%s3675 + $0x68] sm:$0xff]
  %v3690 = vld [vmem:[%s3675 + $0x70] sm:$0xff]
  %v3691 = vld [vmem:[%s3675 + $0x78] sm:$0xff]
  %v3692 = vld [vmem:[%s3675 + $0x80] sm:$0xff]
  %v3693 = vld [vmem:[%s3675 + $0x88] sm:$0xff]
  %v3694 = vld [vmem:[%s3675 + $0x90] sm:$0xff]
  %v3695 = vld [vmem:[%s3675 + $0x98] sm:$0xff]
  %v3696 = vld [vmem:[%s3675 + $0xa0] sm:$0xff]
  %v3697 = vld [vmem:[%s3675 + $0xa8] sm:$0xff]
  %v3698 = vld [vmem:[%s3675 + $0xb0] sm:$0xff]
  %v3699 = vld [vmem:[%s3675 + $0xb8] sm:$0xff]
  %v3700 = vld [vmem:[%s3675 + $0xc0] sm:$0xff]
  %v3701 = vld [vmem:[%s3675 + $0xc8] sm:$0xff]
  %v3702 = vld [vmem:[%s3675 + $0xd0] sm:$0xff]
  %v3703 = vld [vmem:[%s3675 + $0xd8] sm:$0xff]
  %v3704 = vld [vmem:[%s3675 + $0xe0] sm:$0xff]
  %v3705 = vld [vmem:[%s3675 + $0xe8] sm:$0xff]
  %v3706 = vld [vmem:[%s3675 + $0xf0] sm:$0xff]
  %v3707 = vld [vmem:[%s3675 + $0xf8] sm:$0xff]
  %v3708 = vld [vmem:[%s3675 + $0x100] sm:$0xff]
  %v3709 = vld [vmem:[%s3675 + $0x108] sm:$0xff]
  %v3710 = vld [vmem:[%s3675 + $0x110] sm:$0xff]
  %v3711 = vld [vmem:[%s3675 + $0x118] sm:$0xff]
  %v3712 = vld [vmem:[%s3675 + $0x120] sm:$0xff]
  %v3713 = vld [vmem:[%s3675 + $0x128] sm:$0xff]
  %v3714 = vld [vmem:[%s3675 + $0x130] sm:$0xff]
  %v3715 = vld [vmem:[%s3675 + $0x138] sm:$0xff]
  %v3716 = vld [vmem:[%s3675 + $0x140] sm:$0xff]
  %v3717 = vld [vmem:[%s3675 + $0x148] sm:$0xff]
  %v3718 = vld [vmem:[%s3675 + $0x150] sm:$0xff]
  %v3719 = vld [vmem:[%s3675 + $0x158] sm:$0xff]
  %v3720 = vld [vmem:[%s3675 + $0x160] sm:$0xff]
  %v3721 = vld [vmem:[%s3675 + $0x168] sm:$0xff]
  %v3722 = vld [vmem:[%s3675 + $0x170] sm:$0xff]
  %v3723 = vld [vmem:[%s3675 + $0x178] sm:$0xff]
  %v3724 = vld [vmem:[%s3675 + $0x180] sm:$0xff]
  %v3725 = vld [vmem:[%s3675 + $0x188] sm:$0xff]
  %v3726 = vld [vmem:[%s3675 + $0x190] sm:$0xff]
  %v3727 = vld [vmem:[%s3675 + $0x198] sm:$0xff]
  %v3728 = vld [vmem:[%s3675 + $0x1a0] sm:$0xff]
  %v3729 = vld [vmem:[%s3675 + $0x1a8] sm:$0xff]
  %v3730 = vld [vmem:[%s3675 + $0x1b0] sm:$0xff]
  %v3731 = vld [vmem:[%s3675 + $0x1b8] sm:$0xff]
  %v3732 = vld [vmem:[%s3675 + $0x1c0] sm:$0x3f]
  %v3733 = vld [vmem:[%s3675 + $0x1c8] sm:$0x3f]
  %v3798 = vlaneseq
  %v3799 = vshrl.u32 %v3798, 7
  %v3800 = vsub.s32 0, %v3799
  %v3801 = vrot.slane %v3522, %v3800
  %v3802 = vlaneseq
  %v3803 = vshrl.u32 %v3802, 7
  %v3804 = vsub.s32 2, %v3803
  %v3805 = vrot.slane %v3522, %v3804
  %v3806 = vlaneseq
  %v3807 = vshrl.u32 %v3806, 7
  %v3808 = vsub.s32 0, %v3807
  %v3809 = vrot.slane %v3523, %v3808
  %v3810 = vlaneseq
  %v3811 = vshrl.u32 %v3810, 7
  %v3812 = vsub.s32 2, %v3811
  %v3813 = vrot.slane %v3523, %v3812
  %v3814 = vlaneseq
  %v3815 = vshrl.u32 %v3814, 7
  %v3816 = vsub.s32 0, %v3815
  %v3817 = vrot.slane %v3524, %v3816
  %v3818 = vlaneseq
  %v3819 = vshrl.u32 %v3818, 7
  %v3820 = vsub.s32 2, %v3819
  %v3821 = vrot.slane %v3524, %v3820
  %v3822 = vlaneseq
  %v3823 = vshrl.u32 %v3822, 7
  %v3824 = vsub.s32 0, %v3823
  %v3825 = vrot.slane %v3525, %v3824
  %v3826 = vlaneseq
  %v3827 = vshrl.u32 %v3826, 7
  %v3828 = vsub.s32 2, %v3827
  %v3829 = vrot.slane %v3525, %v3828
  %v3830 = vlaneseq
  %v3831 = vshrl.u32 %v3830, 7
  %v3832 = vsub.s32 0, %v3831
  %v3833 = vrot.slane %v3526, %v3832
  %v3834 = vlaneseq
  %v3835 = vshrl.u32 %v3834, 7
  %v3836 = vsub.s32 2, %v3835
  %v3837 = vrot.slane %v3526, %v3836
  %v3838 = vlaneseq
  %v3839 = vshrl.u32 %v3838, 7
  %v3840 = vsub.s32 0, %v3839
  %v3841 = vrot.slane %v3527, %v3840
  %v3842 = vlaneseq
  %v3843 = vshrl.u32 %v3842, 7
  %v3844 = vsub.s32 2, %v3843
  %v3845 = vrot.slane %v3527, %v3844
  %v3846 = vlaneseq
  %v3847 = vshrl.u32 %v3846, 7
  %v3848 = vsub.s32 0, %v3847
  %v3849 = vrot.slane %v3528, %v3848
  %v3850 = vlaneseq
  %v3851 = vshrl.u32 %v3850, 7
  %v3852 = vsub.s32 2, %v3851
  %v3853 = vrot.slane %v3528, %v3852
  %v3854 = vlaneseq
  %v3855 = vshrl.u32 %v3854, 7
  %v3856 = vsub.s32 0, %v3855
  %v3857 = vrot.slane %v3529, %v3856
  %v3858 = vlaneseq
  %v3859 = vshrl.u32 %v3858, 7
  %v3860 = vsub.s32 2, %v3859
  %v3861 = vrot.slane %v3529, %v3860
  %v3862 = vlaneseq
  %v3863 = vshrl.u32 %v3862, 7
  %v3864 = vsub.s32 0, %v3863
  %v3865 = vrot.slane %v3534, %v3864
  %v3866 = vlaneseq
  %v3867 = vshrl.u32 %v3866, 7
  %v3868 = vsub.s32 2, %v3867
  %v3869 = vrot.slane %v3534, %v3868
  %v3870 = vlaneseq
  %v3871 = vshrl.u32 %v3870, 7
  %v3872 = vsub.s32 0, %v3871
  %v3873 = vrot.slane %v3535, %v3872
  %v3874 = vlaneseq
  %v3875 = vshrl.u32 %v3874, 7
  %v3876 = vsub.s32 2, %v3875
  %v3877 = vrot.slane %v3535, %v3876
  %v3878 = vlaneseq
  %v3879 = vshrl.u32 %v3878, 7
  %v3880 = vsub.s32 0, %v3879
  %v3881 = vrot.slane %v3536, %v3880
  %v3882 = vlaneseq
  %v3883 = vshrl.u32 %v3882, 7
  %v3884 = vsub.s32 2, %v3883
  %v3885 = vrot.slane %v3536, %v3884
  %v3886 = vlaneseq
  %v3887 = vshrl.u32 %v3886, 7
  %v3888 = vsub.s32 0, %v3887
  %v3889 = vrot.slane %v3537, %v3888
  %v3890 = vlaneseq
  %v3891 = vshrl.u32 %v3890, 7
  %v3892 = vsub.s32 2, %v3891
  %v3893 = vrot.slane %v3537, %v3892
  %v3894 = vlaneseq
  %v3895 = vshrl.u32 %v3894, 7
  %v3896 = vsub.s32 0, %v3895
  %v3897 = vrot.slane %v3538, %v3896
  %v3898 = vlaneseq
  %v3899 = vshrl.u32 %v3898, 7
  %v3900 = vsub.s32 2, %v3899
  %v3901 = vrot.slane %v3538, %v3900
  %v3902 = vlaneseq
  %v3903 = vshrl.u32 %v3902, 7
  %v3904 = vsub.s32 0, %v3903
  %v3905 = vrot.slane %v3539, %v3904
  %v3906 = vlaneseq
  %v3907 = vshrl.u32 %v3906, 7
  %v3908 = vsub.s32 2, %v3907
  %v3909 = vrot.slane %v3539, %v3908
  %v3910 = vlaneseq
  %v3911 = vshrl.u32 %v3910, 7
  %v3912 = vsub.s32 0, %v3911
  %v3913 = vrot.slane %v3540, %v3912
  %v3914 = vlaneseq
  %v3915 = vshrl.u32 %v3914, 7
  %v3916 = vsub.s32 2, %v3915
  %v3917 = vrot.slane %v3540, %v3916
  %v3918 = vlaneseq
  %v3919 = vshrl.u32 %v3918, 7
  %v3920 = vsub.s32 0, %v3919
  %v3921 = vrot.slane %v3541, %v3920
  %v3922 = vlaneseq
  %v3923 = vshrl.u32 %v3922, 7
  %v3924 = vsub.s32 2, %v3923
  %v3925 = vrot.slane %v3541, %v3924
  %v3926 = vlaneseq
  %v3927 = vshrl.u32 %v3926, 7
  %v3928 = vsub.s32 0, %v3927
  %v3929 = vrot.slane %v3546, %v3928
  %v3930 = vlaneseq
  %v3931 = vshrl.u32 %v3930, 7
  %v3932 = vsub.s32 2, %v3931
  %v3933 = vrot.slane %v3546, %v3932
  %v3934 = vlaneseq
  %v3935 = vshrl.u32 %v3934, 7
  %v3936 = vsub.s32 0, %v3935
  %v3937 = vrot.slane %v3547, %v3936
  %v3938 = vlaneseq
  %v3939 = vshrl.u32 %v3938, 7
  %v3940 = vsub.s32 2, %v3939
  %v3941 = vrot.slane %v3547, %v3940
  %v3942 = vlaneseq
  %v3943 = vshrl.u32 %v3942, 7
  %v3944 = vsub.s32 0, %v3943
  %v3945 = vrot.slane %v3548, %v3944
  %v3946 = vlaneseq
  %v3947 = vshrl.u32 %v3946, 7
  %v3948 = vsub.s32 2, %v3947
  %v3949 = vrot.slane %v3548, %v3948
  %v3950 = vlaneseq
  %v3951 = vshrl.u32 %v3950, 7
  %v3952 = vsub.s32 0, %v3951
  %v3953 = vrot.slane %v3549, %v3952
  %v3954 = vlaneseq
  %v3955 = vshrl.u32 %v3954, 7
  %v3956 = vsub.s32 2, %v3955
  %v3957 = vrot.slane %v3549, %v3956
  %v3958 = vlaneseq
  %v3959 = vshrl.u32 %v3958, 7
  %v3960 = vsub.s32 0, %v3959
  %v3961 = vrot.slane %v3550, %v3960
  %v3962 = vlaneseq
  %v3963 = vshrl.u32 %v3962, 7
  %v3964 = vsub.s32 2, %v3963
  %v3965 = vrot.slane %v3550, %v3964
  %v3966 = vlaneseq
  %v3967 = vshrl.u32 %v3966, 7
  %v3968 = vsub.s32 0, %v3967
  %v3969 = vrot.slane %v3551, %v3968
  %v3970 = vlaneseq
  %v3971 = vshrl.u32 %v3970, 7
  %v3972 = vsub.s32 2, %v3971
  %v3973 = vrot.slane %v3551, %v3972
  %v3974 = vlaneseq
  %v3975 = vshrl.u32 %v3974, 7
  %v3976 = vsub.s32 0, %v3975
  %v3977 = vrot.slane %v3552, %v3976
  %v3978 = vlaneseq
  %v3979 = vshrl.u32 %v3978, 7
  %v3980 = vsub.s32 2, %v3979
  %v3981 = vrot.slane %v3552, %v3980
  %v3982 = vlaneseq
  %v3983 = vshrl.u32 %v3982, 7
  %v3984 = vsub.s32 0, %v3983
  %v3985 = vrot.slane %v3553, %v3984
  %v3986 = vlaneseq
  %v3987 = vshrl.u32 %v3986, 7
  %v3988 = vsub.s32 2, %v3987
  %v3989 = vrot.slane %v3553, %v3988
  %v3990 = vlaneseq
  %v3991 = vshrl.u32 %v3990, 7
  %v3992 = vsub.s32 0, %v3991
  %v3993 = vrot.slane %v3558, %v3992
  %v3994 = vlaneseq
  %v3995 = vshrl.u32 %v3994, 7
  %v3996 = vsub.s32 2, %v3995
  %v3997 = vrot.slane %v3558, %v3996
  %v3998 = vlaneseq
  %v3999 = vshrl.u32 %v3998, 7
  %v4000 = vsub.s32 0, %v3999
  %v4001 = vrot.slane %v3559, %v4000
  %v4002 = vlaneseq
  %v4003 = vshrl.u32 %v4002, 7
  %v4004 = vsub.s32 2, %v4003
  %v4005 = vrot.slane %v3559, %v4004
  %v4006 = vlaneseq
  %v4007 = vshrl.u32 %v4006, 7
  %v4008 = vsub.s32 0, %v4007
  %v4009 = vrot.slane %v3560, %v4008
  %v4010 = vlaneseq
  %v4011 = vshrl.u32 %v4010, 7
  %v4012 = vsub.s32 2, %v4011
  %v4013 = vrot.slane %v3560, %v4012
  %v4014 = vlaneseq
  %v4015 = vshrl.u32 %v4014, 7
  %v4016 = vsub.s32 0, %v4015
  %v4017 = vrot.slane %v3561, %v4016
  %v4018 = vlaneseq
  %v4019 = vshrl.u32 %v4018, 7
  %v4020 = vsub.s32 2, %v4019
  %v4021 = vrot.slane %v3561, %v4020
  %v4022 = vlaneseq
  %v4023 = vshrl.u32 %v4022, 7
  %v4024 = vsub.s32 0, %v4023
  %v4025 = vrot.slane %v3562, %v4024
  %v4026 = vlaneseq
  %v4027 = vshrl.u32 %v4026, 7
  %v4028 = vsub.s32 2, %v4027
  %v4029 = vrot.slane %v3562, %v4028
  %v4030 = vlaneseq
  %v4031 = vshrl.u32 %v4030, 7
  %v4032 = vsub.s32 0, %v4031
  %v4033 = vrot.slane %v3563, %v4032
  %v4034 = vlaneseq
  %v4035 = vshrl.u32 %v4034, 7
  %v4036 = vsub.s32 2, %v4035
  %v4037 = vrot.slane %v3563, %v4036
  %v4038 = vlaneseq
  %v4039 = vshrl.u32 %v4038, 7
  %v4040 = vsub.s32 0, %v4039
  %v4041 = vrot.slane %v3564, %v4040
  %v4042 = vlaneseq
  %v4043 = vshrl.u32 %v4042, 7
  %v4044 = vsub.s32 2, %v4043
  %v4045 = vrot.slane %v3564, %v4044
  %v4046 = vlaneseq
  %v4047 = vshrl.u32 %v4046, 7
  %v4048 = vsub.s32 0, %v4047
  %v4049 = vrot.slane %v3565, %v4048
  %v4050 = vlaneseq
  %v4051 = vshrl.u32 %v4050, 7
  %v4052 = vsub.s32 2, %v4051
  %v4053 = vrot.slane %v3565, %v4052
  %v4054 = vlaneseq
  %v4055 = vshrl.u32 %v4054, 7
  %v4056 = vsub.s32 0, %v4055
  %v4057 = vrot.slane %v3570, %v4056
  %v4058 = vlaneseq
  %v4059 = vshrl.u32 %v4058, 7
  %v4060 = vsub.s32 2, %v4059
  %v4061 = vrot.slane %v3570, %v4060
  %v4062 = vlaneseq
  %v4063 = vshrl.u32 %v4062, 7
  %v4064 = vsub.s32 0, %v4063
  %v4065 = vrot.slane %v3571, %v4064
  %v4066 = vlaneseq
  %v4067 = vshrl.u32 %v4066, 7
  %v4068 = vsub.s32 2, %v4067
  %v4069 = vrot.slane %v3571, %v4068
  %v4070 = vlaneseq
  %v4071 = vshrl.u32 %v4070, 7
  %v4072 = vsub.s32 0, %v4071
  %v4073 = vrot.slane %v3572, %v4072
  %v4074 = vlaneseq
  %v4075 = vshrl.u32 %v4074, 7
  %v4076 = vsub.s32 2, %v4075
  %v4077 = vrot.slane %v3572, %v4076
  %v4078 = vlaneseq
  %v4079 = vshrl.u32 %v4078, 7
  %v4080 = vsub.s32 0, %v4079
  %v4081 = vrot.slane %v3573, %v4080
  %v4082 = vlaneseq
  %v4083 = vshrl.u32 %v4082, 7
  %v4084 = vsub.s32 2, %v4083
  %v4085 = vrot.slane %v3573, %v4084
  %v4086 = vlaneseq
  %v4087 = vshrl.u32 %v4086, 7
  %v4088 = vsub.s32 0, %v4087
  %v4089 = vrot.slane %v3574, %v4088
  %v4090 = vlaneseq
  %v4091 = vshrl.u32 %v4090, 7
  %v4092 = vsub.s32 2, %v4091
  %v4093 = vrot.slane %v3574, %v4092
  %v4094 = vlaneseq
  %v4095 = vshrl.u32 %v4094, 7
  %v4096 = vsub.s32 0, %v4095
  %v4097 = vrot.slane %v3575, %v4096
  %v4098 = vlaneseq
  %v4099 = vshrl.u32 %v4098, 7
  %v4100 = vsub.s32 2, %v4099
  %v4101 = vrot.slane %v3575, %v4100
  %v4102 = vlaneseq
  %v4103 = vshrl.u32 %v4102, 7
  %v4104 = vsub.s32 0, %v4103
  %v4105 = vrot.slane %v3576, %v4104
  %v4106 = vlaneseq
  %v4107 = vshrl.u32 %v4106, 7
  %v4108 = vsub.s32 2, %v4107
  %v4109 = vrot.slane %v3576, %v4108
  %v4110 = vlaneseq
  %v4111 = vshrl.u32 %v4110, 7
  %v4112 = vsub.s32 0, %v4111
  %v4113 = vrot.slane %v3577, %v4112
  %v4114 = vlaneseq
  %v4115 = vshrl.u32 %v4114, 7
  %v4116 = vsub.s32 2, %v4115
  %v4117 = vrot.slane %v3577, %v4116
  %v4118 = vlaneseq
  %v4119 = vshrl.u32 %v4118, 7
  %v4120 = vsub.s32 0, %v4119
  %v4121 = vrot.slane %v3582, %v4120
  %v4122 = vlaneseq
  %v4123 = vshrl.u32 %v4122, 7
  %v4124 = vsub.s32 2, %v4123
  %v4125 = vrot.slane %v3582, %v4124
  %v4126 = vlaneseq
  %v4127 = vshrl.u32 %v4126, 7
  %v4128 = vsub.s32 0, %v4127
  %v4129 = vrot.slane %v3583, %v4128
  %v4130 = vlaneseq
  %v4131 = vshrl.u32 %v4130, 7
  %v4132 = vsub.s32 2, %v4131
  %v4133 = vrot.slane %v3583, %v4132
  %v4134 = vlaneseq
  %v4135 = vshrl.u32 %v4134, 7
  %v4136 = vsub.s32 0, %v4135
  %v4137 = vrot.slane %v3584, %v4136
  %v4138 = vlaneseq
  %v4139 = vshrl.u32 %v4138, 7
  %v4140 = vsub.s32 2, %v4139
  %v4141 = vrot.slane %v3584, %v4140
  %v4142 = vlaneseq
  %v4143 = vshrl.u32 %v4142, 7
  %v4144 = vsub.s32 0, %v4143
  %v4145 = vrot.slane %v3585, %v4144
  %v4146 = vlaneseq
  %v4147 = vshrl.u32 %v4146, 7
  %v4148 = vsub.s32 2, %v4147
  %v4149 = vrot.slane %v3585, %v4148
  %v4150 = vlaneseq
  %v4151 = vshrl.u32 %v4150, 7
  %v4152 = vsub.s32 0, %v4151
  %v4153 = vrot.slane %v3586, %v4152
  %v4154 = vlaneseq
  %v4155 = vshrl.u32 %v4154, 7
  %v4156 = vsub.s32 2, %v4155
  %v4157 = vrot.slane %v3586, %v4156
  %v4158 = vlaneseq
  %v4159 = vshrl.u32 %v4158, 7
  %v4160 = vsub.s32 0, %v4159
  %v4161 = vrot.slane %v3587, %v4160
  %v4162 = vlaneseq
  %v4163 = vshrl.u32 %v4162, 7
  %v4164 = vsub.s32 2, %v4163
  %v4165 = vrot.slane %v3587, %v4164
  %v4166 = vlaneseq
  %v4167 = vshrl.u32 %v4166, 7
  %v4168 = vsub.s32 0, %v4167
  %v4169 = vrot.slane %v3588, %v4168
  %v4170 = vlaneseq
  %v4171 = vshrl.u32 %v4170, 7
  %v4172 = vsub.s32 2, %v4171
  %v4173 = vrot.slane %v3588, %v4172
  %v4174 = vlaneseq
  %v4175 = vshrl.u32 %v4174, 7
  %v4176 = vsub.s32 0, %v4175
  %v4177 = vrot.slane %v3589, %v4176
  %v4178 = vlaneseq
  %v4179 = vshrl.u32 %v4178, 7
  %v4180 = vsub.s32 2, %v4179
  %v4181 = vrot.slane %v3589, %v4180
  %v4182 = vlaneseq
  %v4183 = vshrl.u32 %v4182, 7
  %v4184 = vsub.s32 0, %v4183
  %v4185 = vrot.slane %v3594, %v4184
  %v4186 = vlaneseq
  %v4187 = vshrl.u32 %v4186, 7
  %v4188 = vsub.s32 2, %v4187
  %v4189 = vrot.slane %v3594, %v4188
  %v4190 = vlaneseq
  %v4191 = vshrl.u32 %v4190, 7
  %v4192 = vsub.s32 0, %v4191
  %v4193 = vrot.slane %v3595, %v4192
  %v4194 = vlaneseq
  %v4195 = vshrl.u32 %v4194, 7
  %v4196 = vsub.s32 2, %v4195
  %v4197 = vrot.slane %v3595, %v4196
  %v4198 = vlaneseq
  %v4199 = vshrl.u32 %v4198, 7
  %v4200 = vsub.s32 0, %v4199
  %v4201 = vrot.slane %v3596, %v4200
  %v4202 = vlaneseq
  %v4203 = vshrl.u32 %v4202, 7
  %v4204 = vsub.s32 2, %v4203
  %v4205 = vrot.slane %v3596, %v4204
  %v4206 = vlaneseq
  %v4207 = vshrl.u32 %v4206, 7
  %v4208 = vsub.s32 0, %v4207
  %v4209 = vrot.slane %v3597, %v4208
  %v4210 = vlaneseq
  %v4211 = vshrl.u32 %v4210, 7
  %v4212 = vsub.s32 2, %v4211
  %v4213 = vrot.slane %v3597, %v4212
  %v4214 = vlaneseq
  %v4215 = vshrl.u32 %v4214, 7
  %v4216 = vsub.s32 0, %v4215
  %v4217 = vrot.slane %v3598, %v4216
  %v4218 = vlaneseq
  %v4219 = vshrl.u32 %v4218, 7
  %v4220 = vsub.s32 2, %v4219
  %v4221 = vrot.slane %v3598, %v4220
  %v4222 = vlaneseq
  %v4223 = vshrl.u32 %v4222, 7
  %v4224 = vsub.s32 0, %v4223
  %v4225 = vrot.slane %v3599, %v4224
  %v4226 = vlaneseq
  %v4227 = vshrl.u32 %v4226, 7
  %v4228 = vsub.s32 2, %v4227
  %v4229 = vrot.slane %v3599, %v4228
  %v4230 = vlaneseq
  %v4231 = vshrl.u32 %v4230, 7
  %v4232 = vsub.s32 0, %v4231
  %v4233 = vrot.slane %v3600, %v4232
  %v4234 = vlaneseq
  %v4235 = vshrl.u32 %v4234, 7
  %v4236 = vsub.s32 2, %v4235
  %v4237 = vrot.slane %v3600, %v4236
  %v4238 = vlaneseq
  %v4239 = vshrl.u32 %v4238, 7
  %v4240 = vsub.s32 0, %v4239
  %v4241 = vrot.slane %v3601, %v4240
  %v4242 = vlaneseq
  %v4243 = vshrl.u32 %v4242, 7
  %v4244 = vsub.s32 2, %v4243
  %v4245 = vrot.slane %v3601, %v4244
  %v4246 = vlaneseq
  %v4247 = vshrl.u32 %v4246, 7
  %v4248 = vsub.s32 0, %v4247
  %v4249 = vrot.slane %v3606, %v4248
  %v4250 = vlaneseq
  %v4251 = vshrl.u32 %v4250, 7
  %v4252 = vsub.s32 2, %v4251
  %v4253 = vrot.slane %v3606, %v4252
  %v4254 = vlaneseq
  %v4255 = vshrl.u32 %v4254, 7
  %v4256 = vsub.s32 0, %v4255
  %v4257 = vrot.slane %v3607, %v4256
  %v4258 = vlaneseq
  %v4259 = vshrl.u32 %v4258, 7
  %v4260 = vsub.s32 2, %v4259
  %v4261 = vrot.slane %v3607, %v4260
  %v4262 = vlaneseq
  %v4263 = vshrl.u32 %v4262, 7
  %v4264 = vsub.s32 0, %v4263
  %v4265 = vrot.slane %v3608, %v4264
  %v4266 = vlaneseq
  %v4267 = vshrl.u32 %v4266, 7
  %v4268 = vsub.s32 2, %v4267
  %v4269 = vrot.slane %v3608, %v4268
  %v4270 = vlaneseq
  %v4271 = vshrl.u32 %v4270, 7
  %v4272 = vsub.s32 0, %v4271
  %v4273 = vrot.slane %v3609, %v4272
  %v4274 = vlaneseq
  %v4275 = vshrl.u32 %v4274, 7
  %v4276 = vsub.s32 2, %v4275
  %v4277 = vrot.slane %v3609, %v4276
  %v4278 = vlaneseq
  %v4279 = vshrl.u32 %v4278, 7
  %v4280 = vsub.s32 0, %v4279
  %v4281 = vrot.slane %v3610, %v4280
  %v4282 = vlaneseq
  %v4283 = vshrl.u32 %v4282, 7
  %v4284 = vsub.s32 2, %v4283
  %v4285 = vrot.slane %v3610, %v4284
  %v4286 = vlaneseq
  %v4287 = vshrl.u32 %v4286, 7
  %v4288 = vsub.s32 0, %v4287
  %v4289 = vrot.slane %v3611, %v4288
  %v4290 = vlaneseq
  %v4291 = vshrl.u32 %v4290, 7
  %v4292 = vsub.s32 2, %v4291
  %v4293 = vrot.slane %v3611, %v4292
  %v4294 = vlaneseq
  %v4295 = vshrl.u32 %v4294, 7
  %v4296 = vsub.s32 0, %v4295
  %v4297 = vrot.slane %v3612, %v4296
  %v4298 = vlaneseq
  %v4299 = vshrl.u32 %v4298, 7
  %v4300 = vsub.s32 2, %v4299
  %v4301 = vrot.slane %v3612, %v4300
  %v4302 = vlaneseq
  %v4303 = vshrl.u32 %v4302, 7
  %v4304 = vsub.s32 0, %v4303
  %v4305 = vrot.slane %v3613, %v4304
  %v4306 = vlaneseq
  %v4307 = vshrl.u32 %v4306, 7
  %v4308 = vsub.s32 2, %v4307
  %v4309 = vrot.slane %v3613, %v4308
  %vm4310 = vcmask 1041409
  %v4311 = vsel %vm4310, %v3809, %v3801
  %vm4312 = vcmask 1042434
  %v4313 = vsel %vm4312, %v3817, %v4311
  %vm4314 = vcmask 1043459
  %v4315 = vsel %vm4314, %v3825, %v4313
  %vm4316 = vcmask 1044484
  %v4317 = vsel %vm4316, %v3833, %v4315
  %vm4318 = vcmask 1045509
  %v4319 = vsel %vm4318, %v3841, %v4317
  %vm4320 = vcmask 1046534
  %v4321 = vsel %vm4320, %v3849, %v4319
  %vm4322 = vcmask 1047559
  %v4323 = vsel %vm4322, %v3857, %v4321
  %v4324 = vsel %vm4310, %v3813, %v3805
  %v4325 = vsel %vm4312, %v3821, %v4324
  %v4326 = vsel %vm4314, %v3829, %v4325
  %v4327 = vsel %vm4316, %v3837, %v4326
  %v4328 = vsel %vm4318, %v3845, %v4327
  %v4329 = vsel %vm4320, %v3853, %v4328
  %v4330 = vsel %vm4322, %v3861, %v4329
  %v4331 = vsel %vm4310, %v3873, %v3865
  %v4332 = vsel %vm4312, %v3881, %v4331
  %v4333 = vsel %vm4314, %v3889, %v4332
  %v4334 = vsel %vm4316, %v3897, %v4333
  %v4335 = vsel %vm4318, %v3905, %v4334
  %v4336 = vsel %vm4320, %v3913, %v4335
  %v4337 = vsel %vm4322, %v3921, %v4336
  %v4338 = vsel %vm4310, %v3877, %v3869
  %v4339 = vsel %vm4312, %v3885, %v4338
  %v4340 = vsel %vm4314, %v3893, %v4339
  %v4341 = vsel %vm4316, %v3901, %v4340
  %v4342 = vsel %vm4318, %v3909, %v4341
  %v4343 = vsel %vm4320, %v3917, %v4342
  %v4344 = vsel %vm4322, %v3925, %v4343
  %v4345 = vsel %vm4310, %v3937, %v3929
  %v4346 = vsel %vm4312, %v3945, %v4345
  %v4347 = vsel %vm4314, %v3953, %v4346
  %v4348 = vsel %vm4316, %v3961, %v4347
  %v4349 = vsel %vm4318, %v3969, %v4348
  %v4350 = vsel %vm4320, %v3977, %v4349
  %v4351 = vsel %vm4322, %v3985, %v4350
  %v4352 = vsel %vm4310, %v3941, %v3933
  %v4353 = vsel %vm4312, %v3949, %v4352
  %v4354 = vsel %vm4314, %v3957, %v4353
  %v4355 = vsel %vm4316, %v3965, %v4354
  %v4356 = vsel %vm4318, %v3973, %v4355
  %v4357 = vsel %vm4320, %v3981, %v4356
  %v4358 = vsel %vm4322, %v3989, %v4357
  %v4359 = vsel %vm4310, %v4001, %v3993
  %v4360 = vsel %vm4312, %v4009, %v4359
  %v4361 = vsel %vm4314, %v4017, %v4360
  %v4362 = vsel %vm4316, %v4025, %v4361
  %v4363 = vsel %vm4318, %v4033, %v4362
  %v4364 = vsel %vm4320, %v4041, %v4363
  %v4365 = vsel %vm4322, %v4049, %v4364
  %v4366 = vsel %vm4310, %v4005, %v3997
  %v4367 = vsel %vm4312, %v4013, %v4366
  %v4368 = vsel %vm4314, %v4021, %v4367
  %v4369 = vsel %vm4316, %v4029, %v4368
  %v4370 = vsel %vm4318, %v4037, %v4369
  %v4371 = vsel %vm4320, %v4045, %v4370
  %v4372 = vsel %vm4322, %v4053, %v4371
  %v4373 = vsel %vm4310, %v4065, %v4057
  %v4374 = vsel %vm4312, %v4073, %v4373
  %v4375 = vsel %vm4314, %v4081, %v4374
  %v4376 = vsel %vm4316, %v4089, %v4375
  %v4377 = vsel %vm4318, %v4097, %v4376
  %v4378 = vsel %vm4320, %v4105, %v4377
  %v4379 = vsel %vm4322, %v4113, %v4378
  %v4380 = vsel %vm4310, %v4069, %v4061
  %v4381 = vsel %vm4312, %v4077, %v4380
  %v4382 = vsel %vm4314, %v4085, %v4381
  %v4383 = vsel %vm4316, %v4093, %v4382
  %v4384 = vsel %vm4318, %v4101, %v4383
  %v4385 = vsel %vm4320, %v4109, %v4384
  %v4386 = vsel %vm4322, %v4117, %v4385
  %v4387 = vsel %vm4310, %v4129, %v4121
  %v4388 = vsel %vm4312, %v4137, %v4387
  %v4389 = vsel %vm4314, %v4145, %v4388
  %v4390 = vsel %vm4316, %v4153, %v4389
  %v4391 = vsel %vm4318, %v4161, %v4390
  %v4392 = vsel %vm4320, %v4169, %v4391
  %v4393 = vsel %vm4322, %v4177, %v4392
  %v4394 = vsel %vm4310, %v4133, %v4125
  %v4395 = vsel %vm4312, %v4141, %v4394
  %v4396 = vsel %vm4314, %v4149, %v4395
  %v4397 = vsel %vm4316, %v4157, %v4396
  %v4398 = vsel %vm4318, %v4165, %v4397
  %v4399 = vsel %vm4320, %v4173, %v4398
  %v4400 = vsel %vm4322, %v4181, %v4399
  %v4401 = vsel %vm4310, %v4193, %v4185
  %v4402 = vsel %vm4312, %v4201, %v4401
  %v4403 = vsel %vm4314, %v4209, %v4402
  %v4404 = vsel %vm4316, %v4217, %v4403
  %v4405 = vsel %vm4318, %v4225, %v4404
  %v4406 = vsel %vm4320, %v4233, %v4405
  %v4407 = vsel %vm4322, %v4241, %v4406
  %v4408 = vsel %vm4310, %v4197, %v4189
  %v4409 = vsel %vm4312, %v4205, %v4408
  %v4410 = vsel %vm4314, %v4213, %v4409
  %v4411 = vsel %vm4316, %v4221, %v4410
  %v4412 = vsel %vm4318, %v4229, %v4411
  %v4413 = vsel %vm4320, %v4237, %v4412
  %v4414 = vsel %vm4322, %v4245, %v4413
  %v4415 = vsel %vm4310, %v4257, %v4249
  %v4416 = vsel %vm4312, %v4265, %v4415
  %v4417 = vsel %vm4314, %v4273, %v4416
  %v4418 = vsel %vm4316, %v4281, %v4417
  %v4419 = vsel %vm4318, %v4289, %v4418
  %v4420 = vsel %vm4320, %v4297, %v4419
  %v4421 = vsel %vm4322, %v4305, %v4420
  %v4422 = vsel %vm4310, %v4261, %v4253
  %v4423 = vsel %vm4312, %v4269, %v4422
  %v4424 = vsel %vm4314, %v4277, %v4423
  %v4425 = vsel %vm4316, %v4285, %v4424
  %v4426 = vsel %vm4318, %v4293, %v4425
  %v4427 = vsel %vm4320, %v4301, %v4426
  %v4428 = vsel %vm4322, %v4309, %v4427
  %vm4437 = vcmask 834560
  %v4438 = vsel %vm4437, %v4330, 0
  %v4440 = vsel %vm4437, %v4344, 0
  %v4442 = vsel %vm4437, %v4358, 0
  %v4444 = vsel %vm4437, %v4372, 0
  %v4446 = vsel %vm4437, %v4386, 0
  %v4448 = vsel %vm4437, %v4400, 0
  %v4450 = vsel %vm4437, %v4414, 0
  %v4452 = vsel %vm4437, %v4428, 0
  %v4455 = vsel %vm698, %v3732, 0
  %v4458 = vsel %vm698, %v3733, 0
  %4460 = vmatprep.subr.mxu0 %v3707
  %4461 = vmatpush1.msra.mxu0 %v3706
  %4462 = vmatprep.subr.mxu0 %v3705
  %4463 = vmatpush1.msra.mxu0 %v3704
  %4464 = vmatprep.subr.mxu0 %v3703
  %4465 = vmatpush1.msra.mxu0 %v3702
  %4466 = vmatprep.subr.mxu0 %v3701
  %4467 = vmatpush1.msra.mxu0 %v3700
  %4468 = vmatprep.subr.mxu0 %v3699
  %4469 = vmatpush1.msra.mxu0 %v3698
  %4470 = vmatprep.subr.mxu0 %v3697
  %4471 = vmatpush1.msra.mxu0 %v3696
  %4472 = vmatprep.subr.mxu0 %v3695
  %4473 = vmatpush1.msra.mxu0 %v3694
  %4474 = vmatprep.subr.mxu0 %v3693
  %4475 = vmatpush1.msra.mxu0 %v3692
  %4476 = vmatprep.subr.mxu0 %v3691
  %4477 = vmatpush1.msra.mxu0 %v3690
  %4478 = vmatprep.subr.mxu0 %v3689
  %4479 = vmatpush1.msra.mxu0 %v3688
  %4480 = vmatprep.subr.mxu0 %v3687
  %4481 = vmatpush1.msra.mxu0 %v3686
  %4482 = vmatprep.subr.mxu0 %v3685
  %4483 = vmatpush1.msra.mxu0 %v3684
  %4484 = vmatprep.subr.mxu0 %v3683
  %4485 = vmatpush1.msra.mxu0 %v3682
  %4486 = vmatprep.subr.mxu0 %v3681
  %4487 = vmatpush1.msra.mxu0 %v3680
  %4488 = vmatprep.subr.mxu0 %v3679
  %4489 = vmatpush1.msra.mxu0 %v3678
  %4490 = vmatprep.subr.mxu0 %v3677
  %4491 = vmatpush1.msra.mxu0 %v3676
  %4492 = vmatprep.subr.mxu0 0.0
  %4493 = vmatpush2.msra.mxu0 0.0
  %4494 = vmatprep.subr.mxu0 0.0
  %4495 = vmatpush2.msra.mxu0 0.0
  %4496 = vmatprep.subr.mxu0 0.0
  %4497 = vmatpush2.msra.mxu0 0.0
  %4498 = vmatprep.subr.mxu0 %v4458
  %4499 = vmatpush2.msra.mxu0 %v4455
  %4500 = vmatprep.subr.mxu0 %v3731
  %4501 = vmatpush2.msra.mxu0 %v3730
  %4502 = vmatprep.subr.mxu0 %v3729
  %4503 = vmatpush2.msra.mxu0 %v3728
  %4504 = vmatprep.subr.mxu0 %v3727
  %4505 = vmatpush2.msra.mxu0 %v3726
  %4506 = vmatprep.subr.mxu0 %v3725
  %4507 = vmatpush2.msra.mxu0 %v3724
  %4508 = vmatprep.subr.mxu0 %v3723
  %4509 = vmatpush2.msra.mxu0 %v3722
  %4510 = vmatprep.subr.mxu0 %v3721
  %4511 = vmatpush2.msra.mxu0 %v3720
  %4512 = vmatprep.subr.mxu0 %v3719
  %4513 = vmatpush2.msra.mxu0 %v3718
  %4514 = vmatprep.subr.mxu0 %v3717
  %4515 = vmatpush2.msra.mxu0 %v3716
  %4516 = vmatprep.subr.mxu0 %v3715
  %4517 = vmatpush2.msra.mxu0 %v3714
  %4518 = vmatprep.subr.mxu0 %v3713
  %4519 = vmatpush2.msra.mxu0 %v3712
  %4520 = vmatprep.subr.mxu0 %v3711
  %4521 = vmatpush2.msra.mxu0 %v3710
  %4522 = vmatprep.subr.mxu0 %v3709
  %4523 = vmatpush2.msra.mxu0 %v3708
  %4524 = vmatprep.mubr.f32.mxu0 %v4438
  %4525 = vmatmul.mubr.f32.gmra.mxu0 %v4323
  %v4526 = vpop.f32.mrf.mxu0
  %v4527 = vadd.f32 0.0, %v4526
  %v4528 = vpop.f32.mrf.mxu0
  %v4529 = vadd.f32 0.0, %v4528
  %4530 = vmatprep.mubr.f32.mxu0 %v4440
  %4531 = vmatmul.mubr.f32.gmra.mxu0 %v4337
  %v4532 = vpop.f32.mrf.mxu0
  %v4533 = vadd.f32 0.0, %v4532
  %v4534 = vpop.f32.mrf.mxu0
  %v4535 = vadd.f32 0.0, %v4534
  %4536 = vmatprep.mubr.f32.mxu0 %v4442
  %4537 = vmatmul.mubr.f32.gmra.mxu0 %v4351
  %v4538 = vpop.f32.mrf.mxu0
  %v4539 = vadd.f32 0.0, %v4538
  %v4540 = vpop.f32.mrf.mxu0
  %v4541 = vadd.f32 0.0, %v4540
  %4542 = vmatprep.mubr.f32.mxu0 %v4444
  %4543 = vmatmul.mubr.f32.gmra.mxu0 %v4365
  %v4544 = vpop.f32.mrf.mxu0
  %v4545 = vadd.f32 0.0, %v4544
  %v4546 = vpop.f32.mrf.mxu0
  %v4547 = vadd.f32 0.0, %v4546
  %4548 = vmatprep.mubr.f32.mxu0 %v4446
  %4549 = vmatmul.mubr.f32.gmra.mxu0 %v4379
  %v4550 = vpop.f32.mrf.mxu0
  %v4551 = vadd.f32 0.0, %v4550
  %v4552 = vpop.f32.mrf.mxu0
  %v4553 = vadd.f32 0.0, %v4552
  %4554 = vmatprep.mubr.f32.mxu0 %v4448
  %4555 = vmatmul.mubr.f32.gmra.mxu0 %v4393
  %v4556 = vpop.f32.mrf.mxu0
  %v4557 = vadd.f32 0.0, %v4556
  %v4558 = vpop.f32.mrf.mxu0
  %v4559 = vadd.f32 0.0, %v4558
  %4560 = vmatprep.mubr.f32.mxu0 %v4450
  %4561 = vmatmul.mubr.f32.gmra.mxu0 %v4407
  %v4562 = vpop.f32.mrf.mxu0
  %v4563 = vadd.f32 0.0, %v4562
  %v4564 = vpop.f32.mrf.mxu0
  %v4565 = vadd.f32 0.0, %v4564
  %4566 = vmatprep.mubr.f32.mxu0 %v4452
  %4567 = vmatmul.mubr.f32.gmra.mxu0 %v4421
  %v4568 = vpop.f32.mrf.mxu0
  %v4569 = vadd.f32 0.0, %v4568
  %v4570 = vpop.f32.mrf.mxu0
  %v4571 = vadd.f32 0.0, %v4570
  %4572 = vdwg.mxu0
  %v4581 = vlaneseq
  %v4582 = vshrl.u32 %v4581, 7
  %v4583 = vsub.s32 0, %v4582
  %v4584 = vrot.slane %v3521, %v4583
  %v4585 = vlaneseq
  %v4586 = vshrl.u32 %v4585, 7
  %v4587 = vsub.s32 2, %v4586
  %v4588 = vrot.slane %v3521, %v4587
  %v4589 = vlaneseq
  %v4590 = vshrl.u32 %v4589, 7
  %v4591 = vsub.s32 0, %v4590
  %v4592 = vrot.slane %v3533, %v4591
  %v4593 = vlaneseq
  %v4594 = vshrl.u32 %v4593, 7
  %v4595 = vsub.s32 2, %v4594
  %v4596 = vrot.slane %v3533, %v4595
  %v4597 = vlaneseq
  %v4598 = vshrl.u32 %v4597, 7
  %v4599 = vsub.s32 0, %v4598
  %v4600 = vrot.slane %v3545, %v4599
  %v4601 = vlaneseq
  %v4602 = vshrl.u32 %v4601, 7
  %v4603 = vsub.s32 2, %v4602
  %v4604 = vrot.slane %v3545, %v4603
  %v4605 = vlaneseq
  %v4606 = vshrl.u32 %v4605, 7
  %v4607 = vsub.s32 0, %v4606
  %v4608 = vrot.slane %v3557, %v4607
  %v4609 = vlaneseq
  %v4610 = vshrl.u32 %v4609, 7
  %v4611 = vsub.s32 2, %v4610
  %v4612 = vrot.slane %v3557, %v4611
  %v4613 = vlaneseq
  %v4614 = vshrl.u32 %v4613, 7
  %v4615 = vsub.s32 0, %v4614
  %v4616 = vrot.slane %v3569, %v4615
  %v4617 = vlaneseq
  %v4618 = vshrl.u32 %v4617, 7
  %v4619 = vsub.s32 2, %v4618
  %v4620 = vrot.slane %v3569, %v4619
  %v4621 = vlaneseq
  %v4622 = vshrl.u32 %v4621, 7
  %v4623 = vsub.s32 0, %v4622
  %v4624 = vrot.slane %v3581, %v4623
  %v4625 = vlaneseq
  %v4626 = vshrl.u32 %v4625, 7
  %v4627 = vsub.s32 2, %v4626
  %v4628 = vrot.slane %v3581, %v4627
  %v4629 = vlaneseq
  %v4630 = vshrl.u32 %v4629, 7
  %v4631 = vsub.s32 0, %v4630
  %v4632 = vrot.slane %v3593, %v4631
  %v4633 = vlaneseq
  %v4634 = vshrl.u32 %v4633, 7
  %v4635 = vsub.s32 2, %v4634
  %v4636 = vrot.slane %v3593, %v4635
  %v4637 = vlaneseq
  %v4638 = vshrl.u32 %v4637, 7
  %v4639 = vsub.s32 0, %v4638
  %v4640 = vrot.slane %v3605, %v4639
  %v4641 = vlaneseq
  %v4642 = vshrl.u32 %v4641, 7
  %v4643 = vsub.s32 2, %v4642
  %v4644 = vrot.slane %v3605, %v4643
  %v4645 = vsel %vm4310, %v3801, %v4584
  %v4646 = vsel %vm4312, %v3809, %v4645
  %v4647 = vsel %vm4314, %v3817, %v4646
  %v4648 = vsel %vm4316, %v3825, %v4647
  %v4649 = vsel %vm4318, %v3833, %v4648
  %v4650 = vsel %vm4320, %v3841, %v4649
  %v4651 = vsel %vm4322, %v3849, %v4650
  %v4652 = vsel %vm4310, %v3805, %v4588
  %v4653 = vsel %vm4312, %v3813, %v4652
  %v4654 = vsel %vm4314, %v3821, %v4653
  %v4655 = vsel %vm4316, %v3829, %v4654
  %v4656 = vsel %vm4318, %v3837, %v4655
  %v4657 = vsel %vm4320, %v3845, %v4656
  %v4658 = vsel %vm4322, %v3853, %v4657
  %v4659 = vsel %vm4310, %v3865, %v4592
  %v4660 = vsel %vm4312, %v3873, %v4659
  %v4661 = vsel %vm4314, %v3881, %v4660
  %v4662 = vsel %vm4316, %v3889, %v4661
  %v4663 = vsel %vm4318, %v3897, %v4662
  %v4664 = vsel %vm4320, %v3905, %v4663
  %v4665 = vsel %vm4322, %v3913, %v4664
  %v4666 = vsel %vm4310, %v3869, %v4596
  %v4667 = vsel %vm4312, %v3877, %v4666
  %v4668 = vsel %vm4314, %v3885, %v4667
  %v4669 = vsel %vm4316, %v3893, %v4668
  %v4670 = vsel %vm4318, %v3901, %v4669
  %v4671 = vsel %vm4320, %v3909, %v4670
  %v4672 = vsel %vm4322, %v3917, %v4671
  %v4673 = vsel %vm4310, %v3929, %v4600
  %v4674 = vsel %vm4312, %v3937, %v4673
  %v4675 = vsel %vm4314, %v3945, %v4674
  %v4676 = vsel %vm4316, %v3953, %v4675
  %v4677 = vsel %vm4318, %v3961, %v4676
  %v4678 = vsel %vm4320, %v3969, %v4677
  %v4679 = vsel %vm4322, %v3977, %v4678
  %v4680 = vsel %vm4310, %v3933, %v4604
  %v4681 = vsel %vm4312, %v3941, %v4680
  %v4682 = vsel %vm4314, %v3949, %v4681
  %v4683 = vsel %vm4316, %v3957, %v4682
  %v4684 = vsel %vm4318, %v3965, %v4683
  %v4685 = vsel %vm4320, %v3973, %v4684
  %v4686 = vsel %vm4322, %v3981, %v4685
  %v4687 = vsel %vm4310, %v3993, %v4608
  %v4688 = vsel %vm4312, %v4001, %v4687
  %v4689 = vsel %vm4314, %v4009, %v4688
  %v4690 = vsel %vm4316, %v4017, %v4689
  %v4691 = vsel %vm4318, %v4025, %v4690
  %v4692 = vsel %vm4320, %v4033, %v4691
  %v4693 = vsel %vm4322, %v4041, %v4692
  %v4694 = vsel %vm4310, %v3997, %v4612
  %v4695 = vsel %vm4312, %v4005, %v4694
  %v4696 = vsel %vm4314, %v4013, %v4695
  %v4697 = vsel %vm4316, %v4021, %v4696
  %v4698 = vsel %vm4318, %v4029, %v4697
  %v4699 = vsel %vm4320, %v4037, %v4698
  %v4700 = vsel %vm4322, %v4045, %v4699
  %v4701 = vsel %vm4310, %v4057, %v4616
  %v4702 = vsel %vm4312, %v4065, %v4701
  %v4703 = vsel %vm4314, %v4073, %v4702
  %v4704 = vsel %vm4316, %v4081, %v4703
  %v4705 = vsel %vm4318, %v4089, %v4704
  %v4706 = vsel %vm4320, %v4097, %v4705
  %v4707 = vsel %vm4322, %v4105, %v4706
  %v4708 = vsel %vm4310, %v4061, %v4620
  %v4709 = vsel %vm4312, %v4069, %v4708
  %v4710 = vsel %vm4314, %v4077, %v4709
  %v4711 = vsel %vm4316, %v4085, %v4710
  %v4712 = vsel %vm4318, %v4093, %v4711
  %v4713 = vsel %vm4320, %v4101, %v4712
  %v4714 = vsel %vm4322, %v4109, %v4713
  %v4715 = vsel %vm4310, %v4121, %v4624
  %v4716 = vsel %vm4312, %v4129, %v4715
  %v4717 = vsel %vm4314, %v4137, %v4716
  %v4718 = vsel %vm4316, %v4145, %v4717
  %v4719 = vsel %vm4318, %v4153, %v4718
  %v4720 = vsel %vm4320, %v4161, %v4719
  %v4721 = vsel %vm4322, %v4169, %v4720
  %v4722 = vsel %vm4310, %v4125, %v4628
  %v4723 = vsel %vm4312, %v4133, %v4722
  %v4724 = vsel %vm4314, %v4141, %v4723
  %v4725 = vsel %vm4316, %v4149, %v4724
  %v4726 = vsel %vm4318, %v4157, %v4725
  %v4727 = vsel %vm4320, %v4165, %v4726
  %v4728 = vsel %vm4322, %v4173, %v4727
  %v4729 = vsel %vm4310, %v4185, %v4632
  %v4730 = vsel %vm4312, %v4193, %v4729
  %v4731 = vsel %vm4314, %v4201, %v4730
  %v4732 = vsel %vm4316, %v4209, %v4731
  %v4733 = vsel %vm4318, %v4217, %v4732
  %v4734 = vsel %vm4320, %v4225, %v4733
  %v4735 = vsel %vm4322, %v4233, %v4734
  %v4736 = vsel %vm4310, %v4189, %v4636
  %v4737 = vsel %vm4312, %v4197, %v4736
  %v4738 = vsel %vm4314, %v4205, %v4737
  %v4739 = vsel %vm4316, %v4213, %v4738
  %v4740 = vsel %vm4318, %v4221, %v4739
  %v4741 = vsel %vm4320, %v4229, %v4740
  %v4742 = vsel %vm4322, %v4237, %v4741
  %v4743 = vsel %vm4310, %v4249, %v4640
  %v4744 = vsel %vm4312, %v4257, %v4743
  %v4745 = vsel %vm4314, %v4265, %v4744
  %v4746 = vsel %vm4316, %v4273, %v4745
  %v4747 = vsel %vm4318, %v4281, %v4746
  %v4748 = vsel %vm4320, %v4289, %v4747
  %v4749 = vsel %vm4322, %v4297, %v4748
  %v4750 = vsel %vm4310, %v4253, %v4644
  %v4751 = vsel %vm4312, %v4261, %v4750
  %v4752 = vsel %vm4314, %v4269, %v4751
  %v4753 = vsel %vm4316, %v4277, %v4752
  %v4754 = vsel %vm4318, %v4285, %v4753
  %v4755 = vsel %vm4320, %v4293, %v4754
  %v4756 = vsel %vm4322, %v4301, %v4755
  %v4765 = vsel %vm4437, %v4658, 0
  %v4767 = vsel %vm4437, %v4672, 0
  %v4769 = vsel %vm4437, %v4686, 0
  %v4771 = vsel %vm4437, %v4700, 0
  %v4773 = vsel %vm4437, %v4714, 0
  %v4775 = vsel %vm4437, %v4728, 0
  %v4777 = vsel %vm4437, %v4742, 0
  %v4779 = vsel %vm4437, %v4756, 0
  %v4782 = vsel %vm698, %v3673, 0
  %v4785 = vsel %vm698, %v3674, 0
  %4787 = vmatprep.subr.mxu0 %v3648
  %4788 = vmatpush1.msra.mxu0 %v3647
  %4789 = vmatprep.subr.mxu0 %v3646
  %4790 = vmatpush1.msra.mxu0 %v3645
  %4791 = vmatprep.subr.mxu0 %v3644
  %4792 = vmatpush1.msra.mxu0 %v3643
  %4793 = vmatprep.subr.mxu0 %v3642
  %4794 = vmatpush1.msra.mxu0 %v3641
  %4795 = vmatprep.subr.mxu0 %v3640
  %4796 = vmatpush1.msra.mxu0 %v3639
  %4797 = vmatprep.subr.mxu0 %v3638
  %4798 = vmatpush1.msra.mxu0 %v3637
  %4799 = vmatprep.subr.mxu0 %v3636
  %4800 = vmatpush1.msra.mxu0 %v3635
  %4801 = vmatprep.subr.mxu0 %v3634
  %4802 = vmatpush1.msra.mxu0 %v3633
  %4803 = vmatprep.subr.mxu0 %v3632
  %4804 = vmatpush1.msra.mxu0 %v3631
  %4805 = vmatprep.subr.mxu0 %v3630
  %4806 = vmatpush1.msra.mxu0 %v3629
  %4807 = vmatprep.subr.mxu0 %v3628
  %4808 = vmatpush1.msra.mxu0 %v3627
  %4809 = vmatprep.subr.mxu0 %v3626
  %4810 = vmatpush1.msra.mxu0 %v3625
  %4811 = vmatprep.subr.mxu0 %v3624
  %4812 = vmatpush1.msra.mxu0 %v3623
  %4813 = vmatprep.subr.mxu0 %v3622
  %4814 = vmatpush1.msra.mxu0 %v3621
  %4815 = vmatprep.subr.mxu0 %v3620
  %4816 = vmatpush1.msra.mxu0 %v3619
  %4817 = vmatprep.subr.mxu0 %v3618
  %4818 = vmatpush1.msra.mxu0 %v3617
  %4819 = vmatprep.subr.mxu0 0.0
  %4820 = vmatpush2.msra.mxu0 0.0
  %4821 = vmatprep.subr.mxu0 0.0
  %4822 = vmatpush2.msra.mxu0 0.0
  %4823 = vmatprep.subr.mxu0 0.0
  %4824 = vmatpush2.msra.mxu0 0.0
  %4825 = vmatprep.subr.mxu0 %v4785
  %4826 = vmatpush2.msra.mxu0 %v4782
  %4827 = vmatprep.subr.mxu0 %v3672
  %4828 = vmatpush2.msra.mxu0 %v3671
  %4829 = vmatprep.subr.mxu0 %v3670
  %4830 = vmatpush2.msra.mxu0 %v3669
  %4831 = vmatprep.subr.mxu0 %v3668
  %4832 = vmatpush2.msra.mxu0 %v3667
  %4833 = vmatprep.subr.mxu0 %v3666
  %4834 = vmatpush2.msra.mxu0 %v3665
  %4835 = vmatprep.subr.mxu0 %v3664
  %4836 = vmatpush2.msra.mxu0 %v3663
  %4837 = vmatprep.subr.mxu0 %v3662
  %4838 = vmatpush2.msra.mxu0 %v3661
  %4839 = vmatprep.subr.mxu0 %v3660
  %4840 = vmatpush2.msra.mxu0 %v3659
  %4841 = vmatprep.subr.mxu0 %v3658
  %4842 = vmatpush2.msra.mxu0 %v3657
  %4843 = vmatprep.subr.mxu0 %v3656
  %4844 = vmatpush2.msra.mxu0 %v3655
  %4845 = vmatprep.subr.mxu0 %v3654
  %4846 = vmatpush2.msra.mxu0 %v3653
  %4847 = vmatprep.subr.mxu0 %v3652
  %4848 = vmatpush2.msra.mxu0 %v3651
  %4849 = vmatprep.subr.mxu0 %v3650
  %4850 = vmatpush2.msra.mxu0 %v3649
  %4851 = vmatprep.mubr.f32.mxu0 %v4765
  %4852 = vmatmul.mubr.f32.gmra.mxu0 %v4651
  %v4853 = vpop.f32.mrf.mxu0
  %v4854 = vadd.f32 %v4527, %v4853
  %v4855 = vpop.f32.mrf.mxu0
  %v4856 = vadd.f32 %v4529, %v4855
  %4857 = vmatprep.mubr.f32.mxu0 %v4767
  %4858 = vmatmul.mubr.f32.gmra.mxu0 %v4665
  %v4859 = vpop.f32.mrf.mxu0
  %v4860 = vadd.f32 %v4533, %v4859
  %v4861 = vpop.f32.mrf.mxu0
  %v4862 = vadd.f32 %v4535, %v4861
  %4863 = vmatprep.mubr.f32.mxu0 %v4769
  %4864 = vmatmul.mubr.f32.gmra.mxu0 %v4679
  %v4865 = vpop.f32.mrf.mxu0
  %v4866 = vadd.f32 %v4539, %v4865
  %v4867 = vpop.f32.mrf.mxu0
  %v4868 = vadd.f32 %v4541, %v4867
  %4869 = vmatprep.mubr.f32.mxu0 %v4771
  %4870 = vmatmul.mubr.f32.gmra.mxu0 %v4693
  %v4871 = vpop.f32.mrf.mxu0
  %v4872 = vadd.f32 %v4545, %v4871
  %v4873 = vpop.f32.mrf.mxu0
  %v4874 = vadd.f32 %v4547, %v4873
  %4875 = vmatprep.mubr.f32.mxu0 %v4773
  %4876 = vmatmul.mubr.f32.gmra.mxu0 %v4707
  %v4877 = vpop.f32.mrf.mxu0
  %v4878 = vadd.f32 %v4551, %v4877
  %v4879 = vpop.f32.mrf.mxu0
  %v4880 = vadd.f32 %v4553, %v4879
  %4881 = vmatprep.mubr.f32.mxu0 %v4775
  %4882 = vmatmul.mubr.f32.gmra.mxu0 %v4721
  %v4883 = vpop.f32.mrf.mxu0
  %v4884 = vadd.f32 %v4557, %v4883
  %v4885 = vpop.f32.mrf.mxu0
  %v4886 = vadd.f32 %v4559, %v4885
  %4887 = vmatprep.mubr.f32.mxu0 %v4777
  %4888 = vmatmul.mubr.f32.gmra.mxu0 %v4735
  %v4889 = vpop.f32.mrf.mxu0
  %v4890 = vadd.f32 %v4563, %v4889
  %v4891 = vpop.f32.mrf.mxu0
  %v4892 = vadd.f32 %v4565, %v4891
  %4893 = vmatprep.mubr.f32.mxu0 %v4779
  %4894 = vmatmul.mubr.f32.gmra.mxu0 %v4749
  %v4895 = vpop.f32.mrf.mxu0
  %v4896 = vadd.f32 %v4569, %v4895
  %v4897 = vpop.f32.mrf.mxu0
  %v4898 = vadd.f32 %v4571, %v4897
  %4899 = vdwg.mxu0
  %s4900 = scalar_lea.vmem %s3, 928
  %v4901 = vld [vmem:[%s4900] sm:$0xff]
  %v4902 = vld [vmem:[%s4900 + $0x8] sm:$0xff]
  %v4903 = vld [vmem:[%s4900 + $0x10] sm:$0xff]
  %v4904 = vld [vmem:[%s4900 + $0x18] sm:$0xff]
  %v4905 = vld [vmem:[%s4900 + $0x20] sm:$0xff]
  %v4906 = vld [vmem:[%s4900 + $0x28] sm:$0xff]
  %v4907 = vld [vmem:[%s4900 + $0x30] sm:$0xff]
  %v4908 = vld [vmem:[%s4900 + $0x38] sm:$0xff]
  %v4909 = vld [vmem:[%s4900 + $0x40] sm:$0xff]
  %v4910 = vld [vmem:[%s4900 + $0x48] sm:$0xff]
  %v4911 = vld [vmem:[%s4900 + $0x50] sm:$0xff]
  %v4912 = vld [vmem:[%s4900 + $0x58] sm:$0xff]
  %v4913 = vld [vmem:[%s4900 + $0x60] sm:$0xff]
  %v4914 = vld [vmem:[%s4900 + $0x68] sm:$0xff]
  %v4915 = vld [vmem:[%s4900 + $0x70] sm:$0xff]
  %v4916 = vld [vmem:[%s4900 + $0x78] sm:$0xff]
  %v4917 = vld [vmem:[%s4900 + $0x80] sm:$0xff]
  %v4918 = vld [vmem:[%s4900 + $0x88] sm:$0xff]
  %v4919 = vld [vmem:[%s4900 + $0x90] sm:$0xff]
  %v4920 = vld [vmem:[%s4900 + $0x98] sm:$0xff]
  %v4921 = vld [vmem:[%s4900 + $0xa0] sm:$0xff]
  %v4922 = vld [vmem:[%s4900 + $0xa8] sm:$0xff]
  %v4923 = vld [vmem:[%s4900 + $0xb0] sm:$0xff]
  %v4924 = vld [vmem:[%s4900 + $0xb8] sm:$0xff]
  %v4925 = vld [vmem:[%s4900 + $0xc0] sm:$0xff]
  %v4926 = vld [vmem:[%s4900 + $0xc8] sm:$0xff]
  %v4927 = vld [vmem:[%s4900 + $0xd0] sm:$0xff]
  %v4928 = vld [vmem:[%s4900 + $0xd8] sm:$0xff]
  %v4929 = vld [vmem:[%s4900 + $0xe0] sm:$0xff]
  %v4930 = vld [vmem:[%s4900 + $0xe8] sm:$0xff]
  %v4931 = vld [vmem:[%s4900 + $0xf0] sm:$0xff]
  %v4932 = vld [vmem:[%s4900 + $0xf8] sm:$0xff]
  %v4933 = vld [vmem:[%s4900 + $0x100] sm:$0xff]
  %v4934 = vld [vmem:[%s4900 + $0x108] sm:$0xff]
  %v4935 = vld [vmem:[%s4900 + $0x110] sm:$0xff]
  %v4936 = vld [vmem:[%s4900 + $0x118] sm:$0xff]
  %v4937 = vld [vmem:[%s4900 + $0x120] sm:$0xff]
  %v4938 = vld [vmem:[%s4900 + $0x128] sm:$0xff]
  %v4939 = vld [vmem:[%s4900 + $0x130] sm:$0xff]
  %v4940 = vld [vmem:[%s4900 + $0x138] sm:$0xff]
  %v4941 = vld [vmem:[%s4900 + $0x140] sm:$0xff]
  %v4942 = vld [vmem:[%s4900 + $0x148] sm:$0xff]
  %v4943 = vld [vmem:[%s4900 + $0x150] sm:$0xff]
  %v4944 = vld [vmem:[%s4900 + $0x158] sm:$0xff]
  %v4945 = vld [vmem:[%s4900 + $0x160] sm:$0xff]
  %v4946 = vld [vmem:[%s4900 + $0x168] sm:$0xff]
  %v4947 = vld [vmem:[%s4900 + $0x170] sm:$0xff]
  %v4948 = vld [vmem:[%s4900 + $0x178] sm:$0xff]
  %v4949 = vld [vmem:[%s4900 + $0x180] sm:$0xff]
  %v4950 = vld [vmem:[%s4900 + $0x188] sm:$0xff]
  %v4951 = vld [vmem:[%s4900 + $0x190] sm:$0xff]
  %v4952 = vld [vmem:[%s4900 + $0x198] sm:$0xff]
  %v4953 = vld [vmem:[%s4900 + $0x1a0] sm:$0xff]
  %v4954 = vld [vmem:[%s4900 + $0x1a8] sm:$0xff]
  %v4955 = vld [vmem:[%s4900 + $0x1b0] sm:$0xff]
  %v4956 = vld [vmem:[%s4900 + $0x1b8] sm:$0xff]
  %v4957 = vld [vmem:[%s4900 + $0x1c0] sm:$0x3f]
  %v4958 = vld [vmem:[%s4900 + $0x1c8] sm:$0x3f]
  %v4967 = vlaneseq
  %v4968 = vshrl.u32 %v4967, 7
  %v4969 = vsub.s32 0, %v4968
  %v4970 = vrot.slane %v3530, %v4969
  %v4971 = vlaneseq
  %v4972 = vshrl.u32 %v4971, 7
  %v4973 = vsub.s32 2, %v4972
  %v4974 = vrot.slane %v3530, %v4973
  %v4975 = vlaneseq
  %v4976 = vshrl.u32 %v4975, 7
  %v4977 = vsub.s32 0, %v4976
  %v4978 = vrot.slane %v3542, %v4977
  %v4979 = vlaneseq
  %v4980 = vshrl.u32 %v4979, 7
  %v4981 = vsub.s32 2, %v4980
  %v4982 = vrot.slane %v3542, %v4981
  %v4983 = vlaneseq
  %v4984 = vshrl.u32 %v4983, 7
  %v4985 = vsub.s32 0, %v4984
  %v4986 = vrot.slane %v3554, %v4985
  %v4987 = vlaneseq
  %v4988 = vshrl.u32 %v4987, 7
  %v4989 = vsub.s32 2, %v4988
  %v4990 = vrot.slane %v3554, %v4989
  %v4991 = vlaneseq
  %v4992 = vshrl.u32 %v4991, 7
  %v4993 = vsub.s32 0, %v4992
  %v4994 = vrot.slane %v3566, %v4993
  %v4995 = vlaneseq
  %v4996 = vshrl.u32 %v4995, 7
  %v4997 = vsub.s32 2, %v4996
  %v4998 = vrot.slane %v3566, %v4997
  %v4999 = vlaneseq
  %v5000 = vshrl.u32 %v4999, 7
  %v5001 = vsub.s32 0, %v5000
  %v5002 = vrot.slane %v3578, %v5001
  %v5003 = vlaneseq
  %v5004 = vshrl.u32 %v5003, 7
  %v5005 = vsub.s32 2, %v5004
  %v5006 = vrot.slane %v3578, %v5005
  %v5007 = vlaneseq
  %v5008 = vshrl.u32 %v5007, 7
  %v5009 = vsub.s32 0, %v5008
  %v5010 = vrot.slane %v3590, %v5009
  %v5011 = vlaneseq
  %v5012 = vshrl.u32 %v5011, 7
  %v5013 = vsub.s32 2, %v5012
  %v5014 = vrot.slane %v3590, %v5013
  %v5015 = vlaneseq
  %v5016 = vshrl.u32 %v5015, 7
  %v5017 = vsub.s32 0, %v5016
  %v5018 = vrot.slane %v3602, %v5017
  %v5019 = vlaneseq
  %v5020 = vshrl.u32 %v5019, 7
  %v5021 = vsub.s32 2, %v5020
  %v5022 = vrot.slane %v3602, %v5021
  %v5023 = vlaneseq
  %v5024 = vshrl.u32 %v5023, 7
  %v5025 = vsub.s32 0, %v5024
  %v5026 = vrot.slane %v3614, %v5025
  %v5027 = vlaneseq
  %v5028 = vshrl.u32 %v5027, 7
  %v5029 = vsub.s32 2, %v5028
  %v5030 = vrot.slane %v3614, %v5029
  %v5031 = vsel %vm4310, %v3817, %v3809
  %v5032 = vsel %vm4312, %v3825, %v5031
  %v5033 = vsel %vm4314, %v3833, %v5032
  %v5034 = vsel %vm4316, %v3841, %v5033
  %v5035 = vsel %vm4318, %v3849, %v5034
  %v5036 = vsel %vm4320, %v3857, %v5035
  %v5037 = vsel %vm4322, %v4970, %v5036
  %v5038 = vsel %vm4310, %v3821, %v3813
  %v5039 = vsel %vm4312, %v3829, %v5038
  %v5040 = vsel %vm4314, %v3837, %v5039
  %v5041 = vsel %vm4316, %v3845, %v5040
  %v5042 = vsel %vm4318, %v3853, %v5041
  %v5043 = vsel %vm4320, %v3861, %v5042
  %v5044 = vsel %vm4322, %v4974, %v5043
  %v5045 = vsel %vm4310, %v3881, %v3873
  %v5046 = vsel %vm4312, %v3889, %v5045
  %v5047 = vsel %vm4314, %v3897, %v5046
  %v5048 = vsel %vm4316, %v3905, %v5047
  %v5049 = vsel %vm4318, %v3913, %v5048
  %v5050 = vsel %vm4320, %v3921, %v5049
  %v5051 = vsel %vm4322, %v4978, %v5050
  %v5052 = vsel %vm4310, %v3885, %v3877
  %v5053 = vsel %vm4312, %v3893, %v5052
  %v5054 = vsel %vm4314, %v3901, %v5053
  %v5055 = vsel %vm4316, %v3909, %v5054
  %v5056 = vsel %vm4318, %v3917, %v5055
  %v5057 = vsel %vm4320, %v3925, %v5056
  %v5058 = vsel %vm4322, %v4982, %v5057
  %v5059 = vsel %vm4310, %v3945, %v3937
  %v5060 = vsel %vm4312, %v3953, %v5059
  %v5061 = vsel %vm4314, %v3961, %v5060
  %v5062 = vsel %vm4316, %v3969, %v5061
  %v5063 = vsel %vm4318, %v3977, %v5062
  %v5064 = vsel %vm4320, %v3985, %v5063
  %v5065 = vsel %vm4322, %v4986, %v5064
  %v5066 = vsel %vm4310, %v3949, %v3941
  %v5067 = vsel %vm4312, %v3957, %v5066
  %v5068 = vsel %vm4314, %v3965, %v5067
  %v5069 = vsel %vm4316, %v3973, %v5068
  %v5070 = vsel %vm4318, %v3981, %v5069
  %v5071 = vsel %vm4320, %v3989, %v5070
  %v5072 = vsel %vm4322, %v4990, %v5071
  %v5073 = vsel %vm4310, %v4009, %v4001
  %v5074 = vsel %vm4312, %v4017, %v5073
  %v5075 = vsel %vm4314, %v4025, %v5074
  %v5076 = vsel %vm4316, %v4033, %v5075
  %v5077 = vsel %vm4318, %v4041, %v5076
  %v5078 = vsel %vm4320, %v4049, %v5077
  %v5079 = vsel %vm4322, %v4994, %v5078
  %v5080 = vsel %vm4310, %v4013, %v4005
  %v5081 = vsel %vm4312, %v4021, %v5080
  %v5082 = vsel %vm4314, %v4029, %v5081
  %v5083 = vsel %vm4316, %v4037, %v5082
  %v5084 = vsel %vm4318, %v4045, %v5083
  %v5085 = vsel %vm4320, %v4053, %v5084
  %v5086 = vsel %vm4322, %v4998, %v5085
  %v5087 = vsel %vm4310, %v4073, %v4065
  %v5088 = vsel %vm4312, %v4081, %v5087
  %v5089 = vsel %vm4314, %v4089, %v5088
  %v5090 = vsel %vm4316, %v4097, %v5089
  %v5091 = vsel %vm4318, %v4105, %v5090
  %v5092 = vsel %vm4320, %v4113, %v5091
  %v5093 = vsel %vm4322, %v5002, %v5092
  %v5094 = vsel %vm4310, %v4077, %v4069
  %v5095 = vsel %vm4312, %v4085, %v5094
  %v5096 = vsel %vm4314, %v4093, %v5095
  %v5097 = vsel %vm4316, %v4101, %v5096
  %v5098 = vsel %vm4318, %v4109, %v5097
  %v5099 = vsel %vm4320, %v4117, %v5098
  %v5100 = vsel %vm4322, %v5006, %v5099
  %v5101 = vsel %vm4310, %v4137, %v4129
  %v5102 = vsel %vm4312, %v4145, %v5101
  %v5103 = vsel %vm4314, %v4153, %v5102
  %v5104 = vsel %vm4316, %v4161, %v5103
  %v5105 = vsel %vm4318, %v4169, %v5104
  %v5106 = vsel %vm4320, %v4177, %v5105
  %v5107 = vsel %vm4322, %v5010, %v5106
  %v5108 = vsel %vm4310, %v4141, %v4133
  %v5109 = vsel %vm4312, %v4149, %v5108
  %v5110 = vsel %vm4314, %v4157, %v5109
  %v5111 = vsel %vm4316, %v4165, %v5110
  %v5112 = vsel %vm4318, %v4173, %v5111
  %v5113 = vsel %vm4320, %v4181, %v5112
  %v5114 = vsel %vm4322, %v5014, %v5113
  %v5115 = vsel %vm4310, %v4201, %v4193
  %v5116 = vsel %vm4312, %v4209, %v5115
  %v5117 = vsel %vm4314, %v4217, %v5116
  %v5118 = vsel %vm4316, %v4225, %v5117
  %v5119 = vsel %vm4318, %v4233, %v5118
  %v5120 = vsel %vm4320, %v4241, %v5119
  %v5121 = vsel %vm4322, %v5018, %v5120
  %v5122 = vsel %vm4310, %v4205, %v4197
  %v5123 = vsel %vm4312, %v4213, %v5122
  %v5124 = vsel %vm4314, %v4221, %v5123
  %v5125 = vsel %vm4316, %v4229, %v5124
  %v5126 = vsel %vm4318, %v4237, %v5125
  %v5127 = vsel %vm4320, %v4245, %v5126
  %v5128 = vsel %vm4322, %v5022, %v5127
  %v5129 = vsel %vm4310, %v4265, %v4257
  %v5130 = vsel %vm4312, %v4273, %v5129
  %v5131 = vsel %vm4314, %v4281, %v5130
  %v5132 = vsel %vm4316, %v4289, %v5131
  %v5133 = vsel %vm4318, %v4297, %v5132
  %v5134 = vsel %vm4320, %v4305, %v5133
  %v5135 = vsel %vm4322, %v5026, %v5134
  %v5136 = vsel %vm4310, %v4269, %v4261
  %v5137 = vsel %vm4312, %v4277, %v5136
  %v5138 = vsel %vm4314, %v4285, %v5137
  %v5139 = vsel %vm4316, %v4293, %v5138
  %v5140 = vsel %vm4318, %v4301, %v5139
  %v5141 = vsel %vm4320, %v4309, %v5140
  %v5142 = vsel %vm4322, %v5030, %v5141
  %v5151 = vsel %vm4437, %v5044, 0
  %v5153 = vsel %vm4437, %v5058, 0
  %v5155 = vsel %vm4437, %v5072, 0
  %v5157 = vsel %vm4437, %v5086, 0
  %v5159 = vsel %vm4437, %v5100, 0
  %v5161 = vsel %vm4437, %v5114, 0
  %v5163 = vsel %vm4437, %v5128, 0
  %v5165 = vsel %vm4437, %v5142, 0
  %v5168 = vsel %vm698, %v4957, 0
  %v5171 = vsel %vm698, %v4958, 0
  %5173 = vmatprep.subr.mxu0 %v4932
  %5174 = vmatpush1.msra.mxu0 %v4931
  %5175 = vmatprep.subr.mxu0 %v4930
  %5176 = vmatpush1.msra.mxu0 %v4929
  %5177 = vmatprep.subr.mxu0 %v4928
  %5178 = vmatpush1.msra.mxu0 %v4927
  %5179 = vmatprep.subr.mxu0 %v4926
  %5180 = vmatpush1.msra.mxu0 %v4925
  %5181 = vmatprep.subr.mxu0 %v4924
  %5182 = vmatpush1.msra.mxu0 %v4923
  %5183 = vmatprep.subr.mxu0 %v4922
  %5184 = vmatpush1.msra.mxu0 %v4921
  %5185 = vmatprep.subr.mxu0 %v4920
  %5186 = vmatpush1.msra.mxu0 %v4919
  %5187 = vmatprep.subr.mxu0 %v4918
  %5188 = vmatpush1.msra.mxu0 %v4917
  %5189 = vmatprep.subr.mxu0 %v4916
  %5190 = vmatpush1.msra.mxu0 %v4915
  %5191 = vmatprep.subr.mxu0 %v4914
  %5192 = vmatpush1.msra.mxu0 %v4913
  %5193 = vmatprep.subr.mxu0 %v4912
  %5194 = vmatpush1.msra.mxu0 %v4911
  %5195 = vmatprep.subr.mxu0 %v4910
  %5196 = vmatpush1.msra.mxu0 %v4909
  %5197 = vmatprep.subr.mxu0 %v4908
  %5198 = vmatpush1.msra.mxu0 %v4907
  %5199 = vmatprep.subr.mxu0 %v4906
  %5200 = vmatpush1.msra.mxu0 %v4905
  %5201 = vmatprep.subr.mxu0 %v4904
  %5202 = vmatpush1.msra.mxu0 %v4903
  %5203 = vmatprep.subr.mxu0 %v4902
  %5204 = vmatpush1.msra.mxu0 %v4901
  %5205 = vmatprep.subr.mxu0 0.0
  %5206 = vmatpush2.msra.mxu0 0.0
  %5207 = vmatprep.subr.mxu0 0.0
  %5208 = vmatpush2.msra.mxu0 0.0
  %5209 = vmatprep.subr.mxu0 0.0
  %5210 = vmatpush2.msra.mxu0 0.0
  %5211 = vmatprep.subr.mxu0 %v5171
  %5212 = vmatpush2.msra.mxu0 %v5168
  %5213 = vmatprep.subr.mxu0 %v4956
  %5214 = vmatpush2.msra.mxu0 %v4955
  %5215 = vmatprep.subr.mxu0 %v4954
  %5216 = vmatpush2.msra.mxu0 %v4953
  %5217 = vmatprep.subr.mxu0 %v4952
  %5218 = vmatpush2.msra.mxu0 %v4951
  %5219 = vmatprep.subr.mxu0 %v4950
  %5220 = vmatpush2.msra.mxu0 %v4949
  %5221 = vmatprep.subr.mxu0 %v4948
  %5222 = vmatpush2.msra.mxu0 %v4947
  %5223 = vmatprep.subr.mxu0 %v4946
  %5224 = vmatpush2.msra.mxu0 %v4945
  %5225 = vmatprep.subr.mxu0 %v4944
  %5226 = vmatpush2.msra.mxu0 %v4943
  %5227 = vmatprep.subr.mxu0 %v4942
  %5228 = vmatpush2.msra.mxu0 %v4941
  %5229 = vmatprep.subr.mxu0 %v4940
  %5230 = vmatpush2.msra.mxu0 %v4939
  %5231 = vmatprep.subr.mxu0 %v4938
  %5232 = vmatpush2.msra.mxu0 %v4937
  %5233 = vmatprep.subr.mxu0 %v4936
  %5234 = vmatpush2.msra.mxu0 %v4935
  %5235 = vmatprep.subr.mxu0 %v4934
  %5236 = vmatpush2.msra.mxu0 %v4933
  %5237 = vmatprep.mubr.f32.mxu0 %v5151
  %5238 = vmatmul.mubr.f32.gmra.mxu0 %v5037
  %v5239 = vpop.f32.mrf.mxu0
  %v5240 = vadd.f32 0.0, %v5239
  %v5241 = vpop.f32.mrf.mxu0
  %v5242 = vadd.f32 0.0, %v5241
  %5243 = vmatprep.mubr.f32.mxu0 %v5153
  %5244 = vmatmul.mubr.f32.gmra.mxu0 %v5051
  %v5245 = vpop.f32.mrf.mxu0
  %v5246 = vadd.f32 0.0, %v5245
  %v5247 = vpop.f32.mrf.mxu0
  %v5248 = vadd.f32 0.0, %v5247
  %5249 = vmatprep.mubr.f32.mxu0 %v5155
  %5250 = vmatmul.mubr.f32.gmra.mxu0 %v5065
  %v5251 = vpop.f32.mrf.mxu0
  %v5252 = vadd.f32 0.0, %v5251
  %v5253 = vpop.f32.mrf.mxu0
  %v5254 = vadd.f32 0.0, %v5253
  %5255 = vmatprep.mubr.f32.mxu0 %v5157
  %5256 = vmatmul.mubr.f32.gmra.mxu0 %v5079
  %v5257 = vpop.f32.mrf.mxu0
  %v5258 = vadd.f32 0.0, %v5257
  %v5259 = vpop.f32.mrf.mxu0
  %v5260 = vadd.f32 0.0, %v5259
  %5261 = vmatprep.mubr.f32.mxu0 %v5159
  %5262 = vmatmul.mubr.f32.gmra.mxu0 %v5093
  %v5263 = vpop.f32.mrf.mxu0
  %v5264 = vadd.f32 0.0, %v5263
  %v5265 = vpop.f32.mrf.mxu0
  %v5266 = vadd.f32 0.0, %v5265
  %5267 = vmatprep.mubr.f32.mxu0 %v5161
  %5268 = vmatmul.mubr.f32.gmra.mxu0 %v5107
  %v5269 = vpop.f32.mrf.mxu0
  %v5270 = vadd.f32 0.0, %v5269
  %v5271 = vpop.f32.mrf.mxu0
  %v5272 = vadd.f32 0.0, %v5271
  %5273 = vmatprep.mubr.f32.mxu0 %v5163
  %5274 = vmatmul.mubr.f32.gmra.mxu0 %v5121
  %v5275 = vpop.f32.mrf.mxu0
  %v5276 = vadd.f32 0.0, %v5275
  %v5277 = vpop.f32.mrf.mxu0
  %v5278 = vadd.f32 0.0, %v5277
  %5279 = vmatprep.mubr.f32.mxu0 %v5165
  %5280 = vmatmul.mubr.f32.gmra.mxu0 %v5135
  %v5281 = vpop.f32.mrf.mxu0
  %v5282 = vadd.f32 0.0, %v5281
  %v5283 = vpop.f32.mrf.mxu0
  %v5284 = vadd.f32 0.0, %v5283
  %5285 = vdwg.mxu0
  %v5286 = vadd.f32 %v4854, %v5240
  %v5287 = vadd.f32 %v4856, %v5242
  %v5288 = vadd.f32 %v4860, %v5246
  %v5289 = vadd.f32 %v4862, %v5248
  %v5290 = vadd.f32 %v4866, %v5252
  %v5291 = vadd.f32 %v4868, %v5254
  %v5292 = vadd.f32 %v4872, %v5258
  %v5293 = vadd.f32 %v4874, %v5260
  %v5294 = vadd.f32 %v4878, %v5264
  %v5295 = vadd.f32 %v4880, %v5266
  %v5296 = vadd.f32 %v4884, %v5270
  %v5297 = vadd.f32 %v4886, %v5272
  %v5298 = vadd.f32 %v4890, %v5276
  %v5299 = vadd.f32 %v4892, %v5278
  %v5300 = vadd.f32 %v4896, %v5282
  %v5301 = vadd.f32 %v4898, %v5284
  %s5302 = scalar_lea.vmem %s3, 1392
  %v5303 = vld [vmem:[%s5302] sm:$0xff]
  %v5304 = vld [vmem:[%s5302 + $0x8] sm:$0xff]
  %v5305 = vld [vmem:[%s5302 + $0x10] sm:$0xff]
  %v5306 = vld [vmem:[%s5302 + $0x18] sm:$0xff]
  %v5307 = vld [vmem:[%s5302 + $0x20] sm:$0xff]
  %v5308 = vld [vmem:[%s5302 + $0x28] sm:$0xff]
  %v5309 = vld [vmem:[%s5302 + $0x30] sm:$0xff]
  %v5310 = vld [vmem:[%s5302 + $0x38] sm:$0xff]
  %v5311 = vld [vmem:[%s5302 + $0x40] sm:$0xff]
  %v5312 = vld [vmem:[%s5302 + $0x48] sm:$0xff]
  %v5313 = vld [vmem:[%s5302 + $0x50] sm:$0xff]
  %v5314 = vld [vmem:[%s5302 + $0x58] sm:$0xff]
  %v5315 = vld [vmem:[%s5302 + $0x60] sm:$0xff]
  %v5316 = vld [vmem:[%s5302 + $0x68] sm:$0xff]
  %v5317 = vld [vmem:[%s5302 + $0x70] sm:$0xff]
  %v5318 = vld [vmem:[%s5302 + $0x78] sm:$0xff]
  %v5319 = vld [vmem:[%s5302 + $0x80] sm:$0xff]
  %v5320 = vld [vmem:[%s5302 + $0x88] sm:$0xff]
  %v5321 = vld [vmem:[%s5302 + $0x90] sm:$0xff]
  %v5322 = vld [vmem:[%s5302 + $0x98] sm:$0xff]
  %v5323 = vld [vmem:[%s5302 + $0xa0] sm:$0xff]
  %v5324 = vld [vmem:[%s5302 + $0xa8] sm:$0xff]
  %v5325 = vld [vmem:[%s5302 + $0xb0] sm:$0xff]
  %v5326 = vld [vmem:[%s5302 + $0xb8] sm:$0xff]
  %v5327 = vld [vmem:[%s5302 + $0xc0] sm:$0xff]
  %v5328 = vld [vmem:[%s5302 + $0xc8] sm:$0xff]
  %v5329 = vld [vmem:[%s5302 + $0xd0] sm:$0xff]
  %v5330 = vld [vmem:[%s5302 + $0xd8] sm:$0xff]
  %v5331 = vld [vmem:[%s5302 + $0xe0] sm:$0xff]
  %v5332 = vld [vmem:[%s5302 + $0xe8] sm:$0xff]
  %v5333 = vld [vmem:[%s5302 + $0xf0] sm:$0xff]
  %v5334 = vld [vmem:[%s5302 + $0xf8] sm:$0xff]
  %v5335 = vld [vmem:[%s5302 + $0x100] sm:$0xff]
  %v5336 = vld [vmem:[%s5302 + $0x108] sm:$0xff]
  %v5337 = vld [vmem:[%s5302 + $0x110] sm:$0xff]
  %v5338 = vld [vmem:[%s5302 + $0x118] sm:$0xff]
  %v5339 = vld [vmem:[%s5302 + $0x120] sm:$0xff]
  %v5340 = vld [vmem:[%s5302 + $0x128] sm:$0xff]
  %v5341 = vld [vmem:[%s5302 + $0x130] sm:$0xff]
  %v5342 = vld [vmem:[%s5302 + $0x138] sm:$0xff]
  %v5343 = vld [vmem:[%s5302 + $0x140] sm:$0xff]
  %v5344 = vld [vmem:[%s5302 + $0x148] sm:$0xff]
  %v5345 = vld [vmem:[%s5302 + $0x150] sm:$0xff]
  %v5346 = vld [vmem:[%s5302 + $0x158] sm:$0xff]
  %v5347 = vld [vmem:[%s5302 + $0x160] sm:$0xff]
  %v5348 = vld [vmem:[%s5302 + $0x168] sm:$0xff]
  %v5349 = vld [vmem:[%s5302 + $0x170] sm:$0xff]
  %v5350 = vld [vmem:[%s5302 + $0x178] sm:$0xff]
  %v5351 = vld [vmem:[%s5302 + $0x180] sm:$0xff]
  %v5352 = vld [vmem:[%s5302 + $0x188] sm:$0xff]
  %v5353 = vld [vmem:[%s5302 + $0x190] sm:$0xff]
  %v5354 = vld [vmem:[%s5302 + $0x198] sm:$0xff]
  %v5355 = vld [vmem:[%s5302 + $0x1a0] sm:$0xff]
  %v5356 = vld [vmem:[%s5302 + $0x1a8] sm:$0xff]
  %v5357 = vld [vmem:[%s5302 + $0x1b0] sm:$0xff]
  %v5358 = vld [vmem:[%s5302 + $0x1b8] sm:$0xff]
  %v5359 = vld [vmem:[%s5302 + $0x1c0] sm:$0x3f]
  %v5360 = vld [vmem:[%s5302 + $0x1c8] sm:$0x3f]
  %v5369 = vlaneseq
  %v5370 = vshrl.u32 %v5369, 7
  %v5371 = vsub.s32 0, %v5370
  %v5372 = vrot.slane %v3531, %v5371
  %v5373 = vlaneseq
  %v5374 = vshrl.u32 %v5373, 7
  %v5375 = vsub.s32 2, %v5374
  %v5376 = vrot.slane %v3531, %v5375
  %v5377 = vlaneseq
  %v5378 = vshrl.u32 %v5377, 7
  %v5379 = vsub.s32 0, %v5378
  %v5380 = vrot.slane %v3543, %v5379
  %v5381 = vlaneseq
  %v5382 = vshrl.u32 %v5381, 7
  %v5383 = vsub.s32 2, %v5382
  %v5384 = vrot.slane %v3543, %v5383
  %v5385 = vlaneseq
  %v5386 = vshrl.u32 %v5385, 7
  %v5387 = vsub.s32 0, %v5386
  %v5388 = vrot.slane %v3555, %v5387
  %v5389 = vlaneseq
  %v5390 = vshrl.u32 %v5389, 7
  %v5391 = vsub.s32 2, %v5390
  %v5392 = vrot.slane %v3555, %v5391
  %v5393 = vlaneseq
  %v5394 = vshrl.u32 %v5393, 7
  %v5395 = vsub.s32 0, %v5394
  %v5396 = vrot.slane %v3567, %v5395
  %v5397 = vlaneseq
  %v5398 = vshrl.u32 %v5397, 7
  %v5399 = vsub.s32 2, %v5398
  %v5400 = vrot.slane %v3567, %v5399
  %v5401 = vlaneseq
  %v5402 = vshrl.u32 %v5401, 7
  %v5403 = vsub.s32 0, %v5402
  %v5404 = vrot.slane %v3579, %v5403
  %v5405 = vlaneseq
  %v5406 = vshrl.u32 %v5405, 7
  %v5407 = vsub.s32 2, %v5406
  %v5408 = vrot.slane %v3579, %v5407
  %v5409 = vlaneseq
  %v5410 = vshrl.u32 %v5409, 7
  %v5411 = vsub.s32 0, %v5410
  %v5412 = vrot.slane %v3591, %v5411
  %v5413 = vlaneseq
  %v5414 = vshrl.u32 %v5413, 7
  %v5415 = vsub.s32 2, %v5414
  %v5416 = vrot.slane %v3591, %v5415
  %v5417 = vlaneseq
  %v5418 = vshrl.u32 %v5417, 7
  %v5419 = vsub.s32 0, %v5418
  %v5420 = vrot.slane %v3603, %v5419
  %v5421 = vlaneseq
  %v5422 = vshrl.u32 %v5421, 7
  %v5423 = vsub.s32 2, %v5422
  %v5424 = vrot.slane %v3603, %v5423
  %v5425 = vlaneseq
  %v5426 = vshrl.u32 %v5425, 7
  %v5427 = vsub.s32 0, %v5426
  %v5428 = vrot.slane %v3615, %v5427
  %v5429 = vlaneseq
  %v5430 = vshrl.u32 %v5429, 7
  %v5431 = vsub.s32 2, %v5430
  %v5432 = vrot.slane %v3615, %v5431
  %v5433 = vsel %vm4310, %v3825, %v3817
  %v5434 = vsel %vm4312, %v3833, %v5433
  %v5435 = vsel %vm4314, %v3841, %v5434
  %v5436 = vsel %vm4316, %v3849, %v5435
  %v5437 = vsel %vm4318, %v3857, %v5436
  %v5438 = vsel %vm4320, %v4970, %v5437
  %v5439 = vsel %vm4322, %v5372, %v5438
  %v5440 = vsel %vm4310, %v3829, %v3821
  %v5441 = vsel %vm4312, %v3837, %v5440
  %v5442 = vsel %vm4314, %v3845, %v5441
  %v5443 = vsel %vm4316, %v3853, %v5442
  %v5444 = vsel %vm4318, %v3861, %v5443
  %v5445 = vsel %vm4320, %v4974, %v5444
  %v5446 = vsel %vm4322, %v5376, %v5445
  %v5447 = vsel %vm4310, %v3889, %v3881
  %v5448 = vsel %vm4312, %v3897, %v5447
  %v5449 = vsel %vm4314, %v3905, %v5448
  %v5450 = vsel %vm4316, %v3913, %v5449
  %v5451 = vsel %vm4318, %v3921, %v5450
  %v5452 = vsel %vm4320, %v4978, %v5451
  %v5453 = vsel %vm4322, %v5380, %v5452
  %v5454 = vsel %vm4310, %v3893, %v3885
  %v5455 = vsel %vm4312, %v3901, %v5454
  %v5456 = vsel %vm4314, %v3909, %v5455
  %v5457 = vsel %vm4316, %v3917, %v5456
  %v5458 = vsel %vm4318, %v3925, %v5457
  %v5459 = vsel %vm4320, %v4982, %v5458
  %v5460 = vsel %vm4322, %v5384, %v5459
  %v5461 = vsel %vm4310, %v3953, %v3945
  %v5462 = vsel %vm4312, %v3961, %v5461
  %v5463 = vsel %vm4314, %v3969, %v5462
  %v5464 = vsel %vm4316, %v3977, %v5463
  %v5465 = vsel %vm4318, %v3985, %v5464
  %v5466 = vsel %vm4320, %v4986, %v5465
  %v5467 = vsel %vm4322, %v5388, %v5466
  %v5468 = vsel %vm4310, %v3957, %v3949
  %v5469 = vsel %vm4312, %v3965, %v5468
  %v5470 = vsel %vm4314, %v3973, %v5469
  %v5471 = vsel %vm4316, %v3981, %v5470
  %v5472 = vsel %vm4318, %v3989, %v5471
  %v5473 = vsel %vm4320, %v4990, %v5472
  %v5474 = vsel %vm4322, %v5392, %v5473
  %v5475 = vsel %vm4310, %v4017, %v4009
  %v5476 = vsel %vm4312, %v4025, %v5475
  %v5477 = vsel %vm4314, %v4033, %v5476
  %v5478 = vsel %vm4316, %v4041, %v5477
  %v5479 = vsel %vm4318, %v4049, %v5478
  %v5480 = vsel %vm4320, %v4994, %v5479
  %v5481 = vsel %vm4322, %v5396, %v5480
  %v5482 = vsel %vm4310, %v4021, %v4013
  %v5483 = vsel %vm4312, %v4029, %v5482
  %v5484 = vsel %vm4314, %v4037, %v5483
  %v5485 = vsel %vm4316, %v4045, %v5484
  %v5486 = vsel %vm4318, %v4053, %v5485
  %v5487 = vsel %vm4320, %v4998, %v5486
  %v5488 = vsel %vm4322, %v5400, %v5487
  %v5489 = vsel %vm4310, %v4081, %v4073
  %v5490 = vsel %vm4312, %v4089, %v5489
  %v5491 = vsel %vm4314, %v4097, %v5490
  %v5492 = vsel %vm4316, %v4105, %v5491
  %v5493 = vsel %vm4318, %v4113, %v5492
  %v5494 = vsel %vm4320, %v5002, %v5493
  %v5495 = vsel %vm4322, %v5404, %v5494
  %v5496 = vsel %vm4310, %v4085, %v4077
  %v5497 = vsel %vm4312, %v4093, %v5496
  %v5498 = vsel %vm4314, %v4101, %v5497
  %v5499 = vsel %vm4316, %v4109, %v5498
  %v5500 = vsel %vm4318, %v4117, %v5499
  %v5501 = vsel %vm4320, %v5006, %v5500
  %v5502 = vsel %vm4322, %v5408, %v5501
  %v5503 = vsel %vm4310, %v4145, %v4137
  %v5504 = vsel %vm4312, %v4153, %v5503
  %v5505 = vsel %vm4314, %v4161, %v5504
  %v5506 = vsel %vm4316, %v4169, %v5505
  %v5507 = vsel %vm4318, %v4177, %v5506
  %v5508 = vsel %vm4320, %v5010, %v5507
  %v5509 = vsel %vm4322, %v5412, %v5508
  %v5510 = vsel %vm4310, %v4149, %v4141
  %v5511 = vsel %vm4312, %v4157, %v5510
  %v5512 = vsel %vm4314, %v4165, %v5511
  %v5513 = vsel %vm4316, %v4173, %v5512
  %v5514 = vsel %vm4318, %v4181, %v5513
  %v5515 = vsel %vm4320, %v5014, %v5514
  %v5516 = vsel %vm4322, %v5416, %v5515
  %v5517 = vsel %vm4310, %v4209, %v4201
  %v5518 = vsel %vm4312, %v4217, %v5517
  %v5519 = vsel %vm4314, %v4225, %v5518
  %v5520 = vsel %vm4316, %v4233, %v5519
  %v5521 = vsel %vm4318, %v4241, %v5520
  %v5522 = vsel %vm4320, %v5018, %v5521
  %v5523 = vsel %vm4322, %v5420, %v5522
  %v5524 = vsel %vm4310, %v4213, %v4205
  %v5525 = vsel %vm4312, %v4221, %v5524
  %v5526 = vsel %vm4314, %v4229, %v5525
  %v5527 = vsel %vm4316, %v4237, %v5526
  %v5528 = vsel %vm4318, %v4245, %v5527
  %v5529 = vsel %vm4320, %v5022, %v5528
  %v5530 = vsel %vm4322, %v5424, %v5529
  %v5531 = vsel %vm4310, %v4273, %v4265
  %v5532 = vsel %vm4312, %v4281, %v5531
  %v5533 = vsel %vm4314, %v4289, %v5532
  %v5534 = vsel %vm4316, %v4297, %v5533
  %v5535 = vsel %vm4318, %v4305, %v5534
  %v5536 = vsel %vm4320, %v5026, %v5535
  %v5537 = vsel %vm4322, %v5428, %v5536
  %v5538 = vsel %vm4310, %v4277, %v4269
  %v5539 = vsel %vm4312, %v4285, %v5538
  %v5540 = vsel %vm4314, %v4293, %v5539
  %v5541 = vsel %vm4316, %v4301, %v5540
  %v5542 = vsel %vm4318, %v4309, %v5541
  %v5543 = vsel %vm4320, %v5030, %v5542
  %v5544 = vsel %vm4322, %v5432, %v5543
  %v5553 = vsel %vm4437, %v5446, 0
  %v5555 = vsel %vm4437, %v5460, 0
  %v5557 = vsel %vm4437, %v5474, 0
  %v5559 = vsel %vm4437, %v5488, 0
  %v5561 = vsel %vm4437, %v5502, 0
  %v5563 = vsel %vm4437, %v5516, 0
  %v5565 = vsel %vm4437, %v5530, 0
  %v5567 = vsel %vm4437, %v5544, 0
  %v5570 = vsel %vm698, %v5359, 0
  %v5573 = vsel %vm698, %v5360, 0
  %5575 = vmatprep.subr.mxu0 %v5334
  %5576 = vmatpush1.msra.mxu0 %v5333
  %5577 = vmatprep.subr.mxu0 %v5332
  %5578 = vmatpush1.msra.mxu0 %v5331
  %5579 = vmatprep.subr.mxu0 %v5330
  %5580 = vmatpush1.msra.mxu0 %v5329
  %5581 = vmatprep.subr.mxu0 %v5328
  %5582 = vmatpush1.msra.mxu0 %v5327
  %5583 = vmatprep.subr.mxu0 %v5326
  %5584 = vmatpush1.msra.mxu0 %v5325
  %5585 = vmatprep.subr.mxu0 %v5324
  %5586 = vmatpush1.msra.mxu0 %v5323
  %5587 = vmatprep.subr.mxu0 %v5322
  %5588 = vmatpush1.msra.mxu0 %v5321
  %5589 = vmatprep.subr.mxu0 %v5320
  %5590 = vmatpush1.msra.mxu0 %v5319
  %5591 = vmatprep.subr.mxu0 %v5318
  %5592 = vmatpush1.msra.mxu0 %v5317
  %5593 = vmatprep.subr.mxu0 %v5316
  %5594 = vmatpush1.msra.mxu0 %v5315
  %5595 = vmatprep.subr.mxu0 %v5314
  %5596 = vmatpush1.msra.mxu0 %v5313
  %5597 = vmatprep.subr.mxu0 %v5312
  %5598 = vmatpush1.msra.mxu0 %v5311
  %5599 = vmatprep.subr.mxu0 %v5310
  %5600 = vmatpush1.msra.mxu0 %v5309
  %5601 = vmatprep.subr.mxu0 %v5308
  %5602 = vmatpush1.msra.mxu0 %v5307
  %5603 = vmatprep.subr.mxu0 %v5306
  %5604 = vmatpush1.msra.mxu0 %v5305
  %5605 = vmatprep.subr.mxu0 %v5304
  %5606 = vmatpush1.msra.mxu0 %v5303
  %5607 = vmatprep.subr.mxu0 0.0
  %5608 = vmatpush2.msra.mxu0 0.0
  %5609 = vmatprep.subr.mxu0 0.0
  %5610 = vmatpush2.msra.mxu0 0.0
  %5611 = vmatprep.subr.mxu0 0.0
  %5612 = vmatpush2.msra.mxu0 0.0
  %5613 = vmatprep.subr.mxu0 %v5573
  %5614 = vmatpush2.msra.mxu0 %v5570
  %5615 = vmatprep.subr.mxu0 %v5358
  %5616 = vmatpush2.msra.mxu0 %v5357
  %5617 = vmatprep.subr.mxu0 %v5356
  %5618 = vmatpush2.msra.mxu0 %v5355
  %5619 = vmatprep.subr.mxu0 %v5354
  %5620 = vmatpush2.msra.mxu0 %v5353
  %5621 = vmatprep.subr.mxu0 %v5352
  %5622 = vmatpush2.msra.mxu0 %v5351
  %5623 = vmatprep.subr.mxu0 %v5350
  %5624 = vmatpush2.msra.mxu0 %v5349
  %5625 = vmatprep.subr.mxu0 %v5348
  %5626 = vmatpush2.msra.mxu0 %v5347
  %5627 = vmatprep.subr.mxu0 %v5346
  %5628 = vmatpush2.msra.mxu0 %v5345
  %5629 = vmatprep.subr.mxu0 %v5344
  %5630 = vmatpush2.msra.mxu0 %v5343
  %5631 = vmatprep.subr.mxu0 %v5342
  %5632 = vmatpush2.msra.mxu0 %v5341
  %5633 = vmatprep.subr.mxu0 %v5340
  %5634 = vmatpush2.msra.mxu0 %v5339
  %5635 = vmatprep.subr.mxu0 %v5338
  %5636 = vmatpush2.msra.mxu0 %v5337
  %5637 = vmatprep.subr.mxu0 %v5336
  %5638 = vmatpush2.msra.mxu0 %v5335
  %5639 = vmatprep.mubr.f32.mxu0 %v5553
  %5640 = vmatmul.mubr.f32.gmra.mxu0 %v5439
  %v5641 = vpop.f32.mrf.mxu0
  %v5642 = vadd.f32 0.0, %v5641
  %v5643 = vpop.f32.mrf.mxu0
  %v5644 = vadd.f32 0.0, %v5643
  %5645 = vmatprep.mubr.f32.mxu0 %v5555
  %5646 = vmatmul.mubr.f32.gmra.mxu0 %v5453
  %v5647 = vpop.f32.mrf.mxu0
  %v5648 = vadd.f32 0.0, %v5647
  %v5649 = vpop.f32.mrf.mxu0
  %v5650 = vadd.f32 0.0, %v5649
  %5651 = vmatprep.mubr.f32.mxu0 %v5557
  %5652 = vmatmul.mubr.f32.gmra.mxu0 %v5467
  %v5653 = vpop.f32.mrf.mxu0
  %v5654 = vadd.f32 0.0, %v5653
  %v5655 = vpop.f32.mrf.mxu0
  %v5656 = vadd.f32 0.0, %v5655
  %5657 = vmatprep.mubr.f32.mxu0 %v5559
  %5658 = vmatmul.mubr.f32.gmra.mxu0 %v5481
  %v5659 = vpop.f32.mrf.mxu0
  %v5660 = vadd.f32 0.0, %v5659
  %v5661 = vpop.f32.mrf.mxu0
  %v5662 = vadd.f32 0.0, %v5661
  %5663 = vmatprep.mubr.f32.mxu0 %v5561
  %5664 = vmatmul.mubr.f32.gmra.mxu0 %v5495
  %v5665 = vpop.f32.mrf.mxu0
  %v5666 = vadd.f32 0.0, %v5665
  %v5667 = vpop.f32.mrf.mxu0
  %v5668 = vadd.f32 0.0, %v5667
  %5669 = vmatprep.mubr.f32.mxu0 %v5563
  %5670 = vmatmul.mubr.f32.gmra.mxu0 %v5509
  %v5671 = vpop.f32.mrf.mxu0
  %v5672 = vadd.f32 0.0, %v5671
  %v5673 = vpop.f32.mrf.mxu0
  %v5674 = vadd.f32 0.0, %v5673
  %5675 = vmatprep.mubr.f32.mxu0 %v5565
  %5676 = vmatmul.mubr.f32.gmra.mxu0 %v5523
  %v5677 = vpop.f32.mrf.mxu0
  %v5678 = vadd.f32 0.0, %v5677
  %v5679 = vpop.f32.mrf.mxu0
  %v5680 = vadd.f32 0.0, %v5679
  %5681 = vmatprep.mubr.f32.mxu0 %v5567
  %5682 = vmatmul.mubr.f32.gmra.mxu0 %v5537
  %v5683 = vpop.f32.mrf.mxu0
  %v5684 = vadd.f32 0.0, %v5683
  %v5685 = vpop.f32.mrf.mxu0
  %v5686 = vadd.f32 0.0, %v5685
  %5687 = vdwg.mxu0
  %v5688 = vadd.f32 %v5286, %v5642
  %v5689 = vadd.f32 %v5287, %v5644
  %v5690 = vadd.f32 %v5288, %v5648
  %v5691 = vadd.f32 %v5289, %v5650
  %v5692 = vadd.f32 %v5290, %v5654
  %v5693 = vadd.f32 %v5291, %v5656
  %v5694 = vadd.f32 %v5292, %v5660
  %v5695 = vadd.f32 %v5293, %v5662
  %v5696 = vadd.f32 %v5294, %v5666
  %v5697 = vadd.f32 %v5295, %v5668
  %v5698 = vadd.f32 %v5296, %v5672
  %v5699 = vadd.f32 %v5297, %v5674
  %v5700 = vadd.f32 %v5298, %v5678
  %v5701 = vadd.f32 %v5299, %v5680
  %v5702 = vadd.f32 %v5300, %v5684
  %v5703 = vadd.f32 %v5301, %v5686
  %s5704 = scalar_lea.vmem %s3, 1856
  %v5705 = vld [vmem:[%s5704] sm:$0xff]
  %v5706 = vld [vmem:[%s5704 + $0x8] sm:$0xff]
  %v5707 = vld [vmem:[%s5704 + $0x10] sm:$0xff]
  %v5708 = vld [vmem:[%s5704 + $0x18] sm:$0xff]
  %v5709 = vld [vmem:[%s5704 + $0x20] sm:$0xff]
  %v5710 = vld [vmem:[%s5704 + $0x28] sm:$0xff]
  %v5711 = vld [vmem:[%s5704 + $0x30] sm:$0xff]
  %v5712 = vld [vmem:[%s5704 + $0x38] sm:$0xff]
  %v5713 = vld [vmem:[%s5704 + $0x40] sm:$0xff]
  %v5714 = vld [vmem:[%s5704 + $0x48] sm:$0xff]
  %v5715 = vld [vmem:[%s5704 + $0x50] sm:$0xff]
  %v5716 = vld [vmem:[%s5704 + $0x58] sm:$0xff]
  %v5717 = vld [vmem:[%s5704 + $0x60] sm:$0xff]
  %v5718 = vld [vmem:[%s5704 + $0x68] sm:$0xff]
  %v5719 = vld [vmem:[%s5704 + $0x70] sm:$0xff]
  %v5720 = vld [vmem:[%s5704 + $0x78] sm:$0xff]
  %v5721 = vld [vmem:[%s5704 + $0x80] sm:$0xff]
  %v5722 = vld [vmem:[%s5704 + $0x88] sm:$0xff]
  %v5723 = vld [vmem:[%s5704 + $0x90] sm:$0xff]
  %v5724 = vld [vmem:[%s5704 + $0x98] sm:$0xff]
  %v5725 = vld [vmem:[%s5704 + $0xa0] sm:$0xff]
  %v5726 = vld [vmem:[%s5704 + $0xa8] sm:$0xff]
  %v5727 = vld [vmem:[%s5704 + $0xb0] sm:$0xff]
  %v5728 = vld [vmem:[%s5704 + $0xb8] sm:$0xff]
  %v5729 = vld [vmem:[%s5704 + $0xc0] sm:$0xff]
  %v5730 = vld [vmem:[%s5704 + $0xc8] sm:$0xff]
  %v5731 = vld [vmem:[%s5704 + $0xd0] sm:$0xff]
  %v5732 = vld [vmem:[%s5704 + $0xd8] sm:$0xff]
  %v5733 = vld [vmem:[%s5704 + $0xe0] sm:$0xff]
  %v5734 = vld [vmem:[%s5704 + $0xe8] sm:$0xff]
  %v5735 = vld [vmem:[%s5704 + $0xf0] sm:$0xff]
  %v5736 = vld [vmem:[%s5704 + $0xf8] sm:$0xff]
  %v5737 = vld [vmem:[%s5704 + $0x100] sm:$0xff]
  %v5738 = vld [vmem:[%s5704 + $0x108] sm:$0xff]
  %v5739 = vld [vmem:[%s5704 + $0x110] sm:$0xff]
  %v5740 = vld [vmem:[%s5704 + $0x118] sm:$0xff]
  %v5741 = vld [vmem:[%s5704 + $0x120] sm:$0xff]
  %v5742 = vld [vmem:[%s5704 + $0x128] sm:$0xff]
  %v5743 = vld [vmem:[%s5704 + $0x130] sm:$0xff]
  %v5744 = vld [vmem:[%s5704 + $0x138] sm:$0xff]
  %v5745 = vld [vmem:[%s5704 + $0x140] sm:$0xff]
  %v5746 = vld [vmem:[%s5704 + $0x148] sm:$0xff]
  %v5747 = vld [vmem:[%s5704 + $0x150] sm:$0xff]
  %v5748 = vld [vmem:[%s5704 + $0x158] sm:$0xff]
  %v5749 = vld [vmem:[%s5704 + $0x160] sm:$0xff]
  %v5750 = vld [vmem:[%s5704 + $0x168] sm:$0xff]
  %v5751 = vld [vmem:[%s5704 + $0x170] sm:$0xff]
  %v5752 = vld [vmem:[%s5704 + $0x178] sm:$0xff]
  %v5753 = vld [vmem:[%s5704 + $0x180] sm:$0xff]
  %v5754 = vld [vmem:[%s5704 + $0x188] sm:$0xff]
  %v5755 = vld [vmem:[%s5704 + $0x190] sm:$0xff]
  %v5756 = vld [vmem:[%s5704 + $0x198] sm:$0xff]
  %v5757 = vld [vmem:[%s5704 + $0x1a0] sm:$0xff]
  %v5758 = vld [vmem:[%s5704 + $0x1a8] sm:$0xff]
  %v5759 = vld [vmem:[%s5704 + $0x1b0] sm:$0xff]
  %v5760 = vld [vmem:[%s5704 + $0x1b8] sm:$0xff]
  %v5761 = vld [vmem:[%s5704 + $0x1c0] sm:$0x3f]
  %v5762 = vld [vmem:[%s5704 + $0x1c8] sm:$0x3f]
  %v5771 = vlaneseq
  %v5772 = vshrl.u32 %v5771, 7
  %v5773 = vsub.s32 0, %v5772
  %v5774 = vrot.slane %v3532, %v5773
  %v5775 = vlaneseq
  %v5776 = vshrl.u32 %v5775, 7
  %v5777 = vsub.s32 2, %v5776
  %v5778 = vrot.slane %v3532, %v5777
  %v5779 = vlaneseq
  %v5780 = vshrl.u32 %v5779, 7
  %v5781 = vsub.s32 0, %v5780
  %v5782 = vrot.slane %v3544, %v5781
  %v5783 = vlaneseq
  %v5784 = vshrl.u32 %v5783, 7
  %v5785 = vsub.s32 2, %v5784
  %v5786 = vrot.slane %v3544, %v5785
  %v5787 = vlaneseq
  %v5788 = vshrl.u32 %v5787, 7
  %v5789 = vsub.s32 0, %v5788
  %v5790 = vrot.slane %v3556, %v5789
  %v5791 = vlaneseq
  %v5792 = vshrl.u32 %v5791, 7
  %v5793 = vsub.s32 2, %v5792
  %v5794 = vrot.slane %v3556, %v5793
  %v5795 = vlaneseq
  %v5796 = vshrl.u32 %v5795, 7
  %v5797 = vsub.s32 0, %v5796
  %v5798 = vrot.slane %v3568, %v5797
  %v5799 = vlaneseq
  %v5800 = vshrl.u32 %v5799, 7
  %v5801 = vsub.s32 2, %v5800
  %v5802 = vrot.slane %v3568, %v5801
  %v5803 = vlaneseq
  %v5804 = vshrl.u32 %v5803, 7
  %v5805 = vsub.s32 0, %v5804
  %v5806 = vrot.slane %v3580, %v5805
  %v5807 = vlaneseq
  %v5808 = vshrl.u32 %v5807, 7
  %v5809 = vsub.s32 2, %v5808
  %v5810 = vrot.slane %v3580, %v5809
  %v5811 = vlaneseq
  %v5812 = vshrl.u32 %v5811, 7
  %v5813 = vsub.s32 0, %v5812
  %v5814 = vrot.slane %v3592, %v5813
  %v5815 = vlaneseq
  %v5816 = vshrl.u32 %v5815, 7
  %v5817 = vsub.s32 2, %v5816
  %v5818 = vrot.slane %v3592, %v5817
  %v5819 = vlaneseq
  %v5820 = vshrl.u32 %v5819, 7
  %v5821 = vsub.s32 0, %v5820
  %v5822 = vrot.slane %v3604, %v5821
  %v5823 = vlaneseq
  %v5824 = vshrl.u32 %v5823, 7
  %v5825 = vsub.s32 2, %v5824
  %v5826 = vrot.slane %v3604, %v5825
  %v5827 = vlaneseq
  %v5828 = vshrl.u32 %v5827, 7
  %v5829 = vsub.s32 0, %v5828
  %v5830 = vrot.slane %v3616, %v5829
  %v5831 = vlaneseq
  %v5832 = vshrl.u32 %v5831, 7
  %v5833 = vsub.s32 2, %v5832
  %v5834 = vrot.slane %v3616, %v5833
  %v5835 = vsel %vm4310, %v3833, %v3825
  %v5836 = vsel %vm4312, %v3841, %v5835
  %v5837 = vsel %vm4314, %v3849, %v5836
  %v5838 = vsel %vm4316, %v3857, %v5837
  %v5839 = vsel %vm4318, %v4970, %v5838
  %v5840 = vsel %vm4320, %v5372, %v5839
  %v5841 = vsel %vm4322, %v5774, %v5840
  %v5842 = vsel %vm4310, %v3837, %v3829
  %v5843 = vsel %vm4312, %v3845, %v5842
  %v5844 = vsel %vm4314, %v3853, %v5843
  %v5845 = vsel %vm4316, %v3861, %v5844
  %v5846 = vsel %vm4318, %v4974, %v5845
  %v5847 = vsel %vm4320, %v5376, %v5846
  %v5848 = vsel %vm4322, %v5778, %v5847
  %v5849 = vsel %vm4310, %v3897, %v3889
  %v5850 = vsel %vm4312, %v3905, %v5849
  %v5851 = vsel %vm4314, %v3913, %v5850
  %v5852 = vsel %vm4316, %v3921, %v5851
  %v5853 = vsel %vm4318, %v4978, %v5852
  %v5854 = vsel %vm4320, %v5380, %v5853
  %v5855 = vsel %vm4322, %v5782, %v5854
  %v5856 = vsel %vm4310, %v3901, %v3893
  %v5857 = vsel %vm4312, %v3909, %v5856
  %v5858 = vsel %vm4314, %v3917, %v5857
  %v5859 = vsel %vm4316, %v3925, %v5858
  %v5860 = vsel %vm4318, %v4982, %v5859
  %v5861 = vsel %vm4320, %v5384, %v5860
  %v5862 = vsel %vm4322, %v5786, %v5861
  %v5863 = vsel %vm4310, %v3961, %v3953
  %v5864 = vsel %vm4312, %v3969, %v5863
  %v5865 = vsel %vm4314, %v3977, %v5864
  %v5866 = vsel %vm4316, %v3985, %v5865
  %v5867 = vsel %vm4318, %v4986, %v5866
  %v5868 = vsel %vm4320, %v5388, %v5867
  %v5869 = vsel %vm4322, %v5790, %v5868
  %v5870 = vsel %vm4310, %v3965, %v3957
  %v5871 = vsel %vm4312, %v3973, %v5870
  %v5872 = vsel %vm4314, %v3981, %v5871
  %v5873 = vsel %vm4316, %v3989, %v5872
  %v5874 = vsel %vm4318, %v4990, %v5873
  %v5875 = vsel %vm4320, %v5392, %v5874
  %v5876 = vsel %vm4322, %v5794, %v5875
  %v5877 = vsel %vm4310, %v4025, %v4017
  %v5878 = vsel %vm4312, %v4033, %v5877
  %v5879 = vsel %vm4314, %v4041, %v5878
  %v5880 = vsel %vm4316, %v4049, %v5879
  %v5881 = vsel %vm4318, %v4994, %v5880
  %v5882 = vsel %vm4320, %v5396, %v5881
  %v5883 = vsel %vm4322, %v5798, %v5882
  %v5884 = vsel %vm4310, %v4029, %v4021
  %v5885 = vsel %vm4312, %v4037, %v5884
  %v5886 = vsel %vm4314, %v4045, %v5885
  %v5887 = vsel %vm4316, %v4053, %v5886
  %v5888 = vsel %vm4318, %v4998, %v5887
  %v5889 = vsel %vm4320, %v5400, %v5888
  %v5890 = vsel %vm4322, %v5802, %v5889
  %v5891 = vsel %vm4310, %v4089, %v4081
  %v5892 = vsel %vm4312, %v4097, %v5891
  %v5893 = vsel %vm4314, %v4105, %v5892
  %v5894 = vsel %vm4316, %v4113, %v5893
  %v5895 = vsel %vm4318, %v5002, %v5894
  %v5896 = vsel %vm4320, %v5404, %v5895
  %v5897 = vsel %vm4322, %v5806, %v5896
  %v5898 = vsel %vm4310, %v4093, %v4085
  %v5899 = vsel %vm4312, %v4101, %v5898
  %v5900 = vsel %vm4314, %v4109, %v5899
  %v5901 = vsel %vm4316, %v4117, %v5900
  %v5902 = vsel %vm4318, %v5006, %v5901
  %v5903 = vsel %vm4320, %v5408, %v5902
  %v5904 = vsel %vm4322, %v5810, %v5903
  %v5905 = vsel %vm4310, %v4153, %v4145
  %v5906 = vsel %vm4312, %v4161, %v5905
  %v5907 = vsel %vm4314, %v4169, %v5906
  %v5908 = vsel %vm4316, %v4177, %v5907
  %v5909 = vsel %vm4318, %v5010, %v5908
  %v5910 = vsel %vm4320, %v5412, %v5909
  %v5911 = vsel %vm4322, %v5814, %v5910
  %v5912 = vsel %vm4310, %v4157, %v4149
  %v5913 = vsel %vm4312, %v4165, %v5912
  %v5914 = vsel %vm4314, %v4173, %v5913
  %v5915 = vsel %vm4316, %v4181, %v5914
  %v5916 = vsel %vm4318, %v5014, %v5915
  %v5917 = vsel %vm4320, %v5416, %v5916
  %v5918 = vsel %vm4322, %v5818, %v5917
  %v5919 = vsel %vm4310, %v4217, %v4209
  %v5920 = vsel %vm4312, %v4225, %v5919
  %v5921 = vsel %vm4314, %v4233, %v5920
  %v5922 = vsel %vm4316, %v4241, %v5921
  %v5923 = vsel %vm4318, %v5018, %v5922
  %v5924 = vsel %vm4320, %v5420, %v5923
  %v5925 = vsel %vm4322, %v5822, %v5924
  %v5926 = vsel %vm4310, %v4221, %v4213
  %v5927 = vsel %vm4312, %v4229, %v5926
  %v5928 = vsel %vm4314, %v4237, %v5927
  %v5929 = vsel %vm4316, %v4245, %v5928
  %v5930 = vsel %vm4318, %v5022, %v5929
  %v5931 = vsel %vm4320, %v5424, %v5930
  %v5932 = vsel %vm4322, %v5826, %v5931
  %v5933 = vsel %vm4310, %v4281, %v4273
  %v5934 = vsel %vm4312, %v4289, %v5933
  %v5935 = vsel %vm4314, %v4297, %v5934
  %v5936 = vsel %vm4316, %v4305, %v5935
  %v5937 = vsel %vm4318, %v5026, %v5936
  %v5938 = vsel %vm4320, %v5428, %v5937
  %v5939 = vsel %vm4322, %v5830, %v5938
  %v5940 = vsel %vm4310, %v4285, %v4277
  %v5941 = vsel %vm4312, %v4293, %v5940
  %v5942 = vsel %vm4314, %v4301, %v5941
  %v5943 = vsel %vm4316, %v4309, %v5942
  %v5944 = vsel %vm4318, %v5030, %v5943
  %v5945 = vsel %vm4320, %v5432, %v5944
  %v5946 = vsel %vm4322, %v5834, %v5945
  %v5955 = vsel %vm4437, %v5848, 0
  %v5957 = vsel %vm4437, %v5862, 0
  %v5959 = vsel %vm4437, %v5876, 0
  %v5961 = vsel %vm4437, %v5890, 0
  %v5963 = vsel %vm4437, %v5904, 0
  %v5965 = vsel %vm4437, %v5918, 0
  %v5967 = vsel %vm4437, %v5932, 0
  %v5969 = vsel %vm4437, %v5946, 0
  %v5972 = vsel %vm698, %v5761, 0
  %v5975 = vsel %vm698, %v5762, 0
  %5977 = vmatprep.subr.mxu0 %v5736
  %5978 = vmatpush1.msra.mxu0 %v5735
  %5979 = vmatprep.subr.mxu0 %v5734
  %5980 = vmatpush1.msra.mxu0 %v5733
  %5981 = vmatprep.subr.mxu0 %v5732
  %5982 = vmatpush1.msra.mxu0 %v5731
  %5983 = vmatprep.subr.mxu0 %v5730
  %5984 = vmatpush1.msra.mxu0 %v5729
  %5985 = vmatprep.subr.mxu0 %v5728
  %5986 = vmatpush1.msra.mxu0 %v5727
  %5987 = vmatprep.subr.mxu0 %v5726
  %5988 = vmatpush1.msra.mxu0 %v5725
  %5989 = vmatprep.subr.mxu0 %v5724
  %5990 = vmatpush1.msra.mxu0 %v5723
  %5991 = vmatprep.subr.mxu0 %v5722
  %5992 = vmatpush1.msra.mxu0 %v5721
  %5993 = vmatprep.subr.mxu0 %v5720
  %5994 = vmatpush1.msra.mxu0 %v5719
  %5995 = vmatprep.subr.mxu0 %v5718
  %5996 = vmatpush1.msra.mxu0 %v5717
  %5997 = vmatprep.subr.mxu0 %v5716
  %5998 = vmatpush1.msra.mxu0 %v5715
  %5999 = vmatprep.subr.mxu0 %v5714
  %6000 = vmatpush1.msra.mxu0 %v5713
  %6001 = vmatprep.subr.mxu0 %v5712
  %6002 = vmatpush1.msra.mxu0 %v5711
  %6003 = vmatprep.subr.mxu0 %v5710
  %6004 = vmatpush1.msra.mxu0 %v5709
  %6005 = vmatprep.subr.mxu0 %v5708
  %6006 = vmatpush1.msra.mxu0 %v5707
  %6007 = vmatprep.subr.mxu0 %v5706
  %6008 = vmatpush1.msra.mxu0 %v5705
  %6009 = vmatprep.subr.mxu0 0.0
  %6010 = vmatpush2.msra.mxu0 0.0
  %6011 = vmatprep.subr.mxu0 0.0
  %6012 = vmatpush2.msra.mxu0 0.0
  %6013 = vmatprep.subr.mxu0 0.0
  %6014 = vmatpush2.msra.mxu0 0.0
  %6015 = vmatprep.subr.mxu0 %v5975
  %6016 = vmatpush2.msra.mxu0 %v5972
  %6017 = vmatprep.subr.mxu0 %v5760
  %6018 = vmatpush2.msra.mxu0 %v5759
  %6019 = vmatprep.subr.mxu0 %v5758
  %6020 = vmatpush2.msra.mxu0 %v5757
  %6021 = vmatprep.subr.mxu0 %v5756
  %6022 = vmatpush2.msra.mxu0 %v5755
  %6023 = vmatprep.subr.mxu0 %v5754
  %6024 = vmatpush2.msra.mxu0 %v5753
  %6025 = vmatprep.subr.mxu0 %v5752
  %6026 = vmatpush2.msra.mxu0 %v5751
  %6027 = vmatprep.subr.mxu0 %v5750
  %6028 = vmatpush2.msra.mxu0 %v5749
  %6029 = vmatprep.subr.mxu0 %v5748
  %6030 = vmatpush2.msra.mxu0 %v5747
  %6031 = vmatprep.subr.mxu0 %v5746
  %6032 = vmatpush2.msra.mxu0 %v5745
  %6033 = vmatprep.subr.mxu0 %v5744
  %6034 = vmatpush2.msra.mxu0 %v5743
  %6035 = vmatprep.subr.mxu0 %v5742
  %6036 = vmatpush2.msra.mxu0 %v5741
  %6037 = vmatprep.subr.mxu0 %v5740
  %6038 = vmatpush2.msra.mxu0 %v5739
  %6039 = vmatprep.subr.mxu0 %v5738
  %6040 = vmatpush2.msra.mxu0 %v5737
  %6041 = vmatprep.mubr.f32.mxu0 %v5955
  %6042 = vmatmul.mubr.f32.gmra.mxu0 %v5841
  %v6043 = vpop.f32.mrf.mxu0
  %v6044 = vadd.f32 0.0, %v6043
  %v6045 = vpop.f32.mrf.mxu0
  %v6046 = vadd.f32 0.0, %v6045
  %6047 = vmatprep.mubr.f32.mxu0 %v5957
  %6048 = vmatmul.mubr.f32.gmra.mxu0 %v5855
  %v6049 = vpop.f32.mrf.mxu0
  %v6050 = vadd.f32 0.0, %v6049
  %v6051 = vpop.f32.mrf.mxu0
  %v6052 = vadd.f32 0.0, %v6051
  %6053 = vmatprep.mubr.f32.mxu0 %v5959
  %6054 = vmatmul.mubr.f32.gmra.mxu0 %v5869
  %v6055 = vpop.f32.mrf.mxu0
  %v6056 = vadd.f32 0.0, %v6055
  %v6057 = vpop.f32.mrf.mxu0
  %v6058 = vadd.f32 0.0, %v6057
  %6059 = vmatprep.mubr.f32.mxu0 %v5961
  %6060 = vmatmul.mubr.f32.gmra.mxu0 %v5883
  %v6061 = vpop.f32.mrf.mxu0
  %v6062 = vadd.f32 0.0, %v6061
  %v6063 = vpop.f32.mrf.mxu0
  %v6064 = vadd.f32 0.0, %v6063
  %6065 = vmatprep.mubr.f32.mxu0 %v5963
  %6066 = vmatmul.mubr.f32.gmra.mxu0 %v5897
  %v6067 = vpop.f32.mrf.mxu0
  %v6068 = vadd.f32 0.0, %v6067
  %v6069 = vpop.f32.mrf.mxu0
  %v6070 = vadd.f32 0.0, %v6069
  %6071 = vmatprep.mubr.f32.mxu0 %v5965
  %6072 = vmatmul.mubr.f32.gmra.mxu0 %v5911
  %v6073 = vpop.f32.mrf.mxu0
  %v6074 = vadd.f32 0.0, %v6073
  %v6075 = vpop.f32.mrf.mxu0
  %v6076 = vadd.f32 0.0, %v6075
  %6077 = vmatprep.mubr.f32.mxu0 %v5967
  %6078 = vmatmul.mubr.f32.gmra.mxu0 %v5925
  %v6079 = vpop.f32.mrf.mxu0
  %v6080 = vadd.f32 0.0, %v6079
  %v6081 = vpop.f32.mrf.mxu0
  %v6082 = vadd.f32 0.0, %v6081
  %6083 = vmatprep.mubr.f32.mxu0 %v5969
  %6084 = vmatmul.mubr.f32.gmra.mxu0 %v5939
  %v6085 = vpop.f32.mrf.mxu0
  %v6086 = vadd.f32 0.0, %v6085
  %v6087 = vpop.f32.mrf.mxu0
  %v6088 = vadd.f32 0.0, %v6087
  %6089 = vdwg.mxu0
  %v6090 = vadd.f32 %v5688, %v6044
  %v6091 = vadd.f32 %v5689, %v6046
  %v6092 = vadd.f32 %v5690, %v6050
  %v6093 = vadd.f32 %v5691, %v6052
  %v6094 = vadd.f32 %v5692, %v6056
  %v6095 = vadd.f32 %v5693, %v6058
  %v6096 = vadd.f32 %v5694, %v6062
  %v6097 = vadd.f32 %v5695, %v6064
  %v6098 = vadd.f32 %v5696, %v6068
  %v6099 = vadd.f32 %v5697, %v6070
  %v6100 = vadd.f32 %v5698, %v6074
  %v6101 = vadd.f32 %v5699, %v6076
  %v6102 = vadd.f32 %v5700, %v6080
  %v6103 = vadd.f32 %v5701, %v6082
  %v6104 = vadd.f32 %v5702, %v6086
  %v6105 = vadd.f32 %v5703, %v6088
  %v6106 = vld [vmem:[%s4] sm:$0x3]
  %v6108 = vlaneseq
  %v6109 = vshrl.u32 %v6108, 7
  %v6110 = vsub.s32 0, %v6109
  %v6111 = vrot.slane %v6106, %v6110
  %v6112 = vlaneseq
  %v6113 = vshrl.u32 %v6112, 7
  %v6114 = vsub.s32 1, %v6113
  %v6115 = vrot.slane %v6106, %v6114
  %v6118 = vadd.f32 %v6090, %v6111
  %v6119 = vadd.f32 %v6091, %v6115
  %v6120 = vadd.f32 %v6092, %v6111
  %v6121 = vadd.f32 %v6093, %v6115
  %v6122 = vadd.f32 %v6094, %v6111
  %v6123 = vadd.f32 %v6095, %v6115
  %v6124 = vadd.f32 %v6096, %v6111
  %v6125 = vadd.f32 %v6097, %v6115
  %v6126 = vadd.f32 %v6098, %v6111
  %v6127 = vadd.f32 %v6099, %v6115
  %v6128 = vadd.f32 %v6100, %v6111
  %v6129 = vadd.f32 %v6101, %v6115
  %v6130 = vadd.f32 %v6102, %v6111
  %v6131 = vadd.f32 %v6103, %v6115
  %v6132 = vadd.f32 %v6104, %v6111
  %v6133 = vadd.f32 %v6105, %v6115
  %v6150 = vcombine.low %v6118, %v6119
  %v6151 = vcombine.high %v6118, %v6119
  %v6153 = vunpack.c.l.s4 1983009808
  %v6154 = vunpack.c.0.s8 %v6153
  %v6155 = vlaneseq
  %v6156 = vshrl.u32 %v6155, 7
  %v6157 = vsub.s32 %v6154, %v6156
  %v6158 = vrot.slane %v6150, %v6157
  %v6160 = vunpack.c.l.s4 1983009808
  %v6161 = vunpack.c.0.s8 %v6160
  %v6162 = vlaneseq
  %v6163 = vshrl.u32 %v6162, 7
  %v6164 = vsub.s32 %v6161, %v6163
  %v6165 = vrot.slane %v6151, %v6164
  %v6166 = vcombine.high %v6158, %v6158
  %v6167 = vcombine.high %v6165, %v6165
  %v6168 = vcombine.low %v6120, %v6121
  %v6169 = vcombine.high %v6120, %v6121
  %v6171 = vunpack.c.l.s4 1983009808
  %v6172 = vunpack.c.0.s8 %v6171
  %v6173 = vlaneseq
  %v6174 = vshrl.u32 %v6173, 7
  %v6175 = vsub.s32 %v6172, %v6174
  %v6176 = vrot.slane %v6168, %v6175
  %v6178 = vunpack.c.l.s4 1983009808
  %v6179 = vunpack.c.0.s8 %v6178
  %v6180 = vlaneseq
  %v6181 = vshrl.u32 %v6180, 7
  %v6182 = vsub.s32 %v6179, %v6181
  %v6183 = vrot.slane %v6169, %v6182
  %v6184 = vcombine.high %v6176, %v6176
  %v6185 = vcombine.high %v6183, %v6183
  %v6186 = vcombine.low %v6122, %v6123
  %v6187 = vcombine.high %v6122, %v6123
  %v6189 = vunpack.c.l.s4 1983009808
  %v6190 = vunpack.c.0.s8 %v6189
  %v6191 = vlaneseq
  %v6192 = vshrl.u32 %v6191, 7
  %v6193 = vsub.s32 %v6190, %v6192
  %v6194 = vrot.slane %v6186, %v6193
  %v6196 = vunpack.c.l.s4 1983009808
  %v6197 = vunpack.c.0.s8 %v6196
  %v6198 = vlaneseq
  %v6199 = vshrl.u32 %v6198, 7
  %v6200 = vsub.s32 %v6197, %v6199
  %v6201 = vrot.slane %v6187, %v6200
  %v6202 = vcombine.high %v6194, %v6194
  %v6203 = vcombine.high %v6201, %v6201
  %v6204 = vcombine.low %v6124, %v6125
  %v6205 = vcombine.high %v6124, %v6125
  %v6207 = vunpack.c.l.s4 1983009808
  %v6208 = vunpack.c.0.s8 %v6207
  %v6209 = vlaneseq
  %v6210 = vshrl.u32 %v6209, 7
  %v6211 = vsub.s32 %v6208, %v6210
  %v6212 = vrot.slane %v6204, %v6211
  %v6214 = vunpack.c.l.s4 1983009808
  %v6215 = vunpack.c.0.s8 %v6214
  %v6216 = vlaneseq
  %v6217 = vshrl.u32 %v6216, 7
  %v6218 = vsub.s32 %v6215, %v6217
  %v6219 = vrot.slane %v6205, %v6218
  %v6220 = vcombine.high %v6212, %v6212
  %v6221 = vcombine.high %v6219, %v6219
  %v6222 = vcombine.low %v6126, %v6127
  %v6223 = vcombine.high %v6126, %v6127
  %v6225 = vunpack.c.l.s4 1983009808
  %v6226 = vunpack.c.0.s8 %v6225
  %v6227 = vlaneseq
  %v6228 = vshrl.u32 %v6227, 7
  %v6229 = vsub.s32 %v6226, %v6228
  %v6230 = vrot.slane %v6222, %v6229
  %v6232 = vunpack.c.l.s4 1983009808
  %v6233 = vunpack.c.0.s8 %v6232
  %v6234 = vlaneseq
  %v6235 = vshrl.u32 %v6234, 7
  %v6236 = vsub.s32 %v6233, %v6235
  %v6237 = vrot.slane %v6223, %v6236
  %v6238 = vcombine.high %v6230, %v6230
  %v6239 = vcombine.high %v6237, %v6237
  %v6240 = vcombine.low %v6128, %v6129
  %v6241 = vcombine.high %v6128, %v6129
  %v6243 = vunpack.c.l.s4 1983009808
  %v6244 = vunpack.c.0.s8 %v6243
  %v6245 = vlaneseq
  %v6246 = vshrl.u32 %v6245, 7
  %v6247 = vsub.s32 %v6244, %v6246
  %v6248 = vrot.slane %v6240, %v6247
  %v6250 = vunpack.c.l.s4 1983009808
  %v6251 = vunpack.c.0.s8 %v6250
  %v6252 = vlaneseq
  %v6253 = vshrl.u32 %v6252, 7
  %v6254 = vsub.s32 %v6251, %v6253
  %v6255 = vrot.slane %v6241, %v6254
  %v6256 = vcombine.high %v6248, %v6248
  %v6257 = vcombine.high %v6255, %v6255
  %v6258 = vcombine.low %v6130, %v6131
  %v6259 = vcombine.high %v6130, %v6131
  %v6261 = vunpack.c.l.s4 1983009808
  %v6262 = vunpack.c.0.s8 %v6261
  %v6263 = vlaneseq
  %v6264 = vshrl.u32 %v6263, 7
  %v6265 = vsub.s32 %v6262, %v6264
  %v6266 = vrot.slane %v6258, %v6265
  %v6268 = vunpack.c.l.s4 1983009808
  %v6269 = vunpack.c.0.s8 %v6268
  %v6270 = vlaneseq
  %v6271 = vshrl.u32 %v6270, 7
  %v6272 = vsub.s32 %v6269, %v6271
  %v6273 = vrot.slane %v6259, %v6272
  %v6274 = vcombine.high %v6266, %v6266
  %v6275 = vcombine.high %v6273, %v6273
  %v6276 = vcombine.low %v6132, %v6133
  %v6277 = vcombine.high %v6132, %v6133
  %v6279 = vunpack.c.l.s4 1983009808
  %v6280 = vunpack.c.0.s8 %v6279
  %v6281 = vlaneseq
  %v6282 = vshrl.u32 %v6281, 7
  %v6283 = vsub.s32 %v6280, %v6282
  %v6284 = vrot.slane %v6276, %v6283
  %v6286 = vunpack.c.l.s4 1983009808
  %v6287 = vunpack.c.0.s8 %v6286
  %v6288 = vlaneseq
  %v6289 = vshrl.u32 %v6288, 7
  %v6290 = vsub.s32 %v6287, %v6289
  %v6291 = vrot.slane %v6277, %v6290
  %v6292 = vcombine.high %v6284, %v6284
  %v6293 = vcombine.high %v6291, %v6291
  %v6326 = vrot.slane %v6158, 7
  %v6327 = vrot.slane %v6326, 2
  %v6328 = vrot.slane %v6166, 7
  %v6329 = vrot.slane %v6328, 2
  %v6330 = vrot.slane %v6165, 7
  %v6331 = vrot.slane %v6330, 2
  %v6332 = vrot.slane %v6167, 7
  %v6333 = vrot.slane %v6332, 2
  %v6334 = vrot.slane %v6176, 7
  %v6335 = vrot.slane %v6334, 2
  %v6336 = vrot.slane %v6184, 7
  %v6337 = vrot.slane %v6336, 2
  %v6338 = vrot.slane %v6183, 7
  %v6339 = vrot.slane %v6338, 2
  %v6340 = vrot.slane %v6185, 7
  %v6341 = vrot.slane %v6340, 2
  %v6342 = vrot.slane %v6194, 7
  %v6343 = vrot.slane %v6342, 2
  %v6344 = vrot.slane %v6202, 7
  %v6345 = vrot.slane %v6344, 2
  %v6346 = vrot.slane %v6201, 7
  %v6347 = vrot.slane %v6346, 2
  %v6348 = vrot.slane %v6203, 7
  %v6349 = vrot.slane %v6348, 2
  %v6350 = vrot.slane %v6212, 7
  %v6351 = vrot.slane %v6350, 2
  %v6352 = vrot.slane %v6220, 7
  %v6353 = vrot.slane %v6352, 2
  %v6354 = vrot.slane %v6219, 7
  %v6355 = vrot.slane %v6354, 2
  %v6356 = vrot.slane %v6221, 7
  %v6357 = vrot.slane %v6356, 2
  %v6358 = vrot.slane %v6230, 7
  %v6359 = vrot.slane %v6358, 2
  %v6360 = vrot.slane %v6238, 7
  %v6361 = vrot.slane %v6360, 2
  %v6362 = vrot.slane %v6237, 7
  %v6363 = vrot.slane %v6362, 2
  %v6364 = vrot.slane %v6239, 7
  %v6365 = vrot.slane %v6364, 2
  %v6366 = vrot.slane %v6248, 7
  %v6367 = vrot.slane %v6366, 2
  %v6368 = vrot.slane %v6256, 7
  %v6369 = vrot.slane %v6368, 2
  %v6370 = vrot.slane %v6255, 7
  %v6371 = vrot.slane %v6370, 2
  %v6372 = vrot.slane %v6257, 7
  %v6373 = vrot.slane %v6372, 2
  %v6374 = vrot.slane %v6266, 7
  %v6375 = vrot.slane %v6374, 2
  %v6376 = vrot.slane %v6274, 7
  %v6377 = vrot.slane %v6376, 2
  %v6378 = vrot.slane %v6273, 7
  %v6379 = vrot.slane %v6378, 2
  %v6380 = vrot.slane %v6275, 7
  %v6381 = vrot.slane %v6380, 2
  %v6382 = vrot.slane %v6284, 7
  %v6383 = vrot.slane %v6382, 2
  %v6384 = vrot.slane %v6292, 7
  %v6385 = vrot.slane %v6384, 2
  %v6386 = vrot.slane %v6291, 7
  %v6387 = vrot.slane %v6386, 2
  %v6388 = vrot.slane %v6293, 7
  %v6389 = vrot.slane %v6388, 2
  %v6422 = vmax.f32 %v6158, %v6327
  %v6423 = vmax.f32 %v6166, %v6329
  %v6424 = vmax.f32 %v6165, %v6331
  %v6425 = vmax.f32 %v6167, %v6333
  %v6426 = vmax.f32 %v6176, %v6335
  %v6427 = vmax.f32 %v6184, %v6337
  %v6428 = vmax.f32 %v6183, %v6339
  %v6429 = vmax.f32 %v6185, %v6341
  %v6430 = vmax.f32 %v6194, %v6343
  %v6431 = vmax.f32 %v6202, %v6345
  %v6432 = vmax.f32 %v6201, %v6347
  %v6433 = vmax.f32 %v6203, %v6349
  %v6434 = vmax.f32 %v6212, %v6351
  %v6435 = vmax.f32 %v6220, %v6353
  %v6436 = vmax.f32 %v6219, %v6355
  %v6437 = vmax.f32 %v6221, %v6357
  %v6438 = vmax.f32 %v6230, %v6359
  %v6439 = vmax.f32 %v6238, %v6361
  %v6440 = vmax.f32 %v6237, %v6363
  %v6441 = vmax.f32 %v6239, %v6365
  %v6442 = vmax.f32 %v6248, %v6367
  %v6443 = vmax.f32 %v6256, %v6369
  %v6444 = vmax.f32 %v6255, %v6371
  %v6445 = vmax.f32 %v6257, %v6373
  %v6446 = vmax.f32 %v6266, %v6375
  %v6447 = vmax.f32 %v6274, %v6377
  %v6448 = vmax.f32 %v6273, %v6379
  %v6449 = vmax.f32 %v6275, %v6381
  %v6450 = vmax.f32 %v6284, %v6383
  %v6451 = vmax.f32 %v6292, %v6385
  %v6452 = vmax.f32 %v6291, %v6387
  %v6453 = vmax.f32 %v6293, %v6389
  %6486 = vrot.lane.b32.xlu0 %v6422, 108
  %v6487 = vpop.permute.xlu0 %6486
  %6488 = vrot.lane.b32.xlu0 %v6423, 108
  %v6489 = vpop.permute.xlu0 %6488
  %6490 = vrot.lane.b32.xlu0 %v6424, 108
  %v6491 = vpop.permute.xlu0 %6490
  %6492 = vrot.lane.b32.xlu0 %v6425, 108
  %v6493 = vpop.permute.xlu0 %6492
  %6494 = vrot.lane.b32.xlu0 %v6426, 108
  %v6495 = vpop.permute.xlu0 %6494
  %6496 = vrot.lane.b32.xlu0 %v6427, 108
  %v6497 = vpop.permute.xlu0 %6496
  %6498 = vrot.lane.b32.xlu0 %v6428, 108
  %v6499 = vpop.permute.xlu0 %6498
  %6500 = vrot.lane.b32.xlu0 %v6429, 108
  %v6501 = vpop.permute.xlu0 %6500
  %6502 = vrot.lane.b32.xlu0 %v6430, 108
  %v6503 = vpop.permute.xlu0 %6502
  %6504 = vrot.lane.b32.xlu0 %v6431, 108
  %v6505 = vpop.permute.xlu0 %6504
  %6506 = vrot.lane.b32.xlu0 %v6432, 108
  %v6507 = vpop.permute.xlu0 %6506
  %6508 = vrot.lane.b32.xlu0 %v6433, 108
  %v6509 = vpop.permute.xlu0 %6508
  %6510 = vrot.lane.b32.xlu0 %v6434, 108
  %v6511 = vpop.permute.xlu0 %6510
  %6512 = vrot.lane.b32.xlu0 %v6435, 108
  %v6513 = vpop.permute.xlu0 %6512
  %6514 = vrot.lane.b32.xlu0 %v6436, 108
  %v6515 = vpop.permute.xlu0 %6514
  %6516 = vrot.lane.b32.xlu0 %v6437, 108
  %v6517 = vpop.permute.xlu0 %6516
  %6518 = vrot.lane.b32.xlu0 %v6438, 108
  %v6519 = vpop.permute.xlu0 %6518
  %6520 = vrot.lane.b32.xlu0 %v6439, 108
  %v6521 = vpop.permute.xlu0 %6520
  %6522 = vrot.lane.b32.xlu0 %v6440, 108
  %v6523 = vpop.permute.xlu0 %6522
  %6524 = vrot.lane.b32.xlu0 %v6441, 108
  %v6525 = vpop.permute.xlu0 %6524
  %6526 = vrot.lane.b32.xlu0 %v6442, 108
  %v6527 = vpop.permute.xlu0 %6526
  %6528 = vrot.lane.b32.xlu0 %v6443, 108
  %v6529 = vpop.permute.xlu0 %6528
  %6530 = vrot.lane.b32.xlu0 %v6444, 108
  %v6531 = vpop.permute.xlu0 %6530
  %6532 = vrot.lane.b32.xlu0 %v6445, 108
  %v6533 = vpop.permute.xlu0 %6532
  %6534 = vrot.lane.b32.xlu0 %v6446, 108
  %v6535 = vpop.permute.xlu0 %6534
  %6536 = vrot.lane.b32.xlu0 %v6447, 108
  %v6537 = vpop.permute.xlu0 %6536
  %6538 = vrot.lane.b32.xlu0 %v6448, 108
  %v6539 = vpop.permute.xlu0 %6538
  %6540 = vrot.lane.b32.xlu0 %v6449, 108
  %v6541 = vpop.permute.xlu0 %6540
  %6542 = vrot.lane.b32.xlu0 %v6450, 108
  %v6543 = vpop.permute.xlu0 %6542
  %6544 = vrot.lane.b32.xlu0 %v6451, 108
  %v6545 = vpop.permute.xlu0 %6544
  %6546 = vrot.lane.b32.xlu0 %v6452, 108
  %v6547 = vpop.permute.xlu0 %6546
  %6548 = vrot.lane.b32.xlu0 %v6453, 108
  %v6549 = vpop.permute.xlu0 %6548
  %v6550 = vrot.slane %v6487, 2
  %v6551 = vrot.slane %v6489, 2
  %v6552 = vrot.slane %v6491, 2
  %v6553 = vrot.slane %v6493, 2
  %v6554 = vrot.slane %v6495, 2
  %v6555 = vrot.slane %v6497, 2
  %v6556 = vrot.slane %v6499, 2
  %v6557 = vrot.slane %v6501, 2
  %v6558 = vrot.slane %v6503, 2
  %v6559 = vrot.slane %v6505, 2
  %v6560 = vrot.slane %v6507, 2
  %v6561 = vrot.slane %v6509, 2
  %v6562 = vrot.slane %v6511, 2
  %v6563 = vrot.slane %v6513, 2
  %v6564 = vrot.slane %v6515, 2
  %v6565 = vrot.slane %v6517, 2
  %v6566 = vrot.slane %v6519, 2
  %v6567 = vrot.slane %v6521, 2
  %v6568 = vrot.slane %v6523, 2
  %v6569 = vrot.slane %v6525, 2
  %v6570 = vrot.slane %v6527, 2
  %v6571 = vrot.slane %v6529, 2
  %v6572 = vrot.slane %v6531, 2
  %v6573 = vrot.slane %v6533, 2
  %v6574 = vrot.slane %v6535, 2
  %v6575 = vrot.slane %v6537, 2
  %v6576 = vrot.slane %v6539, 2
  %v6577 = vrot.slane %v6541, 2
  %v6578 = vrot.slane %v6543, 2
  %v6579 = vrot.slane %v6545, 2
  %v6580 = vrot.slane %v6547, 2
  %v6581 = vrot.slane %v6549, 2
  %vm6582 = vcmask 883712
  %v6583 = vsel %vm6582, %v6487, %v6550
  %v6584 = vsel %vm6582, %v6489, %v6551
  %v6585 = vsel %vm6582, %v6491, %v6552
  %v6586 = vsel %vm6582, %v6493, %v6553
  %v6587 = vsel %vm6582, %v6495, %v6554
  %v6588 = vsel %vm6582, %v6497, %v6555
  %v6589 = vsel %vm6582, %v6499, %v6556
  %v6590 = vsel %vm6582, %v6501, %v6557
  %v6591 = vsel %vm6582, %v6503, %v6558
  %v6592 = vsel %vm6582, %v6505, %v6559
  %v6593 = vsel %vm6582, %v6507, %v6560
  %v6594 = vsel %vm6582, %v6509, %v6561
  %v6595 = vsel %vm6582, %v6511, %v6562
  %v6596 = vsel %vm6582, %v6513, %v6563
  %v6597 = vsel %vm6582, %v6515, %v6564
  %v6598 = vsel %vm6582, %v6517, %v6565
  %v6599 = vsel %vm6582, %v6519, %v6566
  %v6600 = vsel %vm6582, %v6521, %v6567
  %v6601 = vsel %vm6582, %v6523, %v6568
  %v6602 = vsel %vm6582, %v6525, %v6569
  %v6603 = vsel %vm6582, %v6527, %v6570
  %v6604 = vsel %vm6582, %v6529, %v6571
  %v6605 = vsel %vm6582, %v6531, %v6572
  %v6606 = vsel %vm6582, %v6533, %v6573
  %v6607 = vsel %vm6582, %v6535, %v6574
  %v6608 = vsel %vm6582, %v6537, %v6575
  %v6609 = vsel %vm6582, %v6539, %v6576
  %v6610 = vsel %vm6582, %v6541, %v6577
  %v6611 = vsel %vm6582, %v6543, %v6578
  %v6612 = vsel %vm6582, %v6545, %v6579
  %v6613 = vsel %vm6582, %v6547, %v6580
  %v6614 = vsel %vm6582, %v6549, %v6581
  %v6647 = vmax.f32 %v6422, %v6583
  %v6648 = vmax.f32 %v6423, %v6584
  %v6649 = vmax.f32 %v6424, %v6585
  %v6650 = vmax.f32 %v6425, %v6586
  %v6651 = vmax.f32 %v6426, %v6587
  %v6652 = vmax.f32 %v6427, %v6588
  %v6653 = vmax.f32 %v6428, %v6589
  %v6654 = vmax.f32 %v6429, %v6590
  %v6655 = vmax.f32 %v6430, %v6591
  %v6656 = vmax.f32 %v6431, %v6592
  %v6657 = vmax.f32 %v6432, %v6593
  %v6658 = vmax.f32 %v6433, %v6594
  %v6659 = vmax.f32 %v6434, %v6595
  %v6660 = vmax.f32 %v6435, %v6596
  %v6661 = vmax.f32 %v6436, %v6597
  %v6662 = vmax.f32 %v6437, %v6598
  %v6663 = vmax.f32 %v6438, %v6599
  %v6664 = vmax.f32 %v6439, %v6600
  %v6665 = vmax.f32 %v6440, %v6601
  %v6666 = vmax.f32 %v6441, %v6602
  %v6667 = vmax.f32 %v6442, %v6603
  %v6668 = vmax.f32 %v6443, %v6604
  %v6669 = vmax.f32 %v6444, %v6605
  %v6670 = vmax.f32 %v6445, %v6606
  %v6671 = vmax.f32 %v6446, %v6607
  %v6672 = vmax.f32 %v6447, %v6608
  %v6673 = vmax.f32 %v6448, %v6609
  %v6674 = vmax.f32 %v6449, %v6610
  %v6675 = vmax.f32 %v6450, %v6611
  %v6676 = vmax.f32 %v6451, %v6612
  %v6677 = vmax.f32 %v6452, %v6613
  %v6678 = vmax.f32 %v6453, %v6614
  %v6679 = vmax.f32 %v6647, 0.0
  %v6680 = vmax.f32 %v6648, 0.0
  %v6681 = vmax.f32 %v6649, 0.0
  %v6682 = vmax.f32 %v6650, 0.0
  %v6683 = vmax.f32 %v6651, 0.0
  %v6684 = vmax.f32 %v6652, 0.0
  %v6685 = vmax.f32 %v6653, 0.0
  %v6686 = vmax.f32 %v6654, 0.0
  %v6687 = vmax.f32 %v6655, 0.0
  %v6688 = vmax.f32 %v6656, 0.0
  %v6689 = vmax.f32 %v6657, 0.0
  %v6690 = vmax.f32 %v6658, 0.0
  %v6691 = vmax.f32 %v6659, 0.0
  %v6692 = vmax.f32 %v6660, 0.0
  %v6693 = vmax.f32 %v6661, 0.0
  %v6694 = vmax.f32 %v6662, 0.0
  %v6695 = vmax.f32 %v6663, 0.0
  %v6696 = vmax.f32 %v6664, 0.0
  %v6697 = vmax.f32 %v6665, 0.0
  %v6698 = vmax.f32 %v6666, 0.0
  %v6699 = vmax.f32 %v6667, 0.0
  %v6700 = vmax.f32 %v6668, 0.0
  %v6701 = vmax.f32 %v6669, 0.0
  %v6702 = vmax.f32 %v6670, 0.0
  %v6703 = vmax.f32 %v6671, 0.0
  %v6704 = vmax.f32 %v6672, 0.0
  %v6705 = vmax.f32 %v6673, 0.0
  %v6706 = vmax.f32 %v6674, 0.0
  %v6707 = vmax.f32 %v6675, 0.0
  %v6708 = vmax.f32 %v6676, 0.0
  %v6709 = vmax.f32 %v6677, 0.0
  %v6710 = vmax.f32 %v6678, 0.0
  %v6711 = vld [vmem:[%s5] sm:$0xff]
  %v6712 = vld [vmem:[%s5 + $0x8] sm:$0xff]
  %v6713 = vld [vmem:[%s5 + $0x10] sm:$0xff]
  %v6714 = vld [vmem:[%s5 + $0x18] sm:$0xff]
  %v6715 = vld [vmem:[%s5 + $0x20] sm:$0xff]
  %v6716 = vld [vmem:[%s5 + $0x28] sm:$0xff]
  %v6717 = vld [vmem:[%s5 + $0x30] sm:$0xff]
  %v6718 = vld [vmem:[%s5 + $0x38] sm:$0xff]
  %v6719 = vld [vmem:[%s5 + $0x40] sm:$0xff]
  %v6720 = vld [vmem:[%s5 + $0x48] sm:$0xff]
  %v6721 = vld [vmem:[%s5 + $0x50] sm:$0xff]
  %v6722 = vld [vmem:[%s5 + $0x58] sm:$0xff]
  %v6723 = vld [vmem:[%s5 + $0x60] sm:$0xff]
  %v6724 = vld [vmem:[%s5 + $0x68] sm:$0xff]
  %v6725 = vld [vmem:[%s5 + $0x70] sm:$0xff]
  %v6726 = vld [vmem:[%s5 + $0x78] sm:$0xff]
  %v6727 = vld [vmem:[%s5 + $0x80] sm:$0xff]
  %v6728 = vld [vmem:[%s5 + $0x88] sm:$0xf]
  %s6729 = scalar_lea.vmem %s5, 144
  %v6730 = vld [vmem:[%s6729] sm:$0xff]
  %v6731 = vld [vmem:[%s6729 + $0x8] sm:$0xff]
  %v6732 = vld [vmem:[%s6729 + $0x10] sm:$0xff]
  %v6733 = vld [vmem:[%s6729 + $0x18] sm:$0xff]
  %v6734 = vld [vmem:[%s6729 + $0x20] sm:$0xff]
  %v6735 = vld [vmem:[%s6729 + $0x28] sm:$0xff]
  %v6736 = vld [vmem:[%s6729 + $0x30] sm:$0xff]
  %v6737 = vld [vmem:[%s6729 + $0x38] sm:$0xff]
  %v6738 = vld [vmem:[%s6729 + $0x40] sm:$0xff]
  %v6739 = vld [vmem:[%s6729 + $0x48] sm:$0xff]
  %v6740 = vld [vmem:[%s6729 + $0x50] sm:$0xff]
  %v6741 = vld [vmem:[%s6729 + $0x58] sm:$0xff]
  %v6742 = vld [vmem:[%s6729 + $0x60] sm:$0xff]
  %v6743 = vld [vmem:[%s6729 + $0x68] sm:$0xff]
  %v6744 = vld [vmem:[%s6729 + $0x70] sm:$0xff]
  %v6745 = vld [vmem:[%s6729 + $0x78] sm:$0xff]
  %v6746 = vld [vmem:[%s6729 + $0x80] sm:$0xff]
  %v6747 = vld [vmem:[%s6729 + $0x88] sm:$0xf]
  %v6756 = vlaneseq
  %v6757 = vshrl.u32 %v6756, 7
  %v6758 = vsub.s32 0, %v6757
  %v6759 = vrot.slane %v6680, %v6758
  %v6760 = vlaneseq
  %v6761 = vshrl.u32 %v6760, 7
  %v6762 = vsub.s32 2, %v6761
  %v6763 = vrot.slane %v6680, %v6762
  %v6764 = vlaneseq
  %v6765 = vshrl.u32 %v6764, 7
  %v6766 = vsub.s32 0, %v6765
  %v6767 = vrot.slane %v6684, %v6766
  %v6768 = vlaneseq
  %v6769 = vshrl.u32 %v6768, 7
  %v6770 = vsub.s32 2, %v6769
  %v6771 = vrot.slane %v6684, %v6770
  %v6772 = vlaneseq
  %v6773 = vshrl.u32 %v6772, 7
  %v6774 = vsub.s32 0, %v6773
  %v6775 = vrot.slane %v6688, %v6774
  %v6776 = vlaneseq
  %v6777 = vshrl.u32 %v6776, 7
  %v6778 = vsub.s32 2, %v6777
  %v6779 = vrot.slane %v6688, %v6778
  %v6780 = vlaneseq
  %v6781 = vshrl.u32 %v6780, 7
  %v6782 = vsub.s32 0, %v6781
  %v6783 = vrot.slane %v6692, %v6782
  %v6784 = vlaneseq
  %v6785 = vshrl.u32 %v6784, 7
  %v6786 = vsub.s32 2, %v6785
  %v6787 = vrot.slane %v6692, %v6786
  %v6788 = vlaneseq
  %v6789 = vshrl.u32 %v6788, 7
  %v6790 = vsub.s32 0, %v6789
  %v6791 = vrot.slane %v6696, %v6790
  %v6792 = vlaneseq
  %v6793 = vshrl.u32 %v6792, 7
  %v6794 = vsub.s32 2, %v6793
  %v6795 = vrot.slane %v6696, %v6794
  %v6796 = vlaneseq
  %v6797 = vshrl.u32 %v6796, 7
  %v6798 = vsub.s32 0, %v6797
  %v6799 = vrot.slane %v6700, %v6798
  %v6800 = vlaneseq
  %v6801 = vshrl.u32 %v6800, 7
  %v6802 = vsub.s32 2, %v6801
  %v6803 = vrot.slane %v6700, %v6802
  %v6804 = vlaneseq
  %v6805 = vshrl.u32 %v6804, 7
  %v6806 = vsub.s32 0, %v6805
  %v6807 = vrot.slane %v6704, %v6806
  %v6808 = vlaneseq
  %v6809 = vshrl.u32 %v6808, 7
  %v6810 = vsub.s32 2, %v6809
  %v6811 = vrot.slane %v6704, %v6810
  %v6812 = vlaneseq
  %v6813 = vshrl.u32 %v6812, 7
  %v6814 = vsub.s32 0, %v6813
  %v6815 = vrot.slane %v6708, %v6814
  %v6816 = vlaneseq
  %v6817 = vshrl.u32 %v6816, 7
  %v6818 = vsub.s32 2, %v6817
  %v6819 = vrot.slane %v6708, %v6818
  %v6820 = vsel %vm4310, %v6767, %v6759
  %v6821 = vsel %vm4312, %v6775, %v6820
  %v6822 = vsel %vm4314, %v6783, %v6821
  %v6823 = vsel %vm4316, %v6791, %v6822
  %v6824 = vsel %vm4318, %v6799, %v6823
  %v6825 = vsel %vm4320, %v6807, %v6824
  %v6826 = vsel %vm4322, %v6815, %v6825
  %v6827 = vsel %vm4310, %v6771, %v6763
  %v6828 = vsel %vm4312, %v6779, %v6827
  %v6829 = vsel %vm4314, %v6787, %v6828
  %v6830 = vsel %vm4316, %v6795, %v6829
  %v6831 = vsel %vm4318, %v6803, %v6830
  %v6832 = vsel %vm4320, %v6811, %v6831
  %v6833 = vsel %vm4322, %v6819, %v6832
  %vm6835 = vcmask 97280
  %v6836 = vsel %vm6835, %v6833, 0
  %v6839 = vsel %vm219, %v6747, 0
  %6841 = vmatprep.subr.mxu0 0.0
  %6842 = vmatpush1.msra.mxu0 %v6745
  %6843 = vmatprep.subr.mxu0 0.0
  %6844 = vmatpush1.msra.mxu0 %v6744
  %6845 = vmatprep.subr.mxu0 0.0
  %6846 = vmatpush1.msra.mxu0 %v6743
  %6847 = vmatprep.subr.mxu0 0.0
  %6848 = vmatpush1.msra.mxu0 %v6742
  %6849 = vmatprep.subr.mxu0 0.0
  %6850 = vmatpush1.msra.mxu0 %v6741
  %6851 = vmatprep.subr.mxu0 0.0
  %6852 = vmatpush1.msra.mxu0 %v6740
  %6853 = vmatprep.subr.mxu0 0.0
  %6854 = vmatpush1.msra.mxu0 %v6739
  %6855 = vmatprep.subr.mxu0 0.0
  %6856 = vmatpush1.msra.mxu0 %v6738
  %6857 = vmatprep.subr.mxu0 0.0
  %6858 = vmatpush1.msra.mxu0 %v6737
  %6859 = vmatprep.subr.mxu0 0.0
  %6860 = vmatpush1.msra.mxu0 %v6736
  %6861 = vmatprep.subr.mxu0 0.0
  %6862 = vmatpush1.msra.mxu0 %v6735
  %6863 = vmatprep.subr.mxu0 0.0
  %6864 = vmatpush1.msra.mxu0 %v6734
  %6865 = vmatprep.subr.mxu0 0.0
  %6866 = vmatpush1.msra.mxu0 %v6733
  %6867 = vmatprep.subr.mxu0 0.0
  %6868 = vmatpush1.msra.mxu0 %v6732
  %6869 = vmatprep.subr.mxu0 0.0
  %6870 = vmatpush1.msra.mxu0 %v6731
  %6871 = vmatprep.subr.mxu0 0.0
  %6872 = vmatpush1.msra.mxu0 %v6730
  %6873 = vmatprep.subr.mxu0 0.0
  %6874 = vmatpush2.msra.mxu0 0.0
  %6875 = vmatprep.subr.mxu0 0.0
  %6876 = vmatpush2.msra.mxu0 0.0
  %6877 = vmatprep.subr.mxu0 0.0
  %6878 = vmatpush2.msra.mxu0 0.0
  %6879 = vmatprep.subr.mxu0 0.0
  %6880 = vmatpush2.msra.mxu0 0.0
  %6881 = vmatprep.subr.mxu0 0.0
  %6882 = vmatpush2.msra.mxu0 0.0
  %6883 = vmatprep.subr.mxu0 0.0
  %6884 = vmatpush2.msra.mxu0 0.0
  %6885 = vmatprep.subr.mxu0 0.0
  %6886 = vmatpush2.msra.mxu0 0.0
  %6887 = vmatprep.subr.mxu0 0.0
  %6888 = vmatpush2.msra.mxu0 0.0
  %6889 = vmatprep.subr.mxu0 0.0
  %6890 = vmatpush2.msra.mxu0 0.0
  %6891 = vmatprep.subr.mxu0 0.0
  %6892 = vmatpush2.msra.mxu0 0.0
  %6893 = vmatprep.subr.mxu0 0.0
  %6894 = vmatpush2.msra.mxu0 0.0
  %6895 = vmatprep.subr.mxu0 0.0
  %6896 = vmatpush2.msra.mxu0 0.0
  %6897 = vmatprep.subr.mxu0 0.0
  %6898 = vmatpush2.msra.mxu0 0.0
  %6899 = vmatprep.subr.mxu0 0.0
  %6900 = vmatpush2.msra.mxu0 0.0
  %6901 = vmatprep.subr.mxu0 0.0
  %6902 = vmatpush2.msra.mxu0 %v6839
  %6903 = vmatprep.subr.mxu0 0.0
  %6904 = vmatpush2.msra.mxu0 %v6746
  %6905 = vmatprep.mubr.f32.mxu0 %v6836
  %6906 = vmatmul.mubr.f32.gmra.mxu0 %v6826
  %v6907 = vpop.f32.mrf.mxu0
  %v6908 = vadd.f32 0.0, %v6907
  %v6909 = vpop.f32.mrf.mxu0
  %6910 = vdwg.mxu0
  %v6919 = vlaneseq
  %v6920 = vshrl.u32 %v6919, 7
  %v6921 = vsub.s32 0, %v6920
  %v6922 = vrot.slane %v6679, %v6921
  %v6923 = vlaneseq
  %v6924 = vshrl.u32 %v6923, 7
  %v6925 = vsub.s32 2, %v6924
  %v6926 = vrot.slane %v6679, %v6925
  %v6927 = vlaneseq
  %v6928 = vshrl.u32 %v6927, 7
  %v6929 = vsub.s32 0, %v6928
  %v6930 = vrot.slane %v6683, %v6929
  %v6931 = vlaneseq
  %v6932 = vshrl.u32 %v6931, 7
  %v6933 = vsub.s32 2, %v6932
  %v6934 = vrot.slane %v6683, %v6933
  %v6935 = vlaneseq
  %v6936 = vshrl.u32 %v6935, 7
  %v6937 = vsub.s32 0, %v6936
  %v6938 = vrot.slane %v6687, %v6937
  %v6939 = vlaneseq
  %v6940 = vshrl.u32 %v6939, 7
  %v6941 = vsub.s32 2, %v6940
  %v6942 = vrot.slane %v6687, %v6941
  %v6943 = vlaneseq
  %v6944 = vshrl.u32 %v6943, 7
  %v6945 = vsub.s32 0, %v6944
  %v6946 = vrot.slane %v6691, %v6945
  %v6947 = vlaneseq
  %v6948 = vshrl.u32 %v6947, 7
  %v6949 = vsub.s32 2, %v6948
  %v6950 = vrot.slane %v6691, %v6949
  %v6951 = vlaneseq
  %v6952 = vshrl.u32 %v6951, 7
  %v6953 = vsub.s32 0, %v6952
  %v6954 = vrot.slane %v6695, %v6953
  %v6955 = vlaneseq
  %v6956 = vshrl.u32 %v6955, 7
  %v6957 = vsub.s32 2, %v6956
  %v6958 = vrot.slane %v6695, %v6957
  %v6959 = vlaneseq
  %v6960 = vshrl.u32 %v6959, 7
  %v6961 = vsub.s32 0, %v6960
  %v6962 = vrot.slane %v6699, %v6961
  %v6963 = vlaneseq
  %v6964 = vshrl.u32 %v6963, 7
  %v6965 = vsub.s32 2, %v6964
  %v6966 = vrot.slane %v6699, %v6965
  %v6967 = vlaneseq
  %v6968 = vshrl.u32 %v6967, 7
  %v6969 = vsub.s32 0, %v6968
  %v6970 = vrot.slane %v6703, %v6969
  %v6971 = vlaneseq
  %v6972 = vshrl.u32 %v6971, 7
  %v6973 = vsub.s32 2, %v6972
  %v6974 = vrot.slane %v6703, %v6973
  %v6975 = vlaneseq
  %v6976 = vshrl.u32 %v6975, 7
  %v6977 = vsub.s32 0, %v6976
  %v6978 = vrot.slane %v6707, %v6977
  %v6979 = vlaneseq
  %v6980 = vshrl.u32 %v6979, 7
  %v6981 = vsub.s32 2, %v6980
  %v6982 = vrot.slane %v6707, %v6981
  %v6983 = vsel %vm4310, %v6930, %v6922
  %v6984 = vsel %vm4312, %v6938, %v6983
  %v6985 = vsel %vm4314, %v6946, %v6984
  %v6986 = vsel %vm4316, %v6954, %v6985
  %v6987 = vsel %vm4318, %v6962, %v6986
  %v6988 = vsel %vm4320, %v6970, %v6987
  %v6989 = vsel %vm4322, %v6978, %v6988
  %v6990 = vsel %vm4310, %v6934, %v6926
  %v6991 = vsel %vm4312, %v6942, %v6990
  %v6992 = vsel %vm4314, %v6950, %v6991
  %v6993 = vsel %vm4316, %v6958, %v6992
  %v6994 = vsel %vm4318, %v6966, %v6993
  %v6995 = vsel %vm4320, %v6974, %v6994
  %v6996 = vsel %vm4322, %v6982, %v6995
  %v6998 = vsel %vm6835, %v6996, 0
  %v7001 = vsel %vm219, %v6728, 0
  %7003 = vmatprep.subr.mxu0 0.0
  %7004 = vmatpush1.msra.mxu0 %v6726
  %7005 = vmatprep.subr.mxu0 0.0
  %7006 = vmatpush1.msra.mxu0 %v6725
  %7007 = vmatprep.subr.mxu0 0.0
  %7008 = vmatpush1.msra.mxu0 %v6724
  %7009 = vmatprep.subr.mxu0 0.0
  %7010 = vmatpush1.msra.mxu0 %v6723
  %7011 = vmatprep.subr.mxu0 0.0
  %7012 = vmatpush1.msra.mxu0 %v6722
  %7013 = vmatprep.subr.mxu0 0.0
  %7014 = vmatpush1.msra.mxu0 %v6721
  %7015 = vmatprep.subr.mxu0 0.0
  %7016 = vmatpush1.msra.mxu0 %v6720
  %7017 = vmatprep.subr.mxu0 0.0
  %7018 = vmatpush1.msra.mxu0 %v6719
  %7019 = vmatprep.subr.mxu0 0.0
  %7020 = vmatpush1.msra.mxu0 %v6718
  %7021 = vmatprep.subr.mxu0 0.0
  %7022 = vmatpush1.msra.mxu0 %v6717
  %7023 = vmatprep.subr.mxu0 0.0
  %7024 = vmatpush1.msra.mxu0 %v6716
  %7025 = vmatprep.subr.mxu0 0.0
  %7026 = vmatpush1.msra.mxu0 %v6715
  %7027 = vmatprep.subr.mxu0 0.0
  %7028 = vmatpush1.msra.mxu0 %v6714
  %7029 = vmatprep.subr.mxu0 0.0
  %7030 = vmatpush1.msra.mxu0 %v6713
  %7031 = vmatprep.subr.mxu0 0.0
  %7032 = vmatpush1.msra.mxu0 %v6712
  %7033 = vmatprep.subr.mxu0 0.0
  %7034 = vmatpush1.msra.mxu0 %v6711
  %7035 = vmatprep.subr.mxu0 0.0
  %7036 = vmatpush2.msra.mxu0 0.0
  %7037 = vmatprep.subr.mxu0 0.0
  %7038 = vmatpush2.msra.mxu0 0.0
  %7039 = vmatprep.subr.mxu0 0.0
  %7040 = vmatpush2.msra.mxu0 0.0
  %7041 = vmatprep.subr.mxu0 0.0
  %7042 = vmatpush2.msra.mxu0 0.0
  %7043 = vmatprep.subr.mxu0 0.0
  %7044 = vmatpush2.msra.mxu0 0.0
  %7045 = vmatprep.subr.mxu0 0.0
  %7046 = vmatpush2.msra.mxu0 0.0
  %7047 = vmatprep.subr.mxu0 0.0
  %7048 = vmatpush2.msra.mxu0 0.0
  %7049 = vmatprep.subr.mxu0 0.0
  %7050 = vmatpush2.msra.mxu0 0.0
  %7051 = vmatprep.subr.mxu0 0.0
  %7052 = vmatpush2.msra.mxu0 0.0
  %7053 = vmatprep.subr.mxu0 0.0
  %7054 = vmatpush2.msra.mxu0 0.0
  %7055 = vmatprep.subr.mxu0 0.0
  %7056 = vmatpush2.msra.mxu0 0.0
  %7057 = vmatprep.subr.mxu0 0.0
  %7058 = vmatpush2.msra.mxu0 0.0
  %7059 = vmatprep.subr.mxu0 0.0
  %7060 = vmatpush2.msra.mxu0 0.0
  %7061 = vmatprep.subr.mxu0 0.0
  %7062 = vmatpush2.msra.mxu0 0.0
  %7063 = vmatprep.subr.mxu0 0.0
  %7064 = vmatpush2.msra.mxu0 %v7001
  %7065 = vmatprep.subr.mxu0 0.0
  %7066 = vmatpush2.msra.mxu0 %v6727
  %7067 = vmatprep.mubr.f32.mxu0 %v6998
  %7068 = vmatmul.mubr.f32.gmra.mxu0 %v6989
  %v7069 = vpop.f32.mrf.mxu0
  %v7070 = vadd.f32 %v6908, %v7069
  %v7071 = vpop.f32.mrf.mxu0
  %7072 = vdwg.mxu0
  %s7073 = scalar_lea.vmem %s5, 288
  %v7074 = vld [vmem:[%s7073] sm:$0xff]
  %v7075 = vld [vmem:[%s7073 + $0x8] sm:$0xff]
  %v7076 = vld [vmem:[%s7073 + $0x10] sm:$0xff]
  %v7077 = vld [vmem:[%s7073 + $0x18] sm:$0xff]
  %v7078 = vld [vmem:[%s7073 + $0x20] sm:$0xff]
  %v7079 = vld [vmem:[%s7073 + $0x28] sm:$0xff]
  %v7080 = vld [vmem:[%s7073 + $0x30] sm:$0xff]
  %v7081 = vld [vmem:[%s7073 + $0x38] sm:$0xff]
  %v7082 = vld [vmem:[%s7073 + $0x40] sm:$0xff]
  %v7083 = vld [vmem:[%s7073 + $0x48] sm:$0xff]
  %v7084 = vld [vmem:[%s7073 + $0x50] sm:$0xff]
  %v7085 = vld [vmem:[%s7073 + $0x58] sm:$0xff]
  %v7086 = vld [vmem:[%s7073 + $0x60] sm:$0xff]
  %v7087 = vld [vmem:[%s7073 + $0x68] sm:$0xff]
  %v7088 = vld [vmem:[%s7073 + $0x70] sm:$0xff]
  %v7089 = vld [vmem:[%s7073 + $0x78] sm:$0xff]
  %v7090 = vld [vmem:[%s7073 + $0x80] sm:$0xff]
  %v7091 = vld [vmem:[%s7073 + $0x88] sm:$0xf]
  %v7100 = vlaneseq
  %v7101 = vshrl.u32 %v7100, 7
  %v7102 = vsub.s32 0, %v7101
  %v7103 = vrot.slane %v6681, %v7102
  %v7104 = vlaneseq
  %v7105 = vshrl.u32 %v7104, 7
  %v7106 = vsub.s32 2, %v7105
  %v7107 = vrot.slane %v6681, %v7106
  %v7108 = vlaneseq
  %v7109 = vshrl.u32 %v7108, 7
  %v7110 = vsub.s32 0, %v7109
  %v7111 = vrot.slane %v6685, %v7110
  %v7112 = vlaneseq
  %v7113 = vshrl.u32 %v7112, 7
  %v7114 = vsub.s32 2, %v7113
  %v7115 = vrot.slane %v6685, %v7114
  %v7116 = vlaneseq
  %v7117 = vshrl.u32 %v7116, 7
  %v7118 = vsub.s32 0, %v7117
  %v7119 = vrot.slane %v6689, %v7118
  %v7120 = vlaneseq
  %v7121 = vshrl.u32 %v7120, 7
  %v7122 = vsub.s32 2, %v7121
  %v7123 = vrot.slane %v6689, %v7122
  %v7124 = vlaneseq
  %v7125 = vshrl.u32 %v7124, 7
  %v7126 = vsub.s32 0, %v7125
  %v7127 = vrot.slane %v6693, %v7126
  %v7128 = vlaneseq
  %v7129 = vshrl.u32 %v7128, 7
  %v7130 = vsub.s32 2, %v7129
  %v7131 = vrot.slane %v6693, %v7130
  %v7132 = vlaneseq
  %v7133 = vshrl.u32 %v7132, 7
  %v7134 = vsub.s32 0, %v7133
  %v7135 = vrot.slane %v6697, %v7134
  %v7136 = vlaneseq
  %v7137 = vshrl.u32 %v7136, 7
  %v7138 = vsub.s32 2, %v7137
  %v7139 = vrot.slane %v6697, %v7138
  %v7140 = vlaneseq
  %v7141 = vshrl.u32 %v7140, 7
  %v7142 = vsub.s32 0, %v7141
  %v7143 = vrot.slane %v6701, %v7142
  %v7144 = vlaneseq
  %v7145 = vshrl.u32 %v7144, 7
  %v7146 = vsub.s32 2, %v7145
  %v7147 = vrot.slane %v6701, %v7146
  %v7148 = vlaneseq
  %v7149 = vshrl.u32 %v7148, 7
  %v7150 = vsub.s32 0, %v7149
  %v7151 = vrot.slane %v6705, %v7150
  %v7152 = vlaneseq
  %v7153 = vshrl.u32 %v7152, 7
  %v7154 = vsub.s32 2, %v7153
  %v7155 = vrot.slane %v6705, %v7154
  %v7156 = vlaneseq
  %v7157 = vshrl.u32 %v7156, 7
  %v7158 = vsub.s32 0, %v7157
  %v7159 = vrot.slane %v6709, %v7158
  %v7160 = vlaneseq
  %v7161 = vshrl.u32 %v7160, 7
  %v7162 = vsub.s32 2, %v7161
  %v7163 = vrot.slane %v6709, %v7162
  %v7164 = vsel %vm4310, %v7111, %v7103
  %v7165 = vsel %vm4312, %v7119, %v7164
  %v7166 = vsel %vm4314, %v7127, %v7165
  %v7167 = vsel %vm4316, %v7135, %v7166
  %v7168 = vsel %vm4318, %v7143, %v7167
  %v7169 = vsel %vm4320, %v7151, %v7168
  %v7170 = vsel %vm4322, %v7159, %v7169
  %v7171 = vsel %vm4310, %v7115, %v7107
  %v7172 = vsel %vm4312, %v7123, %v7171
  %v7173 = vsel %vm4314, %v7131, %v7172
  %v7174 = vsel %vm4316, %v7139, %v7173
  %v7175 = vsel %vm4318, %v7147, %v7174
  %v7176 = vsel %vm4320, %v7155, %v7175
  %v7177 = vsel %vm4322, %v7163, %v7176
  %v7179 = vsel %vm6835, %v7177, 0
  %v7182 = vsel %vm219, %v7091, 0
  %7184 = vmatprep.subr.mxu0 0.0
  %7185 = vmatpush1.msra.mxu0 %v7089
  %7186 = vmatprep.subr.mxu0 0.0
  %7187 = vmatpush1.msra.mxu0 %v7088
  %7188 = vmatprep.subr.mxu0 0.0
  %7189 = vmatpush1.msra.mxu0 %v7087
  %7190 = vmatprep.subr.mxu0 0.0
  %7191 = vmatpush1.msra.mxu0 %v7086
  %7192 = vmatprep.subr.mxu0 0.0
  %7193 = vmatpush1.msra.mxu0 %v7085
  %7194 = vmatprep.subr.mxu0 0.0
  %7195 = vmatpush1.msra.mxu0 %v7084
  %7196 = vmatprep.subr.mxu0 0.0
  %7197 = vmatpush1.msra.mxu0 %v7083
  %7198 = vmatprep.subr.mxu0 0.0
  %7199 = vmatpush1.msra.mxu0 %v7082
  %7200 = vmatprep.subr.mxu0 0.0
  %7201 = vmatpush1.msra.mxu0 %v7081
  %7202 = vmatprep.subr.mxu0 0.0
  %7203 = vmatpush1.msra.mxu0 %v7080
  %7204 = vmatprep.subr.mxu0 0.0
  %7205 = vmatpush1.msra.mxu0 %v7079
  %7206 = vmatprep.subr.mxu0 0.0
  %7207 = vmatpush1.msra.mxu0 %v7078
  %7208 = vmatprep.subr.mxu0 0.0
  %7209 = vmatpush1.msra.mxu0 %v7077
  %7210 = vmatprep.subr.mxu0 0.0
  %7211 = vmatpush1.msra.mxu0 %v7076
  %7212 = vmatprep.subr.mxu0 0.0
  %7213 = vmatpush1.msra.mxu0 %v7075
  %7214 = vmatprep.subr.mxu0 0.0
  %7215 = vmatpush1.msra.mxu0 %v7074
  %7216 = vmatprep.subr.mxu0 0.0
  %7217 = vmatpush2.msra.mxu0 0.0
  %7218 = vmatprep.subr.mxu0 0.0
  %7219 = vmatpush2.msra.mxu0 0.0
  %7220 = vmatprep.subr.mxu0 0.0
  %7221 = vmatpush2.msra.mxu0 0.0
  %7222 = vmatprep.subr.mxu0 0.0
  %7223 = vmatpush2.msra.mxu0 0.0
  %7224 = vmatprep.subr.mxu0 0.0
  %7225 = vmatpush2.msra.mxu0 0.0
  %7226 = vmatprep.subr.mxu0 0.0
  %7227 = vmatpush2.msra.mxu0 0.0
  %7228 = vmatprep.subr.mxu0 0.0
  %7229 = vmatpush2.msra.mxu0 0.0
  %7230 = vmatprep.subr.mxu0 0.0
  %7231 = vmatpush2.msra.mxu0 0.0
  %7232 = vmatprep.subr.mxu0 0.0
  %7233 = vmatpush2.msra.mxu0 0.0
  %7234 = vmatprep.subr.mxu0 0.0
  %7235 = vmatpush2.msra.mxu0 0.0
  %7236 = vmatprep.subr.mxu0 0.0
  %7237 = vmatpush2.msra.mxu0 0.0
  %7238 = vmatprep.subr.mxu0 0.0
  %7239 = vmatpush2.msra.mxu0 0.0
  %7240 = vmatprep.subr.mxu0 0.0
  %7241 = vmatpush2.msra.mxu0 0.0
  %7242 = vmatprep.subr.mxu0 0.0
  %7243 = vmatpush2.msra.mxu0 0.0
  %7244 = vmatprep.subr.mxu0 0.0
  %7245 = vmatpush2.msra.mxu0 %v7182
  %7246 = vmatprep.subr.mxu0 0.0
  %7247 = vmatpush2.msra.mxu0 %v7090
  %7248 = vmatprep.mubr.f32.mxu0 %v7179
  %7249 = vmatmul.mubr.f32.gmra.mxu0 %v7170
  %v7250 = vpop.f32.mrf.mxu0
  %v7251 = vadd.f32 0.0, %v7250
  %v7252 = vpop.f32.mrf.mxu0
  %7253 = vdwg.mxu0
  %v7254 = vadd.f32 %v7070, %v7251
  %s7255 = scalar_lea.vmem %s5, 432
  %v7256 = vld [vmem:[%s7255] sm:$0xff]
  %v7257 = vld [vmem:[%s7255 + $0x8] sm:$0xff]
  %v7258 = vld [vmem:[%s7255 + $0x10] sm:$0xff]
  %v7259 = vld [vmem:[%s7255 + $0x18] sm:$0xff]
  %v7260 = vld [vmem:[%s7255 + $0x20] sm:$0xff]
  %v7261 = vld [vmem:[%s7255 + $0x28] sm:$0xff]
  %v7262 = vld [vmem:[%s7255 + $0x30] sm:$0xff]
  %v7263 = vld [vmem:[%s7255 + $0x38] sm:$0xff]
  %v7264 = vld [vmem:[%s7255 + $0x40] sm:$0xff]
  %v7265 = vld [vmem:[%s7255 + $0x48] sm:$0xff]
  %v7266 = vld [vmem:[%s7255 + $0x50] sm:$0xff]
  %v7267 = vld [vmem:[%s7255 + $0x58] sm:$0xff]
  %v7268 = vld [vmem:[%s7255 + $0x60] sm:$0xff]
  %v7269 = vld [vmem:[%s7255 + $0x68] sm:$0xff]
  %v7270 = vld [vmem:[%s7255 + $0x70] sm:$0xff]
  %v7271 = vld [vmem:[%s7255 + $0x78] sm:$0xff]
  %v7272 = vld [vmem:[%s7255 + $0x80] sm:$0xff]
  %v7273 = vld [vmem:[%s7255 + $0x88] sm:$0xf]
  %v7282 = vlaneseq
  %v7283 = vshrl.u32 %v7282, 7
  %v7284 = vsub.s32 0, %v7283
  %v7285 = vrot.slane %v6682, %v7284
  %v7286 = vlaneseq
  %v7287 = vshrl.u32 %v7286, 7
  %v7288 = vsub.s32 2, %v7287
  %v7289 = vrot.slane %v6682, %v7288
  %v7290 = vlaneseq
  %v7291 = vshrl.u32 %v7290, 7
  %v7292 = vsub.s32 0, %v7291
  %v7293 = vrot.slane %v6686, %v7292
  %v7294 = vlaneseq
  %v7295 = vshrl.u32 %v7294, 7
  %v7296 = vsub.s32 2, %v7295
  %v7297 = vrot.slane %v6686, %v7296
  %v7298 = vlaneseq
  %v7299 = vshrl.u32 %v7298, 7
  %v7300 = vsub.s32 0, %v7299
  %v7301 = vrot.slane %v6690, %v7300
  %v7302 = vlaneseq
  %v7303 = vshrl.u32 %v7302, 7
  %v7304 = vsub.s32 2, %v7303
  %v7305 = vrot.slane %v6690, %v7304
  %v7306 = vlaneseq
  %v7307 = vshrl.u32 %v7306, 7
  %v7308 = vsub.s32 0, %v7307
  %v7309 = vrot.slane %v6694, %v7308
  %v7310 = vlaneseq
  %v7311 = vshrl.u32 %v7310, 7
  %v7312 = vsub.s32 2, %v7311
  %v7313 = vrot.slane %v6694, %v7312
  %v7314 = vlaneseq
  %v7315 = vshrl.u32 %v7314, 7
  %v7316 = vsub.s32 0, %v7315
  %v7317 = vrot.slane %v6698, %v7316
  %v7318 = vlaneseq
  %v7319 = vshrl.u32 %v7318, 7
  %v7320 = vsub.s32 2, %v7319
  %v7321 = vrot.slane %v6698, %v7320
  %v7322 = vlaneseq
  %v7323 = vshrl.u32 %v7322, 7
  %v7324 = vsub.s32 0, %v7323
  %v7325 = vrot.slane %v6702, %v7324
  %v7326 = vlaneseq
  %v7327 = vshrl.u32 %v7326, 7
  %v7328 = vsub.s32 2, %v7327
  %v7329 = vrot.slane %v6702, %v7328
  %v7330 = vlaneseq
  %v7331 = vshrl.u32 %v7330, 7
  %v7332 = vsub.s32 0, %v7331
  %v7333 = vrot.slane %v6706, %v7332
  %v7334 = vlaneseq
  %v7335 = vshrl.u32 %v7334, 7
  %v7336 = vsub.s32 2, %v7335
  %v7337 = vrot.slane %v6706, %v7336
  %v7338 = vlaneseq
  %v7339 = vshrl.u32 %v7338, 7
  %v7340 = vsub.s32 0, %v7339
  %v7341 = vrot.slane %v6710, %v7340
  %v7342 = vlaneseq
  %v7343 = vshrl.u32 %v7342, 7
  %v7344 = vsub.s32 2, %v7343
  %v7345 = vrot.slane %v6710, %v7344
  %v7346 = vsel %vm4310, %v7293, %v7285
  %v7347 = vsel %vm4312, %v7301, %v7346
  %v7348 = vsel %vm4314, %v7309, %v7347
  %v7349 = vsel %vm4316, %v7317, %v7348
  %v7350 = vsel %vm4318, %v7325, %v7349
  %v7351 = vsel %vm4320, %v7333, %v7350
  %v7352 = vsel %vm4322, %v7341, %v7351
  %v7353 = vsel %vm4310, %v7297, %v7289
  %v7354 = vsel %vm4312, %v7305, %v7353
  %v7355 = vsel %vm4314, %v7313, %v7354
  %v7356 = vsel %vm4316, %v7321, %v7355
  %v7357 = vsel %vm4318, %v7329, %v7356
  %v7358 = vsel %vm4320, %v7337, %v7357
  %v7359 = vsel %vm4322, %v7345, %v7358
  %v7361 = vsel %vm6835, %v7359, 0
  %v7364 = vsel %vm219, %v7273, 0
  %7366 = vmatprep.subr.mxu0 0.0
  %7367 = vmatpush1.msra.mxu0 %v7271
  %7368 = vmatprep.subr.mxu0 0.0
  %7369 = vmatpush1.msra.mxu0 %v7270
  %7370 = vmatprep.subr.mxu0 0.0
  %7371 = vmatpush1.msra.mxu0 %v7269
  %7372 = vmatprep.subr.mxu0 0.0
  %7373 = vmatpush1.msra.mxu0 %v7268
  %7374 = vmatprep.subr.mxu0 0.0
  %7375 = vmatpush1.msra.mxu0 %v7267
  %7376 = vmatprep.subr.mxu0 0.0
  %7377 = vmatpush1.msra.mxu0 %v7266
  %7378 = vmatprep.subr.mxu0 0.0
  %7379 = vmatpush1.msra.mxu0 %v7265
  %7380 = vmatprep.subr.mxu0 0.0
  %7381 = vmatpush1.msra.mxu0 %v7264
  %7382 = vmatprep.subr.mxu0 0.0
  %7383 = vmatpush1.msra.mxu0 %v7263
  %7384 = vmatprep.subr.mxu0 0.0
  %7385 = vmatpush1.msra.mxu0 %v7262
  %7386 = vmatprep.subr.mxu0 0.0
  %7387 = vmatpush1.msra.mxu0 %v7261
  %7388 = vmatprep.subr.mxu0 0.0
  %7389 = vmatpush1.msra.mxu0 %v7260
  %7390 = vmatprep.subr.mxu0 0.0
  %7391 = vmatpush1.msra.mxu0 %v7259
  %7392 = vmatprep.subr.mxu0 0.0
  %7393 = vmatpush1.msra.mxu0 %v7258
  %7394 = vmatprep.subr.mxu0 0.0
  %7395 = vmatpush1.msra.mxu0 %v7257
  %7396 = vmatprep.subr.mxu0 0.0
  %7397 = vmatpush1.msra.mxu0 %v7256
  %7398 = vmatprep.subr.mxu0 0.0
  %7399 = vmatpush2.msra.mxu0 0.0
  %7400 = vmatprep.subr.mxu0 0.0
  %7401 = vmatpush2.msra.mxu0 0.0
  %7402 = vmatprep.subr.mxu0 0.0
  %7403 = vmatpush2.msra.mxu0 0.0
  %7404 = vmatprep.subr.mxu0 0.0
  %7405 = vmatpush2.msra.mxu0 0.0
  %7406 = vmatprep.subr.mxu0 0.0
  %7407 = vmatpush2.msra.mxu0 0.0
  %7408 = vmatprep.subr.mxu0 0.0
  %7409 = vmatpush2.msra.mxu0 0.0
  %7410 = vmatprep.subr.mxu0 0.0
  %7411 = vmatpush2.msra.mxu0 0.0
  %7412 = vmatprep.subr.mxu0 0.0
  %7413 = vmatpush2.msra.mxu0 0.0
  %7414 = vmatprep.subr.mxu0 0.0
  %7415 = vmatpush2.msra.mxu0 0.0
  %7416 = vmatprep.subr.mxu0 0.0
  %7417 = vmatpush2.msra.mxu0 0.0
  %7418 = vmatprep.subr.mxu0 0.0
  %7419 = vmatpush2.msra.mxu0 0.0
  %7420 = vmatprep.subr.mxu0 0.0
  %7421 = vmatpush2.msra.mxu0 0.0
  %7422 = vmatprep.subr.mxu0 0.0
  %7423 = vmatpush2.msra.mxu0 0.0
  %7424 = vmatprep.subr.mxu0 0.0
  %7425 = vmatpush2.msra.mxu0 0.0
  %7426 = vmatprep.subr.mxu0 0.0
  %7427 = vmatpush2.msra.mxu0 %v7364
  %7428 = vmatprep.subr.mxu0 0.0
  %7429 = vmatpush2.msra.mxu0 %v7272
  %7430 = vmatprep.mubr.f32.mxu0 %v7361
  %7431 = vmatmul.mubr.f32.gmra.mxu0 %v7352
  %v7432 = vpop.f32.mrf.mxu0
  %v7433 = vadd.f32 0.0, %v7432
  %v7434 = vpop.f32.mrf.mxu0
  %7435 = vdwg.mxu0
  %v7436 = vadd.f32 %v7254, %v7433
  %v7437 = vld [vmem:[%s6] sm:$0x1]
  %v7439 = vlaneseq
  %v7440 = vshrl.u32 %v7439, 7
  %v7441 = vsub.s32 0, %v7440
  %v7442 = vrot.slane %v7437, %v7441
  %v7444 = vadd.f32 %v7436, %v7442
  %v7445 = vmax.f32 %v7444, 0.0
  %v7446 = vld [vmem:[%s7] sm:$0xff]
  %v7447 = vld [vmem:[%s7 + $0x8] sm:$0xff]
  %v7448 = vld [vmem:[%s7 + $0x10] sm:$0xff]
  %v7449 = vld [vmem:[%s7 + $0x18] sm:$0xff]
  %v7450 = vld [vmem:[%s7 + $0x20] sm:$0xff]
  %v7451 = vld [vmem:[%s7 + $0x28] sm:$0xff]
  %v7452 = vld [vmem:[%s7 + $0x30] sm:$0x3]
  %v7453 = vld [vmem:[%s8] sm:$0x1]
  %v7455 = vlaneseq
  %v7456 = vshrl.u32 %v7455, 7
  %v7457 = vsub.s32 0, %v7456
  %v7458 = vrot.slane %v7453, %v7457
  %vm7460 = vcmask 408576
  %v7462 = vsel %vm7460, %v7445, 0
  %vm7464 = vcmask 1041408
  %v7466 = vsel %vm7464, %v7452, 0
  %7468 = vmatprep.subr.mxu0 0.0
  %7469 = vmatpush1.msra.mxu0 0.0
  %7470 = vmatprep.subr.mxu0 0.0
  %7471 = vmatpush1.msra.mxu0 0.0
  %7472 = vmatprep.subr.mxu0 0.0
  %7473 = vmatpush1.msra.mxu0 0.0
  %7474 = vmatprep.subr.mxu0 0.0
  %7475 = vmatpush1.msra.mxu0 0.0
  %7476 = vmatprep.subr.mxu0 0.0
  %7477 = vmatpush1.msra.mxu0 0.0
  %7478 = vmatprep.subr.mxu0 0.0
  %7479 = vmatpush1.msra.mxu0 0.0
  %7480 = vmatprep.subr.mxu0 0.0
  %7481 = vmatpush1.msra.mxu0 0.0
  %7482 = vmatprep.subr.mxu0 0.0
  %7483 = vmatpush1.msra.mxu0 0.0
  %7484 = vmatprep.subr.mxu0 0.0
  %7485 = vmatpush1.msra.mxu0 0.0
  %7486 = vmatprep.subr.mxu0 0.0
  %7487 = vmatpush1.msra.mxu0 %v7466
  %7488 = vmatprep.subr.mxu0 0.0
  %7489 = vmatpush1.msra.mxu0 %v7451
  %7490 = vmatprep.subr.mxu0 0.0
  %7491 = vmatpush1.msra.mxu0 %v7450
  %7492 = vmatprep.subr.mxu0 0.0
  %7493 = vmatpush1.msra.mxu0 %v7449
  %7494 = vmatprep.subr.mxu0 0.0
  %7495 = vmatpush1.msra.mxu0 %v7448
  %7496 = vmatprep.subr.mxu0 0.0
  %7497 = vmatpush1.msra.mxu0 %v7447
  %7498 = vmatprep.subr.mxu0 0.0
  %7499 = vmatpush1.msra.mxu0 %v7446
  %7500 = vmatprep.subr.mxu0 0.0
  %7501 = vmatpush2.msra.mxu0 0.0
  %7502 = vmatprep.subr.mxu0 0.0
  %7503 = vmatpush2.msra.mxu0 0.0
  %7504 = vmatprep.subr.mxu0 0.0
  %7505 = vmatpush2.msra.mxu0 0.0
  %7506 = vmatprep.subr.mxu0 0.0
  %7507 = vmatpush2.msra.mxu0 0.0
  %7508 = vmatprep.subr.mxu0 0.0
  %7509 = vmatpush2.msra.mxu0 0.0
  %7510 = vmatprep.subr.mxu0 0.0
  %7511 = vmatpush2.msra.mxu0 0.0
  %7512 = vmatprep.subr.mxu0 0.0
  %7513 = vmatpush2.msra.mxu0 0.0
  %7514 = vmatprep.subr.mxu0 0.0
  %7515 = vmatpush2.msra.mxu0 0.0
  %7516 = vmatprep.subr.mxu0 0.0
  %7517 = vmatpush2.msra.mxu0 0.0
  %7518 = vmatprep.subr.mxu0 0.0
  %7519 = vmatpush2.msra.mxu0 0.0
  %7520 = vmatprep.subr.mxu0 0.0
  %7521 = vmatpush2.msra.mxu0 0.0
  %7522 = vmatprep.subr.mxu0 0.0
  %7523 = vmatpush2.msra.mxu0 0.0
  %7524 = vmatprep.subr.mxu0 0.0
  %7525 = vmatpush2.msra.mxu0 0.0
  %7526 = vmatprep.subr.mxu0 0.0
  %7527 = vmatpush2.msra.mxu0 0.0
  %7528 = vmatprep.subr.mxu0 0.0
  %7529 = vmatpush2.msra.mxu0 0.0
  %7530 = vmatprep.subr.mxu0 0.0
  %7531 = vmatpush2.msra.mxu0 0.0
  %7532 = vmatprep.mubr.f32.mxu0 0.0
  %7533 = vmatmul.mubr.f32.gmra.mxu0 %v7462
  %v7534 = vpop.f32.mrf.mxu0
  %v7535 = vadd.f32 %v7458, %v7534
  %v7536 = vpop.f32.mrf.mxu0
  %7537 = vdwg.mxu0
  %vm7538 = vcmask 80896
  %v7539 = vsel %vm7538, %v7535, -inf
  %7540 = vmax.xlane.f32.xlu0 %v7539
  %v7541 = vpop.xlane.xlu0 %7540
  %v7542 = vsub.f32 %v7535, %v7541
  %v7543 = vmul.f32 %v7542, 1.442695
  %v7544 = vpow.pop %v7543
  %v7545 = vsel %vm7538, %v7544, 0.0
  %7546 = vadd.xlane.f32.xlu0 %v7545
  %v7547 = vpop.xlane.xlu0 %7546
  %v7548 = vlog2.pop %v7547
  %v7549 = vmul.f32 %v7548, 0.6931472
  %v7550 = vsub.f32 %v7542, %v7549
  %7551 = vst.msk [vmem:[%s9] sm:$0xff] %vm7538, %v7550
  // Predicated region
  $region38: #{fashion_forward.1} parent=0 // pred_check
    _
  $region39: #{fashion_forward.1} parent=0 // pred_check_branch
    %7553 = sbr.rel (0) target = $region41
  $region40: #{fashion_forward.1} parent=0 // pred_region
    _
  $region41: #{fashion_forward.1} parent=0 // pred_fallthru
    _
  // Predicated region
  $region42: #{fashion_forward.1} parent=0 // pred_check
    _
  $region43: #{fashion_forward.1} parent=0 // pred_check_branch
    %7555 = sbr.rel (0) target = $region45
  $region44: #{fashion_forward.1} parent=0 // pred_region
    _
  $region45: #{fashion_forward.1} parent=0 // pred_fallthru
    _

</llo_original>
